<compile_context>
chip_gen: v7x
topology: tpu7x:2x2x1
jax: 0.10.0
libtpu: 0.0.40
codegen_flags: <defaults>
</compile_context>

<pallas_src>
import functools
import math

import jax
import jax.numpy as jnp
from jax.experimental import pallas as pl
from jax.experimental.pallas import tpu as pltpu

_INV_SQRT2 = 1.0 / math.sqrt(2.0)
_COMPUTE_DTYPE = jnp.bfloat16      # MXU operand dtype; accumulation is f32


def _tile_size(dim, target, multiple):
    """Largest tile that divides `dim`, is <= `target`, and is a multiple of
    `multiple`.  Falls back to the full dim (always tiling-legal)."""
    if dim <= target:
        return dim
    t = (target // multiple) * multiple
    while t >= multiple:
        if dim % t == 0:
            return t
        t -= multiple
    return dim


def _pick_hpb(heads, d_head):
    """Smallest head-block that makes the flash-attention lane width a
    multiple of 128; otherwise all heads (block = full last dim)."""
    for hpb in range(1, heads + 1):
        if heads % hpb == 0 and (hpb * d_head) % 128 == 0:
            return hpb
    return heads


# --------------------------- tiled matmul kernel ----------------------------

def _matmul_kernel(*refs, has_ln, has_bias, has_res, ln_eps, compute_dtype):
    it = iter(refs)
    x_ref = next(it)
    w_ref = next(it)
    g_ref = next(it) if has_ln else None
    be_ref = next(it) if has_ln else None
    b_ref = next(it) if has_bias else None
    r_ref = next(it) if has_res else None
    o_ref = next(it)
    acc_ref = next(it)

    k = pl.program_id(2)

    @pl.when(k == 0)
    def _():
        acc_ref[...] = jnp.zeros(acc_ref.shape, jnp.float32)

    x = x_ref[...]
    if has_ln:
        # LayerNorm fused into the matmul prologue (requires tk == K).
        xf = x.astype(jnp.float32)
        mean = jnp.mean(xf, axis=-1, keepdims=True)
        xc = xf - mean
        var = jnp.mean(xc * xc, axis=-1, keepdims=True)
        x = (xc * jax.lax.rsqrt(var + ln_eps) * g_ref[...].astype(jnp.float32)
             + be_ref[...].astype(jnp.float32))

    acc_ref[...] += jnp.dot(x.astype(compute_dtype),
                            w_ref[...].astype(compute_dtype),
                            preferred_element_type=jnp.float32)

    @pl.when(k == pl.num_programs(2) - 1)
    def _():
        out = acc_ref[...]
        if has_bias:
            out = out + b_ref[...].astype(jnp.float32)
        if has_res:
            out = out + r_ref[...].astype(jnp.float32)
        o_ref[...] = out.astype(o_ref.dtype)


def matmul(x, w, bias=None, residual=None, ln=None, *, tm=512, tn=512, tk=512,
           out_dtype=None, ln_eps=1e-5):
    """x:(M,K) @ w:(K,N) [+bias] [+residual] with optional fused LayerNorm(x)."""
    m, kdim = x.shape
    _, n = w.shape
    out_dtype = out_dtype or x.dtype

    fuse_ln = ln is not None and kdim <= 2048
    if ln is not None and not fuse_ln:
        x = layer_norm_2d(x, ln[0], ln[1], eps=ln_eps)
    if fuse_ln:
        tk = kdim                                   # LN needs whole rows

    tm = _tile_size(m, tm, 8)
    tn = _tile_size(n, tn, 128)
    tk = _tile_size(kdim, tk, 128)

    has_bias = bias is not None
    has_res = residual is not None

    in_specs = [
        pl.BlockSpec((tm, tk), lambda i, j, k: (i, k)),
        pl.BlockSpec((tk, tn), lambda i, j, k: (k, j)),
    ]
    args = [x, w]
    if fuse_ln:
        g2 = ln[0] if ln[0].ndim == 2 else ln[0].reshape(1, kdim)
        b2 = ln[1] if ln[1].ndim == 2 else ln[1].reshape(1, kdim)
        in_specs += [pl.BlockSpec((1, tk), lambda i, j, k: (0, 0)),
                     pl.BlockSpec((1, tk), lambda i, j, k: (0, 0))]
        args += [g2, b2]
    if has_bias:
        b1 = bias if bias.ndim == 2 else bias.reshape(1, n)
        in_specs.append(pl.BlockSpec((1, tn), lambda i, j, k: (0, j)))
        args.append(b1)
    if has_res:
        # index_map independent of k -> fetched once per (i, j), not per K step.
        in_specs.append(pl.BlockSpec((tm, tn), lambda i, j, k: (i, j)))
        args.append(residual)

    kern = functools.partial(_matmul_kernel, has_ln=fuse_ln, has_bias=has_bias,
                             has_res=has_res, ln_eps=ln_eps,
                             compute_dtype=_COMPUTE_DTYPE)
    return pl.pallas_call(
        kern,
        out_shape=jax.ShapeDtypeStruct((m, n), out_dtype),
        grid=(m // tm, n // tn, kdim // tk),
        in_specs=in_specs,
        out_specs=pl.BlockSpec((tm, tn), lambda i, j, k: (i, j)),
        scratch_shapes=[pltpu.VMEM((tm, tn), jnp.float32)],
        compiler_params=pltpu.CompilerParams(
            dimension_semantics=("parallel", "parallel", "arbitrary")),
    )(*args)


# ---------------- FF up-projection with fused LN + GEGLU epilogue ------------

def _ff_geglu_kernel(*refs, has_ln, ln_eps, compute_dtype):
    it = iter(refs)
    x_ref = next(it)
    wa_ref = next(it)
    wg_ref = next(it)
    ba_ref = next(it)
    bg_ref = next(it)
    g_ref = next(it) if has_ln else None
    be_ref = next(it) if has_ln else None
    o_ref = next(it)
    acc_a = next(it)
    acc_g = next(it)

    k = pl.program_id(2)

    @pl.when(k == 0)
    def _():
        acc_a[...] = jnp.zeros(acc_a.shape, jnp.float32)
        acc_g[...] = jnp.zeros(acc_g.shape, jnp.float32)

    x = x_ref[...]
    if has_ln:
        xf = x.astype(jnp.float32)
        mean = jnp.mean(xf, axis=-1, keepdims=True)
        xc = xf - mean
        var = jnp.mean(xc * xc, axis=-1, keepdims=True)
        x = (xc * jax.lax.rsqrt(var + ln_eps) * g_ref[...].astype(jnp.float32)
             + be_ref[...].astype(jnp.float32))
    xb = x.astype(compute_dtype)

    acc_a[...] += jnp.dot(xb, wa_ref[...].astype(compute_dtype),
                          preferred_element_type=jnp.float32)
    acc_g[...] += jnp.dot(xb, wg_ref[...].astype(compute_dtype),
                          preferred_element_type=jnp.float32)

    @pl.when(k == pl.num_programs(2) - 1)
    def _():
        a = acc_a[...] + ba_ref[...].astype(jnp.float32)
        g = acc_g[...] + bg_ref[...].astype(jnp.float32)
        # exact (erf-based) GELU, matching torch.nn.functional.gelu default
        gelu_g = 0.5 * g * (1.0 + jax.lax.erf(g * _INV_SQRT2))
        o_ref[...] = (a * gelu_g).astype(o_ref.dtype)


def geglu_ff_proj(x, w1, b1, ln=None, *, tm=512, tn=512, tk=512,
                  out_dtype=_COMPUTE_DTYPE, ln_eps=1e-5):
    """LayerNorm(x) @ w1 + b1, split into (a, gate), returns a * gelu(gate).
    Reads w1/b1 un-sliced (offset index_maps); (M, 2F) intermediate never hits
    HBM."""
    m, kdim = x.shape
    f = w1.shape[1] // 2

    fuse_ln = ln is not None and kdim <= 2048
    if ln is not None and not fuse_ln:
        x = layer_norm_2d(x, ln[0], ln[1], eps=ln_eps)
    if fuse_ln:
        tk = kdim

    tm = _tile_size(m, tm, 8)
    tn = _tile_size(f, tn, 128)
    tk = _tile_size(kdim, tk, 128)
    noff = f // tn
    b1_2d = b1 if b1.ndim == 2 else b1.reshape(1, -1)

    in_specs = [
        pl.BlockSpec((tm, tk), lambda i, j, k: (i, k)),
        pl.BlockSpec((tk, tn), lambda i, j, k: (k, j)),                   # wa
        pl.BlockSpec((tk, tn), lambda i, j, k, o=noff: (k, j + o)),       # wg
        pl.BlockSpec((1, tn), lambda i, j, k: (0, j)),                    # ba
        pl.BlockSpec((1, tn), lambda i, j, k, o=noff: (0, j + o)),        # bg
    ]
    args = [x, w1, w1, b1_2d, b1_2d]
    if fuse_ln:
        g2 = ln[0] if ln[0].ndim == 2 else ln[0].reshape(1, kdim)
        b2 = ln[1] if ln[1].ndim == 2 else ln[1].reshape(1, kdim)
        in_specs += [pl.BlockSpec((1, tk), lambda i, j, k: (0, 0)),
                     pl.BlockSpec((1, tk), lambda i, j, k: (0, 0))]
        args += [g2, b2]

    kern = functools.partial(_ff_geglu_kernel, has_ln=fuse_ln, ln_eps=ln_eps,
                             compute_dtype=_COMPUTE_DTYPE)
    return pl.pallas_call(
        kern,
        out_shape=jax.ShapeDtypeStruct((m, f), out_dtype),
        grid=(m // tm, f // tn, kdim // tk),
        in_specs=in_specs,
        out_specs=pl.BlockSpec((tm, tn), lambda i, j, k: (i, j)),
        scratch_shapes=[pltpu.VMEM((tm, tn), jnp.float32),
                        pltpu.VMEM((tm, tn), jnp.float32)],
        compiler_params=pltpu.CompilerParams(
            dimension_semantics=("parallel", "parallel", "arbitrary")),
    )(*args)


# ------------------------- flash-style attention -----------------------------

def _flash_attn_kernel(q_ref, k_ref, v_ref, o_ref, m_sc, l_sc, acc_sc, *,
                       hpb, d):
    ki = pl.program_id(3)

    @pl.when(ki == 0)
    def _():
        m_sc[...] = jnp.full(m_sc.shape, -jnp.inf, jnp.float32)
        l_sc[...] = jnp.zeros(l_sc.shape, jnp.float32)
        acc_sc[...] = jnp.zeros(acc_sc.shape, jnp.float32)

    q = q_ref[0]                                   # (tq, hpb*d)   (q pre-scaled)
    k = k_ref[0]                                   # (tkv, hpb*d)
    v = v_ref[0]
    tq = q.shape[0]

    for h in range(hpb):                           # static loop over head block
        sl = slice(h * d, (h + 1) * d)
        s = jax.lax.dot_general(q[:, sl], k[:, sl], (((1,), (1,)), ((), ())),
                                preferred_element_type=jnp.float32)  # (tq, tkv)

        m_prev = m_sc[:, h * d:h * d + 1]          # (tq, 1)
        l_prev = l_sc[:, h * d:h * d + 1]
        m_new = jnp.maximum(m_prev, jnp.max(s, axis=-1, keepdims=True))
        alpha = jnp.exp(m_prev - m_new)
        p = jnp.exp(s - m_new)
        l_new = alpha * l_prev + jnp.sum(p, axis=-1, keepdims=True)

        acc_sc[:, sl] = alpha * acc_sc[:, sl] + jnp.dot(
            p.astype(v.dtype), v[:, sl], preferred_element_type=jnp.float32)
        m_sc[:, sl] = jnp.broadcast_to(m_new, (tq, d))
        l_sc[:, sl] = jnp.broadcast_to(l_new, (tq, d))

    @pl.when(ki == pl.num_programs(3) - 1)
    def _():
        # l_sc holds the per-head denominator broadcast over its d lanes, so
        # the finalize is a single lane-dense elementwise store.
        o_ref[0] = (acc_sc[...] *
                    pl.reciprocal(l_sc[...], approx=True)).astype(o_ref.dtype)


def flash_attention(q_src, k_src, v_src, *, heads, d_head, hpb, offsets,
                    tq=512, tkv=512, out_dtype=_COMPUTE_DTYPE):
    """Online-softmax attention on head-packed layouts.

    q_src: (b, nq, *) and k_src/v_src: (b, nk, *); `offsets` gives each
    operand's starting head-block index along its last dim (in units of
    hpb*d_head), so q/k/v can be windows of the same packed QKV activation.
    Output is (b, nq, heads*d_head) — already in (b n (h d)) layout.
    """
    b, nq, _ = q_src.shape
    nk = k_src.shape[1]
    nhb = heads // hpb
    hd = hpb * d_head
    inner = heads * d_head
    tq = _tile_size(nq, tq, 8)
    tkv = _tile_size(nk, tkv, 128)
    qo, ko, vo = offsets

    kern = functools.partial(_flash_attn_kernel, hpb=hpb, d=d_head)
    return pl.pallas_call(
        kern,
        out_shape=jax.ShapeDtypeStruct((b, nq, inner), out_dtype),
        grid=(b, nhb, nq // tq, nk // tkv),
        in_specs=[
            pl.BlockSpec((1, tq, hd), lambda bi, hb, qi, ki, o=qo: (bi, qi, hb + o)),
            pl.BlockSpec((1, tkv, hd), lambda bi, hb, qi, ki, o=ko: (bi, ki, hb + o)),
            pl.BlockSpec((1, tkv, hd), lambda bi, hb, qi, ki, o=vo: (bi, ki, hb + o)),
        ],
        out_specs=pl.BlockSpec((1, tq, hd), lambda bi, hb, qi, ki: (bi, qi, hb)),
        scratch_shapes=[
            pltpu.VMEM((tq, hd), jnp.float32),    # running max (broadcast per head)
            pltpu.VMEM((tq, hd), jnp.float32),    # running denom
            pltpu.VMEM((tq, hd), jnp.float32),    # running output accumulator
        ],
        compiler_params=pltpu.CompilerParams(
            dimension_semantics=("parallel", "parallel", "parallel", "arbitrary")),
    )(q_src, k_src, v_src)


# ------------------------------ normalizations -------------------------------

def _group_norm_kernel(x_ref, g_ref, b_ref, o_ref, *, eps):
    x = x_ref[0].astype(jnp.float32)               # (gpb, cpg, hw)
    cnt = x.shape[1] * x.shape[2]
    mean = jnp.sum(jnp.sum(x, axis=2, keepdims=True), axis=1,
                   keepdims=True) / cnt
    xc = x - mean                                  # centered (two-pass) variance
    var = jnp.sum(jnp.sum(xc * xc, axis=2, keepdims=True), axis=1,
                  keepdims=True) / cnt
    xn = xc * jax.lax.rsqrt(var + eps)
    o_ref[0] = (xn * g_ref[...].astype(jnp.float32)
                + b_ref[...].astype(jnp.float32)).astype(o_ref.dtype)


def group_norm_ncx(x_g, gamma, beta, eps=1e-6, max_block_bytes=4 * 1024 * 1024):
    """GroupNorm on x reshaped to (B, G, cpg, HW); several groups per step."""
    b, g, cpg, hw = x_g.shape
    bytes_per_group = max(cpg * hw * 4, 1)
    gpb = max(1, min(g, max_block_bytes // bytes_per_group))
    while g % gpb != 0:
        gpb -= 1
    gamma_g = gamma.reshape(g, cpg, 1)
    beta_g = beta.reshape(g, cpg, 1)
    kern = functools.partial(_group_norm_kernel, eps=eps)
    return pl.pallas_call(
        kern,
        out_shape=jax.ShapeDtypeStruct(x_g.shape, x_g.dtype),
        grid=(b, g // gpb),
        in_specs=[
            pl.BlockSpec((1, gpb, cpg, hw), lambda i, j: (i, j, 0, 0)),
            pl.BlockSpec((gpb, cpg, 1), lambda i, j: (j, 0, 0)),
            pl.BlockSpec((gpb, cpg, 1), lambda i, j: (j, 0, 0)),
        ],
        out_specs=pl.BlockSpec((1, gpb, cpg, hw), lambda i, j: (i, j, 0, 0)),
        compiler_params=pltpu.CompilerParams(
            dimension_semantics=("parallel", "parallel")),
    )(x_g, gamma_g, beta_g)


def _layer_norm_kernel(x_ref, g_ref, b_ref, o_ref, *, eps):
    x = x_ref[...].astype(jnp.float32)
    mean = jnp.mean(x, axis=-1, keepdims=True)
    xc = x - mean
    var = jnp.mean(xc * xc, axis=-1, keepdims=True)
    xn = xc * jax.lax.rsqrt(var + eps)
    o_ref[...] = (xn * g_ref[...].astype(jnp.float32)
                  + b_ref[...].astype(jnp.float32)).astype(o_ref.dtype)


def layer_norm_2d(x, gamma, beta, eps=1e-5):
    """Standalone LN fallback (used only when LN cannot be fused, K > 2048)."""
    m, c = x.shape
    tm = _tile_size(m, 1024, 8)
    g2 = gamma if gamma.ndim == 2 else gamma.reshape(1, c)
    b2 = beta if beta.ndim == 2 else beta.reshape(1, c)
    kern = functools.partial(_layer_norm_kernel, eps=eps)
    return pl.pallas_call(
        kern,
        out_shape=jax.ShapeDtypeStruct((m, c), x.dtype),
        grid=(m // tm,),
        in_specs=[pl.BlockSpec((tm, c), lambda i: (i, 0)),
                  pl.BlockSpec((1, c), lambda i: (0, 0)),
                  pl.BlockSpec((1, c), lambda i: (0, 0))],
        out_specs=pl.BlockSpec((tm, c), lambda i: (i, 0)),
        compiler_params=pltpu.CompilerParams(dimension_semantics=("parallel",)),
    )(x, g2, b2)


# ------------------------------ model wiring ---------------------------------

def cross_attention(x, context, p, heads, residual, ln):
    """x: (b, n, dim); context: (b, m, ctx_dim) or None (self-attention).
    LayerNorm(x) is fused into the q/qkv projection; `residual` is fused into
    the output-projection epilogue."""
    b, n, dim = x.shape
    inner = p["w_o"].shape[0]
    dh = inner // heads
    hpb = _pick_hpb(heads, dh)
    nhb = heads // hpb
    packed_ok = (hpb * dh) % 128 == 0
    x2d = x.reshape(b * n, dim)

    if context is None:
        # Single fused QKV projection (one HBM read of x, LN fused, scale
        # folded into wq at prepare time).
        qkv = matmul(x2d, p["w_qkv"], ln=ln,
                     out_dtype=_COMPUTE_DTYPE).reshape(b, n, 3 * inner)
        nk_src = qkv
        if packed_ok:
            q_src, k_src, v_src = qkv, qkv, qkv
            offs = (0, nhb, 2 * nhb)
        else:
            q_src, k_src, v_src = jnp.split(qkv, 3, axis=-1)
            offs = (0, 0, 0)
    else:
        cm = context.shape[1]
        ctx2d = context.reshape(b * cm, context.shape[2])
        q = matmul(x2d, p["w_q"], ln=ln,
                   out_dtype=_COMPUTE_DTYPE).reshape(b, n, inner)
        kv = matmul(ctx2d, p["w_kv"],
                    out_dtype=_COMPUTE_DTYPE).reshape(b, cm, 2 * inner)
        if packed_ok:
            q_src, k_src, v_src = q, kv, kv
            offs = (0, 0, nhb)
        else:
            k_src, v_src = jnp.split(kv, 2, axis=-1)
            q_src = q
            offs = (0, 0, 0)

    out = flash_attention(q_src, k_src, v_src, heads=heads, d_head=dh,
                          hpb=hpb, offsets=offs)          # (b, n, inner), packed heads
    out = matmul(out.reshape(b * n, inner), p["w_o"], bias=p["b_o"],
                 residual=residual.reshape(b * n, dim), out_dtype=jnp.float32)
    return out.reshape(b, n, dim)


def feed_forward(x, p, residual, ln):
    b, n, dim = x.shape
    x2d = x.reshape(b * n, dim)
    hidden = geglu_ff_proj(x2d, p["w1"], p["b1"], ln=ln)      # (b*n, F) bf16
    out = matmul(hidden, p["w2"], bias=p["b2"],
                 residual=residual.reshape(b * n, dim), out_dtype=jnp.float32)
    return out.reshape(b, n, dim)


def basic_transformer_block(x, p, heads, context=None):
    x = cross_attention(x, None, p["attn1"], heads, residual=x, ln=p["ln1"])
    x = cross_attention(x, context, p["attn2"], heads, residual=x, ln=p["ln2"])
    x = feed_forward(x, p["ff"], residual=x, ln=p["ln3"])
    return x


def spatial_transformer_forward(x_nchw, pp, n_heads, num_groups=32,
                                context=None):
    b, c, h, w = x_nchw.shape
    hw = h * w
    x_in = x_nchw

    # GroupNorm directly on NCHW (free reshape), all groups of a batch per step.
    xg = x_nchw.reshape(b, num_groups, c // num_groups, hw)
    xg = group_norm_ncx(xg, pp["gn_gamma"], pp["gn_beta"], eps=1e-6)

    # NCHW -> (b, hw, c) tokens  (matches rearrange 'b c h w -> b (h w) c').
    x = xg.reshape(b, c, hw).transpose(0, 2, 1)

    inner = pp["proj_in_w"].shape[1]
    x = matmul(x.reshape(b * hw, c), pp["proj_in_w"], bias=pp["proj_in_b"],
               out_dtype=jnp.float32).reshape(b, hw, inner)

    for blk in pp["blocks"]:
        x = basic_transformer_block(x, blk, n_heads, context=context)

    y = matmul(x.reshape(b * hw, inner), pp["proj_out_w"],
               bias=pp["proj_out_b"], out_dtype=jnp.float32)
    y = y.reshape(b, h, w, c).transpose(0, 3, 1, 2)
    return y + x_in


# --------------------------- parameter creation ------------------------------

def init_params(key, in_channels, n_heads, d_head, depth=1):
    inner = n_heads * d_head
    ff_inner = 4 * inner
    keys = iter(jax.random.split(key, 64))

    def w(shape, scale=0.05):
        return (scale * jax.random.normal(next(keys), shape)).astype(jnp.float32)

    def attn_params(dim, ctx_dim):
        return {
            "wq": w((dim, inner)), "wk": w((ctx_dim, inner)),
            "wv": w((ctx_dim, inner)),
            "wo": w((inner, dim)), "bo": w((dim,)),
        }

    blocks = []
    for _ in range(depth):
        blocks.append({
            "ln1_g": jnp.ones((inner,), jnp.float32), "ln1_b": w((inner,)),
            "ln2_g": jnp.ones((inner,), jnp.float32), "ln2_b": w((inner,)),
            "ln3_g": jnp.ones((inner,), jnp.float32), "ln3_b": w((inner,)),
            "attn1": attn_params(inner, inner),
            "attn2": attn_params(inner, inner),   # context_dim=None -> query dim
            "ff": {"w1": w((inner, 2 * ff_inner)), "b1": w((2 * ff_inner,)),
                   "w2": w((ff_inner, inner)), "b2": w((inner,))},
        })

    return {
        "gn_gamma": jnp.ones((in_channels,), jnp.float32),
        "gn_beta": w((in_channels,)),
        "proj_in_w": w((in_channels, inner)), "proj_in_b": w((inner,)),
        "blocks": blocks,
        # NOTE: original module zero-inits proj_out (zero_module); random here so
        # the full compute path is numerically visible in the self-test.
        "proj_out_w": w((inner, in_channels)), "proj_out_b": w((in_channels,)),
    }


def prepare_params(params, n_heads, compute_dtype=_COMPUTE_DTYPE):
    """One-time weight preparation: fold the attention scale into wq, build the
    fused QKV / KV weights, cast matmul weights to bf16 (done ONCE, never inside
    the forward pass)."""
    def cvt(a):
        return a.astype(compute_dtype)

    inner = params["proj_in_w"].shape[1]
    dh = inner // n_heads
    scale = dh ** (-0.5)

    def prep_attn(p):
        out = {
            "w_q": cvt(p["wq"] * scale),
            "w_kv": cvt(jnp.concatenate([p["wk"], p["wv"]], axis=1)),
            "w_o": cvt(p["wo"]),
            "b_o": p["bo"].reshape(1, -1).astype(jnp.float32),
        }
        if p["wk"].shape[0] == p["wq"].shape[0]:   # self-attention fused form
            out["w_qkv"] = cvt(jnp.concatenate(
                [p["wq"] * scale, p["wk"], p["wv"]], axis=1))
        return out

    blocks = []
    for blk in params["blocks"]:
        blocks.append({
            "ln1": (blk["ln1_g"].reshape(1, -1), blk["ln1_b"].reshape(1, -1)),
            "ln2": (blk["ln2_g"].reshape(1, -1), blk["ln2_b"].reshape(1, -1)),
            "ln3": (blk["ln3_g"].reshape(1, -1), blk["ln3_b"].reshape(1, -1)),
            "attn1": prep_attn(blk["attn1"]),
            "attn2": prep_attn(blk["attn2"]),
            "ff": {"w1": cvt(blk["ff"]["w1"]),
                   "b1": blk["ff"]["b1"].reshape(1, -1).astype(jnp.float32),
                   "w2": cvt(blk["ff"]["w2"]),
                   "b2": blk["ff"]["b2"].reshape(1, -1).astype(jnp.float32)},
        })

    return {
        "gn_gamma": params["gn_gamma"].astype(jnp.float32),
        "gn_beta": params["gn_beta"].astype(jnp.float32),
        "proj_in_w": cvt(params["proj_in_w"]),
        "proj_in_b": params["proj_in_b"].reshape(1, -1).astype(jnp.float32),
        "blocks": blocks,
        "proj_out_w": cvt(params["proj_out_w"]),
        "proj_out_b": params["proj_out_b"].reshape(1, -1).astype(jnp.float32),
    }


# ----------------------------- pure-JAX reference ----------------------------

def reference_forward(x_nchw, P, heads, num_groups=32):
    b, c, h, w = x_nchw.shape
    x_in = x_nchw
    xg = x_nchw.reshape(b, num_groups, c // num_groups, h, w)
    mean = xg.mean(axis=(2, 3, 4), keepdims=True)
    var = xg.var(axis=(2, 3, 4), keepdims=True)
    xn = ((xg - mean) / jnp.sqrt(var + 1e-6)).reshape(b, c, h, w)
    xn = xn * P["gn_gamma"][None, :, None, None] + P["gn_beta"][None, :, None, None]
    x = jnp.einsum("bchw,cd->bdhw", xn, P["proj_in_w"]) \
        + P["proj_in_b"][None, :, None, None]
    x = x.transpose(0, 2, 3, 1).reshape(b, h * w, -1)

    def ln(z, g, bb):
        m = z.mean(-1, keepdims=True)
        v = ((z - m) ** 2).mean(-1, keepdims=True)
        return (z - m) / jnp.sqrt(v + 1e-5) * g + bb

    def attn(z, p):
        q, k, v = z @ p["wq"], z @ p["wk"], z @ p["wv"]
        d = q.shape[-1] // heads

        def split(t):
            return t.reshape(b, -1, heads, d).transpose(0, 2, 1, 3)
        q, k, v = split(q), split(k), split(v)
        s = jnp.einsum("bhid,bhjd->bhij", q, k) * (d ** -0.5)
        a = jax.nn.softmax(s, axis=-1)
        o = jnp.einsum("bhij,bhjd->bhid", a, v).transpose(0, 2, 1, 3)
        o = o.reshape(b, -1, heads * d)
        return o @ p["wo"] + p["bo"]

    for blk in P["blocks"]:
        x1 = attn(ln(x, blk["ln1_g"], blk["ln1_b"]), blk["attn1"]) + x
        x2 = attn(ln(x1, blk["ln2_g"], blk["ln2_b"]), blk["attn2"]) + x1
        z = ln(x2, blk["ln3_g"], blk["ln3_b"])
        proj = z @ blk["ff"]["w1"] + blk["ff"]["b1"]
        a_, gate = jnp.split(proj, 2, axis=-1)
        ff = (a_ * jax.nn.gelu(gate, approximate=False)) @ blk["ff"]["w2"] \
             + blk["ff"]["b2"]
        x = ff + x2

    y = x.reshape(b, h, w, -1)
    y = jnp.einsum("bhwd,dc->bchw", y, P["proj_out_w"]) \
        + P["proj_out_b"][None, :, None, None]
    return y + x_in


# ---------------------------------- main -------------------------------------

if __name__ == "__main__":
    # Small, GroupNorm(32)-compatible config.  d_head=64 exercises the packed
    # zero-copy flash path (2 heads * 64 = 128 lanes per head block).
    B, C, H, W = 2, 32, 8, 8          # in_channels must be divisible by 32
    N_HEADS, D_HEAD = 2, 64           # inner_dim = 128
    DEPTH = 1

    key = jax.random.PRNGKey(0)
    k_x, k_p = jax.random.split(key)
    x = jax.random.normal(k_x, (B, C, H, W), dtype=jnp.float32)
    params = init_params(k_p, C, N_HEADS, D_HEAD, depth=DEPTH)
    pp = prepare_params(params, N_HEADS)           # one-time weight prep (bf16)

    fwd = jax.jit(functools.partial(spatial_transformer_forward,
                                    n_heads=N_HEADS, num_groups=32))
    out = fwd(x, pp)
    out = jax.block_until_ready(out)

    ref = jax.block_until_ready(reference_forward(x, params, N_HEADS))
    max_err = float(jnp.max(jnp.abs(out - ref)))
    assert out.shape == x.shape and out.dtype == x.dtype
    # bf16 MXU operands + approx reciprocal => allow a few e-2 vs f32 reference.
    assert max_err < 5e-2, f"mismatch vs reference: {max_err}"
    print("KERNEL_OK")
</pallas_src>

<mosaic_0001>
module attributes {stable_mosaic.version = 11 : i64} {
  func.func @_group_norm_kernel(%arg0: i32, %arg1: i32, %arg2: memref<1x32x1x64xf32, #tpu.memory_space<vmem>>, %arg3: memref<32x1x1xf32, #tpu.memory_space<vmem>>, %arg4: memref<32x1x1xf32, #tpu.memory_space<vmem>>, %arg5: memref<1x32x1x64xf32, #tpu.memory_space<vmem>>) attributes {dimension_semantics = [#tpu.dimension_semantics<parallel>, #tpu.dimension_semantics<parallel>], iteration_bounds = array<i64: 2, 1>, scalar_prefetch = 0 : i64, scratch_operands = 0 : i64, tpu.core_type = #tpu.core_type<tc>, window_params = [{transform_indices = @transform_0, window_bounds = array<i64: 1, 32, 1, 64>}, {transform_indices = @transform_1, window_bounds = array<i64: 32, 1, 1>}, {transform_indices = @transform_2, window_bounds = array<i64: 32, 1, 1>}, {transform_indices = @transform_3, window_bounds = array<i64: 1, 32, 1, 64>}]} {
    %c0 = arith.constant 0 : index
    %c0_0 = arith.constant 0 : index
    %c0_1 = arith.constant 0 : index
    %c0_2 = arith.constant 0 : index
    %0 = vector.load %arg2[%c0, %c0_0, %c0_1, %c0_2] : memref<1x32x1x64xf32, #tpu.memory_space<vmem>>, vector<1x32x1x64xf32>
    %1 = vector.shape_cast %0 : vector<1x32x1x64xf32> to vector<32x1x64xf32>
    %cst = arith.constant dense<0.000000e+00> : vector<32x1xf32>
    %2 = vector.multi_reduction <add>, %1, %cst [2] : vector<32x1x64xf32> to vector<32x1xf32>
    %3 = vector.shape_cast %2 : vector<32x1xf32> to vector<32x1x1xf32>
    %cst_3 = arith.constant dense<0.000000e+00> : vector<32x1xf32>
    %4 = vector.multi_reduction <add>, %3, %cst_3 [1] : vector<32x1x1xf32> to vector<32x1xf32>
    %5 = vector.shape_cast %4 : vector<32x1xf32> to vector<32x1x1xf32>
    %cst_4 = arith.constant 6.400000e+01 : f32
    %6 = vector.broadcast %cst_4 : f32 to vector<32x1x1xf32>
    %7 = arith.divf %5, %6 : vector<32x1x1xf32>
    %8 = vector.broadcast %7 : vector<32x1x1xf32> to vector<32x1x64xf32>
    %9 = arith.subf %1, %8 : vector<32x1x64xf32>
    %10 = arith.mulf %9, %9 : vector<32x1x64xf32>
    %cst_5 = arith.constant dense<0.000000e+00> : vector<32x1xf32>
    %11 = vector.multi_reduction <add>, %10, %cst_5 [2] : vector<32x1x64xf32> to vector<32x1xf32>
    %12 = vector.shape_cast %11 : vector<32x1xf32> to vector<32x1x1xf32>
    %cst_6 = arith.constant dense<0.000000e+00> : vector<32x1xf32>
    %13 = vector.multi_reduction <add>, %12, %cst_6 [1] : vector<32x1x1xf32> to vector<32x1xf32>
    %14 = vector.shape_cast %13 : vector<32x1xf32> to vector<32x1x1xf32>
    %cst_7 = arith.constant 6.400000e+01 : f32
    %15 = vector.broadcast %cst_7 : f32 to vector<32x1x1xf32>
    %16 = arith.divf %14, %15 : vector<32x1x1xf32>
    %cst_8 = arith.constant 9.99999997E-7 : f32
    %17 = vector.broadcast %cst_8 : f32 to vector<32x1x1xf32>
    %18 = arith.addf %16, %17 : vector<32x1x1xf32>
    %19 = math.rsqrt %18 : vector<32x1x1xf32>
    %20 = vector.broadcast %19 : vector<32x1x1xf32> to vector<32x1x64xf32>
    %21 = arith.mulf %9, %20 : vector<32x1x64xf32>
    %c0_9 = arith.constant 0 : index
    %c0_10 = arith.constant 0 : index
    %c0_11 = arith.constant 0 : index
    %22 = vector.load %arg3[%c0_9, %c0_10, %c0_11] : memref<32x1x1xf32, #tpu.memory_space<vmem>>, vector<32x1x1xf32>
    %23 = vector.broadcast %22 : vector<32x1x1xf32> to vector<32x1x64xf32>
    %24 = arith.mulf %21, %23 : vector<32x1x64xf32>
    %c0_12 = arith.constant 0 : index
    %c0_13 = arith.constant 0 : index
    %c0_14 = arith.constant 0 : index
    %25 = vector.load %arg4[%c0_12, %c0_13, %c0_14] : memref<32x1x1xf32, #tpu.memory_space<vmem>>, vector<32x1x1xf32>
    %26 = vector.broadcast %25 : vector<32x1x1xf32> to vector<32x1x64xf32>
    %27 = arith.addf %24, %26 : vector<32x1x64xf32>
    %c0_15 = arith.constant 0 : index
    %c0_16 = arith.constant 0 : index
    %c0_17 = arith.constant 0 : index
    %c0_18 = arith.constant 0 : index
    %28 = vector.load %arg5[%c0_15, %c0_16, %c0_17, %c0_18] : memref<1x32x1x64xf32, #tpu.memory_space<vmem>>, vector<1x32x1x64xf32>
    %29 = vector.shape_cast %28 : vector<1x32x1x64xf32> to vector<32x1x64xf32>
    %30 = vector.shape_cast %27 : vector<32x1x64xf32> to vector<1x32x1x64xf32>
    tpu.vector_store %arg5[%c0_15, %c0_16, %c0_17, %c0_18], %30 {strides = array<i32>} : memref<1x32x1x64xf32, #tpu.memory_space<vmem>>, vector<1x32x1x64xf32>,
    return
  }
  func.func @transform_0(%arg0: i32, %arg1: i32) -> (i32, i32, i32, i32) {
    %c0_i32 = arith.constant 0 : i32
    %c0_i32_0 = arith.constant 0 : i32
    %c0_i32_1 = arith.constant 0 : i32
    return %arg0, %arg1, %c0_i32, %c0_i32_0 : i32, i32, i32, i32
  }
  func.func @transform_1(%arg0: i32, %arg1: i32) -> (i32, i32, i32) {
    %c0_i32 = arith.constant 0 : i32
    %c0_i32_0 = arith.constant 0 : i32
    %c0_i32_1 = arith.constant 0 : i32
    return %arg1, %c0_i32, %c0_i32_0 : i32, i32, i32
  }
  func.func @transform_2(%arg0: i32, %arg1: i32) -> (i32, i32, i32) {
    %c0_i32 = arith.constant 0 : i32
    %c0_i32_0 = arith.constant 0 : i32
    %c0_i32_1 = arith.constant 0 : i32
    return %arg1, %c0_i32, %c0_i32_0 : i32, i32, i32
  }
  func.func @transform_3(%arg0: i32, %arg1: i32) -> (i32, i32, i32, i32) {
    %c0_i32 = arith.constant 0 : i32
    %c0_i32_0 = arith.constant 0 : i32
    %c0_i32_1 = arith.constant 0 : i32
    return %arg0, %arg1, %c0_i32, %c0_i32_0 : i32, i32, i32, i32
  }
}

module attributes {stable_mosaic.version = 11 : i64} {
  func.func @_matmul_kernel(%arg0: i32, %arg1: i32, %arg2: i32, %arg3: memref<128x128xf32, #tpu.memory_space<vmem>>, %arg4: memref<128x384xbf16, #tpu.memory_space<vmem>>, %arg5: memref<1x128xf32, #tpu.memory_space<vmem>>, %arg6: memref<1x128xf32, #tpu.memory_space<vmem>>, %arg7: memref<128x384xbf16, #tpu.memory_space<vmem>>, %arg8: memref<128x384xf32, #tpu.memory_space<vmem>>) attributes {dimension_semantics = [#tpu.dimension_semantics<parallel>, #tpu.dimension_semantics<parallel>, #tpu.dimension_semantics<arbitrary>], iteration_bounds = array<i64: 1, 1, 1>, scalar_prefetch = 0 : i64, scratch_operands = 1 : i64, tpu.core_type = #tpu.core_type<tc>, window_params = [{transform_indices = @transform_0, window_bounds = array<i64: 128, 128>}, {transform_indices = @transform_1, window_bounds = array<i64: 128, 384>}, {pipeline_mode = #tpu.pipeline_mode<synchronous>, transform_indices = @transform_2, window_bounds = array<i64: 1, 128>}, {pipeline_mode = #tpu.pipeline_mode<synchronous>, transform_indices = @transform_3, window_bounds = array<i64: 1, 128>}, {transform_indices = @transform_4, window_bounds = array<i64: 128, 384>}]} {
    %c0_i32 = arith.constant 0 : i32
    %0 = arith.cmpi eq, %arg2, %c0_i32 : i32
    %1 = arith.extui %0 : i1 to i32
    %c0_i32_0 = arith.constant 0 : i32
    %2 = arith.cmpi ne, %1, %c0_i32_0 : i32
    scf.if %2 {
      %cst_19 = arith.constant 0.000000e+00 : f32
      %35 = vector.broadcast %cst_19 : f32 to vector<128x384xf32>
      %c0_20 = arith.constant 0 : index
      %c0_21 = arith.constant 0 : index
      %36 = vector.load %arg8[%c0_20, %c0_21] : memref<128x384xf32, #tpu.memory_space<vmem>>, vector<128x384xf32>
      tpu.vector_store %arg8[%c0_20, %c0_21], %35 {strides = array<i32>} : memref<128x384xf32, #tpu.memory_space<vmem>>, vector<128x384xf32>,
    } else {
    }
    %c0 = arith.constant 0 : index
    %c0_1 = arith.constant 0 : index
    %3 = vector.load %arg3[%c0, %c0_1] : memref<128x128xf32, #tpu.memory_space<vmem>>, vector<128x128xf32>
    %cst = arith.constant dense<0.000000e+00> : vector<128xf32>
    %4 = vector.multi_reduction <add>, %3, %cst [1] : vector<128x128xf32> to vector<128xf32>
    %5 = vector.shape_cast %4 : vector<128xf32> to vector<128x1xf32>
    %cst_2 = arith.constant 1.280000e+02 : f32
    %6 = vector.broadcast %cst_2 : f32 to vector<128x1xf32>
    %7 = arith.divf %5, %6 : vector<128x1xf32>
    %8 = vector.broadcast %7 : vector<128x1xf32> to vector<128x128xf32>
    %9 = arith.subf %3, %8 : vector<128x128xf32>
    %10 = arith.mulf %9, %9 : vector<128x128xf32>
    %cst_3 = arith.constant dense<0.000000e+00> : vector<128xf32>
    %11 = vector.multi_reduction <add>, %10, %cst_3 [1] : vector<128x128xf32> to vector<128xf32>
    %12 = vector.shape_cast %11 : vector<128xf32> to vector<128x1xf32>
    %cst_4 = arith.constant 1.280000e+02 : f32
    %13 = vector.broadcast %cst_4 : f32 to vector<128x1xf32>
    %14 = arith.divf %12, %13 : vector<128x1xf32>
    %cst_5 = arith.constant 9.99999974E-6 : f32
    %15 = vector.broadcast %cst_5 : f32 to vector<128x1xf32>
    %16 = arith.addf %14, %15 : vector<128x1xf32>
    %17 = math.rsqrt %16 : vector<128x1xf32>
    %18 = vector.broadcast %17 : vector<128x1xf32> to vector<128x128xf32>
    %19 = arith.mulf %9, %18 : vector<128x128xf32>
    %c0_6 = arith.constant 0 : index
    %c0_7 = arith.constant 0 : index
    %20 = vector.load %arg5[%c0_6, %c0_7] : memref<1x128xf32, #tpu.memory_space<vmem>>, vector<1x128xf32>
    %21 = vector.broadcast %20 : vector<1x128xf32> to vector<128x128xf32>
    %22 = arith.mulf %19, %21 : vector<128x128xf32>
    %c0_8 = arith.constant 0 : index
    %c0_9 = arith.constant 0 : index
    %23 = vector.load %arg6[%c0_8, %c0_9] : memref<1x128xf32, #tpu.memory_space<vmem>>, vector<1x128xf32>
    %24 = vector.broadcast %23 : vector<1x128xf32> to vector<128x128xf32>
    %25 = arith.addf %22, %24 : vector<128x128xf32>
    %c0_10 = arith.constant 0 : index
    %c0_11 = arith.constant 0 : index
    %26 = vector.load %arg8[%c0_10, %c0_11] : memref<128x384xf32, #tpu.memory_space<vmem>>, vector<128x384xf32>
    %27 = arith.truncf %25 : vector<128x128xf32> to vector<128x128xbf16>
    %c0_12 = arith.constant 0 : index
    %c0_13 = arith.constant 0 : index
    %28 = vector.load %arg4[%c0_12, %c0_13] : memref<128x384xbf16, #tpu.memory_space<vmem>>, vector<128x384xbf16>
    %cst_14 = arith.constant dense<0.000000e+00> : vector<128x384xf32>
    %29 = tpu.matmul %27, %28, %cst_14 {dimension_numbers = #tpu.dot_dimension_numbers<[1], [0], [0], [1], [0, 0, 1, 1], [], []>} : vector<128x128xbf16>, vector<128x384xbf16>, vector<128x384xf32> -> vector<128x384xf32>
    %30 = arith.addf %26, %29 : vector<128x384xf32>
    %c0_15 = arith.constant 0 : index
    %c0_16 = arith.constant 0 : index
    %31 = vector.load %arg8[%c0_15, %c0_16] : memref<128x384xf32, #tpu.memory_space<vmem>>, vector<128x384xf32>
    tpu.vector_store %arg8[%c0_15, %c0_16], %30 {strides = array<i32>} : memref<128x384xf32, #tpu.memory_space<vmem>>, vector<128x384xf32>,
    %c0_i32_17 = arith.constant 0 : i32
    %32 = arith.cmpi eq, %arg2, %c0_i32_17 : i32
    %33 = arith.extui %32 : i1 to i32
    %c0_i32_18 = arith.constant 0 : i32
    %34 = arith.cmpi ne, %33, %c0_i32_18 : i32
    scf.if %34 {
      %c0_19 = arith.constant 0 : index
      %c0_20 = arith.constant 0 : index
      %35 = vector.load %arg8[%c0_19, %c0_20] : memref<128x384xf32, #tpu.memory_space<vmem>>, vector<128x384xf32>
      %36 = arith.truncf %35 : vector<128x384xf32> to vector<128x384xbf16>
      %c0_21 = arith.constant 0 : index
      %c0_22 = arith.constant 0 : index
      %37 = vector.load %arg7[%c0_21, %c0_22] : memref<128x384xbf16, #tpu.memory_space<vmem>>, vector<128x384xbf16>
      tpu.vector_store %arg7[%c0_21, %c0_22], %36 {strides = array<i32>} : memref<128x384xbf16, #tpu.memory_space<vmem>>, vector<128x384xbf16>,
    } else {
    }
    return
  }
  func.func @transform_0(%arg0: i32, %arg1: i32, %arg2: i32) -> (i32, i32) {
    %c0_i32 = arith.constant 0 : i32
    return %arg0, %arg2 : i32, i32
  }
  func.func @transform_1(%arg0: i32, %arg1: i32, %arg2: i32) -> (i32, i32) {
    %c0_i32 = arith.constant 0 : i32
    return %arg2, %arg1 : i32, i32
  }
  func.func @transform_2(%arg0: i32, %arg1: i32, %arg2: i32) -> (i32, i32) {
    %c0_i32 = arith.constant 0 : i32
    %c0_i32_0 = arith.constant 0 : i32
    %c0_i32_1 = arith.constant 0 : i32
    return %c0_i32, %c0_i32_0 : i32, i32
  }
  func.func @transform_3(%arg0: i32, %arg1: i32, %arg2: i32) -> (i32, i32) {
    %c0_i32 = arith.constant 0 : i32
    %c0_i32_0 = arith.constant 0 : i32
    %c0_i32_1 = arith.constant 0 : i32
    return %c0_i32, %c0_i32_0 : i32, i32
  }
  func.func @transform_4(%arg0: i32, %arg1: i32, %arg2: i32) -> (i32, i32) {
    %c0_i32 = arith.constant 0 : i32
    return %arg0, %arg1 : i32, i32
  }
}

module attributes {stable_mosaic.version = 11 : i64} {
  func.func @_matmul_kernel(%arg0: i32, %arg1: i32, %arg2: i32, %arg3: memref<128x32xf32, #tpu.memory_space<vmem>>, %arg4: memref<32x128xbf16, #tpu.memory_space<vmem>>, %arg5: memref<1x128xf32, #tpu.memory_space<vmem>>, %arg6: memref<128x128xf32, #tpu.memory_space<vmem>>, %arg7: memref<128x128xf32, #tpu.memory_space<vmem>>) attributes {dimension_semantics = [#tpu.dimension_semantics<parallel>, #tpu.dimension_semantics<parallel>, #tpu.dimension_semantics<arbitrary>], iteration_bounds = array<i64: 1, 1, 1>, scalar_prefetch = 0 : i64, scratch_operands = 1 : i64, tpu.core_type = #tpu.core_type<tc>, window_params = [{transform_indices = @transform_0, window_bounds = array<i64: 128, 32>}, {transform_indices = @transform_1, window_bounds = array<i64: 32, 128>}, {transform_indices = @transform_2, window_bounds = array<i64: 1, 128>}, {transform_indices = @transform_3, window_bounds = array<i64: 128, 128>}]} {
    %c0_i32 = arith.constant 0 : i32
    %0 = arith.cmpi eq, %arg2, %c0_i32 : i32
    %1 = arith.extui %0 : i1 to i32
    %c0_i32_0 = arith.constant 0 : i32
    %2 = arith.cmpi ne, %1, %c0_i32_0 : i32
    scf.if %2 {
      %cst_10 = arith.constant 0.000000e+00 : f32
      %13 = vector.broadcast %cst_10 : f32 to vector<128x128xf32>
      %c0_11 = arith.constant 0 : index
      %c0_12 = arith.constant 0 : index
      %14 = vector.load %arg7[%c0_11, %c0_12] : memref<128x128xf32, #tpu.memory_space<vmem>>, vector<128x128xf32>
      tpu.vector_store %arg7[%c0_11, %c0_12], %13 {strides = array<i32>} : memref<128x128xf32, #tpu.memory_space<vmem>>, vector<128x128xf32>,
    } else {
    }
    %c0 = arith.constant 0 : index
    %c0_1 = arith.constant 0 : index
    %3 = vector.load %arg3[%c0, %c0_1] : memref<128x32xf32, #tpu.memory_space<vmem>>, vector<128x32xf32>
    %c0_2 = arith.constant 0 : index
    %c0_3 = arith.constant 0 : index
    %4 = vector.load %arg7[%c0_2, %c0_3] : memref<128x128xf32, #tpu.memory_space<vmem>>, vector<128x128xf32>
    %5 = arith.truncf %3 : vector<128x32xf32> to vector<128x32xbf16>
    %c0_4 = arith.constant 0 : index
    %c0_5 = arith.constant 0 : index
    %6 = vector.load %arg4[%c0_4, %c0_5] : memref<32x128xbf16, #tpu.memory_space<vmem>>, vector<32x128xbf16>
    %cst = arith.constant dense<0.000000e+00> : vector<128x128xf32>
    %7 = tpu.matmul %5, %6, %cst {dimension_numbers = #tpu.dot_dimension_numbers<[1], [0], [0], [1], [0, 0, 1, 1], [], []>} : vector<128x32xbf16>, vector<32x128xbf16>, vector<128x128xf32> -> vector<128x128xf32>
    %8 = arith.addf %4, %7 : vector<128x128xf32>
    %c0_6 = arith.constant 0 : index
    %c0_7 = arith.constant 0 : index
    %9 = vector.load %arg7[%c0_6, %c0_7] : memref<128x128xf32, #tpu.memory_space<vmem>>, vector<128x128xf32>
    tpu.vector_store %arg7[%c0_6, %c0_7], %8 {strides = array<i32>} : memref<128x128xf32, #tpu.memory_space<vmem>>, vector<128x128xf32>,
    %c0_i32_8 = arith.constant 0 : i32
    %10 = arith.cmpi eq, %arg2, %c0_i32_8 : i32
    %11 = arith.extui %10 : i1 to i32
    %c0_i32_9 = arith.constant 0 : i32
    %12 = arith.cmpi ne, %11, %c0_i32_9 : i32
    scf.if %12 {
      %c0_10 = arith.constant 0 : index
      %c0_11 = arith.constant 0 : index
      %13 = vector.load %arg7[%c0_10, %c0_11] : memref<128x128xf32, #tpu.memory_space<vmem>>, vector<128x128xf32>
      %c0_12 = arith.constant 0 : index
      %c0_13 = arith.constant 0 : index
      %14 = vector.load %arg5[%c0_12, %c0_13] : memref<1x128xf32, #tpu.memory_space<vmem>>, vector<1x128xf32>
      %15 = vector.broadcast %14 : vector<1x128xf32> to vector<128x128xf32>
      %16 = arith.addf %13, %15 : vector<128x128xf32>
      %c0_14 = arith.constant 0 : index
      %c0_15 = arith.constant 0 : index
      %17 = vector.load %arg6[%c0_14, %c0_15] : memref<128x128xf32, #tpu.memory_space<vmem>>, vector<128x128xf32>
      tpu.vector_store %arg6[%c0_14, %c0_15], %16 {strides = array<i32>} : memref<128x128xf32, #tpu.memory_space<vmem>>, vector<128x128xf32>,
    } else {
    }
    return
  }
  func.func @transform_0(%arg0: i32, %arg1: i32, %arg2: i32) -> (i32, i32) {
    %c0_i32 = arith.constant 0 : i32
    return %arg0, %arg2 : i32, i32
  }
  func.func @transform_1(%arg0: i32, %arg1: i32, %arg2: i32) -> (i32, i32) {
    %c0_i32 = arith.constant 0 : i32
    return %arg2, %arg1 : i32, i32
  }
  func.func @transform_2(%arg0: i32, %arg1: i32, %arg2: i32) -> (i32, i32) {
    %c0_i32 = arith.constant 0 : i32
    %c0_i32_0 = arith.constant 0 : i32
    return %c0_i32, %arg1 : i32, i32
  }
  func.func @transform_3(%arg0: i32, %arg1: i32, %arg2: i32) -> (i32, i32) {
    %c0_i32 = arith.constant 0 : i32
    return %arg0, %arg1 : i32, i32
  }
}

module attributes {stable_mosaic.version = 11 : i64} {
  func.func @_flash_attn_kernel(%arg0: i32, %arg1: i32, %arg2: i32, %arg3: i32, %arg4: memref<1x64x128xbf16, #tpu.memory_space<vmem>>, %arg5: memref<1x64x128xbf16, #tpu.memory_space<vmem>>, %arg6: memref<1x64x128xbf16, #tpu.memory_space<vmem>>, %arg7: memref<1x64x128xbf16, #tpu.memory_space<vmem>>, %arg8: memref<64x128xf32, #tpu.memory_space<vmem>>, %arg9: memref<64x128xf32, #tpu.memory_space<vmem>>, %arg10: memref<64x128xf32, #tpu.memory_space<vmem>>) attributes {dimension_semantics = [#tpu.dimension_semantics<parallel>, #tpu.dimension_semantics<parallel>, #tpu.dimension_semantics<parallel>, #tpu.dimension_semantics<arbitrary>], iteration_bounds = array<i64: 2, 1, 1, 1>, scalar_prefetch = 0 : i64, scratch_operands = 3 : i64, tpu.core_type = #tpu.core_type<tc>, window_params = [{transform_indices = @transform_0, window_bounds = array<i64: 1, 64, 128>}, {transform_indices = @transform_1, window_bounds = array<i64: 1, 64, 128>}, {transform_indices = @transform_2, window_bounds = array<i64: 1, 64, 128>}, {transform_indices = @transform_3, window_bounds = array<i64: 1, 64, 128>}]} {
    %c0_i32 = arith.constant 0 : i32
    %0 = arith.cmpi eq, %arg3, %c0_i32 : i32
    %1 = arith.extui %0 : i1 to i32
    %c0_i32_0 = arith.constant 0 : i32
    %2 = arith.cmpi ne, %1, %c0_i32_0 : i32
    scf.if %2 {
      %cst_41 = arith.constant 0xFF800000 : f32
      %74 = vector.broadcast %cst_41 : f32 to vector<64x128xf32>
      %c0_42 = arith.constant 0 : index
      %c0_43 = arith.constant 0 : index
      %75 = vector.load %arg8[%c0_42, %c0_43] : memref<64x128xf32, #tpu.memory_space<vmem>>, vector<64x128xf32>
      tpu.vector_store %arg8[%c0_42, %c0_43], %74 {strides = array<i32>} : memref<64x128xf32, #tpu.memory_space<vmem>>, vector<64x128xf32>,
      %cst_44 = arith.constant 0.000000e+00 : f32
      %76 = vector.broadcast %cst_44 : f32 to vector<64x128xf32>
      %c0_45 = arith.constant 0 : index
      %c0_46 = arith.constant 0 : index
      %77 = vector.load %arg9[%c0_45, %c0_46] : memref<64x128xf32, #tpu.memory_space<vmem>>, vector<64x128xf32>
      tpu.vector_store %arg9[%c0_45, %c0_46], %76 {strides = array<i32>} : memref<64x128xf32, #tpu.memory_space<vmem>>, vector<64x128xf32>,
      %cst_47 = arith.constant 0.000000e+00 : f32
      %78 = vector.broadcast %cst_47 : f32 to vector<64x128xf32>
      %c0_48 = arith.constant 0 : index
      %c0_49 = arith.constant 0 : index
      %79 = vector.load %arg10[%c0_48, %c0_49] : memref<64x128xf32, #tpu.memory_space<vmem>>, vector<64x128xf32>
      tpu.vector_store %arg10[%c0_48, %c0_49], %78 {strides = array<i32>} : memref<64x128xf32, #tpu.memory_space<vmem>>, vector<64x128xf32>,
    } else {
    }
    %c0 = arith.constant 0 : index
    %c0_1 = arith.constant 0 : index
    %c0_2 = arith.constant 0 : index
    %3 = vector.load %arg4[%c0, %c0_1, %c0_2] : memref<1x64x128xbf16, #tpu.memory_space<vmem>>, vector<1x64x128xbf16>
    %4 = vector.shape_cast %3 : vector<1x64x128xbf16> to vector<64x128xbf16>
    %c0_3 = arith.constant 0 : index
    %c0_4 = arith.constant 0 : index
    %c0_5 = arith.constant 0 : index
    %5 = vector.load %arg5[%c0_3, %c0_4, %c0_5] : memref<1x64x128xbf16, #tpu.memory_space<vmem>>, vector<1x64x128xbf16>
    %6 = vector.shape_cast %5 : vector<1x64x128xbf16> to vector<64x128xbf16>
    %c0_6 = arith.constant 0 : index
    %c0_7 = arith.constant 0 : index
    %c0_8 = arith.constant 0 : index
    %7 = vector.load %arg6[%c0_6, %c0_7, %c0_8] : memref<1x64x128xbf16, #tpu.memory_space<vmem>>, vector<1x64x128xbf16>
    %8 = vector.shape_cast %7 : vector<1x64x128xbf16> to vector<64x128xbf16>
    %9 = vector.extract_strided_slice %4 {offsets = [0, 0], sizes = [64, 64], strides = [1, 1]} : vector<64x128xbf16> to vector<64x64xbf16>
    %10 = vector.extract_strided_slice %6 {offsets = [0, 0], sizes = [64, 64], strides = [1, 1]} : vector<64x128xbf16> to vector<64x64xbf16>
    %cst = arith.constant dense<0.000000e+00> : vector<64x64xf32>
    %11 = tpu.matmul %9, %10, %cst {dimension_numbers = #tpu.dot_dimension_numbers<[1], [1], [0], [0], [0, 0, 1, 0], [], []>} : vector<64x64xbf16>, vector<64x64xbf16>, vector<64x64xf32> -> vector<64x64xf32>
    %c0_9 = arith.constant 0 : index
    %c0_10 = arith.constant 0 : index
    %12 = vector.load %arg8[%c0_9, %c0_10] : memref<64x128xf32, #tpu.memory_space<vmem>>, vector<64x1xf32>
    %c0_11 = arith.constant 0 : index
    %c0_12 = arith.constant 0 : index
    %13 = vector.load %arg9[%c0_11, %c0_12] : memref<64x128xf32, #tpu.memory_space<vmem>>, vector<64x1xf32>
    %cst_13 = arith.constant dense<0xFF800000> : vector<64xf32>
    %14 = vector.multi_reduction <maximumf>, %11, %cst_13 [1] : vector<64x64xf32> to vector<64xf32>
    %15 = vector.shape_cast %14 : vector<64xf32> to vector<64x1xf32>
    %16 = arith.maximumf %12, %15 : vector<64x1xf32>
    %17 = arith.subf %12, %16 : vector<64x1xf32>
    %18 = math.exp %17 : vector<64x1xf32>
    %19 = vector.broadcast %16 : vector<64x1xf32> to vector<64x64xf32>
    %20 = arith.subf %11, %19 : vector<64x64xf32>
    %21 = math.exp %20 : vector<64x64xf32>
    %22 = arith.mulf %18, %13 : vector<64x1xf32>
    %cst_14 = arith.constant dense<0.000000e+00> : vector<64xf32>
    %23 = vector.multi_reduction <add>, %21, %cst_14 [1] : vector<64x64xf32> to vector<64xf32>
    %24 = vector.shape_cast %23 : vector<64xf32> to vector<64x1xf32>
    %25 = arith.addf %22, %24 : vector<64x1xf32>
    %c0_15 = arith.constant 0 : index
    %c0_16 = arith.constant 0 : index
    %26 = vector.load %arg10[%c0_15, %c0_16] : memref<64x128xf32, #tpu.memory_space<vmem>>, vector<64x64xf32>
    %27 = vector.broadcast %18 : vector<64x1xf32> to vector<64x64xf32>
    %28 = arith.mulf %27, %26 : vector<64x64xf32>
    %29 = arith.truncf %21 : vector<64x64xf32> to vector<64x64xbf16>
    %30 = vector.extract_strided_slice %8 {offsets = [0, 0], sizes = [64, 64], strides = [1, 1]} : vector<64x128xbf16> to vector<64x64xbf16>
    %cst_17 = arith.constant dense<0.000000e+00> : vector<64x64xf32>
    %31 = tpu.matmul %29, %30, %cst_17 {dimension_numbers = #tpu.dot_dimension_numbers<[1], [0], [0], [1], [0, 0, 1, 1], [], []>} : vector<64x64xbf16>, vector<64x64xbf16>, vector<64x64xf32> -> vector<64x64xf32>
    %32 = arith.addf %28, %31 : vector<64x64xf32>
    %c0_18 = arith.constant 0 : index
    %c0_19 = arith.constant 0 : index
    %33 = vector.load %arg10[%c0_18, %c0_19] : memref<64x128xf32, #tpu.memory_space<vmem>>, vector<64x64xf32>
    tpu.vector_store %arg10[%c0_18, %c0_19], %32 {strides = array<i32>} : memref<64x128xf32, #tpu.memory_space<vmem>>, vector<64x64xf32>,
    %34 = vector.shape_cast %16 : vector<64x1xf32> to vector<64x1xf32>
    %35 = vector.broadcast %34 : vector<64x1xf32> to vector<64x64xf32>
    %c0_20 = arith.constant 0 : index
    %c0_21 = arith.constant 0 : index
    %36 = vector.load %arg8[%c0_20, %c0_21] : memref<64x128xf32, #tpu.memory_space<vmem>>, vector<64x64xf32>
    tpu.vector_store %arg8[%c0_20, %c0_21], %35 {strides = array<i32>} : memref<64x128xf32, #tpu.memory_space<vmem>>, vector<64x64xf32>,
    %37 = vector.shape_cast %25 : vector<64x1xf32> to vector<64x1xf32>
    %38 = vector.broadcast %37 : vector<64x1xf32> to vector<64x64xf32>
    %c0_22 = arith.constant 0 : index
    %c0_23 = arith.constant 0 : index
    %39 = vector.load %arg9[%c0_22, %c0_23] : memref<64x128xf32, #tpu.memory_space<vmem>>, vector<64x64xf32>
    tpu.vector_store %arg9[%c0_22, %c0_23], %38 {strides = array<i32>} : memref<64x128xf32, #tpu.memory_space<vmem>>, vector<64x64xf32>,
    %40 = vector.extract_strided_slice %4 {offsets = [0, 64], sizes = [64, 64], strides = [1, 1]} : vector<64x128xbf16> to vector<64x64xbf16>
    %41 = vector.extract_strided_slice %6 {offsets = [0, 64], sizes = [64, 64], strides = [1, 1]} : vector<64x128xbf16> to vector<64x64xbf16>
    %cst_24 = arith.constant dense<0.000000e+00> : vector<64x64xf32>
    %42 = tpu.matmul %40, %41, %cst_24 {dimension_numbers = #tpu.dot_dimension_numbers<[1], [1], [0], [0], [0, 0, 1, 0], [], []>} : vector<64x64xbf16>, vector<64x64xbf16>, vector<64x64xf32> -> vector<64x64xf32>
    %c0_25 = arith.constant 0 : index
    %c64 = arith.constant 64 : index
    %43 = vector.load %arg8[%c0_25, %c64] : memref<64x128xf32, #tpu.memory_space<vmem>>, vector<64x1xf32>
    %c0_26 = arith.constant 0 : index
    %c64_27 = arith.constant 64 : index
    %44 = vector.load %arg9[%c0_26, %c64_27] : memref<64x128xf32, #tpu.memory_space<vmem>>, vector<64x1xf32>
    %cst_28 = arith.constant dense<0xFF800000> : vector<64xf32>
    %45 = vector.multi_reduction <maximumf>, %42, %cst_28 [1] : vector<64x64xf32> to vector<64xf32>
    %46 = vector.shape_cast %45 : vector<64xf32> to vector<64x1xf32>
    %47 = arith.maximumf %43, %46 : vector<64x1xf32>
    %48 = arith.subf %43, %47 : vector<64x1xf32>
    %49 = math.exp %48 : vector<64x1xf32>
    %50 = vector.broadcast %47 : vector<64x1xf32> to vector<64x64xf32>
    %51 = arith.subf %42, %50 : vector<64x64xf32>
    %52 = math.exp %51 : vector<64x64xf32>
    %53 = arith.mulf %49, %44 : vector<64x1xf32>
    %cst_29 = arith.constant dense<0.000000e+00> : vector<64xf32>
    %54 = vector.multi_reduction <add>, %52, %cst_29 [1] : vector<64x64xf32> to vector<64xf32>
    %55 = vector.shape_cast %54 : vector<64xf32> to vector<64x1xf32>
    %56 = arith.addf %53, %55 : vector<64x1xf32>
    %c0_30 = arith.constant 0 : index
    %c64_31 = arith.constant 64 : index
    %57 = vector.load %arg10[%c0_30, %c64_31] : memref<64x128xf32, #tpu.memory_space<vmem>>, vector<64x64xf32>
    %58 = vector.broadcast %49 : vector<64x1xf32> to vector<64x64xf32>
    %59 = arith.mulf %58, %57 : vector<64x64xf32>
    %60 = arith.truncf %52 : vector<64x64xf32> to vector<64x64xbf16>
    %61 = vector.extract_strided_slice %8 {offsets = [0, 64], sizes = [64, 64], strides = [1, 1]} : vector<64x128xbf16> to vector<64x64xbf16>
    %cst_32 = arith.constant dense<0.000000e+00> : vector<64x64xf32>
    %62 = tpu.matmul %60, %61, %cst_32 {dimension_numbers = #tpu.dot_dimension_numbers<[1], [0], [0], [1], [0, 0, 1, 1], [], []>} : vector<64x64xbf16>, vector<64x64xbf16>, vector<64x64xf32> -> vector<64x64xf32>
    %63 = arith.addf %59, %62 : vector<64x64xf32>
    %c0_33 = arith.constant 0 : index
    %c64_34 = arith.constant 64 : index
    %64 = vector.load %arg10[%c0_33, %c64_34] : memref<64x128xf32, #tpu.memory_space<vmem>>, vector<64x64xf32>
    tpu.vector_store %arg10[%c0_33, %c64_34], %63 {strides = array<i32>} : memref<64x128xf32, #tpu.memory_space<vmem>>, vector<64x64xf32>,
    %65 = vector.shape_cast %47 : vector<64x1xf32> to vector<64x1xf32>
    %66 = vector.broadcast %65 : vector<64x1xf32> to vector<64x64xf32>
    %c0_35 = arith.constant 0 : index
    %c64_36 = arith.constant 64 : index
    %67 = vector.load %arg8[%c0_35, %c64_36] : memref<64x128xf32, #tpu.memory_space<vmem>>, vector<64x64xf32>
    tpu.vector_store %arg8[%c0_35, %c64_36], %66 {strides = array<i32>} : memref<64x128xf32, #tpu.memory_space<vmem>>, vector<64x64xf32>,
    %68 = vector.shape_cast %56 : vector<64x1xf32> to vector<64x1xf32>
    %69 = vector.broadcast %68 : vector<64x1xf32> to vector<64x64xf32>
    %c0_37 = arith.constant 0 : index
    %c64_38 = arith.constant 64 : index
    %70 = vector.load %arg9[%c0_37, %c64_38] : memref<64x128xf32, #tpu.memory_space<vmem>>, vector<64x64xf32>
    tpu.vector_store %arg9[%c0_37, %c64_38], %69 {strides = array<i32>} : memref<64x128xf32, #tpu.memory_space<vmem>>, vector<64x64xf32>,
    %c0_i32_39 = arith.constant 0 : i32
    %71 = arith.cmpi eq, %arg3, %c0_i32_39 : i32
    %72 = arith.extui %71 : i1 to i32
    %c0_i32_40 = arith.constant 0 : i32
    %73 = arith.cmpi ne, %72, %c0_i32_40 : i32
    scf.if %73 {
      %c0_41 = arith.constant 0 : index
      %c0_42 = arith.constant 0 : index
      %74 = vector.load %arg10[%c0_41, %c0_42] : memref<64x128xf32, #tpu.memory_space<vmem>>, vector<64x128xf32>
      %c0_43 = arith.constant 0 : index
      %c0_44 = arith.constant 0 : index
      %75 = vector.load %arg9[%c0_43, %c0_44] : memref<64x128xf32, #tpu.memory_space<vmem>>, vector<64x128xf32>
      %76 = tpu.reciprocal %75 {approx = true} : vector<64x128xf32> -> vector<64x128xf32>
      %77 = arith.mulf %74, %76 : vector<64x128xf32>
      %78 = arith.truncf %77 : vector<64x128xf32> to vector<64x128xbf16>
      %c0_45 = arith.constant 0 : index
      %c0_46 = arith.constant 0 : index
      %c0_47 = arith.constant 0 : index
      %79 = vector.load %arg7[%c0_45, %c0_46, %c0_47] : memref<1x64x128xbf16, #tpu.memory_space<vmem>>, vector<1x64x128xbf16>
      %80 = vector.shape_cast %79 : vector<1x64x128xbf16> to vector<64x128xbf16>
      %81 = vector.shape_cast %78 : vector<64x128xbf16> to vector<1x64x128xbf16>
      tpu.vector_store %arg7[%c0_45, %c0_46, %c0_47], %81 {strides = array<i32>} : memref<1x64x128xbf16, #tpu.memory_space<vmem>>, vector<1x64x128xbf16>,
    } else {
    }
    return
  }
  func.func @transform_0(%arg0: i32, %arg1: i32, %arg2: i32, %arg3: i32) -> (i32, i32, i32) {
    %c0_i32 = arith.constant 0 : i32
    %0 = arith.addi %arg1, %c0_i32 : i32
    %c0_i32_0 = arith.constant 0 : i32
    return %arg0, %arg2, %0 : i32, i32, i32
  }
  func.func @transform_1(%arg0: i32, %arg1: i32, %arg2: i32, %arg3: i32) -> (i32, i32, i32) {
    %c1_i32 = arith.constant 1 : i32
    %0 = arith.addi %arg1, %c1_i32 : i32
    %c0_i32 = arith.constant 0 : i32
    return %arg0, %arg3, %0 : i32, i32, i32
  }
  func.func @transform_2(%arg0: i32, %arg1: i32, %arg2: i32, %arg3: i32) -> (i32, i32, i32) {
    %c2_i32 = arith.constant 2 : i32
    %0 = arith.addi %arg1, %c2_i32 : i32
    %c0_i32 = arith.constant 0 : i32
    return %arg0, %arg3, %0 : i32, i32, i32
  }
  func.func @transform_3(%arg0: i32, %arg1: i32, %arg2: i32, %arg3: i32) -> (i32, i32, i32) {
    %c0_i32 = arith.constant 0 : i32
    return %arg0, %arg2, %arg1 : i32, i32, i32
  }
}

module attributes {stable_mosaic.version = 11 : i64} {
  func.func @_matmul_kernel(%arg0: i32, %arg1: i32, %arg2: i32, %arg3: memref<128x128xbf16, #tpu.memory_space<vmem>>, %arg4: memref<128x128xbf16, #tpu.memory_space<vmem>>, %arg5: memref<1x128xf32, #tpu.memory_space<vmem>>, %arg6: memref<128x128xf32, #tpu.memory_space<vmem>>, %arg7: memref<128x128xf32, #tpu.memory_space<vmem>>, %arg8: memref<128x128xf32, #tpu.memory_space<vmem>>) attributes {dimension_semantics = [#tpu.dimension_semantics<parallel>, #tpu.dimension_semantics<parallel>, #tpu.dimension_semantics<arbitrary>], iteration_bounds = array<i64: 1, 1, 1>, scalar_prefetch = 0 : i64, scratch_operands = 1 : i64, tpu.core_type = #tpu.core_type<tc>, window_params = [{transform_indices = @transform_0, window_bounds = array<i64: 128, 128>}, {transform_indices = @transform_1, window_bounds = array<i64: 128, 128>}, {transform_indices = @transform_2, window_bounds = array<i64: 1, 128>}, {transform_indices = @transform_3, window_bounds = array<i64: 128, 128>}, {transform_indices = @transform_4, window_bounds = array<i64: 128, 128>}]} {
    %c0_i32 = arith.constant 0 : i32
    %0 = arith.cmpi eq, %arg2, %c0_i32 : i32
    %1 = arith.extui %0 : i1 to i32
    %c0_i32_0 = arith.constant 0 : i32
    %2 = arith.cmpi ne, %1, %c0_i32_0 : i32
    scf.if %2 {
      %cst_10 = arith.constant 0.000000e+00 : f32
      %12 = vector.broadcast %cst_10 : f32 to vector<128x128xf32>
      %c0_11 = arith.constant 0 : index
      %c0_12 = arith.constant 0 : index
      %13 = vector.load %arg8[%c0_11, %c0_12] : memref<128x128xf32, #tpu.memory_space<vmem>>, vector<128x128xf32>
      tpu.vector_store %arg8[%c0_11, %c0_12], %12 {strides = array<i32>} : memref<128x128xf32, #tpu.memory_space<vmem>>, vector<128x128xf32>,
    } else {
    }
    %c0 = arith.constant 0 : index
    %c0_1 = arith.constant 0 : index
    %3 = vector.load %arg3[%c0, %c0_1] : memref<128x128xbf16, #tpu.memory_space<vmem>>, vector<128x128xbf16>
    %c0_2 = arith.constant 0 : index
    %c0_3 = arith.constant 0 : index
    %4 = vector.load %arg8[%c0_2, %c0_3] : memref<128x128xf32, #tpu.memory_space<vmem>>, vector<128x128xf32>
    %c0_4 = arith.constant 0 : index
    %c0_5 = arith.constant 0 : index
    %5 = vector.load %arg4[%c0_4, %c0_5] : memref<128x128xbf16, #tpu.memory_space<vmem>>, vector<128x128xbf16>
    %cst = arith.constant dense<0.000000e+00> : vector<128x128xf32>
    %6 = tpu.matmul %3, %5, %cst {dimension_numbers = #tpu.dot_dimension_numbers<[1], [0], [0], [1], [0, 0, 1, 1], [], []>} : vector<128x128xbf16>, vector<128x128xbf16>, vector<128x128xf32> -> vector<128x128xf32>
    %7 = arith.addf %4, %6 : vector<128x128xf32>
    %c0_6 = arith.constant 0 : index
    %c0_7 = arith.constant 0 : index
    %8 = vector.load %arg8[%c0_6, %c0_7] : memref<128x128xf32, #tpu.memory_space<vmem>>, vector<128x128xf32>
    tpu.vector_store %arg8[%c0_6, %c0_7], %7 {strides = array<i32>} : memref<128x128xf32, #tpu.memory_space<vmem>>, vector<128x128xf32>,
    %c0_i32_8 = arith.constant 0 : i32
    %9 = arith.cmpi eq, %arg2, %c0_i32_8 : i32
    %10 = arith.extui %9 : i1 to i32
    %c0_i32_9 = arith.constant 0 : i32
    %11 = arith.cmpi ne, %10, %c0_i32_9 : i32
    scf.if %11 {
      %c0_10 = arith.constant 0 : index
      %c0_11 = arith.constant 0 : index
      %12 = vector.load %arg8[%c0_10, %c0_11] : memref<128x128xf32, #tpu.memory_space<vmem>>, vector<128x128xf32>
      %c0_12 = arith.constant 0 : index
      %c0_13 = arith.constant 0 : index
      %13 = vector.load %arg5[%c0_12, %c0_13] : memref<1x128xf32, #tpu.memory_space<vmem>>, vector<1x128xf32>
      %14 = vector.broadcast %13 : vector<1x128xf32> to vector<128x128xf32>
      %15 = arith.addf %12, %14 : vector<128x128xf32>
      %c0_14 = arith.constant 0 : index
      %c0_15 = arith.constant 0 : index
      %16 = vector.load %arg6[%c0_14, %c0_15] : memref<128x128xf32, #tpu.memory_space<vmem>>, vector<128x128xf32>
      %17 = arith.addf %15, %16 : vector<128x128xf32>
      %c0_16 = arith.constant 0 : index
      %c0_17 = arith.constant 0 : index
      %18 = vector.load %arg7[%c0_16, %c0_17] : memref<128x128xf32, #tpu.memory_space<vmem>>, vector<128x128xf32>
      tpu.vector_store %arg7[%c0_16, %c0_17], %17 {strides = array<i32>} : memref<128x128xf32, #tpu.memory_space<vmem>>, vector<128x128xf32>,
    } else {
    }
    return
  }
  func.func @transform_0(%arg0: i32, %arg1: i32, %arg2: i32) -> (i32, i32) {
    %c0_i32 = arith.constant 0 : i32
    return %arg0, %arg2 : i32, i32
  }
  func.func @transform_1(%arg0: i32, %arg1: i32, %arg2: i32) -> (i32, i32) {
    %c0_i32 = arith.constant 0 : i32
    return %arg2, %arg1 : i32, i32
  }
  func.func @transform_2(%arg0: i32, %arg1: i32, %arg2: i32) -> (i32, i32) {
    %c0_i32 = arith.constant 0 : i32
    %c0_i32_0 = arith.constant 0 : i32
    return %c0_i32, %arg1 : i32, i32
  }
  func.func @transform_3(%arg0: i32, %arg1: i32, %arg2: i32) -> (i32, i32) {
    %c0_i32 = arith.constant 0 : i32
    return %arg0, %arg1 : i32, i32
  }
  func.func @transform_4(%arg0: i32, %arg1: i32, %arg2: i32) -> (i32, i32) {
    %c0_i32 = arith.constant 0 : i32
    return %arg0, %arg1 : i32, i32
  }
}

module attributes {stable_mosaic.version = 11 : i64} {
  func.func @_matmul_kernel(%arg0: i32, %arg1: i32, %arg2: i32, %arg3: memref<128x512xbf16, #tpu.memory_space<vmem>>, %arg4: memref<512x128xbf16, #tpu.memory_space<vmem>>, %arg5: memref<1x128xf32, #tpu.memory_space<vmem>>, %arg6: memref<128x128xf32, #tpu.memory_space<vmem>>, %arg7: memref<128x128xf32, #tpu.memory_space<vmem>>, %arg8: memref<128x128xf32, #tpu.memory_space<vmem>>) attributes {dimension_semantics = [#tpu.dimension_semantics<parallel>, #tpu.dimension_semantics<parallel>, #tpu.dimension_semantics<arbitrary>], iteration_bounds = array<i64: 1, 1, 1>, scalar_prefetch = 0 : i64, scratch_operands = 1 : i64, tpu.core_type = #tpu.core_type<tc>, window_params = [{transform_indices = @transform_0, window_bounds = array<i64: 128, 512>}, {transform_indices = @transform_1, window_bounds = array<i64: 512, 128>}, {transform_indices = @transform_2, window_bounds = array<i64: 1, 128>}, {transform_indices = @transform_3, window_bounds = array<i64: 128, 128>}, {transform_indices = @transform_4, window_bounds = array<i64: 128, 128>}]} {
    %c0_i32 = arith.constant 0 : i32
    %0 = arith.cmpi eq, %arg2, %c0_i32 : i32
    %1 = arith.extui %0 : i1 to i32
    %c0_i32_0 = arith.constant 0 : i32
    %2 = arith.cmpi ne, %1, %c0_i32_0 : i32
    scf.if %2 {
      %cst_10 = arith.constant 0.000000e+00 : f32
      %12 = vector.broadcast %cst_10 : f32 to vector<128x128xf32>
      %c0_11 = arith.constant 0 : index
      %c0_12 = arith.constant 0 : index
      %13 = vector.load %arg8[%c0_11, %c0_12] : memref<128x128xf32, #tpu.memory_space<vmem>>, vector<128x128xf32>
      tpu.vector_store %arg8[%c0_11, %c0_12], %12 {strides = array<i32>} : memref<128x128xf32, #tpu.memory_space<vmem>>, vector<128x128xf32>,
    } else {
    }
    %c0 = arith.constant 0 : index
    %c0_1 = arith.constant 0 : index
    %3 = vector.load %arg3[%c0, %c0_1] : memref<128x512xbf16, #tpu.memory_space<vmem>>, vector<128x512xbf16>
    %c0_2 = arith.constant 0 : index
    %c0_3 = arith.constant 0 : index
    %4 = vector.load %arg8[%c0_2, %c0_3] : memref<128x128xf32, #tpu.memory_space<vmem>>, vector<128x128xf32>
    %c0_4 = arith.constant 0 : index
    %c0_5 = arith.constant 0 : index
    %5 = vector.load %arg4[%c0_4, %c0_5] : memref<512x128xbf16, #tpu.memory_space<vmem>>, vector<512x128xbf16>
    %cst = arith.constant dense<0.000000e+00> : vector<128x128xf32>
    %6 = tpu.matmul %3, %5, %cst {dimension_numbers = #tpu.dot_dimension_numbers<[1], [0], [0], [1], [0, 0, 1, 1], [], []>} : vector<128x512xbf16>, vector<512x128xbf16>, vector<128x128xf32> -> vector<128x128xf32>
    %7 = arith.addf %4, %6 : vector<128x128xf32>
    %c0_6 = arith.constant 0 : index
    %c0_7 = arith.constant 0 : index
    %8 = vector.load %arg8[%c0_6, %c0_7] : memref<128x128xf32, #tpu.memory_space<vmem>>, vector<128x128xf32>
    tpu.vector_store %arg8[%c0_6, %c0_7], %7 {strides = array<i32>} : memref<128x128xf32, #tpu.memory_space<vmem>>, vector<128x128xf32>,
    %c0_i32_8 = arith.constant 0 : i32
    %9 = arith.cmpi eq, %arg2, %c0_i32_8 : i32
    %10 = arith.extui %9 : i1 to i32
    %c0_i32_9 = arith.constant 0 : i32
    %11 = arith.cmpi ne, %10, %c0_i32_9 : i32
    scf.if %11 {
      %c0_10 = arith.constant 0 : index
      %c0_11 = arith.constant 0 : index
      %12 = vector.load %arg8[%c0_10, %c0_11] : memref<128x128xf32, #tpu.memory_space<vmem>>, vector<128x128xf32>
      %c0_12 = arith.constant 0 : index
      %c0_13 = arith.constant 0 : index
      %13 = vector.load %arg5[%c0_12, %c0_13] : memref<1x128xf32, #tpu.memory_space<vmem>>, vector<1x128xf32>
      %14 = vector.broadcast %13 : vector<1x128xf32> to vector<128x128xf32>
      %15 = arith.addf %12, %14 : vector<128x128xf32>
      %c0_14 = arith.constant 0 : index
      %c0_15 = arith.constant 0 : index
      %16 = vector.load %arg6[%c0_14, %c0_15] : memref<128x128xf32, #tpu.memory_space<vmem>>, vector<128x128xf32>
      %17 = arith.addf %15, %16 : vector<128x128xf32>
      %c0_16 = arith.constant 0 : index
      %c0_17 = arith.constant 0 : index
      %18 = vector.load %arg7[%c0_16, %c0_17] : memref<128x128xf32, #tpu.memory_space<vmem>>, vector<128x128xf32>
      tpu.vector_store %arg7[%c0_16, %c0_17], %17 {strides = array<i32>} : memref<128x128xf32, #tpu.memory_space<vmem>>, vector<128x128xf32>,
    } else {
    }
    return
  }
  func.func @transform_0(%arg0: i32, %arg1: i32, %arg2: i32) -> (i32, i32) {
    %c0_i32 = arith.constant 0 : i32
    return %arg0, %arg2 : i32, i32
  }
  func.func @transform_1(%arg0: i32, %arg1: i32, %arg2: i32) -> (i32, i32) {
    %c0_i32 = arith.constant 0 : i32
    return %arg2, %arg1 : i32, i32
  }
  func.func @transform_2(%arg0: i32, %arg1: i32, %arg2: i32) -> (i32, i32) {
    %c0_i32 = arith.constant 0 : i32
    %c0_i32_0 = arith.constant 0 : i32
    return %c0_i32, %arg1 : i32, i32
  }
  func.func @transform_3(%arg0: i32, %arg1: i32, %arg2: i32) -> (i32, i32) {
    %c0_i32 = arith.constant 0 : i32
    return %arg0, %arg1 : i32, i32
  }
  func.func @transform_4(%arg0: i32, %arg1: i32, %arg2: i32) -> (i32, i32) {
    %c0_i32 = arith.constant 0 : i32
    return %arg0, %arg1 : i32, i32
  }
}

module attributes {stable_mosaic.version = 11 : i64} {
  func.func @_ff_geglu_kernel(%arg0: i32, %arg1: i32, %arg2: i32, %arg3: memref<128x128xf32, #tpu.memory_space<vmem>>, %arg4: memref<128x512xbf16, #tpu.memory_space<vmem>>, %arg5: memref<128x512xbf16, #tpu.memory_space<vmem>>, %arg6: memref<1x512xf32, #tpu.memory_space<vmem>>, %arg7: memref<1x512xf32, #tpu.memory_space<vmem>>, %arg8: memref<1x128xf32, #tpu.memory_space<vmem>>, %arg9: memref<1x128xf32, #tpu.memory_space<vmem>>, %arg10: memref<128x512xbf16, #tpu.memory_space<vmem>>, %arg11: memref<128x512xf32, #tpu.memory_space<vmem>>, %arg12: memref<128x512xf32, #tpu.memory_space<vmem>>) attributes {dimension_semantics = [#tpu.dimension_semantics<parallel>, #tpu.dimension_semantics<parallel>, #tpu.dimension_semantics<arbitrary>], iteration_bounds = array<i64: 1, 1, 1>, scalar_prefetch = 0 : i64, scratch_operands = 2 : i64, tpu.core_type = #tpu.core_type<tc>, window_params = [{transform_indices = @transform_0, window_bounds = array<i64: 128, 128>}, {transform_indices = @transform_1, window_bounds = array<i64: 128, 512>}, {transform_indices = @transform_2, window_bounds = array<i64: 128, 512>}, {transform_indices = @transform_3, window_bounds = array<i64: 1, 512>}, {transform_indices = @transform_4, window_bounds = array<i64: 1, 512>}, {pipeline_mode = #tpu.pipeline_mode<synchronous>, transform_indices = @transform_5, window_bounds = array<i64: 1, 128>}, {pipeline_mode = #tpu.pipeline_mode<synchronous>, transform_indices = @transform_6, window_bounds = array<i64: 1, 128>}, {transform_indices = @transform_7, window_bounds = array<i64: 128, 512>}]} {
    %c0_i32 = arith.constant 0 : i32
    %0 = arith.cmpi eq, %arg2, %c0_i32 : i32
    %1 = arith.extui %0 : i1 to i32
    %c0_i32_0 = arith.constant 0 : i32
    %2 = arith.cmpi ne, %1, %c0_i32_0 : i32
    scf.if %2 {
      %cst_26 = arith.constant 0.000000e+00 : f32
      %40 = vector.broadcast %cst_26 : f32 to vector<128x512xf32>
      %c0_27 = arith.constant 0 : index
      %c0_28 = arith.constant 0 : index
      %41 = vector.load %arg11[%c0_27, %c0_28] : memref<128x512xf32, #tpu.memory_space<vmem>>, vector<128x512xf32>
      tpu.vector_store %arg11[%c0_27, %c0_28], %40 {strides = array<i32>} : memref<128x512xf32, #tpu.memory_space<vmem>>, vector<128x512xf32>,
      %cst_29 = arith.constant 0.000000e+00 : f32
      %42 = vector.broadcast %cst_29 : f32 to vector<128x512xf32>
      %c0_30 = arith.constant 0 : index
      %c0_31 = arith.constant 0 : index
      %43 = vector.load %arg12[%c0_30, %c0_31] : memref<128x512xf32, #tpu.memory_space<vmem>>, vector<128x512xf32>
      tpu.vector_store %arg12[%c0_30, %c0_31], %42 {strides = array<i32>} : memref<128x512xf32, #tpu.memory_space<vmem>>, vector<128x512xf32>,
    } else {
    }
    %c0 = arith.constant 0 : index
    %c0_1 = arith.constant 0 : index
    %3 = vector.load %arg3[%c0, %c0_1] : memref<128x128xf32, #tpu.memory_space<vmem>>, vector<128x128xf32>
    %cst = arith.constant dense<0.000000e+00> : vector<128xf32>
    %4 = vector.multi_reduction <add>, %3, %cst [1] : vector<128x128xf32> to vector<128xf32>
    %5 = vector.shape_cast %4 : vector<128xf32> to vector<128x1xf32>
    %cst_2 = arith.constant 1.280000e+02 : f32
    %6 = vector.broadcast %cst_2 : f32 to vector<128x1xf32>
    %7 = arith.divf %5, %6 : vector<128x1xf32>
    %8 = vector.broadcast %7 : vector<128x1xf32> to vector<128x128xf32>
    %9 = arith.subf %3, %8 : vector<128x128xf32>
    %10 = arith.mulf %9, %9 : vector<128x128xf32>
    %cst_3 = arith.constant dense<0.000000e+00> : vector<128xf32>
    %11 = vector.multi_reduction <add>, %10, %cst_3 [1] : vector<128x128xf32> to vector<128xf32>
    %12 = vector.shape_cast %11 : vector<128xf32> to vector<128x1xf32>
    %cst_4 = arith.constant 1.280000e+02 : f32
    %13 = vector.broadcast %cst_4 : f32 to vector<128x1xf32>
    %14 = arith.divf %12, %13 : vector<128x1xf32>
    %cst_5 = arith.constant 9.99999974E-6 : f32
    %15 = vector.broadcast %cst_5 : f32 to vector<128x1xf32>
    %16 = arith.addf %14, %15 : vector<128x1xf32>
    %17 = math.rsqrt %16 : vector<128x1xf32>
    %18 = vector.broadcast %17 : vector<128x1xf32> to vector<128x128xf32>
    %19 = arith.mulf %9, %18 : vector<128x128xf32>
    %c0_6 = arith.constant 0 : index
    %c0_7 = arith.constant 0 : index
    %20 = vector.load %arg8[%c0_6, %c0_7] : memref<1x128xf32, #tpu.memory_space<vmem>>, vector<1x128xf32>
    %21 = vector.broadcast %20 : vector<1x128xf32> to vector<128x128xf32>
    %22 = arith.mulf %19, %21 : vector<128x128xf32>
    %c0_8 = arith.constant 0 : index
    %c0_9 = arith.constant 0 : index
    %23 = vector.load %arg9[%c0_8, %c0_9] : memref<1x128xf32, #tpu.memory_space<vmem>>, vector<1x128xf32>
    %24 = vector.broadcast %23 : vector<1x128xf32> to vector<128x128xf32>
    %25 = arith.addf %22, %24 : vector<128x128xf32>
    %26 = arith.truncf %25 : vector<128x128xf32> to vector<128x128xbf16>
    %c0_10 = arith.constant 0 : index
    %c0_11 = arith.constant 0 : index
    %27 = vector.load %arg11[%c0_10, %c0_11] : memref<128x512xf32, #tpu.memory_space<vmem>>, vector<128x512xf32>
    %c0_12 = arith.constant 0 : index
    %c0_13 = arith.constant 0 : index
    %28 = vector.load %arg4[%c0_12, %c0_13] : memref<128x512xbf16, #tpu.memory_space<vmem>>, vector<128x512xbf16>
    %cst_14 = arith.constant dense<0.000000e+00> : vector<128x512xf32>
    %29 = tpu.matmul %26, %28, %cst_14 {dimension_numbers = #tpu.dot_dimension_numbers<[1], [0], [0], [1], [0, 0, 1, 1], [], []>} : vector<128x128xbf16>, vector<128x512xbf16>, vector<128x512xf32> -> vector<128x512xf32>
    %30 = arith.addf %27, %29 : vector<128x512xf32>
    %c0_15 = arith.constant 0 : index
    %c0_16 = arith.constant 0 : index
    %31 = vector.load %arg11[%c0_15, %c0_16] : memref<128x512xf32, #tpu.memory_space<vmem>>, vector<128x512xf32>
    tpu.vector_store %arg11[%c0_15, %c0_16], %30 {strides = array<i32>} : memref<128x512xf32, #tpu.memory_space<vmem>>, vector<128x512xf32>,
    %c0_17 = arith.constant 0 : index
    %c0_18 = arith.constant 0 : index
    %32 = vector.load %arg12[%c0_17, %c0_18] : memref<128x512xf32, #tpu.memory_space<vmem>>, vector<128x512xf32>
    %c0_19 = arith.constant 0 : index
    %c0_20 = arith.constant 0 : index
    %33 = vector.load %arg5[%c0_19, %c0_20] : memref<128x512xbf16, #tpu.memory_space<vmem>>, vector<128x512xbf16>
    %cst_21 = arith.constant dense<0.000000e+00> : vector<128x512xf32>
    %34 = tpu.matmul %26, %33, %cst_21 {dimension_numbers = #tpu.dot_dimension_numbers<[1], [0], [0], [1], [0, 0, 1, 1], [], []>} : vector<128x128xbf16>, vector<128x512xbf16>, vector<128x512xf32> -> vector<128x512xf32>
    %35 = arith.addf %32, %34 : vector<128x512xf32>
    %c0_22 = arith.constant 0 : index
    %c0_23 = arith.constant 0 : index
    %36 = vector.load %arg12[%c0_22, %c0_23] : memref<128x512xf32, #tpu.memory_space<vmem>>, vector<128x512xf32>
    tpu.vector_store %arg12[%c0_22, %c0_23], %35 {strides = array<i32>} : memref<128x512xf32, #tpu.memory_space<vmem>>, vector<128x512xf32>,
    %c0_i32_24 = arith.constant 0 : i32
    %37 = arith.cmpi eq, %arg2, %c0_i32_24 : i32
    %38 = arith.extui %37 : i1 to i32
    %c0_i32_25 = arith.constant 0 : i32
    %39 = arith.cmpi ne, %38, %c0_i32_25 : i32
    scf.if %39 {
      %c0_26 = arith.constant 0 : index
      %c0_27 = arith.constant 0 : index
      %40 = vector.load %arg11[%c0_26, %c0_27] : memref<128x512xf32, #tpu.memory_space<vmem>>, vector<128x512xf32>
      %c0_28 = arith.constant 0 : index
      %c0_29 = arith.constant 0 : index
      %41 = vector.load %arg6[%c0_28, %c0_29] : memref<1x512xf32, #tpu.memory_space<vmem>>, vector<1x512xf32>
      %42 = vector.broadcast %41 : vector<1x512xf32> to vector<128x512xf32>
      %43 = arith.addf %40, %42 : vector<128x512xf32>
      %c0_30 = arith.constant 0 : index
      %c0_31 = arith.constant 0 : index
      %44 = vector.load %arg12[%c0_30, %c0_31] : memref<128x512xf32, #tpu.memory_space<vmem>>, vector<128x512xf32>
      %c0_32 = arith.constant 0 : index
      %c0_33 = arith.constant 0 : index
      %45 = vector.load %arg7[%c0_32, %c0_33] : memref<1x512xf32, #tpu.memory_space<vmem>>, vector<1x512xf32>
      %46 = vector.broadcast %45 : vector<1x512xf32> to vector<128x512xf32>
      %47 = arith.addf %44, %46 : vector<128x512xf32>
      %cst_34 = arith.constant 5.000000e-01 : f32
      %48 = vector.broadcast %cst_34 : f32 to vector<128x512xf32>
      %49 = arith.mulf %48, %47 : vector<128x512xf32>
      %cst_35 = arith.constant 0.707106769 : f32
      %50 = vector.broadcast %cst_35 : f32 to vector<128x512xf32>
      %51 = arith.mulf %47, %50 : vector<128x512xf32>
      %52 = math.erf %51 : vector<128x512xf32>
      %cst_36 = arith.constant 1.000000e+00 : f32
      %53 = vector.broadcast %cst_36 : f32 to vector<128x512xf32>
      %54 = arith.addf %53, %52 : vector<128x512xf32>
      %55 = arith.mulf %49, %54 : vector<128x512xf32>
      %56 = arith.mulf %43, %55 : vector<128x512xf32>
      %57 = arith.truncf %56 : vector<128x512xf32> to vector<128x512xbf16>
      %c0_37 = arith.constant 0 : index
      %c0_38 = arith.constant 0 : index
      %58 = vector.load %arg10[%c0_37, %c0_38] : memref<128x512xbf16, #tpu.memory_space<vmem>>, vector<128x512xbf16>
      tpu.vector_store %arg10[%c0_37, %c0_38], %57 {strides = array<i32>} : memref<128x512xbf16, #tpu.memory_space<vmem>>, vector<128x512xbf16>,
    } else {
    }
    return
  }
  func.func @transform_0(%arg0: i32, %arg1: i32, %arg2: i32) -> (i32, i32) {
    %c0_i32 = arith.constant 0 : i32
    return %arg0, %arg2 : i32, i32
  }
  func.func @transform_1(%arg0: i32, %arg1: i32, %arg2: i32) -> (i32, i32) {
    %c0_i32 = arith.constant 0 : i32
    return %arg2, %arg1 : i32, i32
  }
  func.func @transform_2(%arg0: i32, %arg1: i32, %arg2: i32) -> (i32, i32) {
    %c1_i32 = arith.constant 1 : i32
    %0 = arith.addi %arg1, %c1_i32 : i32
    %c0_i32 = arith.constant 0 : i32
    return %arg2, %0 : i32, i32
  }
  func.func @transform_3(%arg0: i32, %arg1: i32, %arg2: i32) -> (i32, i32) {
    %c0_i32 = arith.constant 0 : i32
    %c0_i32_0 = arith.constant 0 : i32
    return %c0_i32, %arg1 : i32, i32
  }
  func.func @transform_4(%arg0: i32, %arg1: i32, %arg2: i32) -> (i32, i32) {
    %c1_i32 = arith.constant 1 : i32
    %0 = arith.addi %arg1, %c1_i32 : i32
    %c0_i32 = arith.constant 0 : i32
    %c0_i32_0 = arith.constant 0 : i32
    return %c0_i32, %0 : i32, i32
  }
  func.func @transform_5(%arg0: i32, %arg1: i32, %arg2: i32) -> (i32, i32) {
    %c0_i32 = arith.constant 0 : i32
    %c0_i32_0 = arith.constant 0 : i32
    %c0_i32_1 = arith.constant 0 : i32
    return %c0_i32, %c0_i32_0 : i32, i32
  }
  func.func @transform_6(%arg0: i32, %arg1: i32, %arg2: i32) -> (i32, i32) {
    %c0_i32 = arith.constant 0 : i32
    %c0_i32_0 = arith.constant 0 : i32
    %c0_i32_1 = arith.constant 0 : i32
    return %c0_i32, %c0_i32_0 : i32, i32
  }
  func.func @transform_7(%arg0: i32, %arg1: i32, %arg2: i32) -> (i32, i32) {
    %c0_i32 = arith.constant 0 : i32
    return %arg0, %arg1 : i32, i32
  }
}

module attributes {stable_mosaic.version = 11 : i64} {
  func.func @_matmul_kernel(%arg0: i32, %arg1: i32, %arg2: i32, %arg3: memref<128x128xf32, #tpu.memory_space<vmem>>, %arg4: memref<128x32xbf16, #tpu.memory_space<vmem>>, %arg5: memref<1x32xf32, #tpu.memory_space<vmem>>, %arg6: memref<128x32xf32, #tpu.memory_space<vmem>>, %arg7: memref<128x32xf32, #tpu.memory_space<vmem>>) attributes {dimension_semantics = [#tpu.dimension_semantics<parallel>, #tpu.dimension_semantics<parallel>, #tpu.dimension_semantics<arbitrary>], iteration_bounds = array<i64: 1, 1, 1>, scalar_prefetch = 0 : i64, scratch_operands = 1 : i64, tpu.core_type = #tpu.core_type<tc>, window_params = [{transform_indices = @transform_0, window_bounds = array<i64: 128, 128>}, {transform_indices = @transform_1, window_bounds = array<i64: 128, 32>}, {transform_indices = @transform_2, window_bounds = array<i64: 1, 32>}, {transform_indices = @transform_3, window_bounds = array<i64: 128, 32>}]} {
    %c0_i32 = arith.constant 0 : i32
    %0 = arith.cmpi eq, %arg2, %c0_i32 : i32
    %1 = arith.extui %0 : i1 to i32
    %c0_i32_0 = arith.constant 0 : i32
    %2 = arith.cmpi ne, %1, %c0_i32_0 : i32
    scf.if %2 {
      %cst_10 = arith.constant 0.000000e+00 : f32
      %13 = vector.broadcast %cst_10 : f32 to vector<128x32xf32>
      %c0_11 = arith.constant 0 : index
      %c0_12 = arith.constant 0 : index
      %14 = vector.load %arg7[%c0_11, %c0_12] : memref<128x32xf32, #tpu.memory_space<vmem>>, vector<128x32xf32>
      tpu.vector_store %arg7[%c0_11, %c0_12], %13 {strides = array<i32>} : memref<128x32xf32, #tpu.memory_space<vmem>>, vector<128x32xf32>,
    } else {
    }
    %c0 = arith.constant 0 : index
    %c0_1 = arith.constant 0 : index
    %3 = vector.load %arg3[%c0, %c0_1] : memref<128x128xf32, #tpu.memory_space<vmem>>, vector<128x128xf32>
    %c0_2 = arith.constant 0 : index
    %c0_3 = arith.constant 0 : index
    %4 = vector.load %arg7[%c0_2, %c0_3] : memref<128x32xf32, #tpu.memory_space<vmem>>, vector<128x32xf32>
    %5 = arith.truncf %3 : vector<128x128xf32> to vector<128x128xbf16>
    %c0_4 = arith.constant 0 : index
    %c0_5 = arith.constant 0 : index
    %6 = vector.load %arg4[%c0_4, %c0_5] : memref<128x32xbf16, #tpu.memory_space<vmem>>, vector<128x32xbf16>
    %cst = arith.constant dense<0.000000e+00> : vector<128x32xf32>
    %7 = tpu.matmul %5, %6, %cst {dimension_numbers = #tpu.dot_dimension_numbers<[1], [0], [0], [1], [0, 0, 1, 1], [], []>} : vector<128x128xbf16>, vector<128x32xbf16>, vector<128x32xf32> -> vector<128x32xf32>
    %8 = arith.addf %4, %7 : vector<128x32xf32>
    %c0_6 = arith.constant 0 : index
    %c0_7 = arith.constant 0 : index
    %9 = vector.load %arg7[%c0_6, %c0_7] : memref<128x32xf32, #tpu.memory_space<vmem>>, vector<128x32xf32>
    tpu.vector_store %arg7[%c0_6, %c0_7], %8 {strides = array<i32>} : memref<128x32xf32, #tpu.memory_space<vmem>>, vector<128x32xf32>,
    %c0_i32_8 = arith.constant 0 : i32
    %10 = arith.cmpi eq, %arg2, %c0_i32_8 : i32
    %11 = arith.extui %10 : i1 to i32
    %c0_i32_9 = arith.constant 0 : i32
    %12 = arith.cmpi ne, %11, %c0_i32_9 : i32
    scf.if %12 {
      %c0_10 = arith.constant 0 : index
      %c0_11 = arith.constant 0 : index
      %13 = vector.load %arg7[%c0_10, %c0_11] : memref<128x32xf32, #tpu.memory_space<vmem>>, vector<128x32xf32>
      %c0_12 = arith.constant 0 : index
      %c0_13 = arith.constant 0 : index
      %14 = vector.load %arg5[%c0_12, %c0_13] : memref<1x32xf32, #tpu.memory_space<vmem>>, vector<1x32xf32>
      %15 = vector.broadcast %14 : vector<1x32xf32> to vector<128x32xf32>
      %16 = arith.addf %13, %15 : vector<128x32xf32>
      %c0_14 = arith.constant 0 : index
      %c0_15 = arith.constant 0 : index
      %17 = vector.load %arg6[%c0_14, %c0_15] : memref<128x32xf32, #tpu.memory_space<vmem>>, vector<128x32xf32>
      tpu.vector_store %arg6[%c0_14, %c0_15], %16 {strides = array<i32>} : memref<128x32xf32, #tpu.memory_space<vmem>>, vector<128x32xf32>,
    } else {
    }
    return
  }
  func.func @transform_0(%arg0: i32, %arg1: i32, %arg2: i32) -> (i32, i32) {
    %c0_i32 = arith.constant 0 : i32
    return %arg0, %arg2 : i32, i32
  }
  func.func @transform_1(%arg0: i32, %arg1: i32, %arg2: i32) -> (i32, i32) {
    %c0_i32 = arith.constant 0 : i32
    return %arg2, %arg1 : i32, i32
  }
  func.func @transform_2(%arg0: i32, %arg1: i32, %arg2: i32) -> (i32, i32) {
    %c0_i32 = arith.constant 0 : i32
    %c0_i32_0 = arith.constant 0 : i32
    return %c0_i32, %arg1 : i32, i32
  }
  func.func @transform_3(%arg0: i32, %arg1: i32, %arg2: i32) -> (i32, i32) {
    %c0_i32 = arith.constant 0 : i32
    return %arg0, %arg1 : i32, i32
  }
}

</mosaic_0001>

<llo_original>
// kernel: spatial_transformer_forward.11
$region0: #{spatial_transformer_forward.11}
  #allocation0 [shape = 'u32[]', space=smem, size = 0x4, offset = 0x4, fixed_abs, tag = 'smem constant byte address 0x4 - core index']
  #allocation1 [shape = 'u32[144,128]{1,0:T(1,128)}', space=vmem, size = 0x12000, scoped, tag = 'internal scratch']
  %s0 = inlined_call_operand.vmem [shape: f32[2,32,1,64], index: 0, kind: input, shape index: {}]
  %s1 = inlined_call_operand.vmem [shape: f32[32,1,1], index: 1, kind: input, shape index: {}]
  %s2 = inlined_call_operand.vmem [shape: f32[32,1,1], index: 2, kind: input, shape index: {}]
  %s3 = inlined_call_operand.vmem [shape: f32[2,32,1,64], index: 3, kind: output, shape index: {}]
  %s4 = sld [smem:[#allocation0]]
  $region45: #{spatial_transformer_forward.11} parent=0
    _
  %s6 = ssub.s32 1, %s4
  %s7 = scalar_select 0, %s6, %s4
  loop: start=0, step=1, limit=4
  $region2: #{spatial_transformer_forward.11} parent=0 // loop_pre_header
    _
  $region3: #{spatial_transformer_forward.11} parent=0 // loop_header
    %s9 = sphi 0, %s13
    %p10 = scmp.ge.s32.totalorder %s9, 4
    %s16 = sphi 0, %s28
    %s17 = sphi 0, %s24
    %s18 = sphi 0, %s16
    %s19 = sphi 0, %s17
    %s20 = sphi 0, %s18
    %s21 = sphi 0, %s19
    %s33 = sphi 0, %s35
    %s36 = sphi 0, %s33
    %s37 = sphi 0, %s36
    %s53 = sphi 0, %s37
    %s59 = sphi 0, %s61
    %s62 = sphi 0, %s59
    %s63 = sphi 0, %s62
    %s79 = sphi 0, %s63
    %s85 = sphi 0, %s87
    %s88 = sphi 0, %s85
    %s89 = sphi 0, %s88
    %s105 = sphi 0, %s89
    %s113 = sphi 0, %s115
    %s116 = sphi 0, %s113
    %s117 = sphi 0, %s116
    %s133 = sphi 0, %s117
  $region4: #{spatial_transformer_forward.11} parent=0 // loop_header_branch
    %12 = sbr.rel (%p10) target = $region8
  $region5: #{spatial_transformer_forward.11} parent=0 // loop_body
    %s14 = ssub.s32 %s9, 1
    %s15 = ssub.s32 %s9, 2
    %s22 = sadd.s32 1, %s17
    %p23 = scmp.ge.s32.totalorder %s22, 1
    %s24 = scalar_select %p23, 0, %s22
    %s25 = sadd.s32 1, %s16
    %s26 = scalar_select %p23, %s25, %s16
    %p27 = scmp.ge.s32.totalorder %s26, 2
    %s28 = scalar_select %p27, 0, %s26
    %s29 = ssub.s32 %s16, %s28
    %s30 = ssub.s32 %s17, %s24
    %s31 = sor.u32 %s29, %s30
    %p32 = scmp.eq.s32.totalorder %s31, 0
    %s34 = sadd.s32 %s33, 1
    %s35 = scalar_select %p32, %s33, %s34
    %p38 = pneg %p32
    %p39 = scmp.eq.s32.totalorder %s9, 1
    %p40 = por %p38, %p39
    %p41 = scmp.ne.s32.totalorder %s33, %s36
    %p42 = scmp.eq.s32.totalorder %s9, 0
    %p43 = por %p41, %p42
    %p44 = scmp.ne.s32.totalorder %s33, %s36
    %p45 = scmp.eq.s32.totalorder %s14, 1
    %p46 = por %p44, %p45
    %p47 = scmp.ne.s32.totalorder %s36, %s37
    %p48 = scmp.eq.s32.totalorder %s14, 0
    %p49 = por %p47, %p48
    %p50 = scmp.ne.s32.totalorder %s36, %s37
    %p51 = scmp.eq.s32.totalorder %s15, 1
    %p52 = por %p50, %p51
    %p54 = scmp.ne.s32.totalorder %s37, %s53
    %p55 = scmp.eq.s32.totalorder %s15, 0
    %p56 = por %p54, %p55
    %s57 = ssub.s32 %s17, %s24
    %p58 = scmp.eq.s32.totalorder %s57, 0
    %s60 = sadd.s32 %s59, 1
    %s61 = scalar_select %p58, %s59, %s60
    %p64 = pneg %p58
    %p65 = scmp.eq.s32.totalorder %s9, 1
    %p66 = por %p64, %p65
    %p67 = scmp.ne.s32.totalorder %s59, %s62
    %p68 = scmp.eq.s32.totalorder %s9, 0
    %p69 = por %p67, %p68
    %p70 = scmp.ne.s32.totalorder %s59, %s62
    %p71 = scmp.eq.s32.totalorder %s14, 1
    %p72 = por %p70, %p71
    %p73 = scmp.ne.s32.totalorder %s62, %s63
    %p74 = scmp.eq.s32.totalorder %s14, 0
    %p75 = por %p73, %p74
    %p76 = scmp.ne.s32.totalorder %s62, %s63
    %p77 = scmp.eq.s32.totalorder %s15, 1
    %p78 = por %p76, %p77
    %p80 = scmp.ne.s32.totalorder %s63, %s79
    %p81 = scmp.eq.s32.totalorder %s15, 0
    %p82 = por %p80, %p81
    %s83 = ssub.s32 %s17, %s24
    %p84 = scmp.eq.s32.totalorder %s83, 0
    %s86 = sadd.s32 %s85, 1
    %s87 = scalar_select %p84, %s85, %s86
    %p90 = pneg %p84
    %p91 = scmp.eq.s32.totalorder %s9, 1
    %p92 = por %p90, %p91
    %p93 = scmp.ne.s32.totalorder %s85, %s88
    %p94 = scmp.eq.s32.totalorder %s9, 0
    %p95 = por %p93, %p94
    %p96 = scmp.ne.s32.totalorder %s85, %s88
    %p97 = scmp.eq.s32.totalorder %s14, 1
    %p98 = por %p96, %p97
    %p99 = scmp.ne.s32.totalorder %s88, %s89
    %p100 = scmp.eq.s32.totalorder %s14, 0
    %p101 = por %p99, %p100
    %p102 = scmp.ne.s32.totalorder %s88, %s89
    %p103 = scmp.eq.s32.totalorder %s15, 1
    %p104 = por %p102, %p103
    %p106 = scmp.ne.s32.totalorder %s89, %s105
    %p107 = scmp.eq.s32.totalorder %s15, 0
    %p108 = por %p106, %p107
    %s109 = ssub.s32 %s16, %s28
    %s110 = ssub.s32 %s17, %s24
    %s111 = sor.u32 %s109, %s110
    %p112 = scmp.eq.s32.totalorder %s111, 0
    %s114 = sadd.s32 %s113, 1
    %s115 = scalar_select %p112, %s113, %s114
    %p118 = pneg %p112
    %p119 = scmp.eq.s32.totalorder %s9, 1
    %p120 = por %p118, %p119
    %p121 = scmp.ne.s32.totalorder %s113, %s116
    %p122 = scmp.eq.s32.totalorder %s9, 0
    %p123 = por %p121, %p122
    %p124 = scmp.ne.s32.totalorder %s113, %s116
    %p125 = scmp.eq.s32.totalorder %s14, 1
    %p126 = por %p124, %p125
    %p127 = scmp.ne.s32.totalorder %s116, %s117
    %p128 = scmp.eq.s32.totalorder %s14, 0
    %p129 = por %p127, %p128
    %p130 = scmp.ne.s32.totalorder %s116, %s117
    %p131 = scmp.eq.s32.totalorder %s15, 1
    %p132 = por %p130, %p131
    %p134 = scmp.ne.s32.totalorder %s117, %s133
    %p135 = scmp.eq.s32.totalorder %s15, 0
    %p136 = por %p134, %p135
    %p137 = scmp.le.s32.totalorder 1, %s9
    %p138 = scmp.lt.s32.totalorder %s9, 3
    %p139 = pnand %p137, %p138
    %p140 = pneg %p139
    // Predicated region
    $region9: #{spatial_transformer_forward.11} parent=5 // pred_check
      _
    $region10: #{spatial_transformer_forward.11} parent=5 // pred_check_branch
      %142 = sbr.rel (%p139) target = $region12
    $region11: #{spatial_transformer_forward.11} parent=5 // pred_region
      %s143 = ssub.s32 %s9, 1
      // Predicated region
      $region13: #{spatial_transformer_forward.11} parent=11 // pred_check
        %p144 = pneg %p75
      $region14: #{spatial_transformer_forward.11} parent=11 // pred_check_branch
        %146 = sbr.rel (%p144) target = $region16
      $region15: #{spatial_transformer_forward.11} parent=11 // pred_region
        %s147 = smul.u32 32, %s19
        %p148 = scmp.lt.s32.totalorder %s147, 31
        %s149 = scalar_select %p148, %s147, 31
        %s150 = scalar_lea.vmem %s1, %s149
        %s151 = smul.u32 32, %s19
      $region16: #{spatial_transformer_forward.11} parent=11 // pred_fallthru
        _
      // Predicated region
      $region17: #{spatial_transformer_forward.11} parent=11 // pred_check
        %p152 = pneg %p101
      $region18: #{spatial_transformer_forward.11} parent=11 // pred_check_branch
        %154 = sbr.rel (%p152) target = $region20
      $region19: #{spatial_transformer_forward.11} parent=11 // pred_region
        %s155 = smul.u32 32, %s19
        %p156 = scmp.lt.s32.totalorder %s155, 31
        %s157 = scalar_select %p156, %s155, 31
        %s158 = scalar_lea.vmem %s2, %s157
        %s159 = smul.u32 32, %s19
      $region20: #{spatial_transformer_forward.11} parent=11 // pred_fallthru
        _
    $region12: #{spatial_transformer_forward.11} parent=5 // pred_fallthru
      _
    %p160 = scmp.lt.s32.totalorder %s9, 2
    // Predicated region
    $region21: #{spatial_transformer_forward.11} parent=5 // pred_check
      %p161 = pneg %p160
    $region22: #{spatial_transformer_forward.11} parent=5 // pred_check_branch
      %163 = sbr.rel (%p161) target = $region24
    $region23: #{spatial_transformer_forward.11} parent=5 // pred_region
      // Predicated region
      $region25: #{spatial_transformer_forward.11} parent=23 // pred_check
        %p164 = pneg %p43
      $region26: #{spatial_transformer_forward.11} parent=23 // pred_check_branch
        %166 = sbr.rel (%p164) target = $region28
      $region27: #{spatial_transformer_forward.11} parent=23 // pred_region
        %s167 = smul.u32 32, %s17
        %p168 = scmp.lt.s32.totalorder %s16, 1
        %s169 = scalar_select %p168, %s16, 1
        %p170 = scmp.lt.s32.totalorder %s167, 31
        %s171 = scalar_select %p170, %s167, 31
        %s172 = smul.addr %s169, 32
        %s173 = sadd.s32 %s171, %s172
        %s174 = scalar_lea.vmem %s0, %s173
        %s175 = smul.u32 32, %s17
      $region28: #{spatial_transformer_forward.11} parent=23 // pred_fallthru
        _
    $region24: #{spatial_transformer_forward.11} parent=5 // pred_fallthru
      _
    %p176 = scmp.le.s32.totalorder 1, %s9
    %p177 = scmp.lt.s32.totalorder %s9, 3
    %p178 = pnand %p176, %p177
    %p179 = pneg %p178
    // Predicated region
    $region29: #{spatial_transformer_forward.11} parent=5 // pred_check
      _
    $region30: #{spatial_transformer_forward.11} parent=5 // pred_check_branch
      %181 = sbr.rel (%p178) target = $region32
    $region31: #{spatial_transformer_forward.11} parent=5 // pred_region
      %s182 = ssub.s32 %s9, 1
      %s183 = smul.u32 32, %s19
      %p184 = scmp.lt.s32.totalorder %s18, 1
      %s185 = scalar_select %p184, %s18, 1
      %p186 = scmp.lt.s32.totalorder %s183, 31
      %s187 = scalar_select %p186, %s183, 31
      %s188 = smul.addr %s185, 32
      %s189 = sadd.s32 %s187, %s188
      %s190 = scalar_lea.vmem %s0, %s189
      %p191 = pneg %p49
      %p192 = pneg %p46
      %s193 = smul.u32 32, %s19
      %p194 = scmp.lt.s32.totalorder %s193, 31
      %s195 = scalar_select %p194, %s193, 31
      %s196 = scalar_lea.vmem %s1, %s195
      %p197 = pneg %p75
      %p198 = pneg %p72
      %s199 = smul.u32 32, %s19
      %p200 = scmp.lt.s32.totalorder %s199, 31
      %s201 = scalar_select %p200, %s199, 31
      %s202 = scalar_lea.vmem %s2, %s201
      %p203 = pneg %p101
      %p204 = pneg %p98
      %p205 = pneg %p129
      %p206 = pneg %p126
      %s207 = smul.u32 32, %s19
      %p208 = scmp.lt.s32.totalorder %s18, 1
      %s209 = scalar_select %p208, %s18, 1
      %p210 = scmp.lt.s32.totalorder %s207, 31
      %s211 = scalar_select %p210, %s207, 31
      %s212 = smul.addr %s209, 32
      %s213 = sadd.s32 %s211, %s212
      %s214 = scalar_lea.vmem %s3, %s213
      %s215 = smul.u32 32, %s19
      %p216 = scmp.lt.s32.totalorder %s18, 1
      %s217 = scalar_select %p216, %s18, 1
      %p218 = scmp.lt.s32.totalorder %s215, 31
      %s219 = scalar_select %p218, %s215, 31
      %s220 = smul.addr %s217, 32
      %s221 = sadd.s32 %s219, %s220
      %s222 = scalar_lea.vmem %s0, %s221
      %s223 = smul.u32 32, %s19
      %s224 = smul.u32 32, %s19
      %p225 = scmp.lt.s32.totalorder %s224, 31
      %s226 = scalar_select %p225, %s224, 31
      %s227 = scalar_lea.vmem %s1, %s226
      %s228 = smul.u32 32, %s19
      %s229 = smul.u32 32, %s19
      %p230 = scmp.lt.s32.totalorder %s229, 31
      %s231 = scalar_select %p230, %s229, 31
      %s232 = scalar_lea.vmem %s2, %s231
      %s233 = smul.u32 32, %s19
      %s234 = smul.u32 32, %s19
      %p235 = scmp.lt.s32.totalorder %s18, 1
      %s236 = scalar_select %p235, %s18, 1
      %p237 = scmp.lt.s32.totalorder %s234, 31
      %s238 = scalar_select %p237, %s234, 31
      %s239 = smul.addr %s236, 32
      %s240 = sadd.s32 %s238, %s239
      %s241 = scalar_lea.vmem %s3, %s240
      %s242 = smul.u32 32, %s19
      %v243 = vld [vmem:[%s222] sm:$0x1]
      %v244 = vld [vmem:[%s222 + $0x1] sm:$0x1]
      %v245 = vld [vmem:[%s222 + $0x2] sm:$0x1]
      %v246 = vld [vmem:[%s222 + $0x3] sm:$0x1]
      %v247 = vld [vmem:[%s222 + $0x4] sm:$0x1]
      %v248 = vld [vmem:[%s222 + $0x5] sm:$0x1]
      %v249 = vld [vmem:[%s222 + $0x6] sm:$0x1]
      %v250 = vld [vmem:[%s222 + $0x7] sm:$0x1]
      %v251 = vld [vmem:[%s222 + $0x8] sm:$0x1]
      %v252 = vld [vmem:[%s222 + $0x9] sm:$0x1]
      %v253 = vld [vmem:[%s222 + $0xa] sm:$0x1]
      %v254 = vld [vmem:[%s222 + $0xb] sm:$0x1]
      %v255 = vld [vmem:[%s222 + $0xc] sm:$0x1]
      %v256 = vld [vmem:[%s222 + $0xd] sm:$0x1]
      %v257 = vld [vmem:[%s222 + $0xe] sm:$0x1]
      %v258 = vld [vmem:[%s222 + $0xf] sm:$0x1]
      %v259 = vld [vmem:[%s222 + $0x10] sm:$0x1]
      %v260 = vld [vmem:[%s222 + $0x11] sm:$0x1]
      %v261 = vld [vmem:[%s222 + $0x12] sm:$0x1]
      %v262 = vld [vmem:[%s222 + $0x13] sm:$0x1]
      %v263 = vld [vmem:[%s222 + $0x14] sm:$0x1]
      %v264 = vld [vmem:[%s222 + $0x15] sm:$0x1]
      %v265 = vld [vmem:[%s222 + $0x16] sm:$0x1]
      %v266 = vld [vmem:[%s222 + $0x17] sm:$0x1]
      %v267 = vld [vmem:[%s222 + $0x18] sm:$0x1]
      %v268 = vld [vmem:[%s222 + $0x19] sm:$0x1]
      %v269 = vld [vmem:[%s222 + $0x1a] sm:$0x1]
      %v270 = vld [vmem:[%s222 + $0x1b] sm:$0x1]
      %v271 = vld [vmem:[%s222 + $0x1c] sm:$0x1]
      %v272 = vld [vmem:[%s222 + $0x1d] sm:$0x1]
      %v273 = vld [vmem:[%s222 + $0x1e] sm:$0x1]
      %v274 = vld [vmem:[%s222 + $0x1f] sm:$0x1]
      %vm275 = vcmask 516096
      %v276 = vsel %vm275, %v243, 0.0
      %277 = vadd.xlane.f32.xlu0 %v276
      %v278 = vpop.xlane.xlu0 %277
      %v279 = vsel %vm275, %v244, 0.0
      %280 = vadd.xlane.f32.xlu0 %v279
      %v281 = vpop.xlane.xlu0 %280
      %v282 = vsel %vm275, %v245, 0.0
      %283 = vadd.xlane.f32.xlu0 %v282
      %v284 = vpop.xlane.xlu0 %283
      %v285 = vsel %vm275, %v246, 0.0
      %286 = vadd.xlane.f32.xlu0 %v285
      %v287 = vpop.xlane.xlu0 %286
      %v288 = vsel %vm275, %v247, 0.0
      %289 = vadd.xlane.f32.xlu0 %v288
      %v290 = vpop.xlane.xlu0 %289
      %v291 = vsel %vm275, %v248, 0.0
      %292 = vadd.xlane.f32.xlu0 %v291
      %v293 = vpop.xlane.xlu0 %292
      %v294 = vsel %vm275, %v249, 0.0
      %295 = vadd.xlane.f32.xlu0 %v294
      %v296 = vpop.xlane.xlu0 %295
      %v297 = vsel %vm275, %v250, 0.0
      %298 = vadd.xlane.f32.xlu0 %v297
      %v299 = vpop.xlane.xlu0 %298
      %v300 = vsel %vm275, %v251, 0.0
      %301 = vadd.xlane.f32.xlu0 %v300
      %v302 = vpop.xlane.xlu0 %301
      %v303 = vsel %vm275, %v252, 0.0
      %304 = vadd.xlane.f32.xlu0 %v303
      %v305 = vpop.xlane.xlu0 %304
      %v306 = vsel %vm275, %v253, 0.0
      %307 = vadd.xlane.f32.xlu0 %v306
      %v308 = vpop.xlane.xlu0 %307
      %v309 = vsel %vm275, %v254, 0.0
      %310 = vadd.xlane.f32.xlu0 %v309
      %v311 = vpop.xlane.xlu0 %310
      %v312 = vsel %vm275, %v255, 0.0
      %313 = vadd.xlane.f32.xlu0 %v312
      %v314 = vpop.xlane.xlu0 %313
      %v315 = vsel %vm275, %v256, 0.0
      %316 = vadd.xlane.f32.xlu0 %v315
      %v317 = vpop.xlane.xlu0 %316
      %v318 = vsel %vm275, %v257, 0.0
      %319 = vadd.xlane.f32.xlu0 %v318
      %v320 = vpop.xlane.xlu0 %319
      %v321 = vsel %vm275, %v258, 0.0
      %322 = vadd.xlane.f32.xlu0 %v321
      %v323 = vpop.xlane.xlu0 %322
      %v324 = vsel %vm275, %v259, 0.0
      %325 = vadd.xlane.f32.xlu0 %v324
      %v326 = vpop.xlane.xlu0 %325
      %v327 = vsel %vm275, %v260, 0.0
      %328 = vadd.xlane.f32.xlu0 %v327
      %v329 = vpop.xlane.xlu0 %328
      %v330 = vsel %vm275, %v261, 0.0
      %331 = vadd.xlane.f32.xlu0 %v330
      %v332 = vpop.xlane.xlu0 %331
      %v333 = vsel %vm275, %v262, 0.0
      %334 = vadd.xlane.f32.xlu0 %v333
      %v335 = vpop.xlane.xlu0 %334
      %v336 = vsel %vm275, %v263, 0.0
      %337 = vadd.xlane.f32.xlu0 %v336
      %v338 = vpop.xlane.xlu0 %337
      %v339 = vsel %vm275, %v264, 0.0
      %340 = vadd.xlane.f32.xlu0 %v339
      %v341 = vpop.xlane.xlu0 %340
      %v342 = vsel %vm275, %v265, 0.0
      %343 = vadd.xlane.f32.xlu0 %v342
      %v344 = vpop.xlane.xlu0 %343
      %v345 = vsel %vm275, %v266, 0.0
      %346 = vadd.xlane.f32.xlu0 %v345
      %v347 = vpop.xlane.xlu0 %346
      %v348 = vsel %vm275, %v267, 0.0
      %349 = vadd.xlane.f32.xlu0 %v348
      %v350 = vpop.xlane.xlu0 %349
      %v351 = vsel %vm275, %v268, 0.0
      %352 = vadd.xlane.f32.xlu0 %v351
      %v353 = vpop.xlane.xlu0 %352
      %v354 = vsel %vm275, %v269, 0.0
      %355 = vadd.xlane.f32.xlu0 %v354
      %v356 = vpop.xlane.xlu0 %355
      %v357 = vsel %vm275, %v270, 0.0
      %358 = vadd.xlane.f32.xlu0 %v357
      %v359 = vpop.xlane.xlu0 %358
      %v360 = vsel %vm275, %v271, 0.0
      %361 = vadd.xlane.f32.xlu0 %v360
      %v362 = vpop.xlane.xlu0 %361
      %v363 = vsel %vm275, %v272, 0.0
      %364 = vadd.xlane.f32.xlu0 %v363
      %v365 = vpop.xlane.xlu0 %364
      %v366 = vsel %vm275, %v273, 0.0
      %367 = vadd.xlane.f32.xlu0 %v366
      %v368 = vpop.xlane.xlu0 %367
      %v369 = vsel %vm275, %v274, 0.0
      %370 = vadd.xlane.f32.xlu0 %v369
      %v371 = vpop.xlane.xlu0 %370
      %v372 = vadd.f32 %v278, 0.0
      %v373 = vadd.f32 %v281, 0.0
      %v374 = vadd.f32 %v284, 0.0
      %v375 = vadd.f32 %v287, 0.0
      %v376 = vadd.f32 %v290, 0.0
      %v377 = vadd.f32 %v293, 0.0
      %v378 = vadd.f32 %v296, 0.0
      %v379 = vadd.f32 %v299, 0.0
      %v380 = vadd.f32 %v302, 0.0
      %v381 = vadd.f32 %v305, 0.0
      %v382 = vadd.f32 %v308, 0.0
      %v383 = vadd.f32 %v311, 0.0
      %v384 = vadd.f32 %v314, 0.0
      %v385 = vadd.f32 %v317, 0.0
      %v386 = vadd.f32 %v320, 0.0
      %v387 = vadd.f32 %v323, 0.0
      %v388 = vadd.f32 %v326, 0.0
      %v389 = vadd.f32 %v329, 0.0
      %v390 = vadd.f32 %v332, 0.0
      %v391 = vadd.f32 %v335, 0.0
      %v392 = vadd.f32 %v338, 0.0
      %v393 = vadd.f32 %v341, 0.0
      %v394 = vadd.f32 %v344, 0.0
      %v395 = vadd.f32 %v347, 0.0
      %v396 = vadd.f32 %v350, 0.0
      %v397 = vadd.f32 %v353, 0.0
      %v398 = vadd.f32 %v356, 0.0
      %v399 = vadd.f32 %v359, 0.0
      %v400 = vadd.f32 %v362, 0.0
      %v401 = vadd.f32 %v365, 0.0
      %v402 = vadd.f32 %v368, 0.0
      %v403 = vadd.f32 %v371, 0.0
      %v404 = vrcp.pop 64.0
      %v405 = vmul.f32 %v372, %v404
      %v406 = vmul.f32 %v373, %v404
      %v407 = vmul.f32 %v374, %v404
      %v408 = vmul.f32 %v375, %v404
      %v409 = vmul.f32 %v376, %v404
      %v410 = vmul.f32 %v377, %v404
      %v411 = vmul.f32 %v378, %v404
      %v412 = vmul.f32 %v379, %v404
      %v413 = vmul.f32 %v380, %v404
      %v414 = vmul.f32 %v381, %v404
      %v415 = vmul.f32 %v382, %v404
      %v416 = vmul.f32 %v383, %v404
      %v417 = vmul.f32 %v384, %v404
      %v418 = vmul.f32 %v385, %v404
      %v419 = vmul.f32 %v386, %v404
      %v420 = vmul.f32 %v387, %v404
      %v421 = vmul.f32 %v388, %v404
      %v422 = vmul.f32 %v389, %v404
      %v423 = vmul.f32 %v390, %v404
      %v424 = vmul.f32 %v391, %v404
      %v425 = vmul.f32 %v392, %v404
      %v426 = vmul.f32 %v393, %v404
      %v427 = vmul.f32 %v394, %v404
      %v428 = vmul.f32 %v395, %v404
      %v429 = vmul.f32 %v396, %v404
      %v430 = vmul.f32 %v397, %v404
      %v431 = vmul.f32 %v398, %v404
      %v432 = vmul.f32 %v399, %v404
      %v433 = vmul.f32 %v400, %v404
      %v434 = vmul.f32 %v401, %v404
      %v435 = vmul.f32 %v402, %v404
      %v436 = vmul.f32 %v403, %v404
      %v437 = vsub.f32 %v243, %v405
      %v438 = vsub.f32 %v244, %v406
      %v439 = vsub.f32 %v245, %v407
      %v440 = vsub.f32 %v246, %v408
      %v441 = vsub.f32 %v247, %v409
      %v442 = vsub.f32 %v248, %v410
      %v443 = vsub.f32 %v249, %v411
      %v444 = vsub.f32 %v250, %v412
      %v445 = vsub.f32 %v251, %v413
      %v446 = vsub.f32 %v252, %v414
      %v447 = vsub.f32 %v253, %v415
      %v448 = vsub.f32 %v254, %v416
      %v449 = vsub.f32 %v255, %v417
      %v450 = vsub.f32 %v256, %v418
      %v451 = vsub.f32 %v257, %v419
      %v452 = vsub.f32 %v258, %v420
      %v453 = vsub.f32 %v259, %v421
      %v454 = vsub.f32 %v260, %v422
      %v455 = vsub.f32 %v261, %v423
      %v456 = vsub.f32 %v262, %v424
      %v457 = vsub.f32 %v263, %v425
      %v458 = vsub.f32 %v264, %v426
      %v459 = vsub.f32 %v265, %v427
      %v460 = vsub.f32 %v266, %v428
      %v461 = vsub.f32 %v267, %v429
      %v462 = vsub.f32 %v268, %v430
      %v463 = vsub.f32 %v269, %v431
      %v464 = vsub.f32 %v270, %v432
      %v465 = vsub.f32 %v271, %v433
      %v466 = vsub.f32 %v272, %v434
      %v467 = vsub.f32 %v273, %v435
      %v468 = vsub.f32 %v274, %v436
      %v469 = vmul.f32 %v437, %v437
      %v470 = vmul.f32 %v438, %v438
      %v471 = vmul.f32 %v439, %v439
      %v472 = vmul.f32 %v440, %v440
      %v473 = vmul.f32 %v441, %v441
      %v474 = vmul.f32 %v442, %v442
      %v475 = vmul.f32 %v443, %v443
      %v476 = vmul.f32 %v444, %v444
      %v477 = vmul.f32 %v445, %v445
      %v478 = vmul.f32 %v446, %v446
      %v479 = vmul.f32 %v447, %v447
      %v480 = vmul.f32 %v448, %v448
      %v481 = vmul.f32 %v449, %v449
      %v482 = vmul.f32 %v450, %v450
      %v483 = vmul.f32 %v451, %v451
      %v484 = vmul.f32 %v452, %v452
      %v485 = vmul.f32 %v453, %v453
      %v486 = vmul.f32 %v454, %v454
      %v487 = vmul.f32 %v455, %v455
      %v488 = vmul.f32 %v456, %v456
      %v489 = vmul.f32 %v457, %v457
      %v490 = vmul.f32 %v458, %v458
      %v491 = vmul.f32 %v459, %v459
      %v492 = vmul.f32 %v460, %v460
      %v493 = vmul.f32 %v461, %v461
      %v494 = vmul.f32 %v462, %v462
      %v495 = vmul.f32 %v463, %v463
      %v496 = vmul.f32 %v464, %v464
      %v497 = vmul.f32 %v465, %v465
      %v498 = vmul.f32 %v466, %v466
      %v499 = vmul.f32 %v467, %v467
      %v500 = vmul.f32 %v468, %v468
      %v501 = vsel %vm275, %v469, 0.0
      %502 = vadd.xlane.f32.xlu0 %v501
      %v503 = vpop.xlane.xlu0 %502
      %v504 = vsel %vm275, %v470, 0.0
      %505 = vadd.xlane.f32.xlu0 %v504
      %v506 = vpop.xlane.xlu0 %505
      %v507 = vsel %vm275, %v471, 0.0
      %508 = vadd.xlane.f32.xlu0 %v507
      %v509 = vpop.xlane.xlu0 %508
      %v510 = vsel %vm275, %v472, 0.0
      %511 = vadd.xlane.f32.xlu0 %v510
      %v512 = vpop.xlane.xlu0 %511
      %v513 = vsel %vm275, %v473, 0.0
      %514 = vadd.xlane.f32.xlu0 %v513
      %v515 = vpop.xlane.xlu0 %514
      %v516 = vsel %vm275, %v474, 0.0
      %517 = vadd.xlane.f32.xlu0 %v516
      %v518 = vpop.xlane.xlu0 %517
      %v519 = vsel %vm275, %v475, 0.0
      %520 = vadd.xlane.f32.xlu0 %v519
      %v521 = vpop.xlane.xlu0 %520
      %v522 = vsel %vm275, %v476, 0.0
      %523 = vadd.xlane.f32.xlu0 %v522
      %v524 = vpop.xlane.xlu0 %523
      %v525 = vsel %vm275, %v477, 0.0
      %526 = vadd.xlane.f32.xlu0 %v525
      %v527 = vpop.xlane.xlu0 %526
      %v528 = vsel %vm275, %v478, 0.0
      %529 = vadd.xlane.f32.xlu0 %v528
      %v530 = vpop.xlane.xlu0 %529
      %v531 = vsel %vm275, %v479, 0.0
      %532 = vadd.xlane.f32.xlu0 %v531
      %v533 = vpop.xlane.xlu0 %532
      %v534 = vsel %vm275, %v480, 0.0
      %535 = vadd.xlane.f32.xlu0 %v534
      %v536 = vpop.xlane.xlu0 %535
      %v537 = vsel %vm275, %v481, 0.0
      %538 = vadd.xlane.f32.xlu0 %v537
      %v539 = vpop.xlane.xlu0 %538
      %v540 = vsel %vm275, %v482, 0.0
      %541 = vadd.xlane.f32.xlu0 %v540
      %v542 = vpop.xlane.xlu0 %541
      %v543 = vsel %vm275, %v483, 0.0
      %544 = vadd.xlane.f32.xlu0 %v543
      %v545 = vpop.xlane.xlu0 %544
      %v546 = vsel %vm275, %v484, 0.0
      %547 = vadd.xlane.f32.xlu0 %v546
      %v548 = vpop.xlane.xlu0 %547
      %v549 = vsel %vm275, %v485, 0.0
      %550 = vadd.xlane.f32.xlu0 %v549
      %v551 = vpop.xlane.xlu0 %550
      %v552 = vsel %vm275, %v486, 0.0
      %553 = vadd.xlane.f32.xlu0 %v552
      %v554 = vpop.xlane.xlu0 %553
      %v555 = vsel %vm275, %v487, 0.0
      %556 = vadd.xlane.f32.xlu0 %v555
      %v557 = vpop.xlane.xlu0 %556
      %v558 = vsel %vm275, %v488, 0.0
      %559 = vadd.xlane.f32.xlu0 %v558
      %v560 = vpop.xlane.xlu0 %559
      %v561 = vsel %vm275, %v489, 0.0
      %562 = vadd.xlane.f32.xlu0 %v561
      %v563 = vpop.xlane.xlu0 %562
      %v564 = vsel %vm275, %v490, 0.0
      %565 = vadd.xlane.f32.xlu0 %v564
      %v566 = vpop.xlane.xlu0 %565
      %v567 = vsel %vm275, %v491, 0.0
      %568 = vadd.xlane.f32.xlu0 %v567
      %v569 = vpop.xlane.xlu0 %568
      %v570 = vsel %vm275, %v492, 0.0
      %571 = vadd.xlane.f32.xlu0 %v570
      %v572 = vpop.xlane.xlu0 %571
      %v573 = vsel %vm275, %v493, 0.0
      %574 = vadd.xlane.f32.xlu0 %v573
      %v575 = vpop.xlane.xlu0 %574
      %v576 = vsel %vm275, %v494, 0.0
      %577 = vadd.xlane.f32.xlu0 %v576
      %v578 = vpop.xlane.xlu0 %577
      %v579 = vsel %vm275, %v495, 0.0
      %580 = vadd.xlane.f32.xlu0 %v579
      %v581 = vpop.xlane.xlu0 %580
      %v582 = vsel %vm275, %v496, 0.0
      %583 = vadd.xlane.f32.xlu0 %v582
      %v584 = vpop.xlane.xlu0 %583
      %v585 = vsel %vm275, %v497, 0.0
      %586 = vadd.xlane.f32.xlu0 %v585
      %v587 = vpop.xlane.xlu0 %586
      %v588 = vsel %vm275, %v498, 0.0
      %589 = vadd.xlane.f32.xlu0 %v588
      %v590 = vpop.xlane.xlu0 %589
      %v591 = vsel %vm275, %v499, 0.0
      %592 = vadd.xlane.f32.xlu0 %v591
      %v593 = vpop.xlane.xlu0 %592
      %v594 = vsel %vm275, %v500, 0.0
      %595 = vadd.xlane.f32.xlu0 %v594
      %v596 = vpop.xlane.xlu0 %595
      %v597 = vadd.f32 %v503, 0.0
      %v598 = vadd.f32 %v506, 0.0
      %v599 = vadd.f32 %v509, 0.0
      %v600 = vadd.f32 %v512, 0.0
      %v601 = vadd.f32 %v515, 0.0
      %v602 = vadd.f32 %v518, 0.0
      %v603 = vadd.f32 %v521, 0.0
      %v604 = vadd.f32 %v524, 0.0
      %v605 = vadd.f32 %v527, 0.0
      %v606 = vadd.f32 %v530, 0.0
      %v607 = vadd.f32 %v533, 0.0
      %v608 = vadd.f32 %v536, 0.0
      %v609 = vadd.f32 %v539, 0.0
      %v610 = vadd.f32 %v542, 0.0
      %v611 = vadd.f32 %v545, 0.0
      %v612 = vadd.f32 %v548, 0.0
      %v613 = vadd.f32 %v551, 0.0
      %v614 = vadd.f32 %v554, 0.0
      %v615 = vadd.f32 %v557, 0.0
      %v616 = vadd.f32 %v560, 0.0
      %v617 = vadd.f32 %v563, 0.0
      %v618 = vadd.f32 %v566, 0.0
      %v619 = vadd.f32 %v569, 0.0
      %v620 = vadd.f32 %v572, 0.0
      %v621 = vadd.f32 %v575, 0.0
      %v622 = vadd.f32 %v578, 0.0
      %v623 = vadd.f32 %v581, 0.0
      %v624 = vadd.f32 %v584, 0.0
      %v625 = vadd.f32 %v587, 0.0
      %v626 = vadd.f32 %v590, 0.0
      %v627 = vadd.f32 %v593, 0.0
      %v628 = vadd.f32 %v596, 0.0
      %v629 = vmul.f32 %v597, %v404
      %v630 = vmul.f32 %v598, %v404
      %v631 = vmul.f32 %v599, %v404
      %v632 = vmul.f32 %v600, %v404
      %v633 = vmul.f32 %v601, %v404
      %v634 = vmul.f32 %v602, %v404
      %v635 = vmul.f32 %v603, %v404
      %v636 = vmul.f32 %v604, %v404
      %v637 = vmul.f32 %v605, %v404
      %v638 = vmul.f32 %v606, %v404
      %v639 = vmul.f32 %v607, %v404
      %v640 = vmul.f32 %v608, %v404
      %v641 = vmul.f32 %v609, %v404
      %v642 = vmul.f32 %v610, %v404
      %v643 = vmul.f32 %v611, %v404
      %v644 = vmul.f32 %v612, %v404
      %v645 = vmul.f32 %v613, %v404
      %v646 = vmul.f32 %v614, %v404
      %v647 = vmul.f32 %v615, %v404
      %v648 = vmul.f32 %v616, %v404
      %v649 = vmul.f32 %v617, %v404
      %v650 = vmul.f32 %v618, %v404
      %v651 = vmul.f32 %v619, %v404
      %v652 = vmul.f32 %v620, %v404
      %v653 = vmul.f32 %v621, %v404
      %v654 = vmul.f32 %v622, %v404
      %v655 = vmul.f32 %v623, %v404
      %v656 = vmul.f32 %v624, %v404
      %v657 = vmul.f32 %v625, %v404
      %v658 = vmul.f32 %v626, %v404
      %v659 = vmul.f32 %v627, %v404
      %v660 = vmul.f32 %v628, %v404
      %v661 = vadd.f32 %v629, 1e-06
      %v662 = vadd.f32 %v630, 1e-06
      %v663 = vadd.f32 %v631, 1e-06
      %v664 = vadd.f32 %v632, 1e-06
      %v665 = vadd.f32 %v633, 1e-06
      %v666 = vadd.f32 %v634, 1e-06
      %v667 = vadd.f32 %v635, 1e-06
      %v668 = vadd.f32 %v636, 1e-06
      %v669 = vadd.f32 %v637, 1e-06
      %v670 = vadd.f32 %v638, 1e-06
      %v671 = vadd.f32 %v639, 1e-06
      %v672 = vadd.f32 %v640, 1e-06
      %v673 = vadd.f32 %v641, 1e-06
      %v674 = vadd.f32 %v642, 1e-06
      %v675 = vadd.f32 %v643, 1e-06
      %v676 = vadd.f32 %v644, 1e-06
      %v677 = vadd.f32 %v645, 1e-06
      %v678 = vadd.f32 %v646, 1e-06
      %v679 = vadd.f32 %v647, 1e-06
      %v680 = vadd.f32 %v648, 1e-06
      %v681 = vadd.f32 %v649, 1e-06
      %v682 = vadd.f32 %v650, 1e-06
      %v683 = vadd.f32 %v651, 1e-06
      %v684 = vadd.f32 %v652, 1e-06
      %v685 = vadd.f32 %v653, 1e-06
      %v686 = vadd.f32 %v654, 1e-06
      %v687 = vadd.f32 %v655, 1e-06
      %v688 = vadd.f32 %v656, 1e-06
      %v689 = vadd.f32 %v657, 1e-06
      %v690 = vadd.f32 %v658, 1e-06
      %v691 = vadd.f32 %v659, 1e-06
      %v692 = vadd.f32 %v660, 1e-06
      %v693 = vrsqrt.pop %v661
      %v694 = vrsqrt.pop %v662
      %v695 = vrsqrt.pop %v663
      %v696 = vrsqrt.pop %v664
      %v697 = vrsqrt.pop %v665
      %v698 = vrsqrt.pop %v666
      %v699 = vrsqrt.pop %v667
      %v700 = vrsqrt.pop %v668
      %v701 = vrsqrt.pop %v669
      %v702 = vrsqrt.pop %v670
      %v703 = vrsqrt.pop %v671
      %v704 = vrsqrt.pop %v672
      %v705 = vrsqrt.pop %v673
      %v706 = vrsqrt.pop %v674
      %v707 = vrsqrt.pop %v675
      %v708 = vrsqrt.pop %v676
      %v709 = vrsqrt.pop %v677
      %v710 = vrsqrt.pop %v678
      %v711 = vrsqrt.pop %v679
      %v712 = vrsqrt.pop %v680
      %v713 = vrsqrt.pop %v681
      %v714 = vrsqrt.pop %v682
      %v715 = vrsqrt.pop %v683
      %v716 = vrsqrt.pop %v684
      %v717 = vrsqrt.pop %v685
      %v718 = vrsqrt.pop %v686
      %v719 = vrsqrt.pop %v687
      %v720 = vrsqrt.pop %v688
      %v721 = vrsqrt.pop %v689
      %v722 = vrsqrt.pop %v690
      %v723 = vrsqrt.pop %v691
      %v724 = vrsqrt.pop %v692
      %v725 = vmul.f32 %v437, %v693
      %v726 = vmul.f32 %v438, %v694
      %v727 = vmul.f32 %v439, %v695
      %v728 = vmul.f32 %v440, %v696
      %v729 = vmul.f32 %v441, %v697
      %v730 = vmul.f32 %v442, %v698
      %v731 = vmul.f32 %v443, %v699
      %v732 = vmul.f32 %v444, %v700
      %v733 = vmul.f32 %v445, %v701
      %v734 = vmul.f32 %v446, %v702
      %v735 = vmul.f32 %v447, %v703
      %v736 = vmul.f32 %v448, %v704
      %v737 = vmul.f32 %v449, %v705
      %v738 = vmul.f32 %v450, %v706
      %v739 = vmul.f32 %v451, %v707
      %v740 = vmul.f32 %v452, %v708
      %v741 = vmul.f32 %v453, %v709
      %v742 = vmul.f32 %v454, %v710
      %v743 = vmul.f32 %v455, %v711
      %v744 = vmul.f32 %v456, %v712
      %v745 = vmul.f32 %v457, %v713
      %v746 = vmul.f32 %v458, %v714
      %v747 = vmul.f32 %v459, %v715
      %v748 = vmul.f32 %v460, %v716
      %v749 = vmul.f32 %v461, %v717
      %v750 = vmul.f32 %v462, %v718
      %v751 = vmul.f32 %v463, %v719
      %v752 = vmul.f32 %v464, %v720
      %v753 = vmul.f32 %v465, %v721
      %v754 = vmul.f32 %v466, %v722
      %v755 = vmul.f32 %v467, %v723
      %v756 = vmul.f32 %v468, %v724
      %v757 = vld [vmem:[%s227] sm:$0x1]
      %v758 = vld [vmem:[%s227 + $0x1] sm:$0x1]
      %v759 = vld [vmem:[%s227 + $0x2] sm:$0x1]
      %v760 = vld [vmem:[%s227 + $0x3] sm:$0x1]
      %v761 = vld [vmem:[%s227 + $0x4] sm:$0x1]
      %v762 = vld [vmem:[%s227 + $0x5] sm:$0x1]
      %v763 = vld [vmem:[%s227 + $0x6] sm:$0x1]
      %v764 = vld [vmem:[%s227 + $0x7] sm:$0x1]
      %v765 = vld [vmem:[%s227 + $0x8] sm:$0x1]
      %v766 = vld [vmem:[%s227 + $0x9] sm:$0x1]
      %v767 = vld [vmem:[%s227 + $0xa] sm:$0x1]
      %v768 = vld [vmem:[%s227 + $0xb] sm:$0x1]
      %v769 = vld [vmem:[%s227 + $0xc] sm:$0x1]
      %v770 = vld [vmem:[%s227 + $0xd] sm:$0x1]
      %v771 = vld [vmem:[%s227 + $0xe] sm:$0x1]
      %v772 = vld [vmem:[%s227 + $0xf] sm:$0x1]
      %v773 = vld [vmem:[%s227 + $0x10] sm:$0x1]
      %v774 = vld [vmem:[%s227 + $0x11] sm:$0x1]
      %v775 = vld [vmem:[%s227 + $0x12] sm:$0x1]
      %v776 = vld [vmem:[%s227 + $0x13] sm:$0x1]
      %v777 = vld [vmem:[%s227 + $0x14] sm:$0x1]
      %v778 = vld [vmem:[%s227 + $0x15] sm:$0x1]
      %v779 = vld [vmem:[%s227 + $0x16] sm:$0x1]
      %v780 = vld [vmem:[%s227 + $0x17] sm:$0x1]
      %v781 = vld [vmem:[%s227 + $0x18] sm:$0x1]
      %v782 = vld [vmem:[%s227 + $0x19] sm:$0x1]
      %v783 = vld [vmem:[%s227 + $0x1a] sm:$0x1]
      %v784 = vld [vmem:[%s227 + $0x1b] sm:$0x1]
      %v785 = vld [vmem:[%s227 + $0x1c] sm:$0x1]
      %v786 = vld [vmem:[%s227 + $0x1d] sm:$0x1]
      %v787 = vld [vmem:[%s227 + $0x1e] sm:$0x1]
      %v788 = vld [vmem:[%s227 + $0x1f] sm:$0x1]
      %790 = vset.pattern.permute.xlu0 0
      %791 = vperm.xlu0 %790, %v757
      %v792 = vpop.permute.xlu0 %791
      %v794 = vlaneseq
      %v795 = vshrl.u32 %v794, 7
      %v796 = vsub.s32 0, %v795
      %v797 = vrot.slane %v792, %v796
      %799 = vset.pattern.permute.xlu0 0
      %800 = vperm.xlu0 %799, %v758
      %v801 = vpop.permute.xlu0 %800
      %v803 = vlaneseq
      %v804 = vshrl.u32 %v803, 7
      %v805 = vsub.s32 0, %v804
      %v806 = vrot.slane %v801, %v805
      %808 = vset.pattern.permute.xlu0 0
      %809 = vperm.xlu0 %808, %v759
      %v810 = vpop.permute.xlu0 %809
      %v812 = vlaneseq
      %v813 = vshrl.u32 %v812, 7
      %v814 = vsub.s32 0, %v813
      %v815 = vrot.slane %v810, %v814
      %817 = vset.pattern.permute.xlu0 0
      %818 = vperm.xlu0 %817, %v760
      %v819 = vpop.permute.xlu0 %818
      %v821 = vlaneseq
      %v822 = vshrl.u32 %v821, 7
      %v823 = vsub.s32 0, %v822
      %v824 = vrot.slane %v819, %v823
      %826 = vset.pattern.permute.xlu0 0
      %827 = vperm.xlu0 %826, %v761
      %v828 = vpop.permute.xlu0 %827
      %v830 = vlaneseq
      %v831 = vshrl.u32 %v830, 7
      %v832 = vsub.s32 0, %v831
      %v833 = vrot.slane %v828, %v832
      %835 = vset.pattern.permute.xlu0 0
      %836 = vperm.xlu0 %835, %v762
      %v837 = vpop.permute.xlu0 %836
      %v839 = vlaneseq
      %v840 = vshrl.u32 %v839, 7
      %v841 = vsub.s32 0, %v840
      %v842 = vrot.slane %v837, %v841
      %844 = vset.pattern.permute.xlu0 0
      %845 = vperm.xlu0 %844, %v763
      %v846 = vpop.permute.xlu0 %845
      %v848 = vlaneseq
      %v849 = vshrl.u32 %v848, 7
      %v850 = vsub.s32 0, %v849
      %v851 = vrot.slane %v846, %v850
      %853 = vset.pattern.permute.xlu0 0
      %854 = vperm.xlu0 %853, %v764
      %v855 = vpop.permute.xlu0 %854
      %v857 = vlaneseq
      %v858 = vshrl.u32 %v857, 7
      %v859 = vsub.s32 0, %v858
      %v860 = vrot.slane %v855, %v859
      %862 = vset.pattern.permute.xlu0 0
      %863 = vperm.xlu0 %862, %v765
      %v864 = vpop.permute.xlu0 %863
      %v866 = vlaneseq
      %v867 = vshrl.u32 %v866, 7
      %v868 = vsub.s32 0, %v867
      %v869 = vrot.slane %v864, %v868
      %871 = vset.pattern.permute.xlu0 0
      %872 = vperm.xlu0 %871, %v766
      %v873 = vpop.permute.xlu0 %872
      %v875 = vlaneseq
      %v876 = vshrl.u32 %v875, 7
      %v877 = vsub.s32 0, %v876
      %v878 = vrot.slane %v873, %v877
      %880 = vset.pattern.permute.xlu0 0
      %881 = vperm.xlu0 %880, %v767
      %v882 = vpop.permute.xlu0 %881
      %v884 = vlaneseq
      %v885 = vshrl.u32 %v884, 7
      %v886 = vsub.s32 0, %v885
      %v887 = vrot.slane %v882, %v886
      %889 = vset.pattern.permute.xlu0 0
      %890 = vperm.xlu0 %889, %v768
      %v891 = vpop.permute.xlu0 %890
      %v893 = vlaneseq
      %v894 = vshrl.u32 %v893, 7
      %v895 = vsub.s32 0, %v894
      %v896 = vrot.slane %v891, %v895
      %898 = vset.pattern.permute.xlu0 0
      %899 = vperm.xlu0 %898, %v769
      %v900 = vpop.permute.xlu0 %899
      %v902 = vlaneseq
      %v903 = vshrl.u32 %v902, 7
      %v904 = vsub.s32 0, %v903
      %v905 = vrot.slane %v900, %v904
      %907 = vset.pattern.permute.xlu0 0
      %908 = vperm.xlu0 %907, %v770
      %v909 = vpop.permute.xlu0 %908
      %v911 = vlaneseq
      %v912 = vshrl.u32 %v911, 7
      %v913 = vsub.s32 0, %v912
      %v914 = vrot.slane %v909, %v913
      %916 = vset.pattern.permute.xlu0 0
      %917 = vperm.xlu0 %916, %v771
      %v918 = vpop.permute.xlu0 %917
      %v920 = vlaneseq
      %v921 = vshrl.u32 %v920, 7
      %v922 = vsub.s32 0, %v921
      %v923 = vrot.slane %v918, %v922
      %925 = vset.pattern.permute.xlu0 0
      %926 = vperm.xlu0 %925, %v772
      %v927 = vpop.permute.xlu0 %926
      %v929 = vlaneseq
      %v930 = vshrl.u32 %v929, 7
      %v931 = vsub.s32 0, %v930
      %v932 = vrot.slane %v927, %v931
      %934 = vset.pattern.permute.xlu0 0
      %935 = vperm.xlu0 %934, %v773
      %v936 = vpop.permute.xlu0 %935
      %v938 = vlaneseq
      %v939 = vshrl.u32 %v938, 7
      %v940 = vsub.s32 0, %v939
      %v941 = vrot.slane %v936, %v940
      %943 = vset.pattern.permute.xlu0 0
      %944 = vperm.xlu0 %943, %v774
      %v945 = vpop.permute.xlu0 %944
      %v947 = vlaneseq
      %v948 = vshrl.u32 %v947, 7
      %v949 = vsub.s32 0, %v948
      %v950 = vrot.slane %v945, %v949
      %952 = vset.pattern.permute.xlu0 0
      %953 = vperm.xlu0 %952, %v775
      %v954 = vpop.permute.xlu0 %953
      %v956 = vlaneseq
      %v957 = vshrl.u32 %v956, 7
      %v958 = vsub.s32 0, %v957
      %v959 = vrot.slane %v954, %v958
      %961 = vset.pattern.permute.xlu0 0
      %962 = vperm.xlu0 %961, %v776
      %v963 = vpop.permute.xlu0 %962
      %v965 = vlaneseq
      %v966 = vshrl.u32 %v965, 7
      %v967 = vsub.s32 0, %v966
      %v968 = vrot.slane %v963, %v967
      %970 = vset.pattern.permute.xlu0 0
      %971 = vperm.xlu0 %970, %v777
      %v972 = vpop.permute.xlu0 %971
      %v974 = vlaneseq
      %v975 = vshrl.u32 %v974, 7
      %v976 = vsub.s32 0, %v975
      %v977 = vrot.slane %v972, %v976
      %979 = vset.pattern.permute.xlu0 0
      %980 = vperm.xlu0 %979, %v778
      %v981 = vpop.permute.xlu0 %980
      %v983 = vlaneseq
      %v984 = vshrl.u32 %v983, 7
      %v985 = vsub.s32 0, %v984
      %v986 = vrot.slane %v981, %v985
      %988 = vset.pattern.permute.xlu0 0
      %989 = vperm.xlu0 %988, %v779
      %v990 = vpop.permute.xlu0 %989
      %v992 = vlaneseq
      %v993 = vshrl.u32 %v992, 7
      %v994 = vsub.s32 0, %v993
      %v995 = vrot.slane %v990, %v994
      %997 = vset.pattern.permute.xlu0 0
      %998 = vperm.xlu0 %997, %v780
      %v999 = vpop.permute.xlu0 %998
      %v1001 = vlaneseq
      %v1002 = vshrl.u32 %v1001, 7
      %v1003 = vsub.s32 0, %v1002
      %v1004 = vrot.slane %v999, %v1003
      %1006 = vset.pattern.permute.xlu0 0
      %1007 = vperm.xlu0 %1006, %v781
      %v1008 = vpop.permute.xlu0 %1007
      %v1010 = vlaneseq
      %v1011 = vshrl.u32 %v1010, 7
      %v1012 = vsub.s32 0, %v1011
      %v1013 = vrot.slane %v1008, %v1012
      %1015 = vset.pattern.permute.xlu0 0
      %1016 = vperm.xlu0 %1015, %v782
      %v1017 = vpop.permute.xlu0 %1016
      %v1019 = vlaneseq
      %v1020 = vshrl.u32 %v1019, 7
      %v1021 = vsub.s32 0, %v1020
      %v1022 = vrot.slane %v1017, %v1021
      %1024 = vset.pattern.permute.xlu0 0
      %1025 = vperm.xlu0 %1024, %v783
      %v1026 = vpop.permute.xlu0 %1025
      %v1028 = vlaneseq
      %v1029 = vshrl.u32 %v1028, 7
      %v1030 = vsub.s32 0, %v1029
      %v1031 = vrot.slane %v1026, %v1030
      %1033 = vset.pattern.permute.xlu0 0
      %1034 = vperm.xlu0 %1033, %v784
      %v1035 = vpop.permute.xlu0 %1034
      %v1037 = vlaneseq
      %v1038 = vshrl.u32 %v1037, 7
      %v1039 = vsub.s32 0, %v1038
      %v1040 = vrot.slane %v1035, %v1039
      %1042 = vset.pattern.permute.xlu0 0
      %1043 = vperm.xlu0 %1042, %v785
      %v1044 = vpop.permute.xlu0 %1043
      %v1046 = vlaneseq
      %v1047 = vshrl.u32 %v1046, 7
      %v1048 = vsub.s32 0, %v1047
      %v1049 = vrot.slane %v1044, %v1048
      %1051 = vset.pattern.permute.xlu0 0
      %1052 = vperm.xlu0 %1051, %v786
      %v1053 = vpop.permute.xlu0 %1052
      %v1055 = vlaneseq
      %v1056 = vshrl.u32 %v1055, 7
      %v1057 = vsub.s32 0, %v1056
      %v1058 = vrot.slane %v1053, %v1057
      %1060 = vset.pattern.permute.xlu0 0
      %1061 = vperm.xlu0 %1060, %v787
      %v1062 = vpop.permute.xlu0 %1061
      %v1064 = vlaneseq
      %v1065 = vshrl.u32 %v1064, 7
      %v1066 = vsub.s32 0, %v1065
      %v1067 = vrot.slane %v1062, %v1066
      %1069 = vset.pattern.permute.xlu0 0
      %1070 = vperm.xlu0 %1069, %v788
      %v1071 = vpop.permute.xlu0 %1070
      %v1073 = vlaneseq
      %v1074 = vshrl.u32 %v1073, 7
      %v1075 = vsub.s32 0, %v1074
      %v1076 = vrot.slane %v1071, %v1075
      %v1077 = vmul.f32 %v725, %v797
      %v1078 = vmul.f32 %v726, %v806
      %v1079 = vmul.f32 %v727, %v815
      %v1080 = vmul.f32 %v728, %v824
      %v1081 = vmul.f32 %v729, %v833
      %v1082 = vmul.f32 %v730, %v842
      %v1083 = vmul.f32 %v731, %v851
      %v1084 = vmul.f32 %v732, %v860
      %v1085 = vmul.f32 %v733, %v869
      %v1086 = vmul.f32 %v734, %v878
      %v1087 = vmul.f32 %v735, %v887
      %v1088 = vmul.f32 %v736, %v896
      %v1089 = vmul.f32 %v737, %v905
      %v1090 = vmul.f32 %v738, %v914
      %v1091 = vmul.f32 %v739, %v923
      %v1092 = vmul.f32 %v740, %v932
      %v1093 = vmul.f32 %v741, %v941
      %v1094 = vmul.f32 %v742, %v950
      %v1095 = vmul.f32 %v743, %v959
      %v1096 = vmul.f32 %v744, %v968
      %v1097 = vmul.f32 %v745, %v977
      %v1098 = vmul.f32 %v746, %v986
      %v1099 = vmul.f32 %v747, %v995
      %v1100 = vmul.f32 %v748, %v1004
      %v1101 = vmul.f32 %v749, %v1013
      %v1102 = vmul.f32 %v750, %v1022
      %v1103 = vmul.f32 %v751, %v1031
      %v1104 = vmul.f32 %v752, %v1040
      %v1105 = vmul.f32 %v753, %v1049
      %v1106 = vmul.f32 %v754, %v1058
      %v1107 = vmul.f32 %v755, %v1067
      %v1108 = vmul.f32 %v756, %v1076
      %v1109 = vld [vmem:[%s232] sm:$0x1]
      %v1110 = vld [vmem:[%s232 + $0x1] sm:$0x1]
      %v1111 = vld [vmem:[%s232 + $0x2] sm:$0x1]
      %v1112 = vld [vmem:[%s232 + $0x3] sm:$0x1]
      %v1113 = vld [vmem:[%s232 + $0x4] sm:$0x1]
      %v1114 = vld [vmem:[%s232 + $0x5] sm:$0x1]
      %v1115 = vld [vmem:[%s232 + $0x6] sm:$0x1]
      %v1116 = vld [vmem:[%s232 + $0x7] sm:$0x1]
      %v1117 = vld [vmem:[%s232 + $0x8] sm:$0x1]
      %v1118 = vld [vmem:[%s232 + $0x9] sm:$0x1]
      %v1119 = vld [vmem:[%s232 + $0xa] sm:$0x1]
      %v1120 = vld [vmem:[%s232 + $0xb] sm:$0x1]
      %v1121 = vld [vmem:[%s232 + $0xc] sm:$0x1]
      %v1122 = vld [vmem:[%s232 + $0xd] sm:$0x1]
      %v1123 = vld [vmem:[%s232 + $0xe] sm:$0x1]
      %v1124 = vld [vmem:[%s232 + $0xf] sm:$0x1]
      %v1125 = vld [vmem:[%s232 + $0x10] sm:$0x1]
      %v1126 = vld [vmem:[%s232 + $0x11] sm:$0x1]
      %v1127 = vld [vmem:[%s232 + $0x12] sm:$0x1]
      %v1128 = vld [vmem:[%s232 + $0x13] sm:$0x1]
      %v1129 = vld [vmem:[%s232 + $0x14] sm:$0x1]
      %v1130 = vld [vmem:[%s232 + $0x15] sm:$0x1]
      %v1131 = vld [vmem:[%s232 + $0x16] sm:$0x1]
      %v1132 = vld [vmem:[%s232 + $0x17] sm:$0x1]
      %v1133 = vld [vmem:[%s232 + $0x18] sm:$0x1]
      %v1134 = vld [vmem:[%s232 + $0x19] sm:$0x1]
      %v1135 = vld [vmem:[%s232 + $0x1a] sm:$0x1]
      %v1136 = vld [vmem:[%s232 + $0x1b] sm:$0x1]
      %v1137 = vld [vmem:[%s232 + $0x1c] sm:$0x1]
      %v1138 = vld [vmem:[%s232 + $0x1d] sm:$0x1]
      %v1139 = vld [vmem:[%s232 + $0x1e] sm:$0x1]
      %v1140 = vld [vmem:[%s232 + $0x1f] sm:$0x1]
      %1142 = vset.pattern.permute.xlu0 0
      %1143 = vperm.xlu0 %1142, %v1109
      %v1144 = vpop.permute.xlu0 %1143
      %v1146 = vlaneseq
      %v1147 = vshrl.u32 %v1146, 7
      %v1148 = vsub.s32 0, %v1147
      %v1149 = vrot.slane %v1144, %v1148
      %1151 = vset.pattern.permute.xlu0 0
      %1152 = vperm.xlu0 %1151, %v1110
      %v1153 = vpop.permute.xlu0 %1152
      %v1155 = vlaneseq
      %v1156 = vshrl.u32 %v1155, 7
      %v1157 = vsub.s32 0, %v1156
      %v1158 = vrot.slane %v1153, %v1157
      %1160 = vset.pattern.permute.xlu0 0
      %1161 = vperm.xlu0 %1160, %v1111
      %v1162 = vpop.permute.xlu0 %1161
      %v1164 = vlaneseq
      %v1165 = vshrl.u32 %v1164, 7
      %v1166 = vsub.s32 0, %v1165
      %v1167 = vrot.slane %v1162, %v1166
      %1169 = vset.pattern.permute.xlu0 0
      %1170 = vperm.xlu0 %1169, %v1112
      %v1171 = vpop.permute.xlu0 %1170
      %v1173 = vlaneseq
      %v1174 = vshrl.u32 %v1173, 7
      %v1175 = vsub.s32 0, %v1174
      %v1176 = vrot.slane %v1171, %v1175
      %1178 = vset.pattern.permute.xlu0 0
      %1179 = vperm.xlu0 %1178, %v1113
      %v1180 = vpop.permute.xlu0 %1179
      %v1182 = vlaneseq
      %v1183 = vshrl.u32 %v1182, 7
      %v1184 = vsub.s32 0, %v1183
      %v1185 = vrot.slane %v1180, %v1184
      %1187 = vset.pattern.permute.xlu0 0
      %1188 = vperm.xlu0 %1187, %v1114
      %v1189 = vpop.permute.xlu0 %1188
      %v1191 = vlaneseq
      %v1192 = vshrl.u32 %v1191, 7
      %v1193 = vsub.s32 0, %v1192
      %v1194 = vrot.slane %v1189, %v1193
      %1196 = vset.pattern.permute.xlu0 0
      %1197 = vperm.xlu0 %1196, %v1115
      %v1198 = vpop.permute.xlu0 %1197
      %v1200 = vlaneseq
      %v1201 = vshrl.u32 %v1200, 7
      %v1202 = vsub.s32 0, %v1201
      %v1203 = vrot.slane %v1198, %v1202
      %1205 = vset.pattern.permute.xlu0 0
      %1206 = vperm.xlu0 %1205, %v1116
      %v1207 = vpop.permute.xlu0 %1206
      %v1209 = vlaneseq
      %v1210 = vshrl.u32 %v1209, 7
      %v1211 = vsub.s32 0, %v1210
      %v1212 = vrot.slane %v1207, %v1211
      %1214 = vset.pattern.permute.xlu0 0
      %1215 = vperm.xlu0 %1214, %v1117
      %v1216 = vpop.permute.xlu0 %1215
      %v1218 = vlaneseq
      %v1219 = vshrl.u32 %v1218, 7
      %v1220 = vsub.s32 0, %v1219
      %v1221 = vrot.slane %v1216, %v1220
      %1223 = vset.pattern.permute.xlu0 0
      %1224 = vperm.xlu0 %1223, %v1118
      %v1225 = vpop.permute.xlu0 %1224
      %v1227 = vlaneseq
      %v1228 = vshrl.u32 %v1227, 7
      %v1229 = vsub.s32 0, %v1228
      %v1230 = vrot.slane %v1225, %v1229
      %1232 = vset.pattern.permute.xlu0 0
      %1233 = vperm.xlu0 %1232, %v1119
      %v1234 = vpop.permute.xlu0 %1233
      %v1236 = vlaneseq
      %v1237 = vshrl.u32 %v1236, 7
      %v1238 = vsub.s32 0, %v1237
      %v1239 = vrot.slane %v1234, %v1238
      %1241 = vset.pattern.permute.xlu0 0
      %1242 = vperm.xlu0 %1241, %v1120
      %v1243 = vpop.permute.xlu0 %1242
      %v1245 = vlaneseq
      %v1246 = vshrl.u32 %v1245, 7
      %v1247 = vsub.s32 0, %v1246
      %v1248 = vrot.slane %v1243, %v1247
      %1250 = vset.pattern.permute.xlu0 0
      %1251 = vperm.xlu0 %1250, %v1121
      %v1252 = vpop.permute.xlu0 %1251
      %v1254 = vlaneseq
      %v1255 = vshrl.u32 %v1254, 7
      %v1256 = vsub.s32 0, %v1255
      %v1257 = vrot.slane %v1252, %v1256
      %1259 = vset.pattern.permute.xlu0 0
      %1260 = vperm.xlu0 %1259, %v1122
      %v1261 = vpop.permute.xlu0 %1260
      %v1263 = vlaneseq
      %v1264 = vshrl.u32 %v1263, 7
      %v1265 = vsub.s32 0, %v1264
      %v1266 = vrot.slane %v1261, %v1265
      %1268 = vset.pattern.permute.xlu0 0
      %1269 = vperm.xlu0 %1268, %v1123
      %v1270 = vpop.permute.xlu0 %1269
      %v1272 = vlaneseq
      %v1273 = vshrl.u32 %v1272, 7
      %v1274 = vsub.s32 0, %v1273
      %v1275 = vrot.slane %v1270, %v1274
      %1277 = vset.pattern.permute.xlu0 0
      %1278 = vperm.xlu0 %1277, %v1124
      %v1279 = vpop.permute.xlu0 %1278
      %v1281 = vlaneseq
      %v1282 = vshrl.u32 %v1281, 7
      %v1283 = vsub.s32 0, %v1282
      %v1284 = vrot.slane %v1279, %v1283
      %1286 = vset.pattern.permute.xlu0 0
      %1287 = vperm.xlu0 %1286, %v1125
      %v1288 = vpop.permute.xlu0 %1287
      %v1290 = vlaneseq
      %v1291 = vshrl.u32 %v1290, 7
      %v1292 = vsub.s32 0, %v1291
      %v1293 = vrot.slane %v1288, %v1292
      %1295 = vset.pattern.permute.xlu0 0
      %1296 = vperm.xlu0 %1295, %v1126
      %v1297 = vpop.permute.xlu0 %1296
      %v1299 = vlaneseq
      %v1300 = vshrl.u32 %v1299, 7
      %v1301 = vsub.s32 0, %v1300
      %v1302 = vrot.slane %v1297, %v1301
      %1304 = vset.pattern.permute.xlu0 0
      %1305 = vperm.xlu0 %1304, %v1127
      %v1306 = vpop.permute.xlu0 %1305
      %v1308 = vlaneseq
      %v1309 = vshrl.u32 %v1308, 7
      %v1310 = vsub.s32 0, %v1309
      %v1311 = vrot.slane %v1306, %v1310
      %1313 = vset.pattern.permute.xlu0 0
      %1314 = vperm.xlu0 %1313, %v1128
      %v1315 = vpop.permute.xlu0 %1314
      %v1317 = vlaneseq
      %v1318 = vshrl.u32 %v1317, 7
      %v1319 = vsub.s32 0, %v1318
      %v1320 = vrot.slane %v1315, %v1319
      %1322 = vset.pattern.permute.xlu0 0
      %1323 = vperm.xlu0 %1322, %v1129
      %v1324 = vpop.permute.xlu0 %1323
      %v1326 = vlaneseq
      %v1327 = vshrl.u32 %v1326, 7
      %v1328 = vsub.s32 0, %v1327
      %v1329 = vrot.slane %v1324, %v1328
      %1331 = vset.pattern.permute.xlu0 0
      %1332 = vperm.xlu0 %1331, %v1130
      %v1333 = vpop.permute.xlu0 %1332
      %v1335 = vlaneseq
      %v1336 = vshrl.u32 %v1335, 7
      %v1337 = vsub.s32 0, %v1336
      %v1338 = vrot.slane %v1333, %v1337
      %1340 = vset.pattern.permute.xlu0 0
      %1341 = vperm.xlu0 %1340, %v1131
      %v1342 = vpop.permute.xlu0 %1341
      %v1344 = vlaneseq
      %v1345 = vshrl.u32 %v1344, 7
      %v1346 = vsub.s32 0, %v1345
      %v1347 = vrot.slane %v1342, %v1346
      %1349 = vset.pattern.permute.xlu0 0
      %1350 = vperm.xlu0 %1349, %v1132
      %v1351 = vpop.permute.xlu0 %1350
      %v1353 = vlaneseq
      %v1354 = vshrl.u32 %v1353, 7
      %v1355 = vsub.s32 0, %v1354
      %v1356 = vrot.slane %v1351, %v1355
      %1358 = vset.pattern.permute.xlu0 0
      %1359 = vperm.xlu0 %1358, %v1133
      %v1360 = vpop.permute.xlu0 %1359
      %v1362 = vlaneseq
      %v1363 = vshrl.u32 %v1362, 7
      %v1364 = vsub.s32 0, %v1363
      %v1365 = vrot.slane %v1360, %v1364
      %1367 = vset.pattern.permute.xlu0 0
      %1368 = vperm.xlu0 %1367, %v1134
      %v1369 = vpop.permute.xlu0 %1368
      %v1371 = vlaneseq
      %v1372 = vshrl.u32 %v1371, 7
      %v1373 = vsub.s32 0, %v1372
      %v1374 = vrot.slane %v1369, %v1373
      %1376 = vset.pattern.permute.xlu0 0
      %1377 = vperm.xlu0 %1376, %v1135
      %v1378 = vpop.permute.xlu0 %1377
      %v1380 = vlaneseq
      %v1381 = vshrl.u32 %v1380, 7
      %v1382 = vsub.s32 0, %v1381
      %v1383 = vrot.slane %v1378, %v1382
      %1385 = vset.pattern.permute.xlu0 0
      %1386 = vperm.xlu0 %1385, %v1136
      %v1387 = vpop.permute.xlu0 %1386
      %v1389 = vlaneseq
      %v1390 = vshrl.u32 %v1389, 7
      %v1391 = vsub.s32 0, %v1390
      %v1392 = vrot.slane %v1387, %v1391
      %1394 = vset.pattern.permute.xlu0 0
      %1395 = vperm.xlu0 %1394, %v1137
      %v1396 = vpop.permute.xlu0 %1395
      %v1398 = vlaneseq
      %v1399 = vshrl.u32 %v1398, 7
      %v1400 = vsub.s32 0, %v1399
      %v1401 = vrot.slane %v1396, %v1400
      %1403 = vset.pattern.permute.xlu0 0
      %1404 = vperm.xlu0 %1403, %v1138
      %v1405 = vpop.permute.xlu0 %1404
      %v1407 = vlaneseq
      %v1408 = vshrl.u32 %v1407, 7
      %v1409 = vsub.s32 0, %v1408
      %v1410 = vrot.slane %v1405, %v1409
      %1412 = vset.pattern.permute.xlu0 0
      %1413 = vperm.xlu0 %1412, %v1139
      %v1414 = vpop.permute.xlu0 %1413
      %v1416 = vlaneseq
      %v1417 = vshrl.u32 %v1416, 7
      %v1418 = vsub.s32 0, %v1417
      %v1419 = vrot.slane %v1414, %v1418
      %1421 = vset.pattern.permute.xlu0 0
      %1422 = vperm.xlu0 %1421, %v1140
      %v1423 = vpop.permute.xlu0 %1422
      %v1425 = vlaneseq
      %v1426 = vshrl.u32 %v1425, 7
      %v1427 = vsub.s32 0, %v1426
      %v1428 = vrot.slane %v1423, %v1427
      %v1429 = vadd.f32 %v1077, %v1149
      %v1430 = vadd.f32 %v1078, %v1158
      %v1431 = vadd.f32 %v1079, %v1167
      %v1432 = vadd.f32 %v1080, %v1176
      %v1433 = vadd.f32 %v1081, %v1185
      %v1434 = vadd.f32 %v1082, %v1194
      %v1435 = vadd.f32 %v1083, %v1203
      %v1436 = vadd.f32 %v1084, %v1212
      %v1437 = vadd.f32 %v1085, %v1221
      %v1438 = vadd.f32 %v1086, %v1230
      %v1439 = vadd.f32 %v1087, %v1239
      %v1440 = vadd.f32 %v1088, %v1248
      %v1441 = vadd.f32 %v1089, %v1257
      %v1442 = vadd.f32 %v1090, %v1266
      %v1443 = vadd.f32 %v1091, %v1275
      %v1444 = vadd.f32 %v1092, %v1284
      %v1445 = vadd.f32 %v1093, %v1293
      %v1446 = vadd.f32 %v1094, %v1302
      %v1447 = vadd.f32 %v1095, %v1311
      %v1448 = vadd.f32 %v1096, %v1320
      %v1449 = vadd.f32 %v1097, %v1329
      %v1450 = vadd.f32 %v1098, %v1338
      %v1451 = vadd.f32 %v1099, %v1347
      %v1452 = vadd.f32 %v1100, %v1356
      %v1453 = vadd.f32 %v1101, %v1365
      %v1454 = vadd.f32 %v1102, %v1374
      %v1455 = vadd.f32 %v1103, %v1383
      %v1456 = vadd.f32 %v1104, %v1392
      %v1457 = vadd.f32 %v1105, %v1401
      %v1458 = vadd.f32 %v1106, %v1410
      %v1459 = vadd.f32 %v1107, %v1419
      %v1460 = vadd.f32 %v1108, %v1428
      %1461 = vst.msk [vmem:[%s241] sm:$0x1] %vm275, %v1429
      %1462 = vst.msk [vmem:[%s241 + $0x1] sm:$0x1] %vm275, %v1430
      %1463 = vst.msk [vmem:[%s241 + $0x2] sm:$0x1] %vm275, %v1431
      %1464 = vst.msk [vmem:[%s241 + $0x3] sm:$0x1] %vm275, %v1432
      %1465 = vst.msk [vmem:[%s241 + $0x4] sm:$0x1] %vm275, %v1433
      %1466 = vst.msk [vmem:[%s241 + $0x5] sm:$0x1] %vm275, %v1434
      %1467 = vst.msk [vmem:[%s241 + $0x6] sm:$0x1] %vm275, %v1435
      %1468 = vst.msk [vmem:[%s241 + $0x7] sm:$0x1] %vm275, %v1436
      %1469 = vst.msk [vmem:[%s241 + $0x8] sm:$0x1] %vm275, %v1437
      %1470 = vst.msk [vmem:[%s241 + $0x9] sm:$0x1] %vm275, %v1438
      %1471 = vst.msk [vmem:[%s241 + $0xa] sm:$0x1] %vm275, %v1439
      %1472 = vst.msk [vmem:[%s241 + $0xb] sm:$0x1] %vm275, %v1440
      %1473 = vst.msk [vmem:[%s241 + $0xc] sm:$0x1] %vm275, %v1441
      %1474 = vst.msk [vmem:[%s241 + $0xd] sm:$0x1] %vm275, %v1442
      %1475 = vst.msk [vmem:[%s241 + $0xe] sm:$0x1] %vm275, %v1443
      %1476 = vst.msk [vmem:[%s241 + $0xf] sm:$0x1] %vm275, %v1444
      %1477 = vst.msk [vmem:[%s241 + $0x10] sm:$0x1] %vm275, %v1445
      %1478 = vst.msk [vmem:[%s241 + $0x11] sm:$0x1] %vm275, %v1446
      %1479 = vst.msk [vmem:[%s241 + $0x12] sm:$0x1] %vm275, %v1447
      %1480 = vst.msk [vmem:[%s241 + $0x13] sm:$0x1] %vm275, %v1448
      %1481 = vst.msk [vmem:[%s241 + $0x14] sm:$0x1] %vm275, %v1449
      %1482 = vst.msk [vmem:[%s241 + $0x15] sm:$0x1] %vm275, %v1450
      %1483 = vst.msk [vmem:[%s241 + $0x16] sm:$0x1] %vm275, %v1451
      %1484 = vst.msk [vmem:[%s241 + $0x17] sm:$0x1] %vm275, %v1452
      %1485 = vst.msk [vmem:[%s241 + $0x18] sm:$0x1] %vm275, %v1453
      %1486 = vst.msk [vmem:[%s241 + $0x19] sm:$0x1] %vm275, %v1454
      %1487 = vst.msk [vmem:[%s241 + $0x1a] sm:$0x1] %vm275, %v1455
      %1488 = vst.msk [vmem:[%s241 + $0x1b] sm:$0x1] %vm275, %v1456
      %1489 = vst.msk [vmem:[%s241 + $0x1c] sm:$0x1] %vm275, %v1457
      %1490 = vst.msk [vmem:[%s241 + $0x1d] sm:$0x1] %vm275, %v1458
      %1491 = vst.msk [vmem:[%s241 + $0x1e] sm:$0x1] %vm275, %v1459
      %1492 = vst.msk [vmem:[%s241 + $0x1f] sm:$0x1] %vm275, %v1460
      %s1493 = smul.u32 32, %s19
      %p1494 = scmp.lt.s32.totalorder %s18, 1
      %s1495 = scalar_select %p1494, %s18, 1
      %p1496 = scmp.lt.s32.totalorder %s1493, 31
      %s1497 = scalar_select %p1496, %s1493, 31
      %s1498 = smul.addr %s1495, 32
      %s1499 = sadd.s32 %s1497, %s1498
      %s1500 = scalar_lea.vmem %s3, %s1499
      // Predicated region
      $region33: #{spatial_transformer_forward.11} parent=31 // pred_check
        %p1501 = pneg %p126
      $region34: #{spatial_transformer_forward.11} parent=31 // pred_check_branch
        %1503 = sbr.rel (%p1501) target = $region36
      $region35: #{spatial_transformer_forward.11} parent=31 // pred_region
        %s1504 = smul.u32 32, %s19
      $region36: #{spatial_transformer_forward.11} parent=31 // pred_fallthru
        _
    $region32: #{spatial_transformer_forward.11} parent=5 // pred_fallthru
      _
    %p1505 = scmp.le.s32.totalorder 2, %s9
    // Predicated region
    $region37: #{spatial_transformer_forward.11} parent=5 // pred_check
      %p1506 = pneg %p1505
    $region38: #{spatial_transformer_forward.11} parent=5 // pred_check_branch
      %1508 = sbr.rel (%p1506) target = $region40
    $region39: #{spatial_transformer_forward.11} parent=5 // pred_region
      %s1509 = ssub.s32 %s9, 2
      // Predicated region
      $region41: #{spatial_transformer_forward.11} parent=39 // pred_check
        %p1510 = pneg %p132
      $region42: #{spatial_transformer_forward.11} parent=39 // pred_check_branch
        %1512 = sbr.rel (%p1510) target = $region44
      $region43: #{spatial_transformer_forward.11} parent=39 // pred_region
        %s1513 = smul.u32 32, %s21
        %p1514 = scmp.lt.s32.totalorder %s20, 1
        %s1515 = scalar_select %p1514, %s20, 1
        %p1516 = scmp.lt.s32.totalorder %s1513, 31
        %s1517 = scalar_select %p1516, %s1513, 31
        %s1518 = smul.addr %s1515, 32
        %s1519 = sadd.s32 %s1517, %s1518
        %s1520 = scalar_lea.vmem %s3, %s1519
      $region44: #{spatial_transformer_forward.11} parent=39 // pred_fallthru
        _
    $region40: #{spatial_transformer_forward.11} parent=5 // pred_fallthru
      _
  $region6: #{spatial_transformer_forward.11} parent=0 // loop_footer
    %s13 = sadd.s32 1, %s9
  $region7: #{spatial_transformer_forward.11} parent=0 // loop_footer_branch
    %8 = sbr.rel target = $region3
  $region8: #{spatial_transformer_forward.11} parent=0 // loop_exit
    _

// kernel: spatial_transformer_forward.12
$region0: #{spatial_transformer_forward.12}
  #allocation0 [shape = 'u32[]', space=smem, size = 0x4, offset = 0x4, fixed_abs, tag = 'smem constant byte address 0x4 - core index']
  #allocation1 [shape = 'u32[144,128]{1,0:T(1,128)}', space=vmem, size = 0x12000, scoped, tag = 'internal scratch']
  #allocation2 [shape = 'f32[128,128]{1,0:T(8,128)}', space=vmem, size = 0x10000, scoped, tag = 'scratch operand']
  %s0 = inlined_call_operand.vmem [shape: f32[128,32], index: 0, kind: input, shape index: {}]
  %s1 = inlined_call_operand.vmem [shape: bf16[32,128], index: 1, kind: input, shape index: {}]
  %s2 = inlined_call_operand.vmem [shape: f32[1,128], index: 2, kind: input, shape index: {}]
  %s3 = inlined_call_operand.vmem [shape: f32[128,128], index: 3, kind: output, shape index: {}]
  %s4 = sld [smem:[#allocation0]]
  $region30: #{spatial_transformer_forward.12} parent=0
    _
  %s6 = ssub.s32 1, %s4
  %s7 = scalar_select 0, %s6, %s4
  // Predicated region
  $region2: #{spatial_transformer_forward.12} parent=0 // pred_check
    _
  $region3: #{spatial_transformer_forward.12} parent=0 // pred_check_branch
    %9 = sbr.rel (0) target = $region5
  $region4: #{spatial_transformer_forward.12} parent=0 // pred_region
    _
  $region5: #{spatial_transformer_forward.12} parent=0 // pred_fallthru
    _
  // Predicated region
  $region6: #{spatial_transformer_forward.12} parent=0 // pred_check
    _
  $region7: #{spatial_transformer_forward.12} parent=0 // pred_check_branch
    %11 = sbr.rel (0) target = $region9
  $region8: #{spatial_transformer_forward.12} parent=0 // pred_region
    _
  $region9: #{spatial_transformer_forward.12} parent=0 // pred_fallthru
    _
  // Predicated region
  $region10: #{spatial_transformer_forward.12} parent=0 // pred_check
    _
  $region11: #{spatial_transformer_forward.12} parent=0 // pred_check_branch
    %13 = sbr.rel (0) target = $region13
  $region12: #{spatial_transformer_forward.12} parent=0 // pred_region
    _
  $region13: #{spatial_transformer_forward.12} parent=0 // pred_fallthru
    _
  %p15 = scmp.eq.s32.totalorder 0, 0
  // Predicated region
  $region14: #{spatial_transformer_forward.12} parent=0 // pred_check
    %p16 = pneg %p15
  $region15: #{spatial_transformer_forward.12} parent=0 // pred_check_branch
    %18 = sbr.rel (%p16) target = $region17
  $region16: #{spatial_transformer_forward.12} parent=0 // pred_region
    %19 = vst [vmem:[#allocation2] sm:$0xff] 0.0
    %20 = vst [vmem:[#allocation2 + $0x8] sm:$0xff] 0.0
    %21 = vst [vmem:[#allocation2 + $0x10] sm:$0xff] 0.0
    %22 = vst [vmem:[#allocation2 + $0x18] sm:$0xff] 0.0
    %23 = vst [vmem:[#allocation2 + $0x20] sm:$0xff] 0.0
    %24 = vst [vmem:[#allocation2 + $0x28] sm:$0xff] 0.0
    %25 = vst [vmem:[#allocation2 + $0x30] sm:$0xff] 0.0
    %26 = vst [vmem:[#allocation2 + $0x38] sm:$0xff] 0.0
    %27 = vst [vmem:[#allocation2 + $0x40] sm:$0xff] 0.0
    %28 = vst [vmem:[#allocation2 + $0x48] sm:$0xff] 0.0
    %29 = vst [vmem:[#allocation2 + $0x50] sm:$0xff] 0.0
    %30 = vst [vmem:[#allocation2 + $0x58] sm:$0xff] 0.0
    %31 = vst [vmem:[#allocation2 + $0x60] sm:$0xff] 0.0
    %32 = vst [vmem:[#allocation2 + $0x68] sm:$0xff] 0.0
    %33 = vst [vmem:[#allocation2 + $0x70] sm:$0xff] 0.0
    %34 = vst [vmem:[#allocation2 + $0x78] sm:$0xff] 0.0
  $region17: #{spatial_transformer_forward.12} parent=0 // pred_fallthru
    _
  %v35 = vld [vmem:[%s0] sm:$0xff]
  %v36 = vld [vmem:[%s0 + $0x8] sm:$0xff]
  %v37 = vld [vmem:[%s0 + $0x10] sm:$0xff]
  %v38 = vld [vmem:[%s0 + $0x18] sm:$0xff]
  %v39 = vld [vmem:[%s0 + $0x20] sm:$0xff]
  %v40 = vld [vmem:[%s0 + $0x28] sm:$0xff]
  %v41 = vld [vmem:[%s0 + $0x30] sm:$0xff]
  %v42 = vld [vmem:[%s0 + $0x38] sm:$0xff]
  %v43 = vld [vmem:[%s0 + $0x40] sm:$0xff]
  %v44 = vld [vmem:[%s0 + $0x48] sm:$0xff]
  %v45 = vld [vmem:[%s0 + $0x50] sm:$0xff]
  %v46 = vld [vmem:[%s0 + $0x58] sm:$0xff]
  %v47 = vld [vmem:[%s0 + $0x60] sm:$0xff]
  %v48 = vld [vmem:[%s0 + $0x68] sm:$0xff]
  %v49 = vld [vmem:[%s0 + $0x70] sm:$0xff]
  %v50 = vld [vmem:[%s0 + $0x78] sm:$0xff]
  %v51 = vld [vmem:[#allocation2] sm:$0xff]
  %v52 = vld [vmem:[#allocation2 + $0x8] sm:$0xff]
  %v53 = vld [vmem:[#allocation2 + $0x10] sm:$0xff]
  %v54 = vld [vmem:[#allocation2 + $0x18] sm:$0xff]
  %v55 = vld [vmem:[#allocation2 + $0x20] sm:$0xff]
  %v56 = vld [vmem:[#allocation2 + $0x28] sm:$0xff]
  %v57 = vld [vmem:[#allocation2 + $0x30] sm:$0xff]
  %v58 = vld [vmem:[#allocation2 + $0x38] sm:$0xff]
  %v59 = vld [vmem:[#allocation2 + $0x40] sm:$0xff]
  %v60 = vld [vmem:[#allocation2 + $0x48] sm:$0xff]
  %v61 = vld [vmem:[#allocation2 + $0x50] sm:$0xff]
  %v62 = vld [vmem:[#allocation2 + $0x58] sm:$0xff]
  %v63 = vld [vmem:[#allocation2 + $0x60] sm:$0xff]
  %v64 = vld [vmem:[#allocation2 + $0x68] sm:$0xff]
  %v65 = vld [vmem:[#allocation2 + $0x70] sm:$0xff]
  %v66 = vld [vmem:[#allocation2 + $0x78] sm:$0xff]
  %v67 = vpack.c.bf16 %v36, %v35
  %v68 = vpack.c.bf16 %v38, %v37
  %v69 = vpack.c.bf16 %v40, %v39
  %v70 = vpack.c.bf16 %v42, %v41
  %v71 = vpack.c.bf16 %v44, %v43
  %v72 = vpack.c.bf16 %v46, %v45
  %v73 = vpack.c.bf16 %v48, %v47
  %v74 = vpack.c.bf16 %v50, %v49
  %v75 = vld [vmem:[%s1] sm:$0xf]
  %v76 = vld [vmem:[%s1 + $0x4] sm:$0xf]
  %v77 = vld [vmem:[%s1 + $0x8] sm:$0xf]
  %v78 = vld [vmem:[%s1 + $0xc] sm:$0xf]
  %v83 = vunpack.c.l.b16 %v75
  %v84 = vunpack.c.l.b16 %v76
  %v85 = vunpack.c.l.b16 %v77
  %v86 = vunpack.c.l.b16 %v78
  %v87 = vpack.c.b16 %v84, %v83
  %v88 = vpack.c.b16 %v86, %v85
  %vm91 = vcmask 261120
  %v93 = vsel %vm91, %v67, 0
  %v96 = vsel %vm91, %v68, 0
  %v99 = vsel %vm91, %v69, 0
  %v102 = vsel %vm91, %v70, 0
  %v105 = vsel %vm91, %v71, 0
  %v108 = vsel %vm91, %v72, 0
  %v111 = vsel %vm91, %v73, 0
  %v114 = vsel %vm91, %v74, 0
  %116 = vmatprep.subr.bf16.mxu0 0
  %117 = vmatpush1.bf16.msra.mxu0 %v87
  %118 = vmatprep.subr.bf16.mxu0 0
  %119 = vmatpush1.bf16.msra.mxu0 %v88
  %120 = vmatprep.subr.bf16.mxu0 0
  %121 = vmatpush1.bf16.msra.mxu0 0
  %122 = vmatprep.subr.bf16.mxu0 0
  %123 = vmatpush1.bf16.msra.mxu0 0
  %124 = vmatprep.subr.bf16.mxu0 0
  %125 = vmatpush1.bf16.msra.mxu0 0
  %126 = vmatprep.subr.bf16.mxu0 0
  %127 = vmatpush1.bf16.msra.mxu0 0
  %128 = vmatprep.subr.bf16.mxu0 0
  %129 = vmatpush1.bf16.msra.mxu0 0
  %130 = vmatprep.subr.bf16.mxu0 0
  %131 = vmatpush1.bf16.msra.mxu0 0
  %132 = vmatprep.subr.bf16.mxu0 0
  %133 = vmatpush1.bf16.msra.mxu0 0
  %134 = vmatprep.subr.bf16.mxu0 0
  %135 = vmatpush1.bf16.msra.mxu0 0
  %136 = vmatprep.subr.bf16.mxu0 0
  %137 = vmatpush1.bf16.msra.mxu0 0
  %138 = vmatprep.subr.bf16.mxu0 0
  %139 = vmatpush1.bf16.msra.mxu0 0
  %140 = vmatprep.subr.bf16.mxu0 0
  %141 = vmatpush1.bf16.msra.mxu0 0
  %142 = vmatprep.subr.bf16.mxu0 0
  %143 = vmatpush1.bf16.msra.mxu0 0
  %144 = vmatprep.subr.bf16.mxu0 0
  %145 = vmatpush1.bf16.msra.mxu0 0
  %146 = vmatprep.subr.bf16.mxu0 0
  %147 = vmatpush1.bf16.msra.mxu0 0
  %148 = vmatprep.mubr.bf16.mxu0 0
  %149 = vmatmul.mubr.bf16.gmra.mrb[0].mxu0 %v93
  %v150 = vpop.f32.mrb[0].mxu0
  %v151 = vadd.f32 0.0, %v150
  %v152 = vpop.f32.mrb[0].mxu0
  %v153 = vpop.f32.mrb[0].mxu0
  %v154 = vadd.f32 0.0, %v153
  %v155 = vpop.f32.mrb[0].mxu0
  %156 = vmatprep.mubr.bf16.mxu0 0
  %157 = vmatmul.mubr.bf16.gmra.mrb[0].mxu0 %v96
  %v158 = vpop.f32.mrb[0].mxu0
  %v159 = vadd.f32 0.0, %v158
  %v160 = vpop.f32.mrb[0].mxu0
  %v161 = vpop.f32.mrb[0].mxu0
  %v162 = vadd.f32 0.0, %v161
  %v163 = vpop.f32.mrb[0].mxu0
  %164 = vmatprep.mubr.bf16.mxu0 0
  %165 = vmatmul.mubr.bf16.gmra.mrb[0].mxu0 %v99
  %v166 = vpop.f32.mrb[0].mxu0
  %v167 = vadd.f32 0.0, %v166
  %v168 = vpop.f32.mrb[0].mxu0
  %v169 = vpop.f32.mrb[0].mxu0
  %v170 = vadd.f32 0.0, %v169
  %v171 = vpop.f32.mrb[0].mxu0
  %172 = vmatprep.mubr.bf16.mxu0 0
  %173 = vmatmul.mubr.bf16.gmra.mrb[0].mxu0 %v102
  %v174 = vpop.f32.mrb[0].mxu0
  %v175 = vadd.f32 0.0, %v174
  %v176 = vpop.f32.mrb[0].mxu0
  %v177 = vpop.f32.mrb[0].mxu0
  %v178 = vadd.f32 0.0, %v177
  %v179 = vpop.f32.mrb[0].mxu0
  %180 = vmatprep.mubr.bf16.mxu0 0
  %181 = vmatmul.mubr.bf16.gmra.mrb[0].mxu0 %v105
  %v182 = vpop.f32.mrb[0].mxu0
  %v183 = vadd.f32 0.0, %v182
  %v184 = vpop.f32.mrb[0].mxu0
  %v185 = vpop.f32.mrb[0].mxu0
  %v186 = vadd.f32 0.0, %v185
  %v187 = vpop.f32.mrb[0].mxu0
  %188 = vmatprep.mubr.bf16.mxu0 0
  %189 = vmatmul.mubr.bf16.gmra.mrb[0].mxu0 %v108
  %v190 = vpop.f32.mrb[0].mxu0
  %v191 = vadd.f32 0.0, %v190
  %v192 = vpop.f32.mrb[0].mxu0
  %v193 = vpop.f32.mrb[0].mxu0
  %v194 = vadd.f32 0.0, %v193
  %v195 = vpop.f32.mrb[0].mxu0
  %196 = vmatprep.mubr.bf16.mxu0 0
  %197 = vmatmul.mubr.bf16.gmra.mrb[0].mxu0 %v111
  %v198 = vpop.f32.mrb[0].mxu0
  %v199 = vadd.f32 0.0, %v198
  %v200 = vpop.f32.mrb[0].mxu0
  %v201 = vpop.f32.mrb[0].mxu0
  %v202 = vadd.f32 0.0, %v201
  %v203 = vpop.f32.mrb[0].mxu0
  %204 = vmatprep.mubr.bf16.mxu0 0
  %205 = vmatmul.mubr.bf16.gmra.mrb[0].mxu0 %v114
  %v206 = vpop.f32.mrb[0].mxu0
  %v207 = vadd.f32 0.0, %v206
  %v208 = vpop.f32.mrb[0].mxu0
  %v209 = vpop.f32.mrb[0].mxu0
  %v210 = vadd.f32 0.0, %v209
  %v211 = vpop.f32.mrb[0].mxu0
  %212 = vdwg.mxu0
  %v213 = vadd.f32 %v51, %v151
  %v214 = vadd.f32 %v52, %v154
  %v215 = vadd.f32 %v53, %v159
  %v216 = vadd.f32 %v54, %v162
  %v217 = vadd.f32 %v55, %v167
  %v218 = vadd.f32 %v56, %v170
  %v219 = vadd.f32 %v57, %v175
  %v220 = vadd.f32 %v58, %v178
  %v221 = vadd.f32 %v59, %v183
  %v222 = vadd.f32 %v60, %v186
  %v223 = vadd.f32 %v61, %v191
  %v224 = vadd.f32 %v62, %v194
  %v225 = vadd.f32 %v63, %v199
  %v226 = vadd.f32 %v64, %v202
  %v227 = vadd.f32 %v65, %v207
  %v228 = vadd.f32 %v66, %v210
  %229 = vst [vmem:[#allocation2] sm:$0xff] %v213
  %230 = vst [vmem:[#allocation2 + $0x8] sm:$0xff] %v214
  %231 = vst [vmem:[#allocation2 + $0x10] sm:$0xff] %v215
  %232 = vst [vmem:[#allocation2 + $0x18] sm:$0xff] %v216
  %233 = vst [vmem:[#allocation2 + $0x20] sm:$0xff] %v217
  %234 = vst [vmem:[#allocation2 + $0x28] sm:$0xff] %v218
  %235 = vst [vmem:[#allocation2 + $0x30] sm:$0xff] %v219
  %236 = vst [vmem:[#allocation2 + $0x38] sm:$0xff] %v220
  %237 = vst [vmem:[#allocation2 + $0x40] sm:$0xff] %v221
  %238 = vst [vmem:[#allocation2 + $0x48] sm:$0xff] %v222
  %239 = vst [vmem:[#allocation2 + $0x50] sm:$0xff] %v223
  %240 = vst [vmem:[#allocation2 + $0x58] sm:$0xff] %v224
  %241 = vst [vmem:[#allocation2 + $0x60] sm:$0xff] %v225
  %242 = vst [vmem:[#allocation2 + $0x68] sm:$0xff] %v226
  %243 = vst [vmem:[#allocation2 + $0x70] sm:$0xff] %v227
  %244 = vst [vmem:[#allocation2 + $0x78] sm:$0xff] %v228
  // Predicated region
  $region18: #{spatial_transformer_forward.12} parent=0 // pred_check
    %p245 = pneg %p15
  $region19: #{spatial_transformer_forward.12} parent=0 // pred_check_branch
    %247 = sbr.rel (%p245) target = $region21
  $region20: #{spatial_transformer_forward.12} parent=0 // pred_region
    %v248 = vld [vmem:[#allocation2] sm:$0xff]
    %v249 = vld [vmem:[#allocation2 + $0x8] sm:$0xff]
    %v250 = vld [vmem:[#allocation2 + $0x10] sm:$0xff]
    %v251 = vld [vmem:[#allocation2 + $0x18] sm:$0xff]
    %v252 = vld [vmem:[#allocation2 + $0x20] sm:$0xff]
    %v253 = vld [vmem:[#allocation2 + $0x28] sm:$0xff]
    %v254 = vld [vmem:[#allocation2 + $0x30] sm:$0xff]
    %v255 = vld [vmem:[#allocation2 + $0x38] sm:$0xff]
    %v256 = vld [vmem:[#allocation2 + $0x40] sm:$0xff]
    %v257 = vld [vmem:[#allocation2 + $0x48] sm:$0xff]
    %v258 = vld [vmem:[#allocation2 + $0x50] sm:$0xff]
    %v259 = vld [vmem:[#allocation2 + $0x58] sm:$0xff]
    %v260 = vld [vmem:[#allocation2 + $0x60] sm:$0xff]
    %v261 = vld [vmem:[#allocation2 + $0x68] sm:$0xff]
    %v262 = vld [vmem:[#allocation2 + $0x70] sm:$0xff]
    %v263 = vld [vmem:[#allocation2 + $0x78] sm:$0xff]
    %v264 = vld [vmem:[%s2] sm:$0x1]
    %v266 = vlaneseq
    %v267 = vshrl.u32 %v266, 7
    %v268 = vsub.s32 0, %v267
    %v269 = vrot.slane %v264, %v268
    %v271 = vadd.f32 %v248, %v269
    %v272 = vadd.f32 %v249, %v269
    %v273 = vadd.f32 %v250, %v269
    %v274 = vadd.f32 %v251, %v269
    %v275 = vadd.f32 %v252, %v269
    %v276 = vadd.f32 %v253, %v269
    %v277 = vadd.f32 %v254, %v269
    %v278 = vadd.f32 %v255, %v269
    %v279 = vadd.f32 %v256, %v269
    %v280 = vadd.f32 %v257, %v269
    %v281 = vadd.f32 %v258, %v269
    %v282 = vadd.f32 %v259, %v269
    %v283 = vadd.f32 %v260, %v269
    %v284 = vadd.f32 %v261, %v269
    %v285 = vadd.f32 %v262, %v269
    %v286 = vadd.f32 %v263, %v269
    %287 = vst [vmem:[%s3] sm:$0xff] %v271
    %288 = vst [vmem:[%s3 + $0x8] sm:$0xff] %v272
    %289 = vst [vmem:[%s3 + $0x10] sm:$0xff] %v273
    %290 = vst [vmem:[%s3 + $0x18] sm:$0xff] %v274
    %291 = vst [vmem:[%s3 + $0x20] sm:$0xff] %v275
    %292 = vst [vmem:[%s3 + $0x28] sm:$0xff] %v276
    %293 = vst [vmem:[%s3 + $0x30] sm:$0xff] %v277
    %294 = vst [vmem:[%s3 + $0x38] sm:$0xff] %v278
    %295 = vst [vmem:[%s3 + $0x40] sm:$0xff] %v279
    %296 = vst [vmem:[%s3 + $0x48] sm:$0xff] %v280
    %297 = vst [vmem:[%s3 + $0x50] sm:$0xff] %v281
    %298 = vst [vmem:[%s3 + $0x58] sm:$0xff] %v282
    %299 = vst [vmem:[%s3 + $0x60] sm:$0xff] %v283
    %300 = vst [vmem:[%s3 + $0x68] sm:$0xff] %v284
    %301 = vst [vmem:[%s3 + $0x70] sm:$0xff] %v285
    %302 = vst [vmem:[%s3 + $0x78] sm:$0xff] %v286
  $region21: #{spatial_transformer_forward.12} parent=0 // pred_fallthru
    _
  // Predicated region
  $region22: #{spatial_transformer_forward.12} parent=0 // pred_check
    _
  $region23: #{spatial_transformer_forward.12} parent=0 // pred_check_branch
    %304 = sbr.rel (0) target = $region25
  $region24: #{spatial_transformer_forward.12} parent=0 // pred_region
    _
  $region25: #{spatial_transformer_forward.12} parent=0 // pred_fallthru
    _
  // Predicated region
  $region26: #{spatial_transformer_forward.12} parent=0 // pred_check
    _
  $region27: #{spatial_transformer_forward.12} parent=0 // pred_check_branch
    %306 = sbr.rel (0) target = $region29
  $region28: #{spatial_transformer_forward.12} parent=0 // pred_region
    _
  $region29: #{spatial_transformer_forward.12} parent=0 // pred_fallthru
    _

// kernel: spatial_transformer_forward.13
$region0: #{spatial_transformer_forward.13}
  #allocation0 [shape = 'u32[]', space=smem, size = 0x4, offset = 0x4, fixed_abs, tag = 'smem constant byte address 0x4 - core index']
  #allocation1 [shape = 'u32[144,128]{1,0:T(1,128)}', space=vmem, size = 0x12000, scoped, tag = 'internal scratch']
  #allocation2 [shape = 'f32[128,384]{1,0:T(8,128)}', space=vmem, size = 0x30000, scoped, tag = 'scratch operand']
  %s0 = inlined_call_operand.vmem [shape: f32[128,128], index: 0, kind: input, shape index: {}]
  %s1 = inlined_call_operand.vmem [shape: bf16[128,384], index: 1, kind: input, shape index: {}]
  %s2 = inlined_call_operand.vmem [shape: f32[1,128], index: 2, kind: input, shape index: {}]
  %s3 = inlined_call_operand.vmem [shape: f32[1,128], index: 3, kind: input, shape index: {}]
  %s4 = inlined_call_operand.vmem [shape: bf16[128,384], index: 4, kind: output, shape index: {}]
  %s5 = sld [smem:[#allocation0]]
  $region34: #{spatial_transformer_forward.13} parent=0
    _
  %s7 = ssub.s32 1, %s5
  %s8 = scalar_select 0, %s7, %s5
  // Predicated region
  $region2: #{spatial_transformer_forward.13} parent=0 // pred_check
    _
  $region3: #{spatial_transformer_forward.13} parent=0 // pred_check_branch
    %10 = sbr.rel (0) target = $region5
  $region4: #{spatial_transformer_forward.13} parent=0 // pred_region
    _
  $region5: #{spatial_transformer_forward.13} parent=0 // pred_fallthru
    _
  // Predicated region
  $region6: #{spatial_transformer_forward.13} parent=0 // pred_check
    _
  $region7: #{spatial_transformer_forward.13} parent=0 // pred_check_branch
    %12 = sbr.rel (0) target = $region9
  $region8: #{spatial_transformer_forward.13} parent=0 // pred_region
    _
  $region9: #{spatial_transformer_forward.13} parent=0 // pred_fallthru
    _
  // Predicated region
  $region10: #{spatial_transformer_forward.13} parent=0 // pred_check
    _
  $region11: #{spatial_transformer_forward.13} parent=0 // pred_check_branch
    %14 = sbr.rel (0) target = $region13
  $region12: #{spatial_transformer_forward.13} parent=0 // pred_region
    _
  $region13: #{spatial_transformer_forward.13} parent=0 // pred_fallthru
    _
  // Predicated region
  $region14: #{spatial_transformer_forward.13} parent=0 // pred_check
    _
  $region15: #{spatial_transformer_forward.13} parent=0 // pred_check_branch
    %16 = sbr.rel (0) target = $region17
  $region16: #{spatial_transformer_forward.13} parent=0 // pred_region
    _
  $region17: #{spatial_transformer_forward.13} parent=0 // pred_fallthru
    _
  %p18 = scmp.eq.s32.totalorder 0, 0
  // Predicated region
  $region18: #{spatial_transformer_forward.13} parent=0 // pred_check
    %p19 = pneg %p18
  $region19: #{spatial_transformer_forward.13} parent=0 // pred_check_branch
    %21 = sbr.rel (%p19) target = $region21
  $region20: #{spatial_transformer_forward.13} parent=0 // pred_region
    %22 = vst [vmem:[#allocation2] sm:$0xff] 0.0
    %23 = vst [vmem:[#allocation2 + $0x8] sm:$0xff] 0.0
    %24 = vst [vmem:[#allocation2 + $0x10] sm:$0xff] 0.0
    %25 = vst [vmem:[#allocation2 + $0x18] sm:$0xff] 0.0
    %26 = vst [vmem:[#allocation2 + $0x20] sm:$0xff] 0.0
    %27 = vst [vmem:[#allocation2 + $0x28] sm:$0xff] 0.0
    %28 = vst [vmem:[#allocation2 + $0x30] sm:$0xff] 0.0
    %29 = vst [vmem:[#allocation2 + $0x38] sm:$0xff] 0.0
    %30 = vst [vmem:[#allocation2 + $0x40] sm:$0xff] 0.0
    %31 = vst [vmem:[#allocation2 + $0x48] sm:$0xff] 0.0
    %32 = vst [vmem:[#allocation2 + $0x50] sm:$0xff] 0.0
    %33 = vst [vmem:[#allocation2 + $0x58] sm:$0xff] 0.0
    %34 = vst [vmem:[#allocation2 + $0x60] sm:$0xff] 0.0
    %35 = vst [vmem:[#allocation2 + $0x68] sm:$0xff] 0.0
    %36 = vst [vmem:[#allocation2 + $0x70] sm:$0xff] 0.0
    %37 = vst [vmem:[#allocation2 + $0x78] sm:$0xff] 0.0
    %38 = vst [vmem:[#allocation2 + $0x80] sm:$0xff] 0.0
    %39 = vst [vmem:[#allocation2 + $0x88] sm:$0xff] 0.0
    %40 = vst [vmem:[#allocation2 + $0x90] sm:$0xff] 0.0
    %41 = vst [vmem:[#allocation2 + $0x98] sm:$0xff] 0.0
    %42 = vst [vmem:[#allocation2 + $0xa0] sm:$0xff] 0.0
    %43 = vst [vmem:[#allocation2 + $0xa8] sm:$0xff] 0.0
    %44 = vst [vmem:[#allocation2 + $0xb0] sm:$0xff] 0.0
    %45 = vst [vmem:[#allocation2 + $0xb8] sm:$0xff] 0.0
    %46 = vst [vmem:[#allocation2 + $0xc0] sm:$0xff] 0.0
    %47 = vst [vmem:[#allocation2 + $0xc8] sm:$0xff] 0.0
    %48 = vst [vmem:[#allocation2 + $0xd0] sm:$0xff] 0.0
    %49 = vst [vmem:[#allocation2 + $0xd8] sm:$0xff] 0.0
    %50 = vst [vmem:[#allocation2 + $0xe0] sm:$0xff] 0.0
    %51 = vst [vmem:[#allocation2 + $0xe8] sm:$0xff] 0.0
    %52 = vst [vmem:[#allocation2 + $0xf0] sm:$0xff] 0.0
    %53 = vst [vmem:[#allocation2 + $0xf8] sm:$0xff] 0.0
    %54 = vst [vmem:[#allocation2 + $0x100] sm:$0xff] 0.0
    %55 = vst [vmem:[#allocation2 + $0x108] sm:$0xff] 0.0
    %56 = vst [vmem:[#allocation2 + $0x110] sm:$0xff] 0.0
    %57 = vst [vmem:[#allocation2 + $0x118] sm:$0xff] 0.0
    %58 = vst [vmem:[#allocation2 + $0x120] sm:$0xff] 0.0
    %59 = vst [vmem:[#allocation2 + $0x128] sm:$0xff] 0.0
    %60 = vst [vmem:[#allocation2 + $0x130] sm:$0xff] 0.0
    %61 = vst [vmem:[#allocation2 + $0x138] sm:$0xff] 0.0
    %62 = vst [vmem:[#allocation2 + $0x140] sm:$0xff] 0.0
    %63 = vst [vmem:[#allocation2 + $0x148] sm:$0xff] 0.0
    %64 = vst [vmem:[#allocation2 + $0x150] sm:$0xff] 0.0
    %65 = vst [vmem:[#allocation2 + $0x158] sm:$0xff] 0.0
    %66 = vst [vmem:[#allocation2 + $0x160] sm:$0xff] 0.0
    %67 = vst [vmem:[#allocation2 + $0x168] sm:$0xff] 0.0
    %68 = vst [vmem:[#allocation2 + $0x170] sm:$0xff] 0.0
    %69 = vst [vmem:[#allocation2 + $0x178] sm:$0xff] 0.0
  $region21: #{spatial_transformer_forward.13} parent=0 // pred_fallthru
    _
  %v70 = vld [vmem:[%s0] sm:$0xff]
  %v71 = vld [vmem:[%s0 + $0x8] sm:$0xff]
  %v72 = vld [vmem:[%s0 + $0x10] sm:$0xff]
  %v73 = vld [vmem:[%s0 + $0x18] sm:$0xff]
  %v74 = vld [vmem:[%s0 + $0x20] sm:$0xff]
  %v75 = vld [vmem:[%s0 + $0x28] sm:$0xff]
  %v76 = vld [vmem:[%s0 + $0x30] sm:$0xff]
  %v77 = vld [vmem:[%s0 + $0x38] sm:$0xff]
  %v78 = vld [vmem:[%s0 + $0x40] sm:$0xff]
  %v79 = vld [vmem:[%s0 + $0x48] sm:$0xff]
  %v80 = vld [vmem:[%s0 + $0x50] sm:$0xff]
  %v81 = vld [vmem:[%s0 + $0x58] sm:$0xff]
  %v82 = vld [vmem:[%s0 + $0x60] sm:$0xff]
  %v83 = vld [vmem:[%s0 + $0x68] sm:$0xff]
  %v84 = vld [vmem:[%s0 + $0x70] sm:$0xff]
  %v85 = vld [vmem:[%s0 + $0x78] sm:$0xff]
  %86 = vadd.xlane.f32.xlu0 %v70
  %v87 = vpop.xlane.xlu0 %86
  %88 = vadd.xlane.f32.xlu0 %v71
  %v89 = vpop.xlane.xlu0 %88
  %90 = vadd.xlane.f32.xlu0 %v72
  %v91 = vpop.xlane.xlu0 %90
  %92 = vadd.xlane.f32.xlu0 %v73
  %v93 = vpop.xlane.xlu0 %92
  %94 = vadd.xlane.f32.xlu0 %v74
  %v95 = vpop.xlane.xlu0 %94
  %96 = vadd.xlane.f32.xlu0 %v75
  %v97 = vpop.xlane.xlu0 %96
  %98 = vadd.xlane.f32.xlu0 %v76
  %v99 = vpop.xlane.xlu0 %98
  %100 = vadd.xlane.f32.xlu0 %v77
  %v101 = vpop.xlane.xlu0 %100
  %102 = vadd.xlane.f32.xlu0 %v78
  %v103 = vpop.xlane.xlu0 %102
  %104 = vadd.xlane.f32.xlu0 %v79
  %v105 = vpop.xlane.xlu0 %104
  %106 = vadd.xlane.f32.xlu0 %v80
  %v107 = vpop.xlane.xlu0 %106
  %108 = vadd.xlane.f32.xlu0 %v81
  %v109 = vpop.xlane.xlu0 %108
  %110 = vadd.xlane.f32.xlu0 %v82
  %v111 = vpop.xlane.xlu0 %110
  %112 = vadd.xlane.f32.xlu0 %v83
  %v113 = vpop.xlane.xlu0 %112
  %114 = vadd.xlane.f32.xlu0 %v84
  %v115 = vpop.xlane.xlu0 %114
  %116 = vadd.xlane.f32.xlu0 %v85
  %v117 = vpop.xlane.xlu0 %116
  %v118 = vrcp.pop 128.0
  %v119 = vmul.f32 %v87, %v118
  %v120 = vmul.f32 %v89, %v118
  %v121 = vmul.f32 %v91, %v118
  %v122 = vmul.f32 %v93, %v118
  %v123 = vmul.f32 %v95, %v118
  %v124 = vmul.f32 %v97, %v118
  %v125 = vmul.f32 %v99, %v118
  %v126 = vmul.f32 %v101, %v118
  %v127 = vmul.f32 %v103, %v118
  %v128 = vmul.f32 %v105, %v118
  %v129 = vmul.f32 %v107, %v118
  %v130 = vmul.f32 %v109, %v118
  %v131 = vmul.f32 %v111, %v118
  %v132 = vmul.f32 %v113, %v118
  %v133 = vmul.f32 %v115, %v118
  %v134 = vmul.f32 %v117, %v118
  %v135 = vsub.f32 %v70, %v119
  %v136 = vsub.f32 %v71, %v120
  %v137 = vsub.f32 %v72, %v121
  %v138 = vsub.f32 %v73, %v122
  %v139 = vsub.f32 %v74, %v123
  %v140 = vsub.f32 %v75, %v124
  %v141 = vsub.f32 %v76, %v125
  %v142 = vsub.f32 %v77, %v126
  %v143 = vsub.f32 %v78, %v127
  %v144 = vsub.f32 %v79, %v128
  %v145 = vsub.f32 %v80, %v129
  %v146 = vsub.f32 %v81, %v130
  %v147 = vsub.f32 %v82, %v131
  %v148 = vsub.f32 %v83, %v132
  %v149 = vsub.f32 %v84, %v133
  %v150 = vsub.f32 %v85, %v134
  %v151 = vmul.f32 %v135, %v135
  %v152 = vmul.f32 %v136, %v136
  %v153 = vmul.f32 %v137, %v137
  %v154 = vmul.f32 %v138, %v138
  %v155 = vmul.f32 %v139, %v139
  %v156 = vmul.f32 %v140, %v140
  %v157 = vmul.f32 %v141, %v141
  %v158 = vmul.f32 %v142, %v142
  %v159 = vmul.f32 %v143, %v143
  %v160 = vmul.f32 %v144, %v144
  %v161 = vmul.f32 %v145, %v145
  %v162 = vmul.f32 %v146, %v146
  %v163 = vmul.f32 %v147, %v147
  %v164 = vmul.f32 %v148, %v148
  %v165 = vmul.f32 %v149, %v149
  %v166 = vmul.f32 %v150, %v150
  %167 = vadd.xlane.f32.xlu0 %v151
  %v168 = vpop.xlane.xlu0 %167
  %169 = vadd.xlane.f32.xlu0 %v152
  %v170 = vpop.xlane.xlu0 %169
  %171 = vadd.xlane.f32.xlu0 %v153
  %v172 = vpop.xlane.xlu0 %171
  %173 = vadd.xlane.f32.xlu0 %v154
  %v174 = vpop.xlane.xlu0 %173
  %175 = vadd.xlane.f32.xlu0 %v155
  %v176 = vpop.xlane.xlu0 %175
  %177 = vadd.xlane.f32.xlu0 %v156
  %v178 = vpop.xlane.xlu0 %177
  %179 = vadd.xlane.f32.xlu0 %v157
  %v180 = vpop.xlane.xlu0 %179
  %181 = vadd.xlane.f32.xlu0 %v158
  %v182 = vpop.xlane.xlu0 %181
  %183 = vadd.xlane.f32.xlu0 %v159
  %v184 = vpop.xlane.xlu0 %183
  %185 = vadd.xlane.f32.xlu0 %v160
  %v186 = vpop.xlane.xlu0 %185
  %187 = vadd.xlane.f32.xlu0 %v161
  %v188 = vpop.xlane.xlu0 %187
  %189 = vadd.xlane.f32.xlu0 %v162
  %v190 = vpop.xlane.xlu0 %189
  %191 = vadd.xlane.f32.xlu0 %v163
  %v192 = vpop.xlane.xlu0 %191
  %193 = vadd.xlane.f32.xlu0 %v164
  %v194 = vpop.xlane.xlu0 %193
  %195 = vadd.xlane.f32.xlu0 %v165
  %v196 = vpop.xlane.xlu0 %195
  %197 = vadd.xlane.f32.xlu0 %v166
  %v198 = vpop.xlane.xlu0 %197
  %v199 = vmul.f32 %v168, %v118
  %v200 = vmul.f32 %v170, %v118
  %v201 = vmul.f32 %v172, %v118
  %v202 = vmul.f32 %v174, %v118
  %v203 = vmul.f32 %v176, %v118
  %v204 = vmul.f32 %v178, %v118
  %v205 = vmul.f32 %v180, %v118
  %v206 = vmul.f32 %v182, %v118
  %v207 = vmul.f32 %v184, %v118
  %v208 = vmul.f32 %v186, %v118
  %v209 = vmul.f32 %v188, %v118
  %v210 = vmul.f32 %v190, %v118
  %v211 = vmul.f32 %v192, %v118
  %v212 = vmul.f32 %v194, %v118
  %v213 = vmul.f32 %v196, %v118
  %v214 = vmul.f32 %v198, %v118
  %v215 = vadd.f32 %v199, 1e-05
  %v216 = vadd.f32 %v200, 1e-05
  %v217 = vadd.f32 %v201, 1e-05
  %v218 = vadd.f32 %v202, 1e-05
  %v219 = vadd.f32 %v203, 1e-05
  %v220 = vadd.f32 %v204, 1e-05
  %v221 = vadd.f32 %v205, 1e-05
  %v222 = vadd.f32 %v206, 1e-05
  %v223 = vadd.f32 %v207, 1e-05
  %v224 = vadd.f32 %v208, 1e-05
  %v225 = vadd.f32 %v209, 1e-05
  %v226 = vadd.f32 %v210, 1e-05
  %v227 = vadd.f32 %v211, 1e-05
  %v228 = vadd.f32 %v212, 1e-05
  %v229 = vadd.f32 %v213, 1e-05
  %v230 = vadd.f32 %v214, 1e-05
  %v231 = vrsqrt.pop %v215
  %v232 = vrsqrt.pop %v216
  %v233 = vrsqrt.pop %v217
  %v234 = vrsqrt.pop %v218
  %v235 = vrsqrt.pop %v219
  %v236 = vrsqrt.pop %v220
  %v237 = vrsqrt.pop %v221
  %v238 = vrsqrt.pop %v222
  %v239 = vrsqrt.pop %v223
  %v240 = vrsqrt.pop %v224
  %v241 = vrsqrt.pop %v225
  %v242 = vrsqrt.pop %v226
  %v243 = vrsqrt.pop %v227
  %v244 = vrsqrt.pop %v228
  %v245 = vrsqrt.pop %v229
  %v246 = vrsqrt.pop %v230
  %v247 = vmul.f32 %v135, %v231
  %v248 = vmul.f32 %v136, %v232
  %v249 = vmul.f32 %v137, %v233
  %v250 = vmul.f32 %v138, %v234
  %v251 = vmul.f32 %v139, %v235
  %v252 = vmul.f32 %v140, %v236
  %v253 = vmul.f32 %v141, %v237
  %v254 = vmul.f32 %v142, %v238
  %v255 = vmul.f32 %v143, %v239
  %v256 = vmul.f32 %v144, %v240
  %v257 = vmul.f32 %v145, %v241
  %v258 = vmul.f32 %v146, %v242
  %v259 = vmul.f32 %v147, %v243
  %v260 = vmul.f32 %v148, %v244
  %v261 = vmul.f32 %v149, %v245
  %v262 = vmul.f32 %v150, %v246
  %v263 = vld [vmem:[%s2] sm:$0x1]
  %v265 = vlaneseq
  %v266 = vshrl.u32 %v265, 7
  %v267 = vsub.s32 0, %v266
  %v268 = vrot.slane %v263, %v267
  %v270 = vmul.f32 %v247, %v268
  %v271 = vmul.f32 %v248, %v268
  %v272 = vmul.f32 %v249, %v268
  %v273 = vmul.f32 %v250, %v268
  %v274 = vmul.f32 %v251, %v268
  %v275 = vmul.f32 %v252, %v268
  %v276 = vmul.f32 %v253, %v268
  %v277 = vmul.f32 %v254, %v268
  %v278 = vmul.f32 %v255, %v268
  %v279 = vmul.f32 %v256, %v268
  %v280 = vmul.f32 %v257, %v268
  %v281 = vmul.f32 %v258, %v268
  %v282 = vmul.f32 %v259, %v268
  %v283 = vmul.f32 %v260, %v268
  %v284 = vmul.f32 %v261, %v268
  %v285 = vmul.f32 %v262, %v268
  %v286 = vld [vmem:[%s3] sm:$0x1]
  %v288 = vlaneseq
  %v289 = vshrl.u32 %v288, 7
  %v290 = vsub.s32 0, %v289
  %v291 = vrot.slane %v286, %v290
  %v293 = vadd.f32 %v270, %v291
  %v294 = vadd.f32 %v271, %v291
  %v295 = vadd.f32 %v272, %v291
  %v296 = vadd.f32 %v273, %v291
  %v297 = vadd.f32 %v274, %v291
  %v298 = vadd.f32 %v275, %v291
  %v299 = vadd.f32 %v276, %v291
  %v300 = vadd.f32 %v277, %v291
  %v301 = vadd.f32 %v278, %v291
  %v302 = vadd.f32 %v279, %v291
  %v303 = vadd.f32 %v280, %v291
  %v304 = vadd.f32 %v281, %v291
  %v305 = vadd.f32 %v282, %v291
  %v306 = vadd.f32 %v283, %v291
  %v307 = vadd.f32 %v284, %v291
  %v308 = vadd.f32 %v285, %v291
  %v309 = vld [vmem:[#allocation2] sm:$0xff]
  %v310 = vld [vmem:[#allocation2 + $0x8] sm:$0xff]
  %v311 = vld [vmem:[#allocation2 + $0x10] sm:$0xff]
  %v312 = vld [vmem:[#allocation2 + $0x18] sm:$0xff]
  %v313 = vld [vmem:[#allocation2 + $0x20] sm:$0xff]
  %v314 = vld [vmem:[#allocation2 + $0x28] sm:$0xff]
  %v315 = vld [vmem:[#allocation2 + $0x30] sm:$0xff]
  %v316 = vld [vmem:[#allocation2 + $0x38] sm:$0xff]
  %v317 = vld [vmem:[#allocation2 + $0x40] sm:$0xff]
  %v318 = vld [vmem:[#allocation2 + $0x48] sm:$0xff]
  %v319 = vld [vmem:[#allocation2 + $0x50] sm:$0xff]
  %v320 = vld [vmem:[#allocation2 + $0x58] sm:$0xff]
  %v321 = vld [vmem:[#allocation2 + $0x60] sm:$0xff]
  %v322 = vld [vmem:[#allocation2 + $0x68] sm:$0xff]
  %v323 = vld [vmem:[#allocation2 + $0x70] sm:$0xff]
  %v324 = vld [vmem:[#allocation2 + $0x78] sm:$0xff]
  %v325 = vld [vmem:[#allocation2 + $0x80] sm:$0xff]
  %v326 = vld [vmem:[#allocation2 + $0x88] sm:$0xff]
  %v327 = vld [vmem:[#allocation2 + $0x90] sm:$0xff]
  %v328 = vld [vmem:[#allocation2 + $0x98] sm:$0xff]
  %v329 = vld [vmem:[#allocation2 + $0xa0] sm:$0xff]
  %v330 = vld [vmem:[#allocation2 + $0xa8] sm:$0xff]
  %v331 = vld [vmem:[#allocation2 + $0xb0] sm:$0xff]
  %v332 = vld [vmem:[#allocation2 + $0xb8] sm:$0xff]
  %v333 = vld [vmem:[#allocation2 + $0xc0] sm:$0xff]
  %v334 = vld [vmem:[#allocation2 + $0xc8] sm:$0xff]
  %v335 = vld [vmem:[#allocation2 + $0xd0] sm:$0xff]
  %v336 = vld [vmem:[#allocation2 + $0xd8] sm:$0xff]
  %v337 = vld [vmem:[#allocation2 + $0xe0] sm:$0xff]
  %v338 = vld [vmem:[#allocation2 + $0xe8] sm:$0xff]
  %v339 = vld [vmem:[#allocation2 + $0xf0] sm:$0xff]
  %v340 = vld [vmem:[#allocation2 + $0xf8] sm:$0xff]
  %v341 = vld [vmem:[#allocation2 + $0x100] sm:$0xff]
  %v342 = vld [vmem:[#allocation2 + $0x108] sm:$0xff]
  %v343 = vld [vmem:[#allocation2 + $0x110] sm:$0xff]
  %v344 = vld [vmem:[#allocation2 + $0x118] sm:$0xff]
  %v345 = vld [vmem:[#allocation2 + $0x120] sm:$0xff]
  %v346 = vld [vmem:[#allocation2 + $0x128] sm:$0xff]
  %v347 = vld [vmem:[#allocation2 + $0x130] sm:$0xff]
  %v348 = vld [vmem:[#allocation2 + $0x138] sm:$0xff]
  %v349 = vld [vmem:[#allocation2 + $0x140] sm:$0xff]
  %v350 = vld [vmem:[#allocation2 + $0x148] sm:$0xff]
  %v351 = vld [vmem:[#allocation2 + $0x150] sm:$0xff]
  %v352 = vld [vmem:[#allocation2 + $0x158] sm:$0xff]
  %v353 = vld [vmem:[#allocation2 + $0x160] sm:$0xff]
  %v354 = vld [vmem:[#allocation2 + $0x168] sm:$0xff]
  %v355 = vld [vmem:[#allocation2 + $0x170] sm:$0xff]
  %v356 = vld [vmem:[#allocation2 + $0x178] sm:$0xff]
  %v357 = vpack.c.bf16 %v294, %v293
  %v358 = vpack.c.bf16 %v296, %v295
  %v359 = vpack.c.bf16 %v298, %v297
  %v360 = vpack.c.bf16 %v300, %v299
  %v361 = vpack.c.bf16 %v302, %v301
  %v362 = vpack.c.bf16 %v304, %v303
  %v363 = vpack.c.bf16 %v306, %v305
  %v364 = vpack.c.bf16 %v308, %v307
  %v365 = vld [vmem:[%s1] sm:$0xff]
  %v366 = vld [vmem:[%s1 + $0x8] sm:$0xf]
  %v367 = vld [vmem:[%s1 + $0xc] sm:$0xff]
  %v368 = vld [vmem:[%s1 + $0x14] sm:$0xf]
  %v369 = vld [vmem:[%s1 + $0x18] sm:$0xff]
  %v370 = vld [vmem:[%s1 + $0x20] sm:$0xf]
  %v371 = vld [vmem:[%s1 + $0x24] sm:$0xff]
  %v372 = vld [vmem:[%s1 + $0x2c] sm:$0xf]
  %v373 = vld [vmem:[%s1 + $0x30] sm:$0xff]
  %v374 = vld [vmem:[%s1 + $0x38] sm:$0xf]
  %v375 = vld [vmem:[%s1 + $0x3c] sm:$0xff]
  %v376 = vld [vmem:[%s1 + $0x44] sm:$0xf]
  %v377 = vld [vmem:[%s1 + $0x48] sm:$0xff]
  %v378 = vld [vmem:[%s1 + $0x50] sm:$0xf]
  %v379 = vld [vmem:[%s1 + $0x54] sm:$0xff]
  %v380 = vld [vmem:[%s1 + $0x5c] sm:$0xf]
  %v381 = vld [vmem:[%s1 + $0x60] sm:$0xff]
  %v382 = vld [vmem:[%s1 + $0x68] sm:$0xf]
  %v383 = vld [vmem:[%s1 + $0x6c] sm:$0xff]
  %v384 = vld [vmem:[%s1 + $0x74] sm:$0xf]
  %v385 = vld [vmem:[%s1 + $0x78] sm:$0xff]
  %v386 = vld [vmem:[%s1 + $0x80] sm:$0xf]
  %v387 = vld [vmem:[%s1 + $0x84] sm:$0xff]
  %v388 = vld [vmem:[%s1 + $0x8c] sm:$0xf]
  %v389 = vld [vmem:[%s1 + $0x90] sm:$0xff]
  %v390 = vld [vmem:[%s1 + $0x98] sm:$0xf]
  %v391 = vld [vmem:[%s1 + $0x9c] sm:$0xff]
  %v392 = vld [vmem:[%s1 + $0xa4] sm:$0xf]
  %v393 = vld [vmem:[%s1 + $0xa8] sm:$0xff]
  %v394 = vld [vmem:[%s1 + $0xb0] sm:$0xf]
  %v395 = vld [vmem:[%s1 + $0xb4] sm:$0xff]
  %v396 = vld [vmem:[%s1 + $0xbc] sm:$0xf]
  %v429 = vunpack.c.l.b16 %v365
  %v430 = vunpack.c.h.b16 %v365
  %v431 = vunpack.c.l.b16 %v366
  %v432 = vunpack.c.l.b16 %v367
  %v433 = vunpack.c.h.b16 %v367
  %v434 = vunpack.c.l.b16 %v368
  %v435 = vunpack.c.l.b16 %v369
  %v436 = vunpack.c.h.b16 %v369
  %v437 = vunpack.c.l.b16 %v370
  %v438 = vunpack.c.l.b16 %v371
  %v439 = vunpack.c.h.b16 %v371
  %v440 = vunpack.c.l.b16 %v372
  %v441 = vunpack.c.l.b16 %v373
  %v442 = vunpack.c.h.b16 %v373
  %v443 = vunpack.c.l.b16 %v374
  %v444 = vunpack.c.l.b16 %v375
  %v445 = vunpack.c.h.b16 %v375
  %v446 = vunpack.c.l.b16 %v376
  %v447 = vunpack.c.l.b16 %v377
  %v448 = vunpack.c.h.b16 %v377
  %v449 = vunpack.c.l.b16 %v378
  %v450 = vunpack.c.l.b16 %v379
  %v451 = vunpack.c.h.b16 %v379
  %v452 = vunpack.c.l.b16 %v380
  %v453 = vunpack.c.l.b16 %v381
  %v454 = vunpack.c.h.b16 %v381
  %v455 = vunpack.c.l.b16 %v382
  %v456 = vunpack.c.l.b16 %v383
  %v457 = vunpack.c.h.b16 %v383
  %v458 = vunpack.c.l.b16 %v384
  %v459 = vunpack.c.l.b16 %v385
  %v460 = vunpack.c.h.b16 %v385
  %v461 = vunpack.c.l.b16 %v386
  %v462 = vunpack.c.l.b16 %v387
  %v463 = vunpack.c.h.b16 %v387
  %v464 = vunpack.c.l.b16 %v388
  %v465 = vunpack.c.l.b16 %v389
  %v466 = vunpack.c.h.b16 %v389
  %v467 = vunpack.c.l.b16 %v390
  %v468 = vunpack.c.l.b16 %v391
  %v469 = vunpack.c.h.b16 %v391
  %v470 = vunpack.c.l.b16 %v392
  %v471 = vunpack.c.l.b16 %v393
  %v472 = vunpack.c.h.b16 %v393
  %v473 = vunpack.c.l.b16 %v394
  %v474 = vunpack.c.l.b16 %v395
  %v475 = vunpack.c.h.b16 %v395
  %v476 = vunpack.c.l.b16 %v396
  %v477 = vpack.c.b16 %v432, %v429
  %v478 = vpack.c.b16 %v433, %v430
  %v479 = vpack.c.b16 %v434, %v431
  %v480 = vpack.c.b16 %v438, %v435
  %v481 = vpack.c.b16 %v439, %v436
  %v482 = vpack.c.b16 %v440, %v437
  %v483 = vpack.c.b16 %v444, %v441
  %v484 = vpack.c.b16 %v445, %v442
  %v485 = vpack.c.b16 %v446, %v443
  %v486 = vpack.c.b16 %v450, %v447
  %v487 = vpack.c.b16 %v451, %v448
  %v488 = vpack.c.b16 %v452, %v449
  %v489 = vpack.c.b16 %v456, %v453
  %v490 = vpack.c.b16 %v457, %v454
  %v491 = vpack.c.b16 %v458, %v455
  %v492 = vpack.c.b16 %v462, %v459
  %v493 = vpack.c.b16 %v463, %v460
  %v494 = vpack.c.b16 %v464, %v461
  %v495 = vpack.c.b16 %v468, %v465
  %v496 = vpack.c.b16 %v469, %v466
  %v497 = vpack.c.b16 %v470, %v467
  %v498 = vpack.c.b16 %v474, %v471
  %v499 = vpack.c.b16 %v475, %v472
  %v500 = vpack.c.b16 %v476, %v473
  %525 = vmatprep.subr.bf16.mxu0 %v478
  %526 = vmatpush1.bf16.msra.mxu0 %v477
  %527 = vmatprep.subr.bf16.mxu0 %v481
  %528 = vmatpush1.bf16.msra.mxu0 %v480
  %529 = vmatprep.subr.bf16.mxu0 %v484
  %530 = vmatpush1.bf16.msra.mxu0 %v483
  %531 = vmatprep.subr.bf16.mxu0 %v487
  %532 = vmatpush1.bf16.msra.mxu0 %v486
  %533 = vmatprep.subr.bf16.mxu0 %v490
  %534 = vmatpush1.bf16.msra.mxu0 %v489
  %535 = vmatprep.subr.bf16.mxu0 %v493
  %536 = vmatpush1.bf16.msra.mxu0 %v492
  %537 = vmatprep.subr.bf16.mxu0 %v496
  %538 = vmatpush1.bf16.msra.mxu0 %v495
  %539 = vmatprep.subr.bf16.mxu0 %v499
  %540 = vmatpush1.bf16.msra.mxu0 %v498
  %541 = vmatprep.subr.bf16.mxu0 0
  %542 = vmatpush1.bf16.msra.mxu0 0
  %543 = vmatprep.subr.bf16.mxu0 0
  %544 = vmatpush1.bf16.msra.mxu0 0
  %545 = vmatprep.subr.bf16.mxu0 0
  %546 = vmatpush1.bf16.msra.mxu0 0
  %547 = vmatprep.subr.bf16.mxu0 0
  %548 = vmatpush1.bf16.msra.mxu0 0
  %549 = vmatprep.subr.bf16.mxu0 0
  %550 = vmatpush1.bf16.msra.mxu0 0
  %551 = vmatprep.subr.bf16.mxu0 0
  %552 = vmatpush1.bf16.msra.mxu0 0
  %553 = vmatprep.subr.bf16.mxu0 0
  %554 = vmatpush1.bf16.msra.mxu0 0
  %555 = vmatprep.subr.bf16.mxu0 0
  %556 = vmatpush1.bf16.msra.mxu0 0
  %557 = vmatprep.mubr.bf16.mxu0 0
  %558 = vmatmul.mubr.bf16.gmra.mrb[0].mxu0 %v357
  %v559 = vpop.f32.mrb[0].mxu0
  %v560 = vadd.f32 0.0, %v559
  %v561 = vpop.f32.mrb[0].mxu0
  %v562 = vadd.f32 0.0, %v561
  %v563 = vpop.f32.mrb[0].mxu0
  %v564 = vadd.f32 0.0, %v563
  %v565 = vpop.f32.mrb[0].mxu0
  %v566 = vadd.f32 0.0, %v565
  %567 = vmatprep.mubr.bf16.mxu0 0
  %568 = vmatmul.mubr.bf16.gmra.mrb[0].mxu0 %v358
  %v569 = vpop.f32.mrb[0].mxu0
  %v570 = vadd.f32 0.0, %v569
  %v571 = vpop.f32.mrb[0].mxu0
  %v572 = vadd.f32 0.0, %v571
  %v573 = vpop.f32.mrb[0].mxu0
  %v574 = vadd.f32 0.0, %v573
  %v575 = vpop.f32.mrb[0].mxu0
  %v576 = vadd.f32 0.0, %v575
  %577 = vmatprep.mubr.bf16.mxu0 0
  %578 = vmatmul.mubr.bf16.gmra.mrb[0].mxu0 %v359
  %v579 = vpop.f32.mrb[0].mxu0
  %v580 = vadd.f32 0.0, %v579
  %v581 = vpop.f32.mrb[0].mxu0
  %v582 = vadd.f32 0.0, %v581
  %v583 = vpop.f32.mrb[0].mxu0
  %v584 = vadd.f32 0.0, %v583
  %v585 = vpop.f32.mrb[0].mxu0
  %v586 = vadd.f32 0.0, %v585
  %587 = vmatprep.mubr.bf16.mxu0 0
  %588 = vmatmul.mubr.bf16.gmra.mrb[0].mxu0 %v360
  %v589 = vpop.f32.mrb[0].mxu0
  %v590 = vadd.f32 0.0, %v589
  %v591 = vpop.f32.mrb[0].mxu0
  %v592 = vadd.f32 0.0, %v591
  %v593 = vpop.f32.mrb[0].mxu0
  %v594 = vadd.f32 0.0, %v593
  %v595 = vpop.f32.mrb[0].mxu0
  %v596 = vadd.f32 0.0, %v595
  %597 = vmatprep.mubr.bf16.mxu0 0
  %598 = vmatmul.mubr.bf16.gmra.mrb[0].mxu0 %v361
  %v599 = vpop.f32.mrb[0].mxu0
  %v600 = vadd.f32 0.0, %v599
  %v601 = vpop.f32.mrb[0].mxu0
  %v602 = vadd.f32 0.0, %v601
  %v603 = vpop.f32.mrb[0].mxu0
  %v604 = vadd.f32 0.0, %v603
  %v605 = vpop.f32.mrb[0].mxu0
  %v606 = vadd.f32 0.0, %v605
  %607 = vmatprep.mubr.bf16.mxu0 0
  %608 = vmatmul.mubr.bf16.gmra.mrb[0].mxu0 %v362
  %v609 = vpop.f32.mrb[0].mxu0
  %v610 = vadd.f32 0.0, %v609
  %v611 = vpop.f32.mrb[0].mxu0
  %v612 = vadd.f32 0.0, %v611
  %v613 = vpop.f32.mrb[0].mxu0
  %v614 = vadd.f32 0.0, %v613
  %v615 = vpop.f32.mrb[0].mxu0
  %v616 = vadd.f32 0.0, %v615
  %617 = vmatprep.mubr.bf16.mxu0 0
  %618 = vmatmul.mubr.bf16.gmra.mrb[0].mxu0 %v363
  %v619 = vpop.f32.mrb[0].mxu0
  %v620 = vadd.f32 0.0, %v619
  %v621 = vpop.f32.mrb[0].mxu0
  %v622 = vadd.f32 0.0, %v621
  %v623 = vpop.f32.mrb[0].mxu0
  %v624 = vadd.f32 0.0, %v623
  %v625 = vpop.f32.mrb[0].mxu0
  %v626 = vadd.f32 0.0, %v625
  %627 = vmatprep.mubr.bf16.mxu0 0
  %628 = vmatmul.mubr.bf16.gmra.mrb[0].mxu0 %v364
  %v629 = vpop.f32.mrb[0].mxu0
  %v630 = vadd.f32 0.0, %v629
  %v631 = vpop.f32.mrb[0].mxu0
  %v632 = vadd.f32 0.0, %v631
  %v633 = vpop.f32.mrb[0].mxu0
  %v634 = vadd.f32 0.0, %v633
  %v635 = vpop.f32.mrb[0].mxu0
  %v636 = vadd.f32 0.0, %v635
  %637 = vdwg.mxu0
  %638 = vmatprep.subr.bf16.mxu0 0
  %639 = vmatpush1.bf16.msra.mxu0 %v479
  %640 = vmatprep.subr.bf16.mxu0 0
  %641 = vmatpush1.bf16.msra.mxu0 %v482
  %642 = vmatprep.subr.bf16.mxu0 0
  %643 = vmatpush1.bf16.msra.mxu0 %v485
  %644 = vmatprep.subr.bf16.mxu0 0
  %645 = vmatpush1.bf16.msra.mxu0 %v488
  %646 = vmatprep.subr.bf16.mxu0 0
  %647 = vmatpush1.bf16.msra.mxu0 %v491
  %648 = vmatprep.subr.bf16.mxu0 0
  %649 = vmatpush1.bf16.msra.mxu0 %v494
  %650 = vmatprep.subr.bf16.mxu0 0
  %651 = vmatpush1.bf16.msra.mxu0 %v497
  %652 = vmatprep.subr.bf16.mxu0 0
  %653 = vmatpush1.bf16.msra.mxu0 %v500
  %654 = vmatprep.subr.bf16.mxu0 0
  %655 = vmatpush1.bf16.msra.mxu0 0
  %656 = vmatprep.subr.bf16.mxu0 0
  %657 = vmatpush1.bf16.msra.mxu0 0
  %658 = vmatprep.subr.bf16.mxu0 0
  %659 = vmatpush1.bf16.msra.mxu0 0
  %660 = vmatprep.subr.bf16.mxu0 0
  %661 = vmatpush1.bf16.msra.mxu0 0
  %662 = vmatprep.subr.bf16.mxu0 0
  %663 = vmatpush1.bf16.msra.mxu0 0
  %664 = vmatprep.subr.bf16.mxu0 0
  %665 = vmatpush1.bf16.msra.mxu0 0
  %666 = vmatprep.subr.bf16.mxu0 0
  %667 = vmatpush1.bf16.msra.mxu0 0
  %668 = vmatprep.subr.bf16.mxu0 0
  %669 = vmatpush1.bf16.msra.mxu0 0
  %670 = vmatprep.mubr.bf16.mxu0 0
  %671 = vmatmul.mubr.bf16.gmra.mrb[0].mxu0 %v357
  %v672 = vpop.f32.mrb[0].mxu0
  %v673 = vadd.f32 0.0, %v672
  %v674 = vpop.f32.mrb[0].mxu0
  %v675 = vpop.f32.mrb[0].mxu0
  %v676 = vadd.f32 0.0, %v675
  %v677 = vpop.f32.mrb[0].mxu0
  %678 = vmatprep.mubr.bf16.mxu0 0
  %679 = vmatmul.mubr.bf16.gmra.mrb[0].mxu0 %v358
  %v680 = vpop.f32.mrb[0].mxu0
  %v681 = vadd.f32 0.0, %v680
  %v682 = vpop.f32.mrb[0].mxu0
  %v683 = vpop.f32.mrb[0].mxu0
  %v684 = vadd.f32 0.0, %v683
  %v685 = vpop.f32.mrb[0].mxu0
  %686 = vmatprep.mubr.bf16.mxu0 0
  %687 = vmatmul.mubr.bf16.gmra.mrb[0].mxu0 %v359
  %v688 = vpop.f32.mrb[0].mxu0
  %v689 = vadd.f32 0.0, %v688
  %v690 = vpop.f32.mrb[0].mxu0
  %v691 = vpop.f32.mrb[0].mxu0
  %v692 = vadd.f32 0.0, %v691
  %v693 = vpop.f32.mrb[0].mxu0
  %694 = vmatprep.mubr.bf16.mxu0 0
  %695 = vmatmul.mubr.bf16.gmra.mrb[0].mxu0 %v360
  %v696 = vpop.f32.mrb[0].mxu0
  %v697 = vadd.f32 0.0, %v696
  %v698 = vpop.f32.mrb[0].mxu0
  %v699 = vpop.f32.mrb[0].mxu0
  %v700 = vadd.f32 0.0, %v699
  %v701 = vpop.f32.mrb[0].mxu0
  %702 = vmatprep.mubr.bf16.mxu0 0
  %703 = vmatmul.mubr.bf16.gmra.mrb[0].mxu0 %v361
  %v704 = vpop.f32.mrb[0].mxu0
  %v705 = vadd.f32 0.0, %v704
  %v706 = vpop.f32.mrb[0].mxu0
  %v707 = vpop.f32.mrb[0].mxu0
  %v708 = vadd.f32 0.0, %v707
  %v709 = vpop.f32.mrb[0].mxu0
  %710 = vmatprep.mubr.bf16.mxu0 0
  %711 = vmatmul.mubr.bf16.gmra.mrb[0].mxu0 %v362
  %v712 = vpop.f32.mrb[0].mxu0
  %v713 = vadd.f32 0.0, %v712
  %v714 = vpop.f32.mrb[0].mxu0
  %v715 = vpop.f32.mrb[0].mxu0
  %v716 = vadd.f32 0.0, %v715
  %v717 = vpop.f32.mrb[0].mxu0
  %718 = vmatprep.mubr.bf16.mxu0 0
  %719 = vmatmul.mubr.bf16.gmra.mrb[0].mxu0 %v363
  %v720 = vpop.f32.mrb[0].mxu0
  %v721 = vadd.f32 0.0, %v720
  %v722 = vpop.f32.mrb[0].mxu0
  %v723 = vpop.f32.mrb[0].mxu0
  %v724 = vadd.f32 0.0, %v723
  %v725 = vpop.f32.mrb[0].mxu0
  %726 = vmatprep.mubr.bf16.mxu0 0
  %727 = vmatmul.mubr.bf16.gmra.mrb[0].mxu0 %v364
  %v728 = vpop.f32.mrb[0].mxu0
  %v729 = vadd.f32 0.0, %v728
  %v730 = vpop.f32.mrb[0].mxu0
  %v731 = vpop.f32.mrb[0].mxu0
  %v732 = vadd.f32 0.0, %v731
  %v733 = vpop.f32.mrb[0].mxu0
  %734 = vdwg.mxu0
  %v735 = vadd.f32 %v309, %v560
  %v736 = vadd.f32 %v310, %v562
  %v737 = vadd.f32 %v311, %v673
  %v738 = vadd.f32 %v312, %v564
  %v739 = vadd.f32 %v313, %v566
  %v740 = vadd.f32 %v314, %v676
  %v741 = vadd.f32 %v315, %v570
  %v742 = vadd.f32 %v316, %v572
  %v743 = vadd.f32 %v317, %v681
  %v744 = vadd.f32 %v318, %v574
  %v745 = vadd.f32 %v319, %v576
  %v746 = vadd.f32 %v320, %v684
  %v747 = vadd.f32 %v321, %v580
  %v748 = vadd.f32 %v322, %v582
  %v749 = vadd.f32 %v323, %v689
  %v750 = vadd.f32 %v324, %v584
  %v751 = vadd.f32 %v325, %v586
  %v752 = vadd.f32 %v326, %v692
  %v753 = vadd.f32 %v327, %v590
  %v754 = vadd.f32 %v328, %v592
  %v755 = vadd.f32 %v329, %v697
  %v756 = vadd.f32 %v330, %v594
  %v757 = vadd.f32 %v331, %v596
  %v758 = vadd.f32 %v332, %v700
  %v759 = vadd.f32 %v333, %v600
  %v760 = vadd.f32 %v334, %v602
  %v761 = vadd.f32 %v335, %v705
  %v762 = vadd.f32 %v336, %v604
  %v763 = vadd.f32 %v337, %v606
  %v764 = vadd.f32 %v338, %v708
  %v765 = vadd.f32 %v339, %v610
  %v766 = vadd.f32 %v340, %v612
  %v767 = vadd.f32 %v341, %v713
  %v768 = vadd.f32 %v342, %v614
  %v769 = vadd.f32 %v343, %v616
  %v770 = vadd.f32 %v344, %v716
  %v771 = vadd.f32 %v345, %v620
  %v772 = vadd.f32 %v346, %v622
  %v773 = vadd.f32 %v347, %v721
  %v774 = vadd.f32 %v348, %v624
  %v775 = vadd.f32 %v349, %v626
  %v776 = vadd.f32 %v350, %v724
  %v777 = vadd.f32 %v351, %v630
  %v778 = vadd.f32 %v352, %v632
  %v779 = vadd.f32 %v353, %v729
  %v780 = vadd.f32 %v354, %v634
  %v781 = vadd.f32 %v355, %v636
  %v782 = vadd.f32 %v356, %v732
  %783 = vst [vmem:[#allocation2] sm:$0xff] %v735
  %784 = vst [vmem:[#allocation2 + $0x8] sm:$0xff] %v736
  %785 = vst [vmem:[#allocation2 + $0x10] sm:$0xff] %v737
  %786 = vst [vmem:[#allocation2 + $0x18] sm:$0xff] %v738
  %787 = vst [vmem:[#allocation2 + $0x20] sm:$0xff] %v739
  %788 = vst [vmem:[#allocation2 + $0x28] sm:$0xff] %v740
  %789 = vst [vmem:[#allocation2 + $0x30] sm:$0xff] %v741
  %790 = vst [vmem:[#allocation2 + $0x38] sm:$0xff] %v742
  %791 = vst [vmem:[#allocation2 + $0x40] sm:$0xff] %v743
  %792 = vst [vmem:[#allocation2 + $0x48] sm:$0xff] %v744
  %793 = vst [vmem:[#allocation2 + $0x50] sm:$0xff] %v745
  %794 = vst [vmem:[#allocation2 + $0x58] sm:$0xff] %v746
  %795 = vst [vmem:[#allocation2 + $0x60] sm:$0xff] %v747
  %796 = vst [vmem:[#allocation2 + $0x68] sm:$0xff] %v748
  %797 = vst [vmem:[#allocation2 + $0x70] sm:$0xff] %v749
  %798 = vst [vmem:[#allocation2 + $0x78] sm:$0xff] %v750
  %799 = vst [vmem:[#allocation2 + $0x80] sm:$0xff] %v751
  %800 = vst [vmem:[#allocation2 + $0x88] sm:$0xff] %v752
  %801 = vst [vmem:[#allocation2 + $0x90] sm:$0xff] %v753
  %802 = vst [vmem:[#allocation2 + $0x98] sm:$0xff] %v754
  %803 = vst [vmem:[#allocation2 + $0xa0] sm:$0xff] %v755
  %804 = vst [vmem:[#allocation2 + $0xa8] sm:$0xff] %v756
  %805 = vst [vmem:[#allocation2 + $0xb0] sm:$0xff] %v757
  %806 = vst [vmem:[#allocation2 + $0xb8] sm:$0xff] %v758
  %807 = vst [vmem:[#allocation2 + $0xc0] sm:$0xff] %v759
  %808 = vst [vmem:[#allocation2 + $0xc8] sm:$0xff] %v760
  %809 = vst [vmem:[#allocation2 + $0xd0] sm:$0xff] %v761
  %810 = vst [vmem:[#allocation2 + $0xd8] sm:$0xff] %v762
  %811 = vst [vmem:[#allocation2 + $0xe0] sm:$0xff] %v763
  %812 = vst [vmem:[#allocation2 + $0xe8] sm:$0xff] %v764
  %813 = vst [vmem:[#allocation2 + $0xf0] sm:$0xff] %v765
  %814 = vst [vmem:[#allocation2 + $0xf8] sm:$0xff] %v766
  %815 = vst [vmem:[#allocation2 + $0x100] sm:$0xff] %v767
  %816 = vst [vmem:[#allocation2 + $0x108] sm:$0xff] %v768
  %817 = vst [vmem:[#allocation2 + $0x110] sm:$0xff] %v769
  %818 = vst [vmem:[#allocation2 + $0x118] sm:$0xff] %v770
  %819 = vst [vmem:[#allocation2 + $0x120] sm:$0xff] %v771
  %820 = vst [vmem:[#allocation2 + $0x128] sm:$0xff] %v772
  %821 = vst [vmem:[#allocation2 + $0x130] sm:$0xff] %v773
  %822 = vst [vmem:[#allocation2 + $0x138] sm:$0xff] %v774
  %823 = vst [vmem:[#allocation2 + $0x140] sm:$0xff] %v775
  %824 = vst [vmem:[#allocation2 + $0x148] sm:$0xff] %v776
  %825 = vst [vmem:[#allocation2 + $0x150] sm:$0xff] %v777
  %826 = vst [vmem:[#allocation2 + $0x158] sm:$0xff] %v778
  %827 = vst [vmem:[#allocation2 + $0x160] sm:$0xff] %v779
  %828 = vst [vmem:[#allocation2 + $0x168] sm:$0xff] %v780
  %829 = vst [vmem:[#allocation2 + $0x170] sm:$0xff] %v781
  %830 = vst [vmem:[#allocation2 + $0x178] sm:$0xff] %v782
  // Predicated region
  $region22: #{spatial_transformer_forward.13} parent=0 // pred_check
    %p831 = pneg %p18
  $region23: #{spatial_transformer_forward.13} parent=0 // pred_check_branch
    %833 = sbr.rel (%p831) target = $region25
  $region24: #{spatial_transformer_forward.13} parent=0 // pred_region
    %v834 = vld [vmem:[#allocation2] sm:$0xff]
    %v835 = vld [vmem:[#allocation2 + $0x8] sm:$0xff]
    %v836 = vld [vmem:[#allocation2 + $0x10] sm:$0xff]
    %v837 = vld [vmem:[#allocation2 + $0x18] sm:$0xff]
    %v838 = vld [vmem:[#allocation2 + $0x20] sm:$0xff]
    %v839 = vld [vmem:[#allocation2 + $0x28] sm:$0xff]
    %v840 = vld [vmem:[#allocation2 + $0x30] sm:$0xff]
    %v841 = vld [vmem:[#allocation2 + $0x38] sm:$0xff]
    %v842 = vld [vmem:[#allocation2 + $0x40] sm:$0xff]
    %v843 = vld [vmem:[#allocation2 + $0x48] sm:$0xff]
    %v844 = vld [vmem:[#allocation2 + $0x50] sm:$0xff]
    %v845 = vld [vmem:[#allocation2 + $0x58] sm:$0xff]
    %v846 = vld [vmem:[#allocation2 + $0x60] sm:$0xff]
    %v847 = vld [vmem:[#allocation2 + $0x68] sm:$0xff]
    %v848 = vld [vmem:[#allocation2 + $0x70] sm:$0xff]
    %v849 = vld [vmem:[#allocation2 + $0x78] sm:$0xff]
    %v850 = vld [vmem:[#allocation2 + $0x80] sm:$0xff]
    %v851 = vld [vmem:[#allocation2 + $0x88] sm:$0xff]
    %v852 = vld [vmem:[#allocation2 + $0x90] sm:$0xff]
    %v853 = vld [vmem:[#allocation2 + $0x98] sm:$0xff]
    %v854 = vld [vmem:[#allocation2 + $0xa0] sm:$0xff]
    %v855 = vld [vmem:[#allocation2 + $0xa8] sm:$0xff]
    %v856 = vld [vmem:[#allocation2 + $0xb0] sm:$0xff]
    %v857 = vld [vmem:[#allocation2 + $0xb8] sm:$0xff]
    %v858 = vld [vmem:[#allocation2 + $0xc0] sm:$0xff]
    %v859 = vld [vmem:[#allocation2 + $0xc8] sm:$0xff]
    %v860 = vld [vmem:[#allocation2 + $0xd0] sm:$0xff]
    %v861 = vld [vmem:[#allocation2 + $0xd8] sm:$0xff]
    %v862 = vld [vmem:[#allocation2 + $0xe0] sm:$0xff]
    %v863 = vld [vmem:[#allocation2 + $0xe8] sm:$0xff]
    %v864 = vld [vmem:[#allocation2 + $0xf0] sm:$0xff]
    %v865 = vld [vmem:[#allocation2 + $0xf8] sm:$0xff]
    %v866 = vld [vmem:[#allocation2 + $0x100] sm:$0xff]
    %v867 = vld [vmem:[#allocation2 + $0x108] sm:$0xff]
    %v868 = vld [vmem:[#allocation2 + $0x110] sm:$0xff]
    %v869 = vld [vmem:[#allocation2 + $0x118] sm:$0xff]
    %v870 = vld [vmem:[#allocation2 + $0x120] sm:$0xff]
    %v871 = vld [vmem:[#allocation2 + $0x128] sm:$0xff]
    %v872 = vld [vmem:[#allocation2 + $0x130] sm:$0xff]
    %v873 = vld [vmem:[#allocation2 + $0x138] sm:$0xff]
    %v874 = vld [vmem:[#allocation2 + $0x140] sm:$0xff]
    %v875 = vld [vmem:[#allocation2 + $0x148] sm:$0xff]
    %v876 = vld [vmem:[#allocation2 + $0x150] sm:$0xff]
    %v877 = vld [vmem:[#allocation2 + $0x158] sm:$0xff]
    %v878 = vld [vmem:[#allocation2 + $0x160] sm:$0xff]
    %v879 = vld [vmem:[#allocation2 + $0x168] sm:$0xff]
    %v880 = vld [vmem:[#allocation2 + $0x170] sm:$0xff]
    %v881 = vld [vmem:[#allocation2 + $0x178] sm:$0xff]
    %v882 = vpack.c.bf16 %v837, %v834
    %v883 = vpack.c.bf16 %v838, %v835
    %v884 = vpack.c.bf16 %v839, %v836
    %v885 = vpack.c.bf16 %v843, %v840
    %v886 = vpack.c.bf16 %v844, %v841
    %v887 = vpack.c.bf16 %v845, %v842
    %v888 = vpack.c.bf16 %v849, %v846
    %v889 = vpack.c.bf16 %v850, %v847
    %v890 = vpack.c.bf16 %v851, %v848
    %v891 = vpack.c.bf16 %v855, %v852
    %v892 = vpack.c.bf16 %v856, %v853
    %v893 = vpack.c.bf16 %v857, %v854
    %v894 = vpack.c.bf16 %v861, %v858
    %v895 = vpack.c.bf16 %v862, %v859
    %v896 = vpack.c.bf16 %v863, %v860
    %v897 = vpack.c.bf16 %v867, %v864
    %v898 = vpack.c.bf16 %v868, %v865
    %v899 = vpack.c.bf16 %v869, %v866
    %v900 = vpack.c.bf16 %v873, %v870
    %v901 = vpack.c.bf16 %v874, %v871
    %v902 = vpack.c.bf16 %v875, %v872
    %v903 = vpack.c.bf16 %v879, %v876
    %v904 = vpack.c.bf16 %v880, %v877
    %v905 = vpack.c.bf16 %v881, %v878
    %v930 = vunpack.c.l.b16 %v882
    %v931 = vunpack.c.l.b16 %v883
    %v932 = vunpack.c.l.b16 %v884
    %v933 = vunpack.c.h.b16 %v882
    %v934 = vunpack.c.h.b16 %v883
    %v935 = vunpack.c.h.b16 %v884
    %v936 = vunpack.c.l.b16 %v885
    %v937 = vunpack.c.l.b16 %v886
    %v938 = vunpack.c.l.b16 %v887
    %v939 = vunpack.c.h.b16 %v885
    %v940 = vunpack.c.h.b16 %v886
    %v941 = vunpack.c.h.b16 %v887
    %v942 = vunpack.c.l.b16 %v888
    %v943 = vunpack.c.l.b16 %v889
    %v944 = vunpack.c.l.b16 %v890
    %v945 = vunpack.c.h.b16 %v888
    %v946 = vunpack.c.h.b16 %v889
    %v947 = vunpack.c.h.b16 %v890
    %v948 = vunpack.c.l.b16 %v891
    %v949 = vunpack.c.l.b16 %v892
    %v950 = vunpack.c.l.b16 %v893
    %v951 = vunpack.c.h.b16 %v891
    %v952 = vunpack.c.h.b16 %v892
    %v953 = vunpack.c.h.b16 %v893
    %v954 = vunpack.c.l.b16 %v894
    %v955 = vunpack.c.l.b16 %v895
    %v956 = vunpack.c.l.b16 %v896
    %v957 = vunpack.c.h.b16 %v894
    %v958 = vunpack.c.h.b16 %v895
    %v959 = vunpack.c.h.b16 %v896
    %v960 = vunpack.c.l.b16 %v897
    %v961 = vunpack.c.l.b16 %v898
    %v962 = vunpack.c.l.b16 %v899
    %v963 = vunpack.c.h.b16 %v897
    %v964 = vunpack.c.h.b16 %v898
    %v965 = vunpack.c.h.b16 %v899
    %v966 = vunpack.c.l.b16 %v900
    %v967 = vunpack.c.l.b16 %v901
    %v968 = vunpack.c.l.b16 %v902
    %v969 = vunpack.c.h.b16 %v900
    %v970 = vunpack.c.h.b16 %v901
    %v971 = vunpack.c.h.b16 %v902
    %v972 = vunpack.c.l.b16 %v903
    %v973 = vunpack.c.l.b16 %v904
    %v974 = vunpack.c.l.b16 %v905
    %v975 = vunpack.c.h.b16 %v903
    %v976 = vunpack.c.h.b16 %v904
    %v977 = vunpack.c.h.b16 %v905
    %v978 = vpack.c.b16 %v931, %v930
    %v979 = vpack.c.b16 %v932, %v932
    %v980 = vpack.c.b16 %v934, %v933
    %v981 = vpack.c.b16 %v935, %v935
    %v982 = vpack.c.b16 %v937, %v936
    %v983 = vpack.c.b16 %v938, %v938
    %v984 = vpack.c.b16 %v940, %v939
    %v985 = vpack.c.b16 %v941, %v941
    %v986 = vpack.c.b16 %v943, %v942
    %v987 = vpack.c.b16 %v944, %v944
    %v988 = vpack.c.b16 %v946, %v945
    %v989 = vpack.c.b16 %v947, %v947
    %v990 = vpack.c.b16 %v949, %v948
    %v991 = vpack.c.b16 %v950, %v950
    %v992 = vpack.c.b16 %v952, %v951
    %v993 = vpack.c.b16 %v953, %v953
    %v994 = vpack.c.b16 %v955, %v954
    %v995 = vpack.c.b16 %v956, %v956
    %v996 = vpack.c.b16 %v958, %v957
    %v997 = vpack.c.b16 %v959, %v959
    %v998 = vpack.c.b16 %v961, %v960
    %v999 = vpack.c.b16 %v962, %v962
    %v1000 = vpack.c.b16 %v964, %v963
    %v1001 = vpack.c.b16 %v965, %v965
    %v1002 = vpack.c.b16 %v967, %v966
    %v1003 = vpack.c.b16 %v968, %v968
    %v1004 = vpack.c.b16 %v970, %v969
    %v1005 = vpack.c.b16 %v971, %v971
    %v1006 = vpack.c.b16 %v973, %v972
    %v1007 = vpack.c.b16 %v974, %v974
    %v1008 = vpack.c.b16 %v976, %v975
    %v1009 = vpack.c.b16 %v977, %v977
    %1042 = vst [vmem:[%s4] sm:$0xff] %v978
    %1043 = vst [vmem:[%s4 + $0x8] sm:$0xf] %v979
    %1044 = vst [vmem:[%s4 + $0xc] sm:$0xff] %v980
    %1045 = vst [vmem:[%s4 + $0x14] sm:$0xf] %v981
    %1046 = vst [vmem:[%s4 + $0x18] sm:$0xff] %v982
    %1047 = vst [vmem:[%s4 + $0x20] sm:$0xf] %v983
    %1048 = vst [vmem:[%s4 + $0x24] sm:$0xff] %v984
    %1049 = vst [vmem:[%s4 + $0x2c] sm:$0xf] %v985
    %1050 = vst [vmem:[%s4 + $0x30] sm:$0xff] %v986
    %1051 = vst [vmem:[%s4 + $0x38] sm:$0xf] %v987
    %1052 = vst [vmem:[%s4 + $0x3c] sm:$0xff] %v988
    %1053 = vst [vmem:[%s4 + $0x44] sm:$0xf] %v989
    %1054 = vst [vmem:[%s4 + $0x48] sm:$0xff] %v990
    %1055 = vst [vmem:[%s4 + $0x50] sm:$0xf] %v991
    %1056 = vst [vmem:[%s4 + $0x54] sm:$0xff] %v992
    %1057 = vst [vmem:[%s4 + $0x5c] sm:$0xf] %v993
    %1058 = vst [vmem:[%s4 + $0x60] sm:$0xff] %v994
    %1059 = vst [vmem:[%s4 + $0x68] sm:$0xf] %v995
    %1060 = vst [vmem:[%s4 + $0x6c] sm:$0xff] %v996
    %1061 = vst [vmem:[%s4 + $0x74] sm:$0xf] %v997
    %1062 = vst [vmem:[%s4 + $0x78] sm:$0xff] %v998
    %1063 = vst [vmem:[%s4 + $0x80] sm:$0xf] %v999
    %1064 = vst [vmem:[%s4 + $0x84] sm:$0xff] %v1000
    %1065 = vst [vmem:[%s4 + $0x8c] sm:$0xf] %v1001
    %1066 = vst [vmem:[%s4 + $0x90] sm:$0xff] %v1002
    %1067 = vst [vmem:[%s4 + $0x98] sm:$0xf] %v1003
    %1068 = vst [vmem:[%s4 + $0x9c] sm:$0xff] %v1004
    %1069 = vst [vmem:[%s4 + $0xa4] sm:$0xf] %v1005
    %1070 = vst [vmem:[%s4 + $0xa8] sm:$0xff] %v1006
    %1071 = vst [vmem:[%s4 + $0xb0] sm:$0xf] %v1007
    %1072 = vst [vmem:[%s4 + $0xb4] sm:$0xff] %v1008
    %1073 = vst [vmem:[%s4 + $0xbc] sm:$0xf] %v1009
  $region25: #{spatial_transformer_forward.13} parent=0 // pred_fallthru
    _
  // Predicated region
  $region26: #{spatial_transformer_forward.13} parent=0 // pred_check
    _
  $region27: #{spatial_transformer_forward.13} parent=0 // pred_check_branch
    %1075 = sbr.rel (0) target = $region29
  $region28: #{spatial_transformer_forward.13} parent=0 // pred_region
    _
  $region29: #{spatial_transformer_forward.13} parent=0 // pred_fallthru
    _
  // Predicated region
  $region30: #{spatial_transformer_forward.13} parent=0 // pred_check
    _
  $region31: #{spatial_transformer_forward.13} parent=0 // pred_check_branch
    %1077 = sbr.rel (0) target = $region33
  $region32: #{spatial_transformer_forward.13} parent=0 // pred_region
    _
  $region33: #{spatial_transformer_forward.13} parent=0 // pred_fallthru
    _

// kernel: spatial_transformer_forward.14
$region0: #{spatial_transformer_forward.14}
  #allocation0 [shape = 'u32[]', space=smem, size = 0x4, offset = 0x4, fixed_abs, tag = 'smem constant byte address 0x4 - core index']
  #allocation1 [shape = 'u32[144,128]{1,0:T(1,128)}', space=vmem, size = 0x12000, scoped, tag = 'internal scratch']
  #allocation2 [shape = 'f32[64,128]{1,0:T(8,128)}', space=vmem, size = 0x8000, scoped, tag = 'scratch operand']
  #allocation3 [shape = 'f32[64,128]{1,0:T(8,128)}', space=vmem, size = 0x8000, scoped, tag = 'scratch operand']
  #allocation4 [shape = 'f32[64,128]{1,0:T(8,128)}', space=vmem, size = 0x8000, scoped, tag = 'scratch operand']
  %s0 = inlined_call_operand.vmem [shape: bf16[2,64,384], index: 0, kind: input, shape index: {}, may-alias: {0,1,2}]
  %s1 = inlined_call_operand.vmem [shape: bf16[2,64,384], index: 1, kind: input, shape index: {}, may-alias: {0,1,2}]
  %s2 = inlined_call_operand.vmem [shape: bf16[2,64,384], index: 2, kind: input, shape index: {}, may-alias: {0,1,2}]
  %s3 = inlined_call_operand.vmem [shape: bf16[2,64,128], index: 3, kind: output, shape index: {}]
  %s4 = sld [smem:[#allocation0]]
  $region176: #{spatial_transformer_forward.14} parent=0
    _
  %s6 = ssub.s32 1, %s4
  %s7 = scalar_select 0, %s6, %s4
  $region1: #{spatial_transformer_forward.14} parent=0
    #allocation5 [shape = 'u8[32768]{0}', space=vmem, size = 0x8000, scoped, tag = 'input window, operand 0']
    #allocation6 [shape = 'u8[32768]{0}', space=vmem, size = 0x8000, scoped, tag = 'input window, operand 1']
    #allocation7 [shape = 'u8[32768]{0}', space=vmem, size = 0x8000, scoped, tag = 'input window, operand 2']
    loop: start=0, step=1, limit=4
    $region2: #{spatial_transformer_forward.14} parent=1 // loop_pre_header
      _
    $region3: #{spatial_transformer_forward.14} parent=1 // loop_header
      %s9 = sphi 0, %s13
      %p10 = scmp.ge.s32.totalorder %s9, 4
      %s16 = sphi 0, %s42
      %s17 = sphi 0, %s38
      %s18 = sphi 0, %s34
      %s19 = sphi 0, %s30
      %s20 = sphi 0, %s16
      %s21 = sphi 0, %s17
      %s22 = sphi 0, %s18
      %s23 = sphi 0, %s19
      %s24 = sphi 0, %s20
      %s25 = sphi 0, %s21
      %s26 = sphi 0, %s22
      %s27 = sphi 0, %s23
      %s49 = sphi 0, %s51
      %s52 = sphi 0, %s49
      %s53 = sphi 0, %s52
      %s69 = sphi 0, %s53
      %s81 = sphi 0, %s83
      %s84 = sphi 0, %s81
      %s85 = sphi 0, %s84
      %s101 = sphi 0, %s85
      %s113 = sphi 0, %s115
      %s116 = sphi 0, %s113
      %s117 = sphi 0, %s116
      %s133 = sphi 0, %s117
      %s143 = sphi 0, %s145
      %s146 = sphi 0, %s143
      %s147 = sphi 0, %s146
      %s163 = sphi 0, %s147
    $region4: #{spatial_transformer_forward.14} parent=1 // loop_header_branch
      %12 = sbr.rel (%p10) target = $region8
    $region5: #{spatial_transformer_forward.14} parent=1 // loop_body
      %s14 = ssub.s32 %s9, 1
      %s15 = ssub.s32 %s9, 2
      %s28 = sadd.s32 1, %s19
      %p29 = scmp.ge.s32.totalorder %s28, 1
      %s30 = scalar_select %p29, 0, %s28
      %s31 = sadd.s32 1, %s18
      %s32 = scalar_select %p29, %s31, %s18
      %p33 = scmp.ge.s32.totalorder %s32, 1
      %s34 = scalar_select %p33, 0, %s32
      %s35 = sadd.s32 1, %s17
      %s36 = scalar_select %p33, %s35, %s17
      %p37 = scmp.ge.s32.totalorder %s36, 1
      %s38 = scalar_select %p37, 0, %s36
      %s39 = sadd.s32 1, %s16
      %s40 = scalar_select %p37, %s39, %s16
      %p41 = scmp.ge.s32.totalorder %s40, 2
      %s42 = scalar_select %p41, 0, %s40
      %s43 = ssub.s32 %s16, %s42
      %s44 = ssub.s32 %s18, %s34
      %s45 = sor.u32 %s43, %s44
      %s46 = ssub.s32 %s17, %s38
      %s47 = sor.u32 %s45, %s46
      %p48 = scmp.eq.s32.totalorder %s47, 0
      %s50 = sadd.s32 %s49, 1
      %s51 = scalar_select %p48, %s49, %s50
      %p54 = pneg %p48
      %p55 = scmp.eq.s32.totalorder %s9, 1
      %p56 = por %p54, %p55
      %p57 = scmp.ne.s32.totalorder %s49, %s52
      %p58 = scmp.eq.s32.totalorder %s9, 0
      %p59 = por %p57, %p58
      %p60 = scmp.ne.s32.totalorder %s49, %s52
      %p61 = scmp.eq.s32.totalorder %s14, 1
      %p62 = por %p60, %p61
      %p63 = scmp.ne.s32.totalorder %s52, %s53
      %p64 = scmp.eq.s32.totalorder %s14, 0
      %p65 = por %p63, %p64
      %p66 = scmp.ne.s32.totalorder %s52, %s53
      %p67 = scmp.eq.s32.totalorder %s15, 1
      %p68 = por %p66, %p67
      %p70 = scmp.ne.s32.totalorder %s53, %s69
      %p71 = scmp.eq.s32.totalorder %s15, 0
      %p72 = por %p70, %p71
      %s73 = sadd.s32 %s17, 1
      %s74 = sadd.s32 %s38, 1
      %s75 = ssub.s32 %s16, %s42
      %s76 = ssub.s32 %s19, %s30
      %s77 = sor.u32 %s75, %s76
      %s78 = ssub.s32 %s73, %s74
      %s79 = sor.u32 %s77, %s78
      %p80 = scmp.eq.s32.totalorder %s79, 0
      %s82 = sadd.s32 %s81, 1
      %s83 = scalar_select %p80, %s81, %s82
      %p86 = pneg %p80
      %p87 = scmp.eq.s32.totalorder %s9, 1
      %p88 = por %p86, %p87
      %p89 = scmp.ne.s32.totalorder %s81, %s84
      %p90 = scmp.eq.s32.totalorder %s9, 0
      %p91 = por %p89, %p90
      %p92 = scmp.ne.s32.totalorder %s81, %s84
      %p93 = scmp.eq.s32.totalorder %s14, 1
      %p94 = por %p92, %p93
      %p95 = scmp.ne.s32.totalorder %s84, %s85
      %p96 = scmp.eq.s32.totalorder %s14, 0
      %p97 = por %p95, %p96
      %p98 = scmp.ne.s32.totalorder %s84, %s85
      %p99 = scmp.eq.s32.totalorder %s15, 1
      %p100 = por %p98, %p99
      %p102 = scmp.ne.s32.totalorder %s85, %s101
      %p103 = scmp.eq.s32.totalorder %s15, 0
      %p104 = por %p102, %p103
      %s105 = sadd.s32 %s17, 2
      %s106 = sadd.s32 %s38, 2
      %s107 = ssub.s32 %s16, %s42
      %s108 = ssub.s32 %s19, %s30
      %s109 = sor.u32 %s107, %s108
      %s110 = ssub.s32 %s105, %s106
      %s111 = sor.u32 %s109, %s110
      %p112 = scmp.eq.s32.totalorder %s111, 0
      %s114 = sadd.s32 %s113, 1
      %s115 = scalar_select %p112, %s113, %s114
      %p118 = pneg %p112
      %p119 = scmp.eq.s32.totalorder %s9, 1
      %p120 = por %p118, %p119
      %p121 = scmp.ne.s32.totalorder %s113, %s116
      %p122 = scmp.eq.s32.totalorder %s9, 0
      %p123 = por %p121, %p122
      %p124 = scmp.ne.s32.totalorder %s113, %s116
      %p125 = scmp.eq.s32.totalorder %s14, 1
      %p126 = por %p124, %p125
      %p127 = scmp.ne.s32.totalorder %s116, %s117
      %p128 = scmp.eq.s32.totalorder %s14, 0
      %p129 = por %p127, %p128
      %p130 = scmp.ne.s32.totalorder %s116, %s117
      %p131 = scmp.eq.s32.totalorder %s15, 1
      %p132 = por %p130, %p131
      %p134 = scmp.ne.s32.totalorder %s117, %s133
      %p135 = scmp.eq.s32.totalorder %s15, 0
      %p136 = por %p134, %p135
      %s137 = ssub.s32 %s16, %s42
      %s138 = ssub.s32 %s18, %s34
      %s139 = sor.u32 %s137, %s138
      %s140 = ssub.s32 %s17, %s38
      %s141 = sor.u32 %s139, %s140
      %p142 = scmp.eq.s32.totalorder %s141, 0
      %s144 = sadd.s32 %s143, 1
      %s145 = scalar_select %p142, %s143, %s144
      %p148 = pneg %p142
      %p149 = scmp.eq.s32.totalorder %s9, 1
      %p150 = por %p148, %p149
      %p151 = scmp.ne.s32.totalorder %s143, %s146
      %p152 = scmp.eq.s32.totalorder %s9, 0
      %p153 = por %p151, %p152
      %p154 = scmp.ne.s32.totalorder %s143, %s146
      %p155 = scmp.eq.s32.totalorder %s14, 1
      %p156 = por %p154, %p155
      %p157 = scmp.ne.s32.totalorder %s146, %s147
      %p158 = scmp.eq.s32.totalorder %s14, 0
      %p159 = por %p157, %p158
      %p160 = scmp.ne.s32.totalorder %s146, %s147
      %p161 = scmp.eq.s32.totalorder %s15, 1
      %p162 = por %p160, %p161
      %p164 = scmp.ne.s32.totalorder %s147, %s163
      %p165 = scmp.eq.s32.totalorder %s15, 0
      %p166 = por %p164, %p165
      %p167 = scmp.le.s32.totalorder 1, %s9
      %p168 = scmp.lt.s32.totalorder %s9, 3
      %p169 = pnand %p167, %p168
      %p170 = pneg %p169
      // Predicated region
      $region9: #{spatial_transformer_forward.14} parent=5 // pred_check
        _
      $region10: #{spatial_transformer_forward.14} parent=5 // pred_check_branch
        %172 = sbr.rel (%p169) target = $region12
      $region11: #{spatial_transformer_forward.14} parent=5 // pred_region
        %s173 = ssub.s32 %s9, 1
      $region12: #{spatial_transformer_forward.14} parent=5 // pred_fallthru
        _
      %p174 = scmp.lt.s32.totalorder %s9, 2
      // Predicated region
      $region13: #{spatial_transformer_forward.14} parent=5 // pred_check
        %p175 = pneg %p174
      $region14: #{spatial_transformer_forward.14} parent=5 // pred_check_branch
        %177 = sbr.rel (%p175) target = $region16
      $region15: #{spatial_transformer_forward.14} parent=5 // pred_region
        // Predicated region
        $region17: #{spatial_transformer_forward.14} parent=15 // pred_check
          %p178 = pneg %p59
        $region18: #{spatial_transformer_forward.14} parent=15 // pred_check_branch
          %180 = sbr.rel (%p178) target = $region20
        $region19: #{spatial_transformer_forward.14} parent=15 // pred_region
          %s181 = sand.u32 %s49, 1
          %s182 = sand.u32 %s49, 1
          %s183 = smul.addr %s182, 32
          %s184 = scalar_lea.vmem [#allocation5], %s183
          %s185 = smul.u32 8, %s18
          %s186 = smul.addr %s185, 3
          %s187 = sadd.s32 %s17, %s186
          %s188 = smul.addr %s16, 24
          %s189 = sadd.s32 %s187, %s188
          %s190 = smul.addr %s189, 4
          %s191 = scalar_lea.vmem %s0, %s190
          // Predicated region
          $region21: #{spatial_transformer_forward.14} parent=19 // pred_check
            _
          $region22: #{spatial_transformer_forward.14} parent=19 // pred_check_branch
            %193 = sbr.rel (0) target = $region24
          $region23: #{spatial_transformer_forward.14} parent=19 // pred_region
            // Predicated region
            $region25: #{spatial_transformer_forward.14} parent=23 // pred_check
              _
            $region26: #{spatial_transformer_forward.14} parent=23 // pred_check_branch
              %195 = sbr.rel target = $region28
            $region27: #{spatial_transformer_forward.14} parent=23 // pred_region
              // Predicated region
              $region40: #{spatial_transformer_forward.14} parent=27 // pred_check
                _
              $region41: #{spatial_transformer_forward.14} parent=27 // pred_check_branch
                %224 = sbr.rel (0) target = $region43
              $region42: #{spatial_transformer_forward.14} parent=27 // pred_region
                loop: start=0, step=1, limit=1
                $region44: #{spatial_transformer_forward.14} parent=42 // loop_pre_header
                  _
                $region45: #{spatial_transformer_forward.14} parent=42 // loop_header
                  %s226 = sphi 0, %s230
                  %p227 = scmp.ge.s32.totalorder %s226, 1
                  %s231 = sphi %s191, %s191
                  %s232 = sphi %s184, %s184
                $region46: #{spatial_transformer_forward.14} parent=42 // loop_header_branch
                  %229 = sbr.rel (%p227) target = $region50
                $region47: #{spatial_transformer_forward.14} parent=42 // loop_body
                  _
                $region48: #{spatial_transformer_forward.14} parent=42 // loop_footer
                  %s230 = sadd.s32 1, %s226
                $region49: #{spatial_transformer_forward.14} parent=42 // loop_footer_branch
                  %225 = sbr.rel target = $region45
                $region50: #{spatial_transformer_forward.14} parent=42 // loop_exit
                  _
                loop: start=0, step=1, limit=1
                $region51: #{spatial_transformer_forward.14} parent=42 // loop_pre_header
                  _
                $region52: #{spatial_transformer_forward.14} parent=42 // loop_header
                  %s235 = sphi 0, %s239
                  %p236 = scmp.ge.s32.totalorder %s235, 1
                  %s240 = sphi %s191, %s191
                  %s241 = sphi %s184, %s184
                $region53: #{spatial_transformer_forward.14} parent=42 // loop_header_branch
                  %238 = sbr.rel (%p236) target = $region57
                $region54: #{spatial_transformer_forward.14} parent=42 // loop_body
                  %v242 = vld [vmem:[%s240] sm:$0xf]
                  %243 = vst [vmem:[%s241] sm:$0xf] %v242
                  %v244 = vld [vmem:[%s240 + $0xc] sm:$0xf]
                  %245 = vst [vmem:[%s241 + $0x4] sm:$0xf] %v244
                  %v246 = vld [vmem:[%s240 + $0x18] sm:$0xf]
                  %247 = vst [vmem:[%s241 + $0x8] sm:$0xf] %v246
                  %v248 = vld [vmem:[%s240 + $0x24] sm:$0xf]
                  %249 = vst [vmem:[%s241 + $0xc] sm:$0xf] %v248
                  %v250 = vld [vmem:[%s240 + $0x30] sm:$0xf]
                  %251 = vst [vmem:[%s241 + $0x10] sm:$0xf] %v250
                  %v252 = vld [vmem:[%s240 + $0x3c] sm:$0xf]
                  %253 = vst [vmem:[%s241 + $0x14] sm:$0xf] %v252
                  %v254 = vld [vmem:[%s240 + $0x48] sm:$0xf]
                  %255 = vst [vmem:[%s241 + $0x18] sm:$0xf] %v254
                  %v256 = vld [vmem:[%s240 + $0x54] sm:$0xf]
                  %257 = vst [vmem:[%s241 + $0x1c] sm:$0xf] %v256
                $region55: #{spatial_transformer_forward.14} parent=42 // loop_footer
                  %s239 = sadd.s32 1, %s235
                $region56: #{spatial_transformer_forward.14} parent=42 // loop_footer_branch
                  %234 = sbr.rel target = $region52
                $region57: #{spatial_transformer_forward.14} parent=42 // loop_exit
                  _
              $region43: #{spatial_transformer_forward.14} parent=27 // pred_fallthru
                _
            $region28: #{spatial_transformer_forward.14} parent=23 // pred_fallthru
              _
            // Predicated region
            $region29: #{spatial_transformer_forward.14} parent=23 // pred_check
              _
            $region30: #{spatial_transformer_forward.14} parent=23 // pred_check_branch
              %197 = sbr.rel (0) target = $region32
            $region31: #{spatial_transformer_forward.14} parent=23 // pred_region
              loop: start=0, step=1, limit=1
              $region33: #{spatial_transformer_forward.14} parent=31 // loop_pre_header
                _
              $region34: #{spatial_transformer_forward.14} parent=31 // loop_header
                %s200 = sphi 0, %s204
                %p201 = scmp.ge.s32.totalorder %s200, 1
                %s205 = sphi %s191, %s191
                %s206 = sphi %s184, %s184
              $region35: #{spatial_transformer_forward.14} parent=31 // loop_header_branch
                %203 = sbr.rel (%p201) target = $region39
              $region36: #{spatial_transformer_forward.14} parent=31 // loop_body
                %v207 = vld [vmem:[%s205] sm:$0xf]
                %208 = vst [vmem:[%s206] sm:$0xf] %v207
                %v209 = vld [vmem:[%s205 + $0xc] sm:$0xf]
                %210 = vst [vmem:[%s206 + $0x4] sm:$0xf] %v209
                %v211 = vld [vmem:[%s205 + $0x18] sm:$0xf]
                %212 = vst [vmem:[%s206 + $0x8] sm:$0xf] %v211
                %v213 = vld [vmem:[%s205 + $0x24] sm:$0xf]
                %214 = vst [vmem:[%s206 + $0xc] sm:$0xf] %v213
                %v215 = vld [vmem:[%s205 + $0x30] sm:$0xf]
                %216 = vst [vmem:[%s206 + $0x10] sm:$0xf] %v215
                %v217 = vld [vmem:[%s205 + $0x3c] sm:$0xf]
                %218 = vst [vmem:[%s206 + $0x14] sm:$0xf] %v217
                %v219 = vld [vmem:[%s205 + $0x48] sm:$0xf]
                %220 = vst [vmem:[%s206 + $0x18] sm:$0xf] %v219
                %v221 = vld [vmem:[%s205 + $0x54] sm:$0xf]
                %222 = vst [vmem:[%s206 + $0x1c] sm:$0xf] %v221
              $region37: #{spatial_transformer_forward.14} parent=31 // loop_footer
                %s204 = sadd.s32 1, %s200
              $region38: #{spatial_transformer_forward.14} parent=31 // loop_footer_branch
                %199 = sbr.rel target = $region34
              $region39: #{spatial_transformer_forward.14} parent=31 // loop_exit
                _
            $region32: #{spatial_transformer_forward.14} parent=23 // pred_fallthru
              _
          $region24: #{spatial_transformer_forward.14} parent=19 // pred_fallthru
            _
          %258 = vnop
        $region20: #{spatial_transformer_forward.14} parent=15 // pred_fallthru
          _
        // Predicated region
        $region58: #{spatial_transformer_forward.14} parent=15 // pred_check
          %p259 = pneg %p91
        $region59: #{spatial_transformer_forward.14} parent=15 // pred_check_branch
          %261 = sbr.rel (%p259) target = $region61
        $region60: #{spatial_transformer_forward.14} parent=15 // pred_region
          %s262 = sand.u32 %s81, 1
          %s263 = sand.u32 %s81, 1
          %s264 = smul.addr %s263, 32
          %s265 = scalar_lea.vmem [#allocation6], %s264
          %s266 = sadd.s32 %s17, 1
          %s267 = smul.u32 8, %s19
          %s268 = smul.addr %s267, 3
          %s269 = sadd.s32 %s266, %s268
          %s270 = smul.addr %s16, 24
          %s271 = sadd.s32 %s269, %s270
          %s272 = smul.addr %s271, 4
          %s273 = scalar_lea.vmem %s1, %s272
          // Predicated region
          $region62: #{spatial_transformer_forward.14} parent=60 // pred_check
            _
          $region63: #{spatial_transformer_forward.14} parent=60 // pred_check_branch
            %275 = sbr.rel (0) target = $region65
          $region64: #{spatial_transformer_forward.14} parent=60 // pred_region
            // Predicated region
            $region66: #{spatial_transformer_forward.14} parent=64 // pred_check
              _
            $region67: #{spatial_transformer_forward.14} parent=64 // pred_check_branch
              %277 = sbr.rel target = $region69
            $region68: #{spatial_transformer_forward.14} parent=64 // pred_region
              // Predicated region
              $region81: #{spatial_transformer_forward.14} parent=68 // pred_check
                _
              $region82: #{spatial_transformer_forward.14} parent=68 // pred_check_branch
                %306 = sbr.rel (0) target = $region84
              $region83: #{spatial_transformer_forward.14} parent=68 // pred_region
                loop: start=0, step=1, limit=1
                $region85: #{spatial_transformer_forward.14} parent=83 // loop_pre_header
                  _
                $region86: #{spatial_transformer_forward.14} parent=83 // loop_header
                  %s308 = sphi 0, %s312
                  %p309 = scmp.ge.s32.totalorder %s308, 1
                  %s313 = sphi %s273, %s273
                  %s314 = sphi %s265, %s265
                $region87: #{spatial_transformer_forward.14} parent=83 // loop_header_branch
                  %311 = sbr.rel (%p309) target = $region91
                $region88: #{spatial_transformer_forward.14} parent=83 // loop_body
                  _
                $region89: #{spatial_transformer_forward.14} parent=83 // loop_footer
                  %s312 = sadd.s32 1, %s308
                $region90: #{spatial_transformer_forward.14} parent=83 // loop_footer_branch
                  %307 = sbr.rel target = $region86
                $region91: #{spatial_transformer_forward.14} parent=83 // loop_exit
                  _
                loop: start=0, step=1, limit=1
                $region92: #{spatial_transformer_forward.14} parent=83 // loop_pre_header
                  _
                $region93: #{spatial_transformer_forward.14} parent=83 // loop_header
                  %s317 = sphi 0, %s321
                  %p318 = scmp.ge.s32.totalorder %s317, 1
                  %s322 = sphi %s273, %s273
                  %s323 = sphi %s265, %s265
                $region94: #{spatial_transformer_forward.14} parent=83 // loop_header_branch
                  %320 = sbr.rel (%p318) target = $region98
                $region95: #{spatial_transformer_forward.14} parent=83 // loop_body
                  %v324 = vld [vmem:[%s322] sm:$0xf]
                  %325 = vst [vmem:[%s323] sm:$0xf] %v324
                  %v326 = vld [vmem:[%s322 + $0xc] sm:$0xf]
                  %327 = vst [vmem:[%s323 + $0x4] sm:$0xf] %v326
                  %v328 = vld [vmem:[%s322 + $0x18] sm:$0xf]
                  %329 = vst [vmem:[%s323 + $0x8] sm:$0xf] %v328
                  %v330 = vld [vmem:[%s322 + $0x24] sm:$0xf]
                  %331 = vst [vmem:[%s323 + $0xc] sm:$0xf] %v330
                  %v332 = vld [vmem:[%s322 + $0x30] sm:$0xf]
                  %333 = vst [vmem:[%s323 + $0x10] sm:$0xf] %v332
                  %v334 = vld [vmem:[%s322 + $0x3c] sm:$0xf]
                  %335 = vst [vmem:[%s323 + $0x14] sm:$0xf] %v334
                  %v336 = vld [vmem:[%s322 + $0x48] sm:$0xf]
                  %337 = vst [vmem:[%s323 + $0x18] sm:$0xf] %v336
                  %v338 = vld [vmem:[%s322 + $0x54] sm:$0xf]
                  %339 = vst [vmem:[%s323 + $0x1c] sm:$0xf] %v338
                $region96: #{spatial_transformer_forward.14} parent=83 // loop_footer
                  %s321 = sadd.s32 1, %s317
                $region97: #{spatial_transformer_forward.14} parent=83 // loop_footer_branch
                  %316 = sbr.rel target = $region93
                $region98: #{spatial_transformer_forward.14} parent=83 // loop_exit
                  _
              $region84: #{spatial_transformer_forward.14} parent=68 // pred_fallthru
                _
            $region69: #{spatial_transformer_forward.14} parent=64 // pred_fallthru
              _
            // Predicated region
            $region70: #{spatial_transformer_forward.14} parent=64 // pred_check
              _
            $region71: #{spatial_transformer_forward.14} parent=64 // pred_check_branch
              %279 = sbr.rel (0) target = $region73
            $region72: #{spatial_transformer_forward.14} parent=64 // pred_region
              loop: start=0, step=1, limit=1
              $region74: #{spatial_transformer_forward.14} parent=72 // loop_pre_header
                _
              $region75: #{spatial_transformer_forward.14} parent=72 // loop_header
                %s282 = sphi 0, %s286
                %p283 = scmp.ge.s32.totalorder %s282, 1
                %s287 = sphi %s273, %s273
                %s288 = sphi %s265, %s265
              $region76: #{spatial_transformer_forward.14} parent=72 // loop_header_branch
                %285 = sbr.rel (%p283) target = $region80
              $region77: #{spatial_transformer_forward.14} parent=72 // loop_body
                %v289 = vld [vmem:[%s287] sm:$0xf]
                %290 = vst [vmem:[%s288] sm:$0xf] %v289
                %v291 = vld [vmem:[%s287 + $0xc] sm:$0xf]
                %292 = vst [vmem:[%s288 + $0x4] sm:$0xf] %v291
                %v293 = vld [vmem:[%s287 + $0x18] sm:$0xf]
                %294 = vst [vmem:[%s288 + $0x8] sm:$0xf] %v293
                %v295 = vld [vmem:[%s287 + $0x24] sm:$0xf]
                %296 = vst [vmem:[%s288 + $0xc] sm:$0xf] %v295
                %v297 = vld [vmem:[%s287 + $0x30] sm:$0xf]
                %298 = vst [vmem:[%s288 + $0x10] sm:$0xf] %v297
                %v299 = vld [vmem:[%s287 + $0x3c] sm:$0xf]
                %300 = vst [vmem:[%s288 + $0x14] sm:$0xf] %v299
                %v301 = vld [vmem:[%s287 + $0x48] sm:$0xf]
                %302 = vst [vmem:[%s288 + $0x18] sm:$0xf] %v301
                %v303 = vld [vmem:[%s287 + $0x54] sm:$0xf]
                %304 = vst [vmem:[%s288 + $0x1c] sm:$0xf] %v303
              $region78: #{spatial_transformer_forward.14} parent=72 // loop_footer
                %s286 = sadd.s32 1, %s282
              $region79: #{spatial_transformer_forward.14} parent=72 // loop_footer_branch
                %281 = sbr.rel target = $region75
              $region80: #{spatial_transformer_forward.14} parent=72 // loop_exit
                _
            $region73: #{spatial_transformer_forward.14} parent=64 // pred_fallthru
              _
          $region65: #{spatial_transformer_forward.14} parent=60 // pred_fallthru
            _
          %340 = vnop
        $region61: #{spatial_transformer_forward.14} parent=15 // pred_fallthru
          _
        // Predicated region
        $region99: #{spatial_transformer_forward.14} parent=15 // pred_check
          %p341 = pneg %p123
        $region100: #{spatial_transformer_forward.14} parent=15 // pred_check_branch
          %343 = sbr.rel (%p341) target = $region102
        $region101: #{spatial_transformer_forward.14} parent=15 // pred_region
          %s344 = sand.u32 %s113, 1
          %s345 = sand.u32 %s113, 1
          %s346 = smul.addr %s345, 32
          %s347 = scalar_lea.vmem [#allocation7], %s346
          %s348 = sadd.s32 %s17, 2
          %s349 = smul.u32 8, %s19
          %s350 = smul.addr %s349, 3
          %s351 = sadd.s32 %s348, %s350
          %s352 = smul.addr %s16, 24
          %s353 = sadd.s32 %s351, %s352
          %s354 = smul.addr %s353, 4
          %s355 = scalar_lea.vmem %s2, %s354
          // Predicated region
          $region103: #{spatial_transformer_forward.14} parent=101 // pred_check
            _
          $region104: #{spatial_transformer_forward.14} parent=101 // pred_check_branch
            %357 = sbr.rel (0) target = $region106
          $region105: #{spatial_transformer_forward.14} parent=101 // pred_region
            // Predicated region
            $region107: #{spatial_transformer_forward.14} parent=105 // pred_check
              _
            $region108: #{spatial_transformer_forward.14} parent=105 // pred_check_branch
              %359 = sbr.rel target = $region110
            $region109: #{spatial_transformer_forward.14} parent=105 // pred_region
              // Predicated region
              $region122: #{spatial_transformer_forward.14} parent=109 // pred_check
                _
              $region123: #{spatial_transformer_forward.14} parent=109 // pred_check_branch
                %388 = sbr.rel (0) target = $region125
              $region124: #{spatial_transformer_forward.14} parent=109 // pred_region
                loop: start=0, step=1, limit=1
                $region126: #{spatial_transformer_forward.14} parent=124 // loop_pre_header
                  _
                $region127: #{spatial_transformer_forward.14} parent=124 // loop_header
                  %s390 = sphi 0, %s394
                  %p391 = scmp.ge.s32.totalorder %s390, 1
                  %s395 = sphi %s355, %s355
                  %s396 = sphi %s347, %s347
                $region128: #{spatial_transformer_forward.14} parent=124 // loop_header_branch
                  %393 = sbr.rel (%p391) target = $region132
                $region129: #{spatial_transformer_forward.14} parent=124 // loop_body
                  _
                $region130: #{spatial_transformer_forward.14} parent=124 // loop_footer
                  %s394 = sadd.s32 1, %s390
                $region131: #{spatial_transformer_forward.14} parent=124 // loop_footer_branch
                  %389 = sbr.rel target = $region127
                $region132: #{spatial_transformer_forward.14} parent=124 // loop_exit
                  _
                loop: start=0, step=1, limit=1
                $region133: #{spatial_transformer_forward.14} parent=124 // loop_pre_header
                  _
                $region134: #{spatial_transformer_forward.14} parent=124 // loop_header
                  %s399 = sphi 0, %s403
                  %p400 = scmp.ge.s32.totalorder %s399, 1
                  %s404 = sphi %s355, %s355
                  %s405 = sphi %s347, %s347
                $region135: #{spatial_transformer_forward.14} parent=124 // loop_header_branch
                  %402 = sbr.rel (%p400) target = $region139
                $region136: #{spatial_transformer_forward.14} parent=124 // loop_body
                  %v406 = vld [vmem:[%s404] sm:$0xf]
                  %407 = vst [vmem:[%s405] sm:$0xf] %v406
                  %v408 = vld [vmem:[%s404 + $0xc] sm:$0xf]
                  %409 = vst [vmem:[%s405 + $0x4] sm:$0xf] %v408
                  %v410 = vld [vmem:[%s404 + $0x18] sm:$0xf]
                  %411 = vst [vmem:[%s405 + $0x8] sm:$0xf] %v410
                  %v412 = vld [vmem:[%s404 + $0x24] sm:$0xf]
                  %413 = vst [vmem:[%s405 + $0xc] sm:$0xf] %v412
                  %v414 = vld [vmem:[%s404 + $0x30] sm:$0xf]
                  %415 = vst [vmem:[%s405 + $0x10] sm:$0xf] %v414
                  %v416 = vld [vmem:[%s404 + $0x3c] sm:$0xf]
                  %417 = vst [vmem:[%s405 + $0x14] sm:$0xf] %v416
                  %v418 = vld [vmem:[%s404 + $0x48] sm:$0xf]
                  %419 = vst [vmem:[%s405 + $0x18] sm:$0xf] %v418
                  %v420 = vld [vmem:[%s404 + $0x54] sm:$0xf]
                  %421 = vst [vmem:[%s405 + $0x1c] sm:$0xf] %v420
                $region137: #{spatial_transformer_forward.14} parent=124 // loop_footer
                  %s403 = sadd.s32 1, %s399
                $region138: #{spatial_transformer_forward.14} parent=124 // loop_footer_branch
                  %398 = sbr.rel target = $region134
                $region139: #{spatial_transformer_forward.14} parent=124 // loop_exit
                  _
              $region125: #{spatial_transformer_forward.14} parent=109 // pred_fallthru
                _
            $region110: #{spatial_transformer_forward.14} parent=105 // pred_fallthru
              _
            // Predicated region
            $region111: #{spatial_transformer_forward.14} parent=105 // pred_check
              _
            $region112: #{spatial_transformer_forward.14} parent=105 // pred_check_branch
              %361 = sbr.rel (0) target = $region114
            $region113: #{spatial_transformer_forward.14} parent=105 // pred_region
              loop: start=0, step=1, limit=1
              $region115: #{spatial_transformer_forward.14} parent=113 // loop_pre_header
                _
              $region116: #{spatial_transformer_forward.14} parent=113 // loop_header
                %s364 = sphi 0, %s368
                %p365 = scmp.ge.s32.totalorder %s364, 1
                %s369 = sphi %s355, %s355
                %s370 = sphi %s347, %s347
              $region117: #{spatial_transformer_forward.14} parent=113 // loop_header_branch
                %367 = sbr.rel (%p365) target = $region121
              $region118: #{spatial_transformer_forward.14} parent=113 // loop_body
                %v371 = vld [vmem:[%s369] sm:$0xf]
                %372 = vst [vmem:[%s370] sm:$0xf] %v371
                %v373 = vld [vmem:[%s369 + $0xc] sm:$0xf]
                %374 = vst [vmem:[%s370 + $0x4] sm:$0xf] %v373
                %v375 = vld [vmem:[%s369 + $0x18] sm:$0xf]
                %376 = vst [vmem:[%s370 + $0x8] sm:$0xf] %v375
                %v377 = vld [vmem:[%s369 + $0x24] sm:$0xf]
                %378 = vst [vmem:[%s370 + $0xc] sm:$0xf] %v377
                %v379 = vld [vmem:[%s369 + $0x30] sm:$0xf]
                %380 = vst [vmem:[%s370 + $0x10] sm:$0xf] %v379
                %v381 = vld [vmem:[%s369 + $0x3c] sm:$0xf]
                %382 = vst [vmem:[%s370 + $0x14] sm:$0xf] %v381
                %v383 = vld [vmem:[%s369 + $0x48] sm:$0xf]
                %384 = vst [vmem:[%s370 + $0x18] sm:$0xf] %v383
                %v385 = vld [vmem:[%s369 + $0x54] sm:$0xf]
                %386 = vst [vmem:[%s370 + $0x1c] sm:$0xf] %v385
              $region119: #{spatial_transformer_forward.14} parent=113 // loop_footer
                %s368 = sadd.s32 1, %s364
              $region120: #{spatial_transformer_forward.14} parent=113 // loop_footer_branch
                %363 = sbr.rel target = $region116
              $region121: #{spatial_transformer_forward.14} parent=113 // loop_exit
                _
            $region114: #{spatial_transformer_forward.14} parent=105 // pred_fallthru
              _
          $region106: #{spatial_transformer_forward.14} parent=101 // pred_fallthru
            _
          %422 = vnop
        $region102: #{spatial_transformer_forward.14} parent=15 // pred_fallthru
          _
      $region16: #{spatial_transformer_forward.14} parent=5 // pred_fallthru
        _
      %p423 = scmp.le.s32.totalorder 1, %s9
      %p424 = scmp.lt.s32.totalorder %s9, 3
      %p425 = pnand %p423, %p424
      %p426 = pneg %p425
      // Predicated region
      $region140: #{spatial_transformer_forward.14} parent=5 // pred_check
        _
      $region141: #{spatial_transformer_forward.14} parent=5 // pred_check_branch
        %428 = sbr.rel (%p425) target = $region143
      $region142: #{spatial_transformer_forward.14} parent=5 // pred_region
        %s429 = ssub.s32 %s9, 1
        %s430 = sand.u32 %s52, 1
        %s431 = sand.u32 %s52, 1
        %s432 = smul.addr %s431, 32
        %s433 = scalar_lea.vmem [#allocation5], %s432
        // Predicated region
        $region144: #{spatial_transformer_forward.14} parent=142 // pred_check
          %p434 = pneg %p65
        $region145: #{spatial_transformer_forward.14} parent=142 // pred_check_branch
          %436 = sbr.rel (%p434) target = $region147
        $region146: #{spatial_transformer_forward.14} parent=142 // pred_region
          _
        $region147: #{spatial_transformer_forward.14} parent=142 // pred_fallthru
          _
        %s437 = sand.u32 %s84, 1
        %s438 = sand.u32 %s84, 1
        %s439 = smul.addr %s438, 32
        %s440 = scalar_lea.vmem [#allocation6], %s439
        // Predicated region
        $region148: #{spatial_transformer_forward.14} parent=142 // pred_check
          %p441 = pneg %p97
        $region149: #{spatial_transformer_forward.14} parent=142 // pred_check_branch
          %443 = sbr.rel (%p441) target = $region151
        $region150: #{spatial_transformer_forward.14} parent=142 // pred_region
          _
        $region151: #{spatial_transformer_forward.14} parent=142 // pred_fallthru
          _
        %s444 = sand.u32 %s116, 1
        %s445 = sand.u32 %s116, 1
        %s446 = smul.addr %s445, 32
        %s447 = scalar_lea.vmem [#allocation7], %s446
        // Predicated region
        $region152: #{spatial_transformer_forward.14} parent=142 // pred_check
          %p448 = pneg %p129
        $region153: #{spatial_transformer_forward.14} parent=142 // pred_check_branch
          %450 = sbr.rel (%p448) target = $region155
        $region154: #{spatial_transformer_forward.14} parent=142 // pred_region
          _
        $region155: #{spatial_transformer_forward.14} parent=142 // pred_fallthru
          _
        %s451 = sand.u32 %s52, 1
        %s452 = sand.u32 %s52, 1
        %s453 = smul.addr %s452, 32
        %s454 = scalar_lea.vmem [#allocation5], %s453
        %p455 = pneg %p65
        %p456 = pneg %p62
        %s457 = sand.u32 %s84, 1
        %s458 = sand.u32 %s84, 1
        %s459 = smul.addr %s458, 32
        %s460 = scalar_lea.vmem [#allocation6], %s459
        %p461 = pneg %p97
        %p462 = pneg %p94
        %s463 = sand.u32 %s116, 1
        %s464 = sand.u32 %s116, 1
        %s465 = smul.addr %s464, 32
        %s466 = scalar_lea.vmem [#allocation7], %s465
        %p467 = pneg %p129
        %p468 = pneg %p126
        %p469 = pneg %p159
        %p470 = pneg %p156
        %s471 = smul.u32 8, %s22
        %p472 = scmp.lt.s32.totalorder %s20, 1
        %s473 = scalar_select %p472, %s20, 1
        %p474 = scmp.lt.s32.totalorder %s471, 7
        %s475 = scalar_select %p474, %s471, 7
        %p476 = scmp.lt.s32.totalorder %s21, 0
        %s477 = scalar_select %p476, %s21, 0
        %s478 = sadd.s32 %s477, %s475
        %s479 = smul.addr %s473, 8
        %s480 = sadd.s32 %s478, %s479
        %s481 = smul.addr %s480, 4
        %s482 = scalar_lea.vmem %s3, %s481
        %s483 = smul.u32 8, %s22
        %s484 = sadd.s32 %s21, 1
        %s485 = smul.u32 8, %s23
        %s486 = sadd.s32 %s21, 2
        %s487 = smul.u32 8, %s23
        %s488 = smul.u32 8, %s22
        %p489 = scmp.lt.s32.totalorder %s20, 1
        %s490 = scalar_select %p489, %s20, 1
        %p491 = scmp.lt.s32.totalorder %s488, 7
        %s492 = scalar_select %p491, %s488, 7
        %p493 = scmp.lt.s32.totalorder %s21, 0
        %s494 = scalar_select %p493, %s21, 0
        %s495 = sadd.s32 %s494, %s492
        %s496 = smul.addr %s490, 8
        %s497 = sadd.s32 %s495, %s496
        %s498 = smul.addr %s497, 4
        %s499 = scalar_lea.vmem %s3, %s498
        %s500 = smul.u32 8, %s22
        %p502 = scmp.eq.s32.totalorder %s23, 0
        // Predicated region
        $region156: #{spatial_transformer_forward.14} parent=142 // pred_check
          %p503 = pneg %p502
        $region157: #{spatial_transformer_forward.14} parent=142 // pred_check_branch
          %505 = sbr.rel (%p503) target = $region159
        $region158: #{spatial_transformer_forward.14} parent=142 // pred_region
          %506 = vst [vmem:[#allocation2] sm:$0xff] -inf
          %507 = vst [vmem:[#allocation2 + $0x8] sm:$0xff] -inf
          %508 = vst [vmem:[#allocation2 + $0x10] sm:$0xff] -inf
          %509 = vst [vmem:[#allocation2 + $0x18] sm:$0xff] -inf
          %510 = vst [vmem:[#allocation2 + $0x20] sm:$0xff] -inf
          %511 = vst [vmem:[#allocation2 + $0x28] sm:$0xff] -inf
          %512 = vst [vmem:[#allocation2 + $0x30] sm:$0xff] -inf
          %513 = vst [vmem:[#allocation2 + $0x38] sm:$0xff] -inf
          %514 = vst [vmem:[#allocation3] sm:$0xff] 0.0
          %515 = vst [vmem:[#allocation3 + $0x8] sm:$0xff] 0.0
          %516 = vst [vmem:[#allocation3 + $0x10] sm:$0xff] 0.0
          %517 = vst [vmem:[#allocation3 + $0x18] sm:$0xff] 0.0
          %518 = vst [vmem:[#allocation3 + $0x20] sm:$0xff] 0.0
          %519 = vst [vmem:[#allocation3 + $0x28] sm:$0xff] 0.0
          %520 = vst [vmem:[#allocation3 + $0x30] sm:$0xff] 0.0
          %521 = vst [vmem:[#allocation3 + $0x38] sm:$0xff] 0.0
          %522 = vst [vmem:[#allocation4] sm:$0xff] 0.0
          %523 = vst [vmem:[#allocation4 + $0x8] sm:$0xff] 0.0
          %524 = vst [vmem:[#allocation4 + $0x10] sm:$0xff] 0.0
          %525 = vst [vmem:[#allocation4 + $0x18] sm:$0xff] 0.0
          %526 = vst [vmem:[#allocation4 + $0x20] sm:$0xff] 0.0
          %527 = vst [vmem:[#allocation4 + $0x28] sm:$0xff] 0.0
          %528 = vst [vmem:[#allocation4 + $0x30] sm:$0xff] 0.0
          %529 = vst [vmem:[#allocation4 + $0x38] sm:$0xff] 0.0
        $region159: #{spatial_transformer_forward.14} parent=142 // pred_fallthru
          _
        %v530 = vld [vmem:[%s433] sm:$0xf]
        %v531 = vld [vmem:[%s433 + $0x4] sm:$0xf]
        %v532 = vld [vmem:[%s433 + $0x8] sm:$0xf]
        %v533 = vld [vmem:[%s433 + $0xc] sm:$0xf]
        %v534 = vld [vmem:[%s433 + $0x10] sm:$0xf]
        %v535 = vld [vmem:[%s433 + $0x14] sm:$0xf]
        %v536 = vld [vmem:[%s433 + $0x18] sm:$0xf]
        %v537 = vld [vmem:[%s433 + $0x1c] sm:$0xf]
        %v538 = vld [vmem:[%s440] sm:$0xf]
        %v539 = vld [vmem:[%s440 + $0x4] sm:$0xf]
        %v540 = vld [vmem:[%s440 + $0x8] sm:$0xf]
        %v541 = vld [vmem:[%s440 + $0xc] sm:$0xf]
        %v542 = vld [vmem:[%s440 + $0x10] sm:$0xf]
        %v543 = vld [vmem:[%s440 + $0x14] sm:$0xf]
        %v544 = vld [vmem:[%s440 + $0x18] sm:$0xf]
        %v545 = vld [vmem:[%s440 + $0x1c] sm:$0xf]
        %v546 = vld [vmem:[%s447] sm:$0xf]
        %v547 = vld [vmem:[%s447 + $0x4] sm:$0xf]
        %v548 = vld [vmem:[%s447 + $0x8] sm:$0xf]
        %v549 = vld [vmem:[%s447 + $0xc] sm:$0xf]
        %v550 = vld [vmem:[%s447 + $0x10] sm:$0xf]
        %v551 = vld [vmem:[%s447 + $0x14] sm:$0xf]
        %v552 = vld [vmem:[%s447 + $0x18] sm:$0xf]
        %v553 = vld [vmem:[%s447 + $0x1c] sm:$0xf]
        %v562 = vunpack.c.l.b16 %v530
        %v563 = vunpack.c.l.b16 %v531
        %v564 = vunpack.c.l.b16 %v532
        %v565 = vunpack.c.l.b16 %v533
        %v566 = vunpack.c.l.b16 %v534
        %v567 = vunpack.c.l.b16 %v535
        %v568 = vunpack.c.l.b16 %v536
        %v569 = vunpack.c.l.b16 %v537
        %v570 = vpack.c.b16 %v563, %v562
        %v571 = vpack.c.b16 %v565, %v564
        %v572 = vpack.c.b16 %v567, %v566
        %v573 = vpack.c.b16 %v569, %v568
        %v582 = vunpack.c.l.b16 %v538
        %v583 = vunpack.c.l.b16 %v539
        %v584 = vunpack.c.l.b16 %v540
        %v585 = vunpack.c.l.b16 %v541
        %v586 = vunpack.c.l.b16 %v542
        %v587 = vunpack.c.l.b16 %v543
        %v588 = vunpack.c.l.b16 %v544
        %v589 = vunpack.c.l.b16 %v545
        %v590 = vpack.c.b16 %v583, %v582
        %v591 = vpack.c.b16 %v585, %v584
        %v592 = vpack.c.b16 %v587, %v586
        %v593 = vpack.c.b16 %v589, %v588
        %vm594 = vcmask 523264
        %v596 = vsel %vm594, %v570, 0
        %v599 = vsel %vm594, %v571, 0
        %v602 = vsel %vm594, %v572, 0
        %v605 = vsel %vm594, %v573, 0
        %v608 = vsel %vm594, %v590, 0
        %v611 = vsel %vm594, %v591, 0
        %v614 = vsel %vm594, %v592, 0
        %v617 = vsel %vm594, %v593, 0
        %619 = vmatprep.subr.bf16.mxu0 0
        %620 = vmatpush1.bf16.xpose.msra.mxu0 %v608
        %621 = vmatprep.subr.bf16.mxu0 0
        %622 = vmatpush1.bf16.xpose.msra.mxu0 %v611
        %623 = vmatprep.subr.bf16.mxu0 0
        %624 = vmatpush1.bf16.xpose.msra.mxu0 %v614
        %625 = vmatprep.subr.bf16.mxu0 0
        %626 = vmatpush1.bf16.xpose.msra.mxu0 %v617
        %627 = vmatprep.subr.bf16.mxu0 0
        %628 = vmatpush1.bf16.xpose.msra.mxu0 0
        %629 = vmatprep.subr.bf16.mxu0 0
        %630 = vmatpush1.bf16.xpose.msra.mxu0 0
        %631 = vmatprep.subr.bf16.mxu0 0
        %632 = vmatpush1.bf16.xpose.msra.mxu0 0
        %633 = vmatprep.subr.bf16.mxu0 0
        %634 = vmatpush1.bf16.xpose.msra.mxu0 0
        %635 = vmatprep.subr.bf16.mxu0 0
        %636 = vmatpush1.bf16.xpose.msra.mxu0 0
        %637 = vmatprep.subr.bf16.mxu0 0
        %638 = vmatpush1.bf16.xpose.msra.mxu0 0
        %639 = vmatprep.subr.bf16.mxu0 0
        %640 = vmatpush1.bf16.xpose.msra.mxu0 0
        %641 = vmatprep.subr.bf16.mxu0 0
        %642 = vmatpush1.bf16.xpose.msra.mxu0 0
        %643 = vmatprep.subr.bf16.mxu0 0
        %644 = vmatpush1.bf16.xpose.msra.mxu0 0
        %645 = vmatprep.subr.bf16.mxu0 0
        %646 = vmatpush1.bf16.xpose.msra.mxu0 0
        %647 = vmatprep.subr.bf16.mxu0 0
        %648 = vmatpush1.bf16.xpose.msra.mxu0 0
        %649 = vmatprep.subr.bf16.mxu0 0
        %650 = vmatpush1.bf16.xpose.msra.mxu0 0
        %651 = vmatprep.mubr.bf16.mxu0 0
        %652 = vmatmul.mubr.bf16.gmra.mrb[0].mxu0 %v596
        %v653 = vpop.f32.mrb[0].mxu0
        %v654 = vadd.f32 0.0, %v653
        %v655 = vpop.f32.mrb[0].mxu0
        %v656 = vpop.f32.mrb[0].mxu0
        %v657 = vadd.f32 0.0, %v656
        %v658 = vpop.f32.mrb[0].mxu0
        %659 = vmatprep.mubr.bf16.mxu0 0
        %660 = vmatmul.mubr.bf16.gmra.mrb[0].mxu0 %v599
        %v661 = vpop.f32.mrb[0].mxu0
        %v662 = vadd.f32 0.0, %v661
        %v663 = vpop.f32.mrb[0].mxu0
        %v664 = vpop.f32.mrb[0].mxu0
        %v665 = vadd.f32 0.0, %v664
        %v666 = vpop.f32.mrb[0].mxu0
        %667 = vmatprep.mubr.bf16.mxu0 0
        %668 = vmatmul.mubr.bf16.gmra.mrb[0].mxu0 %v602
        %v669 = vpop.f32.mrb[0].mxu0
        %v670 = vadd.f32 0.0, %v669
        %v671 = vpop.f32.mrb[0].mxu0
        %v672 = vpop.f32.mrb[0].mxu0
        %v673 = vadd.f32 0.0, %v672
        %v674 = vpop.f32.mrb[0].mxu0
        %675 = vmatprep.mubr.bf16.mxu0 0
        %676 = vmatmul.mubr.bf16.gmra.mrb[0].mxu0 %v605
        %v677 = vpop.f32.mrb[0].mxu0
        %v678 = vadd.f32 0.0, %v677
        %v679 = vpop.f32.mrb[0].mxu0
        %v680 = vpop.f32.mrb[0].mxu0
        %v681 = vadd.f32 0.0, %v680
        %v682 = vpop.f32.mrb[0].mxu0
        %683 = vdwg.mxu0
        %v684 = vld [vmem:[#allocation2] sm:$0xff]
        %v685 = vld [vmem:[#allocation2 + $0x8] sm:$0xff]
        %v686 = vld [vmem:[#allocation2 + $0x10] sm:$0xff]
        %v687 = vld [vmem:[#allocation2 + $0x18] sm:$0xff]
        %v688 = vld [vmem:[#allocation2 + $0x20] sm:$0xff]
        %v689 = vld [vmem:[#allocation2 + $0x28] sm:$0xff]
        %v690 = vld [vmem:[#allocation2 + $0x30] sm:$0xff]
        %v691 = vld [vmem:[#allocation2 + $0x38] sm:$0xff]
        %v692 = vld [vmem:[#allocation3] sm:$0xff]
        %v693 = vld [vmem:[#allocation3 + $0x8] sm:$0xff]
        %v694 = vld [vmem:[#allocation3 + $0x10] sm:$0xff]
        %v695 = vld [vmem:[#allocation3 + $0x18] sm:$0xff]
        %v696 = vld [vmem:[#allocation3 + $0x20] sm:$0xff]
        %v697 = vld [vmem:[#allocation3 + $0x28] sm:$0xff]
        %v698 = vld [vmem:[#allocation3 + $0x30] sm:$0xff]
        %v699 = vld [vmem:[#allocation3 + $0x38] sm:$0xff]
        %v700 = vsel %vm594, %v654, -inf
        %701 = vmax.xlane.f32.xlu0 %v700
        %v702 = vpop.xlane.xlu0 %701
        %v703 = vsel %vm594, %v657, -inf
        %704 = vmax.xlane.f32.xlu0 %v703
        %v705 = vpop.xlane.xlu0 %704
        %v706 = vsel %vm594, %v662, -inf
        %707 = vmax.xlane.f32.xlu0 %v706
        %v708 = vpop.xlane.xlu0 %707
        %v709 = vsel %vm594, %v665, -inf
        %710 = vmax.xlane.f32.xlu0 %v709
        %v711 = vpop.xlane.xlu0 %710
        %v712 = vsel %vm594, %v670, -inf
        %713 = vmax.xlane.f32.xlu0 %v712
        %v714 = vpop.xlane.xlu0 %713
        %v715 = vsel %vm594, %v673, -inf
        %716 = vmax.xlane.f32.xlu0 %v715
        %v717 = vpop.xlane.xlu0 %716
        %v718 = vsel %vm594, %v678, -inf
        %719 = vmax.xlane.f32.xlu0 %v718
        %v720 = vpop.xlane.xlu0 %719
        %v721 = vsel %vm594, %v681, -inf
        %722 = vmax.xlane.f32.xlu0 %v721
        %v723 = vpop.xlane.xlu0 %722
        %v724 = vmax.f32 %v684, %v702
        %v725 = vmax.f32 %v685, %v705
        %v726 = vmax.f32 %v686, %v708
        %v727 = vmax.f32 %v687, %v711
        %v728 = vmax.f32 %v688, %v714
        %v729 = vmax.f32 %v689, %v717
        %v730 = vmax.f32 %v690, %v720
        %v731 = vmax.f32 %v691, %v723
        %v732 = vsub.f32 %v684, %v724
        %v733 = vsub.f32 %v685, %v725
        %v734 = vsub.f32 %v686, %v726
        %v735 = vsub.f32 %v687, %v727
        %v736 = vsub.f32 %v688, %v728
        %v737 = vsub.f32 %v689, %v729
        %v738 = vsub.f32 %v690, %v730
        %v739 = vsub.f32 %v691, %v731
        %v740 = vmul.f32 %v732, 1.442695
        %v741 = vpow.pop %v740
        %v742 = vmul.f32 %v733, 1.442695
        %v743 = vpow.pop %v742
        %v744 = vmul.f32 %v734, 1.442695
        %v745 = vpow.pop %v744
        %v746 = vmul.f32 %v735, 1.442695
        %v747 = vpow.pop %v746
        %v748 = vmul.f32 %v736, 1.442695
        %v749 = vpow.pop %v748
        %v750 = vmul.f32 %v737, 1.442695
        %v751 = vpow.pop %v750
        %v752 = vmul.f32 %v738, 1.442695
        %v753 = vpow.pop %v752
        %v754 = vmul.f32 %v739, 1.442695
        %v755 = vpow.pop %v754
        %757 = vset.pattern.permute.xlu0 0
        %758 = vperm.xlu0 %757, %v724
        %v759 = vpop.permute.xlu0 %758
        %762 = vset.pattern.permute.xlu0 0
        %763 = vperm.xlu0 %762, %v725
        %v764 = vpop.permute.xlu0 %763
        %767 = vset.pattern.permute.xlu0 0
        %768 = vperm.xlu0 %767, %v726
        %v769 = vpop.permute.xlu0 %768
        %772 = vset.pattern.permute.xlu0 0
        %773 = vperm.xlu0 %772, %v727
        %v774 = vpop.permute.xlu0 %773
        %777 = vset.pattern.permute.xlu0 0
        %778 = vperm.xlu0 %777, %v728
        %v779 = vpop.permute.xlu0 %778
        %782 = vset.pattern.permute.xlu0 0
        %783 = vperm.xlu0 %782, %v729
        %v784 = vpop.permute.xlu0 %783
        %787 = vset.pattern.permute.xlu0 0
        %788 = vperm.xlu0 %787, %v730
        %v789 = vpop.permute.xlu0 %788
        %792 = vset.pattern.permute.xlu0 0
        %793 = vperm.xlu0 %792, %v731
        %v794 = vpop.permute.xlu0 %793
        %v796 = vsub.f32 %v654, %v759
        %v797 = vsub.f32 %v657, %v764
        %v798 = vsub.f32 %v662, %v769
        %v799 = vsub.f32 %v665, %v774
        %v800 = vsub.f32 %v670, %v779
        %v801 = vsub.f32 %v673, %v784
        %v802 = vsub.f32 %v678, %v789
        %v803 = vsub.f32 %v681, %v794
        %v804 = vmul.f32 %v796, 1.442695
        %v805 = vpow.pop %v804
        %v806 = vmul.f32 %v797, 1.442695
        %v807 = vpow.pop %v806
        %v808 = vmul.f32 %v798, 1.442695
        %v809 = vpow.pop %v808
        %v810 = vmul.f32 %v799, 1.442695
        %v811 = vpow.pop %v810
        %v812 = vmul.f32 %v800, 1.442695
        %v813 = vpow.pop %v812
        %v814 = vmul.f32 %v801, 1.442695
        %v815 = vpow.pop %v814
        %v816 = vmul.f32 %v802, 1.442695
        %v817 = vpow.pop %v816
        %v818 = vmul.f32 %v803, 1.442695
        %v819 = vpow.pop %v818
        %v820 = vmul.f32 %v741, %v692
        %v821 = vmul.f32 %v743, %v693
        %v822 = vmul.f32 %v745, %v694
        %v823 = vmul.f32 %v747, %v695
        %v824 = vmul.f32 %v749, %v696
        %v825 = vmul.f32 %v751, %v697
        %v826 = vmul.f32 %v753, %v698
        %v827 = vmul.f32 %v755, %v699
        %v828 = vsel %vm594, %v805, 0.0
        %829 = vadd.xlane.f32.xlu0 %v828
        %v830 = vpop.xlane.xlu0 %829
        %v831 = vsel %vm594, %v807, 0.0
        %832 = vadd.xlane.f32.xlu0 %v831
        %v833 = vpop.xlane.xlu0 %832
        %v834 = vsel %vm594, %v809, 0.0
        %835 = vadd.xlane.f32.xlu0 %v834
        %v836 = vpop.xlane.xlu0 %835
        %v837 = vsel %vm594, %v811, 0.0
        %838 = vadd.xlane.f32.xlu0 %v837
        %v839 = vpop.xlane.xlu0 %838
        %v840 = vsel %vm594, %v813, 0.0
        %841 = vadd.xlane.f32.xlu0 %v840
        %v842 = vpop.xlane.xlu0 %841
        %v843 = vsel %vm594, %v815, 0.0
        %844 = vadd.xlane.f32.xlu0 %v843
        %v845 = vpop.xlane.xlu0 %844
        %v846 = vsel %vm594, %v817, 0.0
        %847 = vadd.xlane.f32.xlu0 %v846
        %v848 = vpop.xlane.xlu0 %847
        %v849 = vsel %vm594, %v819, 0.0
        %850 = vadd.xlane.f32.xlu0 %v849
        %v851 = vpop.xlane.xlu0 %850
        %v852 = vadd.f32 %v820, %v830
        %v853 = vadd.f32 %v821, %v833
        %v854 = vadd.f32 %v822, %v836
        %v855 = vadd.f32 %v823, %v839
        %v856 = vadd.f32 %v824, %v842
        %v857 = vadd.f32 %v825, %v845
        %v858 = vadd.f32 %v826, %v848
        %v859 = vadd.f32 %v827, %v851
        %v860 = vld [vmem:[#allocation4] sm:$0xff]
        %v861 = vld [vmem:[#allocation4 + $0x8] sm:$0xff]
        %v862 = vld [vmem:[#allocation4 + $0x10] sm:$0xff]
        %v863 = vld [vmem:[#allocation4 + $0x18] sm:$0xff]
        %v864 = vld [vmem:[#allocation4 + $0x20] sm:$0xff]
        %v865 = vld [vmem:[#allocation4 + $0x28] sm:$0xff]
        %v866 = vld [vmem:[#allocation4 + $0x30] sm:$0xff]
        %v867 = vld [vmem:[#allocation4 + $0x38] sm:$0xff]
        %869 = vset.pattern.permute.xlu0 0
        %870 = vperm.xlu0 %869, %v741
        %v871 = vpop.permute.xlu0 %870
        %874 = vset.pattern.permute.xlu0 0
        %875 = vperm.xlu0 %874, %v743
        %v876 = vpop.permute.xlu0 %875
        %879 = vset.pattern.permute.xlu0 0
        %880 = vperm.xlu0 %879, %v745
        %v881 = vpop.permute.xlu0 %880
        %884 = vset.pattern.permute.xlu0 0
        %885 = vperm.xlu0 %884, %v747
        %v886 = vpop.permute.xlu0 %885
        %889 = vset.pattern.permute.xlu0 0
        %890 = vperm.xlu0 %889, %v749
        %v891 = vpop.permute.xlu0 %890
        %894 = vset.pattern.permute.xlu0 0
        %895 = vperm.xlu0 %894, %v751
        %v896 = vpop.permute.xlu0 %895
        %899 = vset.pattern.permute.xlu0 0
        %900 = vperm.xlu0 %899, %v753
        %v901 = vpop.permute.xlu0 %900
        %904 = vset.pattern.permute.xlu0 0
        %905 = vperm.xlu0 %904, %v755
        %v906 = vpop.permute.xlu0 %905
        %v908 = vmul.f32 %v871, %v860
        %v909 = vmul.f32 %v876, %v861
        %v910 = vmul.f32 %v881, %v862
        %v911 = vmul.f32 %v886, %v863
        %v912 = vmul.f32 %v891, %v864
        %v913 = vmul.f32 %v896, %v865
        %v914 = vmul.f32 %v901, %v866
        %v915 = vmul.f32 %v906, %v867
        %v916 = vpack.c.bf16 %v807, %v805
        %v917 = vpack.c.bf16 %v811, %v809
        %v918 = vpack.c.bf16 %v815, %v813
        %v919 = vpack.c.bf16 %v819, %v817
        %v928 = vunpack.c.l.b16 %v546
        %v929 = vunpack.c.l.b16 %v547
        %v930 = vunpack.c.l.b16 %v548
        %v931 = vunpack.c.l.b16 %v549
        %v932 = vunpack.c.l.b16 %v550
        %v933 = vunpack.c.l.b16 %v551
        %v934 = vunpack.c.l.b16 %v552
        %v935 = vunpack.c.l.b16 %v553
        %v936 = vpack.c.b16 %v929, %v928
        %v937 = vpack.c.b16 %v931, %v930
        %v938 = vpack.c.b16 %v933, %v932
        %v939 = vpack.c.b16 %v935, %v934
        %v945 = vsel %vm594, %v916, 0
        %v948 = vsel %vm594, %v917, 0
        %v951 = vsel %vm594, %v918, 0
        %v954 = vsel %vm594, %v919, 0
        %956 = vmatprep.subr.bf16.mxu0 0
        %957 = vmatpush1.bf16.msra.mxu0 %v936
        %958 = vmatprep.subr.bf16.mxu0 0
        %959 = vmatpush1.bf16.msra.mxu0 %v937
        %960 = vmatprep.subr.bf16.mxu0 0
        %961 = vmatpush1.bf16.msra.mxu0 %v938
        %962 = vmatprep.subr.bf16.mxu0 0
        %963 = vmatpush1.bf16.msra.mxu0 %v939
        %964 = vmatprep.subr.bf16.mxu0 0
        %965 = vmatpush1.bf16.msra.mxu0 0
        %966 = vmatprep.subr.bf16.mxu0 0
        %967 = vmatpush1.bf16.msra.mxu0 0
        %968 = vmatprep.subr.bf16.mxu0 0
        %969 = vmatpush1.bf16.msra.mxu0 0
        %970 = vmatprep.subr.bf16.mxu0 0
        %971 = vmatpush1.bf16.msra.mxu0 0
        %972 = vmatprep.subr.bf16.mxu0 0
        %973 = vmatpush1.bf16.msra.mxu0 0
        %974 = vmatprep.subr.bf16.mxu0 0
        %975 = vmatpush1.bf16.msra.mxu0 0
        %976 = vmatprep.subr.bf16.mxu0 0
        %977 = vmatpush1.bf16.msra.mxu0 0
        %978 = vmatprep.subr.bf16.mxu0 0
        %979 = vmatpush1.bf16.msra.mxu0 0
        %980 = vmatprep.subr.bf16.mxu0 0
        %981 = vmatpush1.bf16.msra.mxu0 0
        %982 = vmatprep.subr.bf16.mxu0 0
        %983 = vmatpush1.bf16.msra.mxu0 0
        %984 = vmatprep.subr.bf16.mxu0 0
        %985 = vmatpush1.bf16.msra.mxu0 0
        %986 = vmatprep.subr.bf16.mxu0 0
        %987 = vmatpush1.bf16.msra.mxu0 0
        %988 = vmatprep.mubr.bf16.mxu0 0
        %989 = vmatmul.mubr.bf16.gmra.mrb[0].mxu0 %v945
        %v990 = vpop.f32.mrb[0].mxu0
        %v991 = vadd.f32 0.0, %v990
        %v992 = vpop.f32.mrb[0].mxu0
        %v993 = vpop.f32.mrb[0].mxu0
        %v994 = vadd.f32 0.0, %v993
        %v995 = vpop.f32.mrb[0].mxu0
        %996 = vmatprep.mubr.bf16.mxu0 0
        %997 = vmatmul.mubr.bf16.gmra.mrb[0].mxu0 %v948
        %v998 = vpop.f32.mrb[0].mxu0
        %v999 = vadd.f32 0.0, %v998
        %v1000 = vpop.f32.mrb[0].mxu0
        %v1001 = vpop.f32.mrb[0].mxu0
        %v1002 = vadd.f32 0.0, %v1001
        %v1003 = vpop.f32.mrb[0].mxu0
        %1004 = vmatprep.mubr.bf16.mxu0 0
        %1005 = vmatmul.mubr.bf16.gmra.mrb[0].mxu0 %v951
        %v1006 = vpop.f32.mrb[0].mxu0
        %v1007 = vadd.f32 0.0, %v1006
        %v1008 = vpop.f32.mrb[0].mxu0
        %v1009 = vpop.f32.mrb[0].mxu0
        %v1010 = vadd.f32 0.0, %v1009
        %v1011 = vpop.f32.mrb[0].mxu0
        %1012 = vmatprep.mubr.bf16.mxu0 0
        %1013 = vmatmul.mubr.bf16.gmra.mrb[0].mxu0 %v954
        %v1014 = vpop.f32.mrb[0].mxu0
        %v1015 = vadd.f32 0.0, %v1014
        %v1016 = vpop.f32.mrb[0].mxu0
        %v1017 = vpop.f32.mrb[0].mxu0
        %v1018 = vadd.f32 0.0, %v1017
        %v1019 = vpop.f32.mrb[0].mxu0
        %1020 = vdwg.mxu0
        %v1021 = vadd.f32 %v908, %v991
        %v1022 = vadd.f32 %v909, %v994
        %v1023 = vadd.f32 %v910, %v999
        %v1024 = vadd.f32 %v911, %v1002
        %v1025 = vadd.f32 %v912, %v1007
        %v1026 = vadd.f32 %v913, %v1010
        %v1027 = vadd.f32 %v914, %v1015
        %v1028 = vadd.f32 %v915, %v1018
        %1029 = vst.msk [vmem:[#allocation4] sm:$0xff] %vm594, %v1021
        %1030 = vst.msk [vmem:[#allocation4 + $0x8] sm:$0xff] %vm594, %v1022
        %1031 = vst.msk [vmem:[#allocation4 + $0x10] sm:$0xff] %vm594, %v1023
        %1032 = vst.msk [vmem:[#allocation4 + $0x18] sm:$0xff] %vm594, %v1024
        %1033 = vst.msk [vmem:[#allocation4 + $0x20] sm:$0xff] %vm594, %v1025
        %1034 = vst.msk [vmem:[#allocation4 + $0x28] sm:$0xff] %vm594, %v1026
        %1035 = vst.msk [vmem:[#allocation4 + $0x30] sm:$0xff] %vm594, %v1027
        %1036 = vst.msk [vmem:[#allocation4 + $0x38] sm:$0xff] %vm594, %v1028
        %1037 = vst.msk [vmem:[#allocation2] sm:$0xff] %vm594, %v759
        %1038 = vst.msk [vmem:[#allocation2 + $0x8] sm:$0xff] %vm594, %v764
        %1039 = vst.msk [vmem:[#allocation2 + $0x10] sm:$0xff] %vm594, %v769
        %1040 = vst.msk [vmem:[#allocation2 + $0x18] sm:$0xff] %vm594, %v774
        %1041 = vst.msk [vmem:[#allocation2 + $0x20] sm:$0xff] %vm594, %v779
        %1042 = vst.msk [vmem:[#allocation2 + $0x28] sm:$0xff] %vm594, %v784
        %1043 = vst.msk [vmem:[#allocation2 + $0x30] sm:$0xff] %vm594, %v789
        %1044 = vst.msk [vmem:[#allocation2 + $0x38] sm:$0xff] %vm594, %v794
        %1046 = vset.pattern.permute.xlu0 0
        %1047 = vperm.xlu0 %1046, %v852
        %v1048 = vpop.permute.xlu0 %1047
        %1051 = vset.pattern.permute.xlu0 0
        %1052 = vperm.xlu0 %1051, %v853
        %v1053 = vpop.permute.xlu0 %1052
        %1056 = vset.pattern.permute.xlu0 0
        %1057 = vperm.xlu0 %1056, %v854
        %v1058 = vpop.permute.xlu0 %1057
        %1061 = vset.pattern.permute.xlu0 0
        %1062 = vperm.xlu0 %1061, %v855
        %v1063 = vpop.permute.xlu0 %1062
        %1066 = vset.pattern.permute.xlu0 0
        %1067 = vperm.xlu0 %1066, %v856
        %v1068 = vpop.permute.xlu0 %1067
        %1071 = vset.pattern.permute.xlu0 0
        %1072 = vperm.xlu0 %1071, %v857
        %v1073 = vpop.permute.xlu0 %1072
        %1076 = vset.pattern.permute.xlu0 0
        %1077 = vperm.xlu0 %1076, %v858
        %v1078 = vpop.permute.xlu0 %1077
        %1081 = vset.pattern.permute.xlu0 0
        %1082 = vperm.xlu0 %1081, %v859
        %v1083 = vpop.permute.xlu0 %1082
        %1085 = vst.msk [vmem:[#allocation3] sm:$0xff] %vm594, %v1048
        %1086 = vst.msk [vmem:[#allocation3 + $0x8] sm:$0xff] %vm594, %v1053
        %1087 = vst.msk [vmem:[#allocation3 + $0x10] sm:$0xff] %vm594, %v1058
        %1088 = vst.msk [vmem:[#allocation3 + $0x18] sm:$0xff] %vm594, %v1063
        %1089 = vst.msk [vmem:[#allocation3 + $0x20] sm:$0xff] %vm594, %v1068
        %1090 = vst.msk [vmem:[#allocation3 + $0x28] sm:$0xff] %vm594, %v1073
        %1091 = vst.msk [vmem:[#allocation3 + $0x30] sm:$0xff] %vm594, %v1078
        %1092 = vst.msk [vmem:[#allocation3 + $0x38] sm:$0xff] %vm594, %v1083
        %1093 = vrot.lane.b32.xlu0 %v570, 64
        %v1094 = vpop.permute.xlu0 %1093
        %1095 = vrot.lane.b32.xlu0 %v571, 64
        %v1096 = vpop.permute.xlu0 %1095
        %1097 = vrot.lane.b32.xlu0 %v572, 64
        %v1098 = vpop.permute.xlu0 %1097
        %1099 = vrot.lane.b32.xlu0 %v573, 64
        %v1100 = vpop.permute.xlu0 %1099
        %1101 = vrot.lane.b32.xlu0 %v590, 64
        %v1102 = vpop.permute.xlu0 %1101
        %1103 = vrot.lane.b32.xlu0 %v591, 64
        %v1104 = vpop.permute.xlu0 %1103
        %1105 = vrot.lane.b32.xlu0 %v592, 64
        %v1106 = vpop.permute.xlu0 %1105
        %1107 = vrot.lane.b32.xlu0 %v593, 64
        %v1108 = vpop.permute.xlu0 %1107
        %v1110 = vsel %vm594, %v1094, 0
        %v1113 = vsel %vm594, %v1096, 0
        %v1116 = vsel %vm594, %v1098, 0
        %v1119 = vsel %vm594, %v1100, 0
        %v1122 = vsel %vm594, %v1102, 0
        %v1125 = vsel %vm594, %v1104, 0
        %v1128 = vsel %vm594, %v1106, 0
        %v1131 = vsel %vm594, %v1108, 0
        %1133 = vmatprep.subr.bf16.mxu0 0
        %1134 = vmatpush1.bf16.xpose.msra.mxu0 %v1122
        %1135 = vmatprep.subr.bf16.mxu0 0
        %1136 = vmatpush1.bf16.xpose.msra.mxu0 %v1125
        %1137 = vmatprep.subr.bf16.mxu0 0
        %1138 = vmatpush1.bf16.xpose.msra.mxu0 %v1128
        %1139 = vmatprep.subr.bf16.mxu0 0
        %1140 = vmatpush1.bf16.xpose.msra.mxu0 %v1131
        %1141 = vmatprep.subr.bf16.mxu0 0
        %1142 = vmatpush1.bf16.xpose.msra.mxu0 0
        %1143 = vmatprep.subr.bf16.mxu0 0
        %1144 = vmatpush1.bf16.xpose.msra.mxu0 0
        %1145 = vmatprep.subr.bf16.mxu0 0
        %1146 = vmatpush1.bf16.xpose.msra.mxu0 0
        %1147 = vmatprep.subr.bf16.mxu0 0
        %1148 = vmatpush1.bf16.xpose.msra.mxu0 0
        %1149 = vmatprep.subr.bf16.mxu0 0
        %1150 = vmatpush1.bf16.xpose.msra.mxu0 0
        %1151 = vmatprep.subr.bf16.mxu0 0
        %1152 = vmatpush1.bf16.xpose.msra.mxu0 0
        %1153 = vmatprep.subr.bf16.mxu0 0
        %1154 = vmatpush1.bf16.xpose.msra.mxu0 0
        %1155 = vmatprep.subr.bf16.mxu0 0
        %1156 = vmatpush1.bf16.xpose.msra.mxu0 0
        %1157 = vmatprep.subr.bf16.mxu0 0
        %1158 = vmatpush1.bf16.xpose.msra.mxu0 0
        %1159 = vmatprep.subr.bf16.mxu0 0
        %1160 = vmatpush1.bf16.xpose.msra.mxu0 0
        %1161 = vmatprep.subr.bf16.mxu0 0
        %1162 = vmatpush1.bf16.xpose.msra.mxu0 0
        %1163 = vmatprep.subr.bf16.mxu0 0
        %1164 = vmatpush1.bf16.xpose.msra.mxu0 0
        %1165 = vmatprep.mubr.bf16.mxu0 0
        %1166 = vmatmul.mubr.bf16.gmra.mrb[0].mxu0 %v1110
        %v1167 = vpop.f32.mrb[0].mxu0
        %v1168 = vadd.f32 0.0, %v1167
        %v1169 = vpop.f32.mrb[0].mxu0
        %v1170 = vpop.f32.mrb[0].mxu0
        %v1171 = vadd.f32 0.0, %v1170
        %v1172 = vpop.f32.mrb[0].mxu0
        %1173 = vmatprep.mubr.bf16.mxu0 0
        %1174 = vmatmul.mubr.bf16.gmra.mrb[0].mxu0 %v1113
        %v1175 = vpop.f32.mrb[0].mxu0
        %v1176 = vadd.f32 0.0, %v1175
        %v1177 = vpop.f32.mrb[0].mxu0
        %v1178 = vpop.f32.mrb[0].mxu0
        %v1179 = vadd.f32 0.0, %v1178
        %v1180 = vpop.f32.mrb[0].mxu0
        %1181 = vmatprep.mubr.bf16.mxu0 0
        %1182 = vmatmul.mubr.bf16.gmra.mrb[0].mxu0 %v1116
        %v1183 = vpop.f32.mrb[0].mxu0
        %v1184 = vadd.f32 0.0, %v1183
        %v1185 = vpop.f32.mrb[0].mxu0
        %v1186 = vpop.f32.mrb[0].mxu0
        %v1187 = vadd.f32 0.0, %v1186
        %v1188 = vpop.f32.mrb[0].mxu0
        %1189 = vmatprep.mubr.bf16.mxu0 0
        %1190 = vmatmul.mubr.bf16.gmra.mrb[0].mxu0 %v1119
        %v1191 = vpop.f32.mrb[0].mxu0
        %v1192 = vadd.f32 0.0, %v1191
        %v1193 = vpop.f32.mrb[0].mxu0
        %v1194 = vpop.f32.mrb[0].mxu0
        %v1195 = vadd.f32 0.0, %v1194
        %v1196 = vpop.f32.mrb[0].mxu0
        %1197 = vdwg.mxu0
        %v1198 = vld [vmem:[#allocation2] sm:$0xff]
        %v1199 = vld [vmem:[#allocation2 + $0x8] sm:$0xff]
        %v1200 = vld [vmem:[#allocation2 + $0x10] sm:$0xff]
        %v1201 = vld [vmem:[#allocation2 + $0x18] sm:$0xff]
        %v1202 = vld [vmem:[#allocation2 + $0x20] sm:$0xff]
        %v1203 = vld [vmem:[#allocation2 + $0x28] sm:$0xff]
        %v1204 = vld [vmem:[#allocation2 + $0x30] sm:$0xff]
        %v1205 = vld [vmem:[#allocation2 + $0x38] sm:$0xff]
        %v1206 = vld [vmem:[#allocation3] sm:$0xff]
        %v1207 = vld [vmem:[#allocation3 + $0x8] sm:$0xff]
        %v1208 = vld [vmem:[#allocation3 + $0x10] sm:$0xff]
        %v1209 = vld [vmem:[#allocation3 + $0x18] sm:$0xff]
        %v1210 = vld [vmem:[#allocation3 + $0x20] sm:$0xff]
        %v1211 = vld [vmem:[#allocation3 + $0x28] sm:$0xff]
        %v1212 = vld [vmem:[#allocation3 + $0x30] sm:$0xff]
        %v1213 = vld [vmem:[#allocation3 + $0x38] sm:$0xff]
        %v1214 = vsel %vm594, %v1168, -inf
        %1215 = vmax.xlane.f32.xlu0 %v1214
        %v1216 = vpop.xlane.xlu0 %1215
        %v1217 = vsel %vm594, %v1171, -inf
        %1218 = vmax.xlane.f32.xlu0 %v1217
        %v1219 = vpop.xlane.xlu0 %1218
        %v1220 = vsel %vm594, %v1176, -inf
        %1221 = vmax.xlane.f32.xlu0 %v1220
        %v1222 = vpop.xlane.xlu0 %1221
        %v1223 = vsel %vm594, %v1179, -inf
        %1224 = vmax.xlane.f32.xlu0 %v1223
        %v1225 = vpop.xlane.xlu0 %1224
        %v1226 = vsel %vm594, %v1184, -inf
        %1227 = vmax.xlane.f32.xlu0 %v1226
        %v1228 = vpop.xlane.xlu0 %1227
        %v1229 = vsel %vm594, %v1187, -inf
        %1230 = vmax.xlane.f32.xlu0 %v1229
        %v1231 = vpop.xlane.xlu0 %1230
        %v1232 = vsel %vm594, %v1192, -inf
        %1233 = vmax.xlane.f32.xlu0 %v1232
        %v1234 = vpop.xlane.xlu0 %1233
        %v1235 = vsel %vm594, %v1195, -inf
        %1236 = vmax.xlane.f32.xlu0 %v1235
        %v1237 = vpop.xlane.xlu0 %1236
        %v1238 = vmax.f32 %v1198, %v1216
        %v1239 = vmax.f32 %v1199, %v1219
        %v1240 = vmax.f32 %v1200, %v1222
        %v1241 = vmax.f32 %v1201, %v1225
        %v1242 = vmax.f32 %v1202, %v1228
        %v1243 = vmax.f32 %v1203, %v1231
        %v1244 = vmax.f32 %v1204, %v1234
        %v1245 = vmax.f32 %v1205, %v1237
        %v1246 = vsub.f32 %v1198, %v1238
        %v1247 = vsub.f32 %v1199, %v1239
        %v1248 = vsub.f32 %v1200, %v1240
        %v1249 = vsub.f32 %v1201, %v1241
        %v1250 = vsub.f32 %v1202, %v1242
        %v1251 = vsub.f32 %v1203, %v1243
        %v1252 = vsub.f32 %v1204, %v1244
        %v1253 = vsub.f32 %v1205, %v1245
        %v1254 = vmul.f32 %v1246, 1.442695
        %v1255 = vpow.pop %v1254
        %v1256 = vmul.f32 %v1247, 1.442695
        %v1257 = vpow.pop %v1256
        %v1258 = vmul.f32 %v1248, 1.442695
        %v1259 = vpow.pop %v1258
        %v1260 = vmul.f32 %v1249, 1.442695
        %v1261 = vpow.pop %v1260
        %v1262 = vmul.f32 %v1250, 1.442695
        %v1263 = vpow.pop %v1262
        %v1264 = vmul.f32 %v1251, 1.442695
        %v1265 = vpow.pop %v1264
        %v1266 = vmul.f32 %v1252, 1.442695
        %v1267 = vpow.pop %v1266
        %v1268 = vmul.f32 %v1253, 1.442695
        %v1269 = vpow.pop %v1268
        %1271 = vset.pattern.permute.xlu0 64
        %1272 = vperm.xlu0 %1271, %v1238
        %v1273 = vpop.permute.xlu0 %1272
        %1276 = vset.pattern.permute.xlu0 64
        %1277 = vperm.xlu0 %1276, %v1239
        %v1278 = vpop.permute.xlu0 %1277
        %1281 = vset.pattern.permute.xlu0 64
        %1282 = vperm.xlu0 %1281, %v1240
        %v1283 = vpop.permute.xlu0 %1282
        %1286 = vset.pattern.permute.xlu0 64
        %1287 = vperm.xlu0 %1286, %v1241
        %v1288 = vpop.permute.xlu0 %1287
        %1291 = vset.pattern.permute.xlu0 64
        %1292 = vperm.xlu0 %1291, %v1242
        %v1293 = vpop.permute.xlu0 %1292
        %1296 = vset.pattern.permute.xlu0 64
        %1297 = vperm.xlu0 %1296, %v1243
        %v1298 = vpop.permute.xlu0 %1297
        %1301 = vset.pattern.permute.xlu0 64
        %1302 = vperm.xlu0 %1301, %v1244
        %v1303 = vpop.permute.xlu0 %1302
        %1306 = vset.pattern.permute.xlu0 64
        %1307 = vperm.xlu0 %1306, %v1245
        %v1308 = vpop.permute.xlu0 %1307
        %v1310 = vsub.f32 %v1168, %v1273
        %v1311 = vsub.f32 %v1171, %v1278
        %v1312 = vsub.f32 %v1176, %v1283
        %v1313 = vsub.f32 %v1179, %v1288
        %v1314 = vsub.f32 %v1184, %v1293
        %v1315 = vsub.f32 %v1187, %v1298
        %v1316 = vsub.f32 %v1192, %v1303
        %v1317 = vsub.f32 %v1195, %v1308
        %v1318 = vmul.f32 %v1310, 1.442695
        %v1319 = vpow.pop %v1318
        %v1320 = vmul.f32 %v1311, 1.442695
        %v1321 = vpow.pop %v1320
        %v1322 = vmul.f32 %v1312, 1.442695
        %v1323 = vpow.pop %v1322
        %v1324 = vmul.f32 %v1313, 1.442695
        %v1325 = vpow.pop %v1324
        %v1326 = vmul.f32 %v1314, 1.442695
        %v1327 = vpow.pop %v1326
        %v1328 = vmul.f32 %v1315, 1.442695
        %v1329 = vpow.pop %v1328
        %v1330 = vmul.f32 %v1316, 1.442695
        %v1331 = vpow.pop %v1330
        %v1332 = vmul.f32 %v1317, 1.442695
        %v1333 = vpow.pop %v1332
        %v1334 = vmul.f32 %v1255, %v1206
        %v1335 = vmul.f32 %v1257, %v1207
        %v1336 = vmul.f32 %v1259, %v1208
        %v1337 = vmul.f32 %v1261, %v1209
        %v1338 = vmul.f32 %v1263, %v1210
        %v1339 = vmul.f32 %v1265, %v1211
        %v1340 = vmul.f32 %v1267, %v1212
        %v1341 = vmul.f32 %v1269, %v1213
        %v1342 = vsel %vm594, %v1319, 0.0
        %1343 = vadd.xlane.f32.xlu0 %v1342
        %v1344 = vpop.xlane.xlu0 %1343
        %v1345 = vsel %vm594, %v1321, 0.0
        %1346 = vadd.xlane.f32.xlu0 %v1345
        %v1347 = vpop.xlane.xlu0 %1346
        %v1348 = vsel %vm594, %v1323, 0.0
        %1349 = vadd.xlane.f32.xlu0 %v1348
        %v1350 = vpop.xlane.xlu0 %1349
        %v1351 = vsel %vm594, %v1325, 0.0
        %1352 = vadd.xlane.f32.xlu0 %v1351
        %v1353 = vpop.xlane.xlu0 %1352
        %v1354 = vsel %vm594, %v1327, 0.0
        %1355 = vadd.xlane.f32.xlu0 %v1354
        %v1356 = vpop.xlane.xlu0 %1355
        %v1357 = vsel %vm594, %v1329, 0.0
        %1358 = vadd.xlane.f32.xlu0 %v1357
        %v1359 = vpop.xlane.xlu0 %1358
        %v1360 = vsel %vm594, %v1331, 0.0
        %1361 = vadd.xlane.f32.xlu0 %v1360
        %v1362 = vpop.xlane.xlu0 %1361
        %v1363 = vsel %vm594, %v1333, 0.0
        %1364 = vadd.xlane.f32.xlu0 %v1363
        %v1365 = vpop.xlane.xlu0 %1364
        %v1366 = vadd.f32 %v1334, %v1344
        %v1367 = vadd.f32 %v1335, %v1347
        %v1368 = vadd.f32 %v1336, %v1350
        %v1369 = vadd.f32 %v1337, %v1353
        %v1370 = vadd.f32 %v1338, %v1356
        %v1371 = vadd.f32 %v1339, %v1359
        %v1372 = vadd.f32 %v1340, %v1362
        %v1373 = vadd.f32 %v1341, %v1365
        %v1374 = vld [vmem:[#allocation4] sm:$0xff]
        %v1375 = vld [vmem:[#allocation4 + $0x8] sm:$0xff]
        %v1376 = vld [vmem:[#allocation4 + $0x10] sm:$0xff]
        %v1377 = vld [vmem:[#allocation4 + $0x18] sm:$0xff]
        %v1378 = vld [vmem:[#allocation4 + $0x20] sm:$0xff]
        %v1379 = vld [vmem:[#allocation4 + $0x28] sm:$0xff]
        %v1380 = vld [vmem:[#allocation4 + $0x30] sm:$0xff]
        %v1381 = vld [vmem:[#allocation4 + $0x38] sm:$0xff]
        %1383 = vset.pattern.permute.xlu0 64
        %1384 = vperm.xlu0 %1383, %v1255
        %v1385 = vpop.permute.xlu0 %1384
        %1388 = vset.pattern.permute.xlu0 64
        %1389 = vperm.xlu0 %1388, %v1257
        %v1390 = vpop.permute.xlu0 %1389
        %1393 = vset.pattern.permute.xlu0 64
        %1394 = vperm.xlu0 %1393, %v1259
        %v1395 = vpop.permute.xlu0 %1394
        %1398 = vset.pattern.permute.xlu0 64
        %1399 = vperm.xlu0 %1398, %v1261
        %v1400 = vpop.permute.xlu0 %1399
        %1403 = vset.pattern.permute.xlu0 64
        %1404 = vperm.xlu0 %1403, %v1263
        %v1405 = vpop.permute.xlu0 %1404
        %1408 = vset.pattern.permute.xlu0 64
        %1409 = vperm.xlu0 %1408, %v1265
        %v1410 = vpop.permute.xlu0 %1409
        %1413 = vset.pattern.permute.xlu0 64
        %1414 = vperm.xlu0 %1413, %v1267
        %v1415 = vpop.permute.xlu0 %1414
        %1418 = vset.pattern.permute.xlu0 64
        %1419 = vperm.xlu0 %1418, %v1269
        %v1420 = vpop.permute.xlu0 %1419
        %v1422 = vmul.f32 %v1385, %v1374
        %v1423 = vmul.f32 %v1390, %v1375
        %v1424 = vmul.f32 %v1395, %v1376
        %v1425 = vmul.f32 %v1400, %v1377
        %v1426 = vmul.f32 %v1405, %v1378
        %v1427 = vmul.f32 %v1410, %v1379
        %v1428 = vmul.f32 %v1415, %v1380
        %v1429 = vmul.f32 %v1420, %v1381
        %v1430 = vpack.c.bf16 %v1321, %v1319
        %v1431 = vpack.c.bf16 %v1325, %v1323
        %v1432 = vpack.c.bf16 %v1329, %v1327
        %v1433 = vpack.c.bf16 %v1333, %v1331
        %1434 = vrot.lane.b32.xlu0 %v936, 64
        %v1435 = vpop.permute.xlu0 %1434
        %1436 = vrot.lane.b32.xlu0 %v937, 64
        %v1437 = vpop.permute.xlu0 %1436
        %1438 = vrot.lane.b32.xlu0 %v938, 64
        %v1439 = vpop.permute.xlu0 %1438
        %1440 = vrot.lane.b32.xlu0 %v939, 64
        %v1441 = vpop.permute.xlu0 %1440
        %v1447 = vsel %vm594, %v1430, 0
        %v1450 = vsel %vm594, %v1431, 0
        %v1453 = vsel %vm594, %v1432, 0
        %v1456 = vsel %vm594, %v1433, 0
        %1458 = vmatprep.subr.bf16.mxu0 0
        %1459 = vmatpush1.bf16.msra.mxu0 %v1435
        %1460 = vmatprep.subr.bf16.mxu0 0
        %1461 = vmatpush1.bf16.msra.mxu0 %v1437
        %1462 = vmatprep.subr.bf16.mxu0 0
        %1463 = vmatpush1.bf16.msra.mxu0 %v1439
        %1464 = vmatprep.subr.bf16.mxu0 0
        %1465 = vmatpush1.bf16.msra.mxu0 %v1441
        %1466 = vmatprep.subr.bf16.mxu0 0
        %1467 = vmatpush1.bf16.msra.mxu0 0
        %1468 = vmatprep.subr.bf16.mxu0 0
        %1469 = vmatpush1.bf16.msra.mxu0 0
        %1470 = vmatprep.subr.bf16.mxu0 0
        %1471 = vmatpush1.bf16.msra.mxu0 0
        %1472 = vmatprep.subr.bf16.mxu0 0
        %1473 = vmatpush1.bf16.msra.mxu0 0
        %1474 = vmatprep.subr.bf16.mxu0 0
        %1475 = vmatpush1.bf16.msra.mxu0 0
        %1476 = vmatprep.subr.bf16.mxu0 0
        %1477 = vmatpush1.bf16.msra.mxu0 0
        %1478 = vmatprep.subr.bf16.mxu0 0
        %1479 = vmatpush1.bf16.msra.mxu0 0
        %1480 = vmatprep.subr.bf16.mxu0 0
        %1481 = vmatpush1.bf16.msra.mxu0 0
        %1482 = vmatprep.subr.bf16.mxu0 0
        %1483 = vmatpush1.bf16.msra.mxu0 0
        %1484 = vmatprep.subr.bf16.mxu0 0
        %1485 = vmatpush1.bf16.msra.mxu0 0
        %1486 = vmatprep.subr.bf16.mxu0 0
        %1487 = vmatpush1.bf16.msra.mxu0 0
        %1488 = vmatprep.subr.bf16.mxu0 0
        %1489 = vmatpush1.bf16.msra.mxu0 0
        %1490 = vmatprep.mubr.bf16.mxu0 0
        %1491 = vmatmul.mubr.bf16.gmra.mrb[0].mxu0 %v1447
        %v1492 = vpop.f32.mrb[0].mxu0
        %v1493 = vadd.f32 0.0, %v1492
        %v1494 = vpop.f32.mrb[0].mxu0
        %v1495 = vpop.f32.mrb[0].mxu0
        %v1496 = vadd.f32 0.0, %v1495
        %v1497 = vpop.f32.mrb[0].mxu0
        %1498 = vmatprep.mubr.bf16.mxu0 0
        %1499 = vmatmul.mubr.bf16.gmra.mrb[0].mxu0 %v1450
        %v1500 = vpop.f32.mrb[0].mxu0
        %v1501 = vadd.f32 0.0, %v1500
        %v1502 = vpop.f32.mrb[0].mxu0
        %v1503 = vpop.f32.mrb[0].mxu0
        %v1504 = vadd.f32 0.0, %v1503
        %v1505 = vpop.f32.mrb[0].mxu0
        %1506 = vmatprep.mubr.bf16.mxu0 0
        %1507 = vmatmul.mubr.bf16.gmra.mrb[0].mxu0 %v1453
        %v1508 = vpop.f32.mrb[0].mxu0
        %v1509 = vadd.f32 0.0, %v1508
        %v1510 = vpop.f32.mrb[0].mxu0
        %v1511 = vpop.f32.mrb[0].mxu0
        %v1512 = vadd.f32 0.0, %v1511
        %v1513 = vpop.f32.mrb[0].mxu0
        %1514 = vmatprep.mubr.bf16.mxu0 0
        %1515 = vmatmul.mubr.bf16.gmra.mrb[0].mxu0 %v1456
        %v1516 = vpop.f32.mrb[0].mxu0
        %v1517 = vadd.f32 0.0, %v1516
        %v1518 = vpop.f32.mrb[0].mxu0
        %v1519 = vpop.f32.mrb[0].mxu0
        %v1520 = vadd.f32 0.0, %v1519
        %v1521 = vpop.f32.mrb[0].mxu0
        %1522 = vdwg.mxu0
        %1531 = vrot.lane.b32.xlu0 %v1493, 64
        %v1532 = vpop.permute.xlu0 %1531
        %1533 = vrot.lane.b32.xlu0 %v1496, 64
        %v1534 = vpop.permute.xlu0 %1533
        %1535 = vrot.lane.b32.xlu0 %v1501, 64
        %v1536 = vpop.permute.xlu0 %1535
        %1537 = vrot.lane.b32.xlu0 %v1504, 64
        %v1538 = vpop.permute.xlu0 %1537
        %1539 = vrot.lane.b32.xlu0 %v1509, 64
        %v1540 = vpop.permute.xlu0 %1539
        %1541 = vrot.lane.b32.xlu0 %v1512, 64
        %v1542 = vpop.permute.xlu0 %1541
        %1543 = vrot.lane.b32.xlu0 %v1517, 64
        %v1544 = vpop.permute.xlu0 %1543
        %1545 = vrot.lane.b32.xlu0 %v1520, 64
        %v1546 = vpop.permute.xlu0 %1545
        %v1555 = vadd.f32 %v1422, %v1532
        %v1556 = vadd.f32 %v1423, %v1534
        %v1557 = vadd.f32 %v1424, %v1536
        %v1558 = vadd.f32 %v1425, %v1538
        %v1559 = vadd.f32 %v1426, %v1540
        %v1560 = vadd.f32 %v1427, %v1542
        %v1561 = vadd.f32 %v1428, %v1544
        %v1562 = vadd.f32 %v1429, %v1546
        %vm1563 = vcmask 1048064
        %1564 = vst.msk [vmem:[#allocation4] sm:$0xff] %vm1563, %v1555
        %1565 = vst.msk [vmem:[#allocation4 + $0x8] sm:$0xff] %vm1563, %v1556
        %1566 = vst.msk [vmem:[#allocation4 + $0x10] sm:$0xff] %vm1563, %v1557
        %1567 = vst.msk [vmem:[#allocation4 + $0x18] sm:$0xff] %vm1563, %v1558
        %1568 = vst.msk [vmem:[#allocation4 + $0x20] sm:$0xff] %vm1563, %v1559
        %1569 = vst.msk [vmem:[#allocation4 + $0x28] sm:$0xff] %vm1563, %v1560
        %1570 = vst.msk [vmem:[#allocation4 + $0x30] sm:$0xff] %vm1563, %v1561
        %1571 = vst.msk [vmem:[#allocation4 + $0x38] sm:$0xff] %vm1563, %v1562
        %1572 = vst.msk [vmem:[#allocation2] sm:$0xff] %vm1563, %v1273
        %1573 = vst.msk [vmem:[#allocation2 + $0x8] sm:$0xff] %vm1563, %v1278
        %1574 = vst.msk [vmem:[#allocation2 + $0x10] sm:$0xff] %vm1563, %v1283
        %1575 = vst.msk [vmem:[#allocation2 + $0x18] sm:$0xff] %vm1563, %v1288
        %1576 = vst.msk [vmem:[#allocation2 + $0x20] sm:$0xff] %vm1563, %v1293
        %1577 = vst.msk [vmem:[#allocation2 + $0x28] sm:$0xff] %vm1563, %v1298
        %1578 = vst.msk [vmem:[#allocation2 + $0x30] sm:$0xff] %vm1563, %v1303
        %1579 = vst.msk [vmem:[#allocation2 + $0x38] sm:$0xff] %vm1563, %v1308
        %1581 = vset.pattern.permute.xlu0 64
        %1582 = vperm.xlu0 %1581, %v1366
        %v1583 = vpop.permute.xlu0 %1582
        %1586 = vset.pattern.permute.xlu0 64
        %1587 = vperm.xlu0 %1586, %v1367
        %v1588 = vpop.permute.xlu0 %1587
        %1591 = vset.pattern.permute.xlu0 64
        %1592 = vperm.xlu0 %1591, %v1368
        %v1593 = vpop.permute.xlu0 %1592
        %1596 = vset.pattern.permute.xlu0 64
        %1597 = vperm.xlu0 %1596, %v1369
        %v1598 = vpop.permute.xlu0 %1597
        %1601 = vset.pattern.permute.xlu0 64
        %1602 = vperm.xlu0 %1601, %v1370
        %v1603 = vpop.permute.xlu0 %1602
        %1606 = vset.pattern.permute.xlu0 64
        %1607 = vperm.xlu0 %1606, %v1371
        %v1608 = vpop.permute.xlu0 %1607
        %1611 = vset.pattern.permute.xlu0 64
        %1612 = vperm.xlu0 %1611, %v1372
        %v1613 = vpop.permute.xlu0 %1612
        %1616 = vset.pattern.permute.xlu0 64
        %1617 = vperm.xlu0 %1616, %v1373
        %v1618 = vpop.permute.xlu0 %1617
        %1620 = vst.msk [vmem:[#allocation3] sm:$0xff] %vm1563, %v1583
        %1621 = vst.msk [vmem:[#allocation3 + $0x8] sm:$0xff] %vm1563, %v1588
        %1622 = vst.msk [vmem:[#allocation3 + $0x10] sm:$0xff] %vm1563, %v1593
        %1623 = vst.msk [vmem:[#allocation3 + $0x18] sm:$0xff] %vm1563, %v1598
        %1624 = vst.msk [vmem:[#allocation3 + $0x20] sm:$0xff] %vm1563, %v1603
        %1625 = vst.msk [vmem:[#allocation3 + $0x28] sm:$0xff] %vm1563, %v1608
        %1626 = vst.msk [vmem:[#allocation3 + $0x30] sm:$0xff] %vm1563, %v1613
        %1627 = vst.msk [vmem:[#allocation3 + $0x38] sm:$0xff] %vm1563, %v1618
        // Predicated region
        $region160: #{spatial_transformer_forward.14} parent=142 // pred_check
          %p1628 = pneg %p502
        $region161: #{spatial_transformer_forward.14} parent=142 // pred_check_branch
          %1630 = sbr.rel (%p1628) target = $region163
        $region162: #{spatial_transformer_forward.14} parent=142 // pred_region
          %v1631 = vld [vmem:[#allocation4] sm:$0xff]
          %v1632 = vld [vmem:[#allocation4 + $0x8] sm:$0xff]
          %v1633 = vld [vmem:[#allocation4 + $0x10] sm:$0xff]
          %v1634 = vld [vmem:[#allocation4 + $0x18] sm:$0xff]
          %v1635 = vld [vmem:[#allocation4 + $0x20] sm:$0xff]
          %v1636 = vld [vmem:[#allocation4 + $0x28] sm:$0xff]
          %v1637 = vld [vmem:[#allocation4 + $0x30] sm:$0xff]
          %v1638 = vld [vmem:[#allocation4 + $0x38] sm:$0xff]
          %v1639 = vld [vmem:[#allocation3] sm:$0xff]
          %v1640 = vld [vmem:[#allocation3 + $0x8] sm:$0xff]
          %v1641 = vld [vmem:[#allocation3 + $0x10] sm:$0xff]
          %v1642 = vld [vmem:[#allocation3 + $0x18] sm:$0xff]
          %v1643 = vld [vmem:[#allocation3 + $0x20] sm:$0xff]
          %v1644 = vld [vmem:[#allocation3 + $0x28] sm:$0xff]
          %v1645 = vld [vmem:[#allocation3 + $0x30] sm:$0xff]
          %v1646 = vld [vmem:[#allocation3 + $0x38] sm:$0xff]
          %v1647 = vrcp.pop %v1639
          %v1648 = vrcp.pop %v1640
          %v1649 = vrcp.pop %v1641
          %v1650 = vrcp.pop %v1642
          %v1651 = vrcp.pop %v1643
          %v1652 = vrcp.pop %v1644
          %v1653 = vrcp.pop %v1645
          %v1654 = vrcp.pop %v1646
          %v1655 = vmul.f32 %v1631, %v1647
          %v1656 = vmul.f32 %v1632, %v1648
          %v1657 = vmul.f32 %v1633, %v1649
          %v1658 = vmul.f32 %v1634, %v1650
          %v1659 = vmul.f32 %v1635, %v1651
          %v1660 = vmul.f32 %v1636, %v1652
          %v1661 = vmul.f32 %v1637, %v1653
          %v1662 = vmul.f32 %v1638, %v1654
          %v1663 = vpack.c.bf16 %v1656, %v1655
          %v1664 = vpack.c.bf16 %v1658, %v1657
          %v1665 = vpack.c.bf16 %v1660, %v1659
          %v1666 = vpack.c.bf16 %v1662, %v1661
          %v1671 = vunpack.c.l.b16 %v1663
          %v1672 = vunpack.c.h.b16 %v1663
          %v1673 = vunpack.c.l.b16 %v1664
          %v1674 = vunpack.c.h.b16 %v1664
          %v1675 = vunpack.c.l.b16 %v1665
          %v1676 = vunpack.c.h.b16 %v1665
          %v1677 = vunpack.c.l.b16 %v1666
          %v1678 = vunpack.c.h.b16 %v1666
          %v1679 = vpack.c.b16 %v1671, %v1671
          %v1680 = vpack.c.b16 %v1672, %v1672
          %v1681 = vpack.c.b16 %v1673, %v1673
          %v1682 = vpack.c.b16 %v1674, %v1674
          %v1683 = vpack.c.b16 %v1675, %v1675
          %v1684 = vpack.c.b16 %v1676, %v1676
          %v1685 = vpack.c.b16 %v1677, %v1677
          %v1686 = vpack.c.b16 %v1678, %v1678
          %1695 = vst [vmem:[%s499] sm:$0xf] %v1679
          %1696 = vst [vmem:[%s499 + $0x4] sm:$0xf] %v1680
          %1697 = vst [vmem:[%s499 + $0x8] sm:$0xf] %v1681
          %1698 = vst [vmem:[%s499 + $0xc] sm:$0xf] %v1682
          %1699 = vst [vmem:[%s499 + $0x10] sm:$0xf] %v1683
          %1700 = vst [vmem:[%s499 + $0x14] sm:$0xf] %v1684
          %1701 = vst [vmem:[%s499 + $0x18] sm:$0xf] %v1685
          %1702 = vst [vmem:[%s499 + $0x1c] sm:$0xf] %v1686
        $region163: #{spatial_transformer_forward.14} parent=142 // pred_fallthru
          _
        %s1703 = smul.u32 8, %s22
        %p1704 = scmp.lt.s32.totalorder %s20, 1
        %s1705 = scalar_select %p1704, %s20, 1
        %p1706 = scmp.lt.s32.totalorder %s1703, 7
        %s1707 = scalar_select %p1706, %s1703, 7
        %p1708 = scmp.lt.s32.totalorder %s21, 0
        %s1709 = scalar_select %p1708, %s21, 0
        %s1710 = sadd.s32 %s1709, %s1707
        %s1711 = smul.addr %s1705, 8
        %s1712 = sadd.s32 %s1710, %s1711
        %s1713 = smul.addr %s1712, 4
        %s1714 = scalar_lea.vmem %s3, %s1713
        // Predicated region
        $region164: #{spatial_transformer_forward.14} parent=142 // pred_check
          %p1715 = pneg %p156
        $region165: #{spatial_transformer_forward.14} parent=142 // pred_check_branch
          %1717 = sbr.rel (%p1715) target = $region167
        $region166: #{spatial_transformer_forward.14} parent=142 // pred_region
          %s1718 = smul.u32 8, %s22
        $region167: #{spatial_transformer_forward.14} parent=142 // pred_fallthru
          _
      $region143: #{spatial_transformer_forward.14} parent=5 // pred_fallthru
        _
      %p1719 = scmp.le.s32.totalorder 2, %s9
      // Predicated region
      $region168: #{spatial_transformer_forward.14} parent=5 // pred_check
        %p1720 = pneg %p1719
      $region169: #{spatial_transformer_forward.14} parent=5 // pred_check_branch
        %1722 = sbr.rel (%p1720) target = $region171
      $region170: #{spatial_transformer_forward.14} parent=5 // pred_region
        %s1723 = ssub.s32 %s9, 2
        // Predicated region
        $region172: #{spatial_transformer_forward.14} parent=170 // pred_check
          %p1724 = pneg %p162
        $region173: #{spatial_transformer_forward.14} parent=170 // pred_check_branch
          %1726 = sbr.rel (%p1724) target = $region175
        $region174: #{spatial_transformer_forward.14} parent=170 // pred_region
          %s1727 = smul.u32 8, %s26
          %p1728 = scmp.lt.s32.totalorder %s24, 1
          %s1729 = scalar_select %p1728, %s24, 1
          %p1730 = scmp.lt.s32.totalorder %s1727, 7
          %s1731 = scalar_select %p1730, %s1727, 7
          %p1732 = scmp.lt.s32.totalorder %s25, 0
          %s1733 = scalar_select %p1732, %s25, 0
          %s1734 = sadd.s32 %s1733, %s1731
          %s1735 = smul.addr %s1729, 8
          %s1736 = sadd.s32 %s1734, %s1735
          %s1737 = smul.addr %s1736, 4
          %s1738 = scalar_lea.vmem %s3, %s1737
        $region175: #{spatial_transformer_forward.14} parent=170 // pred_fallthru
          _
      $region171: #{spatial_transformer_forward.14} parent=5 // pred_fallthru
        _
    $region6: #{spatial_transformer_forward.14} parent=1 // loop_footer
      %s13 = sadd.s32 1, %s9
    $region7: #{spatial_transformer_forward.14} parent=1 // loop_footer_branch
      %8 = sbr.rel target = $region3
    $region8: #{spatial_transformer_forward.14} parent=1 // loop_exit
      _

// kernel: spatial_transformer_forward.15
$region0: #{spatial_transformer_forward.15}
  #allocation0 [shape = 'u32[]', space=smem, size = 0x4, offset = 0x4, fixed_abs, tag = 'smem constant byte address 0x4 - core index']
  #allocation1 [shape = 'u32[144,128]{1,0:T(1,128)}', space=vmem, size = 0x12000, scoped, tag = 'internal scratch']
  #allocation2 [shape = 'f32[128,128]{1,0:T(8,128)}', space=vmem, size = 0x10000, scoped, tag = 'scratch operand']
  %s0 = inlined_call_operand.vmem [shape: bf16[128,128], index: 0, kind: input, shape index: {}]
  %s1 = inlined_call_operand.vmem [shape: bf16[128,128], index: 1, kind: input, shape index: {}]
  %s2 = inlined_call_operand.vmem [shape: f32[1,128], index: 2, kind: input, shape index: {}]
  %s3 = inlined_call_operand.vmem [shape: f32[128,128], index: 3, kind: input, shape index: {}]
  %s4 = inlined_call_operand.vmem [shape: f32[128,128], index: 4, kind: output, shape index: {}]
  %s5 = sld [smem:[#allocation0]]
  $region34: #{spatial_transformer_forward.15} parent=0
    _
  %s7 = ssub.s32 1, %s5
  %s8 = scalar_select 0, %s7, %s5
  // Predicated region
  $region2: #{spatial_transformer_forward.15} parent=0 // pred_check
    _
  $region3: #{spatial_transformer_forward.15} parent=0 // pred_check_branch
    %10 = sbr.rel (0) target = $region5
  $region4: #{spatial_transformer_forward.15} parent=0 // pred_region
    _
  $region5: #{spatial_transformer_forward.15} parent=0 // pred_fallthru
    _
  // Predicated region
  $region6: #{spatial_transformer_forward.15} parent=0 // pred_check
    _
  $region7: #{spatial_transformer_forward.15} parent=0 // pred_check_branch
    %12 = sbr.rel (0) target = $region9
  $region8: #{spatial_transformer_forward.15} parent=0 // pred_region
    _
  $region9: #{spatial_transformer_forward.15} parent=0 // pred_fallthru
    _
  // Predicated region
  $region10: #{spatial_transformer_forward.15} parent=0 // pred_check
    _
  $region11: #{spatial_transformer_forward.15} parent=0 // pred_check_branch
    %14 = sbr.rel (0) target = $region13
  $region12: #{spatial_transformer_forward.15} parent=0 // pred_region
    _
  $region13: #{spatial_transformer_forward.15} parent=0 // pred_fallthru
    _
  // Predicated region
  $region14: #{spatial_transformer_forward.15} parent=0 // pred_check
    _
  $region15: #{spatial_transformer_forward.15} parent=0 // pred_check_branch
    %16 = sbr.rel (0) target = $region17
  $region16: #{spatial_transformer_forward.15} parent=0 // pred_region
    _
  $region17: #{spatial_transformer_forward.15} parent=0 // pred_fallthru
    _
  %p18 = scmp.eq.s32.totalorder 0, 0
  // Predicated region
  $region18: #{spatial_transformer_forward.15} parent=0 // pred_check
    %p19 = pneg %p18
  $region19: #{spatial_transformer_forward.15} parent=0 // pred_check_branch
    %21 = sbr.rel (%p19) target = $region21
  $region20: #{spatial_transformer_forward.15} parent=0 // pred_region
    %22 = vst [vmem:[#allocation2] sm:$0xff] 0.0
    %23 = vst [vmem:[#allocation2 + $0x8] sm:$0xff] 0.0
    %24 = vst [vmem:[#allocation2 + $0x10] sm:$0xff] 0.0
    %25 = vst [vmem:[#allocation2 + $0x18] sm:$0xff] 0.0
    %26 = vst [vmem:[#allocation2 + $0x20] sm:$0xff] 0.0
    %27 = vst [vmem:[#allocation2 + $0x28] sm:$0xff] 0.0
    %28 = vst [vmem:[#allocation2 + $0x30] sm:$0xff] 0.0
    %29 = vst [vmem:[#allocation2 + $0x38] sm:$0xff] 0.0
    %30 = vst [vmem:[#allocation2 + $0x40] sm:$0xff] 0.0
    %31 = vst [vmem:[#allocation2 + $0x48] sm:$0xff] 0.0
    %32 = vst [vmem:[#allocation2 + $0x50] sm:$0xff] 0.0
    %33 = vst [vmem:[#allocation2 + $0x58] sm:$0xff] 0.0
    %34 = vst [vmem:[#allocation2 + $0x60] sm:$0xff] 0.0
    %35 = vst [vmem:[#allocation2 + $0x68] sm:$0xff] 0.0
    %36 = vst [vmem:[#allocation2 + $0x70] sm:$0xff] 0.0
    %37 = vst [vmem:[#allocation2 + $0x78] sm:$0xff] 0.0
  $region21: #{spatial_transformer_forward.15} parent=0 // pred_fallthru
    _
  %v38 = vld [vmem:[%s0] sm:$0xf]
  %v39 = vld [vmem:[%s0 + $0x4] sm:$0xf]
  %v40 = vld [vmem:[%s0 + $0x8] sm:$0xf]
  %v41 = vld [vmem:[%s0 + $0xc] sm:$0xf]
  %v42 = vld [vmem:[%s0 + $0x10] sm:$0xf]
  %v43 = vld [vmem:[%s0 + $0x14] sm:$0xf]
  %v44 = vld [vmem:[%s0 + $0x18] sm:$0xf]
  %v45 = vld [vmem:[%s0 + $0x1c] sm:$0xf]
  %v46 = vld [vmem:[%s0 + $0x20] sm:$0xf]
  %v47 = vld [vmem:[%s0 + $0x24] sm:$0xf]
  %v48 = vld [vmem:[%s0 + $0x28] sm:$0xf]
  %v49 = vld [vmem:[%s0 + $0x2c] sm:$0xf]
  %v50 = vld [vmem:[%s0 + $0x30] sm:$0xf]
  %v51 = vld [vmem:[%s0 + $0x34] sm:$0xf]
  %v52 = vld [vmem:[%s0 + $0x38] sm:$0xf]
  %v53 = vld [vmem:[%s0 + $0x3c] sm:$0xf]
  %v54 = vld [vmem:[#allocation2] sm:$0xff]
  %v55 = vld [vmem:[#allocation2 + $0x8] sm:$0xff]
  %v56 = vld [vmem:[#allocation2 + $0x10] sm:$0xff]
  %v57 = vld [vmem:[#allocation2 + $0x18] sm:$0xff]
  %v58 = vld [vmem:[#allocation2 + $0x20] sm:$0xff]
  %v59 = vld [vmem:[#allocation2 + $0x28] sm:$0xff]
  %v60 = vld [vmem:[#allocation2 + $0x30] sm:$0xff]
  %v61 = vld [vmem:[#allocation2 + $0x38] sm:$0xff]
  %v62 = vld [vmem:[#allocation2 + $0x40] sm:$0xff]
  %v63 = vld [vmem:[#allocation2 + $0x48] sm:$0xff]
  %v64 = vld [vmem:[#allocation2 + $0x50] sm:$0xff]
  %v65 = vld [vmem:[#allocation2 + $0x58] sm:$0xff]
  %v66 = vld [vmem:[#allocation2 + $0x60] sm:$0xff]
  %v67 = vld [vmem:[#allocation2 + $0x68] sm:$0xff]
  %v68 = vld [vmem:[#allocation2 + $0x70] sm:$0xff]
  %v69 = vld [vmem:[#allocation2 + $0x78] sm:$0xff]
  %v70 = vld [vmem:[%s1] sm:$0xf]
  %v71 = vld [vmem:[%s1 + $0x4] sm:$0xf]
  %v72 = vld [vmem:[%s1 + $0x8] sm:$0xf]
  %v73 = vld [vmem:[%s1 + $0xc] sm:$0xf]
  %v74 = vld [vmem:[%s1 + $0x10] sm:$0xf]
  %v75 = vld [vmem:[%s1 + $0x14] sm:$0xf]
  %v76 = vld [vmem:[%s1 + $0x18] sm:$0xf]
  %v77 = vld [vmem:[%s1 + $0x1c] sm:$0xf]
  %v78 = vld [vmem:[%s1 + $0x20] sm:$0xf]
  %v79 = vld [vmem:[%s1 + $0x24] sm:$0xf]
  %v80 = vld [vmem:[%s1 + $0x28] sm:$0xf]
  %v81 = vld [vmem:[%s1 + $0x2c] sm:$0xf]
  %v82 = vld [vmem:[%s1 + $0x30] sm:$0xf]
  %v83 = vld [vmem:[%s1 + $0x34] sm:$0xf]
  %v84 = vld [vmem:[%s1 + $0x38] sm:$0xf]
  %v85 = vld [vmem:[%s1 + $0x3c] sm:$0xf]
  %v102 = vunpack.c.l.b16 %v38
  %v103 = vunpack.c.l.b16 %v39
  %v104 = vunpack.c.l.b16 %v40
  %v105 = vunpack.c.l.b16 %v41
  %v106 = vunpack.c.l.b16 %v42
  %v107 = vunpack.c.l.b16 %v43
  %v108 = vunpack.c.l.b16 %v44
  %v109 = vunpack.c.l.b16 %v45
  %v110 = vunpack.c.l.b16 %v46
  %v111 = vunpack.c.l.b16 %v47
  %v112 = vunpack.c.l.b16 %v48
  %v113 = vunpack.c.l.b16 %v49
  %v114 = vunpack.c.l.b16 %v50
  %v115 = vunpack.c.l.b16 %v51
  %v116 = vunpack.c.l.b16 %v52
  %v117 = vunpack.c.l.b16 %v53
  %v118 = vpack.c.b16 %v103, %v102
  %v119 = vpack.c.b16 %v105, %v104
  %v120 = vpack.c.b16 %v107, %v106
  %v121 = vpack.c.b16 %v109, %v108
  %v122 = vpack.c.b16 %v111, %v110
  %v123 = vpack.c.b16 %v113, %v112
  %v124 = vpack.c.b16 %v115, %v114
  %v125 = vpack.c.b16 %v117, %v116
  %v150 = vunpack.c.l.b16 %v70
  %v151 = vunpack.c.l.b16 %v71
  %v152 = vunpack.c.l.b16 %v72
  %v153 = vunpack.c.l.b16 %v73
  %v154 = vunpack.c.l.b16 %v74
  %v155 = vunpack.c.l.b16 %v75
  %v156 = vunpack.c.l.b16 %v76
  %v157 = vunpack.c.l.b16 %v77
  %v158 = vunpack.c.l.b16 %v78
  %v159 = vunpack.c.l.b16 %v79
  %v160 = vunpack.c.l.b16 %v80
  %v161 = vunpack.c.l.b16 %v81
  %v162 = vunpack.c.l.b16 %v82
  %v163 = vunpack.c.l.b16 %v83
  %v164 = vunpack.c.l.b16 %v84
  %v165 = vunpack.c.l.b16 %v85
  %v166 = vpack.c.b16 %v151, %v150
  %v167 = vpack.c.b16 %v153, %v152
  %v168 = vpack.c.b16 %v155, %v154
  %v169 = vpack.c.b16 %v157, %v156
  %v170 = vpack.c.b16 %v159, %v158
  %v171 = vpack.c.b16 %v161, %v160
  %v172 = vpack.c.b16 %v163, %v162
  %v173 = vpack.c.b16 %v165, %v164
  %182 = vmatprep.subr.bf16.mxu0 0
  %183 = vmatpush1.bf16.msra.mxu0 %v166
  %184 = vmatprep.subr.bf16.mxu0 0
  %185 = vmatpush1.bf16.msra.mxu0 %v167
  %186 = vmatprep.subr.bf16.mxu0 0
  %187 = vmatpush1.bf16.msra.mxu0 %v168
  %188 = vmatprep.subr.bf16.mxu0 0
  %189 = vmatpush1.bf16.msra.mxu0 %v169
  %190 = vmatprep.subr.bf16.mxu0 0
  %191 = vmatpush1.bf16.msra.mxu0 %v170
  %192 = vmatprep.subr.bf16.mxu0 0
  %193 = vmatpush1.bf16.msra.mxu0 %v171
  %194 = vmatprep.subr.bf16.mxu0 0
  %195 = vmatpush1.bf16.msra.mxu0 %v172
  %196 = vmatprep.subr.bf16.mxu0 0
  %197 = vmatpush1.bf16.msra.mxu0 %v173
  %198 = vmatprep.subr.bf16.mxu0 0
  %199 = vmatpush1.bf16.msra.mxu0 0
  %200 = vmatprep.subr.bf16.mxu0 0
  %201 = vmatpush1.bf16.msra.mxu0 0
  %202 = vmatprep.subr.bf16.mxu0 0
  %203 = vmatpush1.bf16.msra.mxu0 0
  %204 = vmatprep.subr.bf16.mxu0 0
  %205 = vmatpush1.bf16.msra.mxu0 0
  %206 = vmatprep.subr.bf16.mxu0 0
  %207 = vmatpush1.bf16.msra.mxu0 0
  %208 = vmatprep.subr.bf16.mxu0 0
  %209 = vmatpush1.bf16.msra.mxu0 0
  %210 = vmatprep.subr.bf16.mxu0 0
  %211 = vmatpush1.bf16.msra.mxu0 0
  %212 = vmatprep.subr.bf16.mxu0 0
  %213 = vmatpush1.bf16.msra.mxu0 0
  %214 = vmatprep.mubr.bf16.mxu0 0
  %215 = vmatmul.mubr.bf16.gmra.mrb[0].mxu0 %v118
  %v216 = vpop.f32.mrb[0].mxu0
  %v217 = vadd.f32 0.0, %v216
  %v218 = vpop.f32.mrb[0].mxu0
  %v219 = vpop.f32.mrb[0].mxu0
  %v220 = vadd.f32 0.0, %v219
  %v221 = vpop.f32.mrb[0].mxu0
  %222 = vmatprep.mubr.bf16.mxu0 0
  %223 = vmatmul.mubr.bf16.gmra.mrb[0].mxu0 %v119
  %v224 = vpop.f32.mrb[0].mxu0
  %v225 = vadd.f32 0.0, %v224
  %v226 = vpop.f32.mrb[0].mxu0
  %v227 = vpop.f32.mrb[0].mxu0
  %v228 = vadd.f32 0.0, %v227
  %v229 = vpop.f32.mrb[0].mxu0
  %230 = vmatprep.mubr.bf16.mxu0 0
  %231 = vmatmul.mubr.bf16.gmra.mrb[0].mxu0 %v120
  %v232 = vpop.f32.mrb[0].mxu0
  %v233 = vadd.f32 0.0, %v232
  %v234 = vpop.f32.mrb[0].mxu0
  %v235 = vpop.f32.mrb[0].mxu0
  %v236 = vadd.f32 0.0, %v235
  %v237 = vpop.f32.mrb[0].mxu0
  %238 = vmatprep.mubr.bf16.mxu0 0
  %239 = vmatmul.mubr.bf16.gmra.mrb[0].mxu0 %v121
  %v240 = vpop.f32.mrb[0].mxu0
  %v241 = vadd.f32 0.0, %v240
  %v242 = vpop.f32.mrb[0].mxu0
  %v243 = vpop.f32.mrb[0].mxu0
  %v244 = vadd.f32 0.0, %v243
  %v245 = vpop.f32.mrb[0].mxu0
  %246 = vmatprep.mubr.bf16.mxu0 0
  %247 = vmatmul.mubr.bf16.gmra.mrb[0].mxu0 %v122
  %v248 = vpop.f32.mrb[0].mxu0
  %v249 = vadd.f32 0.0, %v248
  %v250 = vpop.f32.mrb[0].mxu0
  %v251 = vpop.f32.mrb[0].mxu0
  %v252 = vadd.f32 0.0, %v251
  %v253 = vpop.f32.mrb[0].mxu0
  %254 = vmatprep.mubr.bf16.mxu0 0
  %255 = vmatmul.mubr.bf16.gmra.mrb[0].mxu0 %v123
  %v256 = vpop.f32.mrb[0].mxu0
  %v257 = vadd.f32 0.0, %v256
  %v258 = vpop.f32.mrb[0].mxu0
  %v259 = vpop.f32.mrb[0].mxu0
  %v260 = vadd.f32 0.0, %v259
  %v261 = vpop.f32.mrb[0].mxu0
  %262 = vmatprep.mubr.bf16.mxu0 0
  %263 = vmatmul.mubr.bf16.gmra.mrb[0].mxu0 %v124
  %v264 = vpop.f32.mrb[0].mxu0
  %v265 = vadd.f32 0.0, %v264
  %v266 = vpop.f32.mrb[0].mxu0
  %v267 = vpop.f32.mrb[0].mxu0
  %v268 = vadd.f32 0.0, %v267
  %v269 = vpop.f32.mrb[0].mxu0
  %270 = vmatprep.mubr.bf16.mxu0 0
  %271 = vmatmul.mubr.bf16.gmra.mrb[0].mxu0 %v125
  %v272 = vpop.f32.mrb[0].mxu0
  %v273 = vadd.f32 0.0, %v272
  %v274 = vpop.f32.mrb[0].mxu0
  %v275 = vpop.f32.mrb[0].mxu0
  %v276 = vadd.f32 0.0, %v275
  %v277 = vpop.f32.mrb[0].mxu0
  %278 = vdwg.mxu0
  %v279 = vadd.f32 %v54, %v217
  %v280 = vadd.f32 %v55, %v220
  %v281 = vadd.f32 %v56, %v225
  %v282 = vadd.f32 %v57, %v228
  %v283 = vadd.f32 %v58, %v233
  %v284 = vadd.f32 %v59, %v236
  %v285 = vadd.f32 %v60, %v241
  %v286 = vadd.f32 %v61, %v244
  %v287 = vadd.f32 %v62, %v249
  %v288 = vadd.f32 %v63, %v252
  %v289 = vadd.f32 %v64, %v257
  %v290 = vadd.f32 %v65, %v260
  %v291 = vadd.f32 %v66, %v265
  %v292 = vadd.f32 %v67, %v268
  %v293 = vadd.f32 %v68, %v273
  %v294 = vadd.f32 %v69, %v276
  %295 = vst [vmem:[#allocation2] sm:$0xff] %v279
  %296 = vst [vmem:[#allocation2 + $0x8] sm:$0xff] %v280
  %297 = vst [vmem:[#allocation2 + $0x10] sm:$0xff] %v281
  %298 = vst [vmem:[#allocation2 + $0x18] sm:$0xff] %v282
  %299 = vst [vmem:[#allocation2 + $0x20] sm:$0xff] %v283
  %300 = vst [vmem:[#allocation2 + $0x28] sm:$0xff] %v284
  %301 = vst [vmem:[#allocation2 + $0x30] sm:$0xff] %v285
  %302 = vst [vmem:[#allocation2 + $0x38] sm:$0xff] %v286
  %303 = vst [vmem:[#allocation2 + $0x40] sm:$0xff] %v287
  %304 = vst [vmem:[#allocation2 + $0x48] sm:$0xff] %v288
  %305 = vst [vmem:[#allocation2 + $0x50] sm:$0xff] %v289
  %306 = vst [vmem:[#allocation2 + $0x58] sm:$0xff] %v290
  %307 = vst [vmem:[#allocation2 + $0x60] sm:$0xff] %v291
  %308 = vst [vmem:[#allocation2 + $0x68] sm:$0xff] %v292
  %309 = vst [vmem:[#allocation2 + $0x70] sm:$0xff] %v293
  %310 = vst [vmem:[#allocation2 + $0x78] sm:$0xff] %v294
  // Predicated region
  $region22: #{spatial_transformer_forward.15} parent=0 // pred_check
    %p311 = pneg %p18
  $region23: #{spatial_transformer_forward.15} parent=0 // pred_check_branch
    %313 = sbr.rel (%p311) target = $region25
  $region24: #{spatial_transformer_forward.15} parent=0 // pred_region
    %v314 = vld [vmem:[#allocation2] sm:$0xff]
    %v315 = vld [vmem:[#allocation2 + $0x8] sm:$0xff]
    %v316 = vld [vmem:[#allocation2 + $0x10] sm:$0xff]
    %v317 = vld [vmem:[#allocation2 + $0x18] sm:$0xff]
    %v318 = vld [vmem:[#allocation2 + $0x20] sm:$0xff]
    %v319 = vld [vmem:[#allocation2 + $0x28] sm:$0xff]
    %v320 = vld [vmem:[#allocation2 + $0x30] sm:$0xff]
    %v321 = vld [vmem:[#allocation2 + $0x38] sm:$0xff]
    %v322 = vld [vmem:[#allocation2 + $0x40] sm:$0xff]
    %v323 = vld [vmem:[#allocation2 + $0x48] sm:$0xff]
    %v324 = vld [vmem:[#allocation2 + $0x50] sm:$0xff]
    %v325 = vld [vmem:[#allocation2 + $0x58] sm:$0xff]
    %v326 = vld [vmem:[#allocation2 + $0x60] sm:$0xff]
    %v327 = vld [vmem:[#allocation2 + $0x68] sm:$0xff]
    %v328 = vld [vmem:[#allocation2 + $0x70] sm:$0xff]
    %v329 = vld [vmem:[#allocation2 + $0x78] sm:$0xff]
    %v330 = vld [vmem:[%s2] sm:$0x1]
    %v332 = vlaneseq
    %v333 = vshrl.u32 %v332, 7
    %v334 = vsub.s32 0, %v333
    %v335 = vrot.slane %v330, %v334
    %v337 = vadd.f32 %v314, %v335
    %v338 = vadd.f32 %v315, %v335
    %v339 = vadd.f32 %v316, %v335
    %v340 = vadd.f32 %v317, %v335
    %v341 = vadd.f32 %v318, %v335
    %v342 = vadd.f32 %v319, %v335
    %v343 = vadd.f32 %v320, %v335
    %v344 = vadd.f32 %v321, %v335
    %v345 = vadd.f32 %v322, %v335
    %v346 = vadd.f32 %v323, %v335
    %v347 = vadd.f32 %v324, %v335
    %v348 = vadd.f32 %v325, %v335
    %v349 = vadd.f32 %v326, %v335
    %v350 = vadd.f32 %v327, %v335
    %v351 = vadd.f32 %v328, %v335
    %v352 = vadd.f32 %v329, %v335
    %v353 = vld [vmem:[%s3] sm:$0xff]
    %v354 = vld [vmem:[%s3 + $0x8] sm:$0xff]
    %v355 = vld [vmem:[%s3 + $0x10] sm:$0xff]
    %v356 = vld [vmem:[%s3 + $0x18] sm:$0xff]
    %v357 = vld [vmem:[%s3 + $0x20] sm:$0xff]
    %v358 = vld [vmem:[%s3 + $0x28] sm:$0xff]
    %v359 = vld [vmem:[%s3 + $0x30] sm:$0xff]
    %v360 = vld [vmem:[%s3 + $0x38] sm:$0xff]
    %v361 = vld [vmem:[%s3 + $0x40] sm:$0xff]
    %v362 = vld [vmem:[%s3 + $0x48] sm:$0xff]
    %v363 = vld [vmem:[%s3 + $0x50] sm:$0xff]
    %v364 = vld [vmem:[%s3 + $0x58] sm:$0xff]
    %v365 = vld [vmem:[%s3 + $0x60] sm:$0xff]
    %v366 = vld [vmem:[%s3 + $0x68] sm:$0xff]
    %v367 = vld [vmem:[%s3 + $0x70] sm:$0xff]
    %v368 = vld [vmem:[%s3 + $0x78] sm:$0xff]
    %v369 = vadd.f32 %v337, %v353
    %v370 = vadd.f32 %v338, %v354
    %v371 = vadd.f32 %v339, %v355
    %v372 = vadd.f32 %v340, %v356
    %v373 = vadd.f32 %v341, %v357
    %v374 = vadd.f32 %v342, %v358
    %v375 = vadd.f32 %v343, %v359
    %v376 = vadd.f32 %v344, %v360
    %v377 = vadd.f32 %v345, %v361
    %v378 = vadd.f32 %v346, %v362
    %v379 = vadd.f32 %v347, %v363
    %v380 = vadd.f32 %v348, %v364
    %v381 = vadd.f32 %v349, %v365
    %v382 = vadd.f32 %v350, %v366
    %v383 = vadd.f32 %v351, %v367
    %v384 = vadd.f32 %v352, %v368
    %385 = vst [vmem:[%s4] sm:$0xff] %v369
    %386 = vst [vmem:[%s4 + $0x8] sm:$0xff] %v370
    %387 = vst [vmem:[%s4 + $0x10] sm:$0xff] %v371
    %388 = vst [vmem:[%s4 + $0x18] sm:$0xff] %v372
    %389 = vst [vmem:[%s4 + $0x20] sm:$0xff] %v373
    %390 = vst [vmem:[%s4 + $0x28] sm:$0xff] %v374
    %391 = vst [vmem:[%s4 + $0x30] sm:$0xff] %v375
    %392 = vst [vmem:[%s4 + $0x38] sm:$0xff] %v376
    %393 = vst [vmem:[%s4 + $0x40] sm:$0xff] %v377
    %394 = vst [vmem:[%s4 + $0x48] sm:$0xff] %v378
    %395 = vst [vmem:[%s4 + $0x50] sm:$0xff] %v379
    %396 = vst [vmem:[%s4 + $0x58] sm:$0xff] %v380
    %397 = vst [vmem:[%s4 + $0x60] sm:$0xff] %v381
    %398 = vst [vmem:[%s4 + $0x68] sm:$0xff] %v382
    %399 = vst [vmem:[%s4 + $0x70] sm:$0xff] %v383
    %400 = vst [vmem:[%s4 + $0x78] sm:$0xff] %v384
  $region25: #{spatial_transformer_forward.15} parent=0 // pred_fallthru
    _
  // Predicated region
  $region26: #{spatial_transformer_forward.15} parent=0 // pred_check
    _
  $region27: #{spatial_transformer_forward.15} parent=0 // pred_check_branch
    %402 = sbr.rel (0) target = $region29
  $region28: #{spatial_transformer_forward.15} parent=0 // pred_region
    _
  $region29: #{spatial_transformer_forward.15} parent=0 // pred_fallthru
    _
  // Predicated region
  $region30: #{spatial_transformer_forward.15} parent=0 // pred_check
    _
  $region31: #{spatial_transformer_forward.15} parent=0 // pred_check_branch
    %404 = sbr.rel (0) target = $region33
  $region32: #{spatial_transformer_forward.15} parent=0 // pred_region
    _
  $region33: #{spatial_transformer_forward.15} parent=0 // pred_fallthru
    _

// kernel: spatial_transformer_forward.20
$region0: #{spatial_transformer_forward.20}
  #allocation0 [shape = 'u32[]', space=smem, size = 0x4, offset = 0x4, fixed_abs, tag = 'smem constant byte address 0x4 - core index']
  #allocation1 [shape = 'u32[144,128]{1,0:T(1,128)}', space=vmem, size = 0x12000, scoped, tag = 'internal scratch']
  #allocation2 [shape = 'f32[128,128]{1,0:T(8,128)}', space=vmem, size = 0x10000, scoped, tag = 'scratch operand']
  %s0 = inlined_call_operand.vmem [shape: bf16[128,512], index: 0, kind: input, shape index: {}]
  %s1 = inlined_call_operand.vmem [shape: bf16[512,128], index: 1, kind: input, shape index: {}]
  %s2 = inlined_call_operand.vmem [shape: f32[1,128], index: 2, kind: input, shape index: {}]
  %s3 = inlined_call_operand.vmem [shape: f32[128,128], index: 3, kind: input, shape index: {}]
  %s4 = inlined_call_operand.vmem [shape: f32[128,128], index: 4, kind: output, shape index: {}]
  %s5 = sld [smem:[#allocation0]]
  $region34: #{spatial_transformer_forward.20} parent=0
    _
  %s7 = ssub.s32 1, %s5
  %s8 = scalar_select 0, %s7, %s5
  // Predicated region
  $region2: #{spatial_transformer_forward.20} parent=0 // pred_check
    _
  $region3: #{spatial_transformer_forward.20} parent=0 // pred_check_branch
    %10 = sbr.rel (0) target = $region5
  $region4: #{spatial_transformer_forward.20} parent=0 // pred_region
    _
  $region5: #{spatial_transformer_forward.20} parent=0 // pred_fallthru
    _
  // Predicated region
  $region6: #{spatial_transformer_forward.20} parent=0 // pred_check
    _
  $region7: #{spatial_transformer_forward.20} parent=0 // pred_check_branch
    %12 = sbr.rel (0) target = $region9
  $region8: #{spatial_transformer_forward.20} parent=0 // pred_region
    _
  $region9: #{spatial_transformer_forward.20} parent=0 // pred_fallthru
    _
  // Predicated region
  $region10: #{spatial_transformer_forward.20} parent=0 // pred_check
    _
  $region11: #{spatial_transformer_forward.20} parent=0 // pred_check_branch
    %14 = sbr.rel (0) target = $region13
  $region12: #{spatial_transformer_forward.20} parent=0 // pred_region
    _
  $region13: #{spatial_transformer_forward.20} parent=0 // pred_fallthru
    _
  // Predicated region
  $region14: #{spatial_transformer_forward.20} parent=0 // pred_check
    _
  $region15: #{spatial_transformer_forward.20} parent=0 // pred_check_branch
    %16 = sbr.rel (0) target = $region17
  $region16: #{spatial_transformer_forward.20} parent=0 // pred_region
    _
  $region17: #{spatial_transformer_forward.20} parent=0 // pred_fallthru
    _
  %p18 = scmp.eq.s32.totalorder 0, 0
  // Predicated region
  $region18: #{spatial_transformer_forward.20} parent=0 // pred_check
    %p19 = pneg %p18
  $region19: #{spatial_transformer_forward.20} parent=0 // pred_check_branch
    %21 = sbr.rel (%p19) target = $region21
  $region20: #{spatial_transformer_forward.20} parent=0 // pred_region
    %22 = vst [vmem:[#allocation2] sm:$0xff] 0.0
    %23 = vst [vmem:[#allocation2 + $0x8] sm:$0xff] 0.0
    %24 = vst [vmem:[#allocation2 + $0x10] sm:$0xff] 0.0
    %25 = vst [vmem:[#allocation2 + $0x18] sm:$0xff] 0.0
    %26 = vst [vmem:[#allocation2 + $0x20] sm:$0xff] 0.0
    %27 = vst [vmem:[#allocation2 + $0x28] sm:$0xff] 0.0
    %28 = vst [vmem:[#allocation2 + $0x30] sm:$0xff] 0.0
    %29 = vst [vmem:[#allocation2 + $0x38] sm:$0xff] 0.0
    %30 = vst [vmem:[#allocation2 + $0x40] sm:$0xff] 0.0
    %31 = vst [vmem:[#allocation2 + $0x48] sm:$0xff] 0.0
    %32 = vst [vmem:[#allocation2 + $0x50] sm:$0xff] 0.0
    %33 = vst [vmem:[#allocation2 + $0x58] sm:$0xff] 0.0
    %34 = vst [vmem:[#allocation2 + $0x60] sm:$0xff] 0.0
    %35 = vst [vmem:[#allocation2 + $0x68] sm:$0xff] 0.0
    %36 = vst [vmem:[#allocation2 + $0x70] sm:$0xff] 0.0
    %37 = vst [vmem:[#allocation2 + $0x78] sm:$0xff] 0.0
  $region21: #{spatial_transformer_forward.20} parent=0 // pred_fallthru
    _
  %v38 = vld [vmem:[%s0] sm:$0xff]
  %v39 = vld [vmem:[%s0 + $0x8] sm:$0xff]
  %v40 = vld [vmem:[%s0 + $0x10] sm:$0xff]
  %v41 = vld [vmem:[%s0 + $0x18] sm:$0xff]
  %v42 = vld [vmem:[%s0 + $0x20] sm:$0xff]
  %v43 = vld [vmem:[%s0 + $0x28] sm:$0xff]
  %v44 = vld [vmem:[%s0 + $0x30] sm:$0xff]
  %v45 = vld [vmem:[%s0 + $0x38] sm:$0xff]
  %v46 = vld [vmem:[%s0 + $0x40] sm:$0xff]
  %v47 = vld [vmem:[%s0 + $0x48] sm:$0xff]
  %v48 = vld [vmem:[%s0 + $0x50] sm:$0xff]
  %v49 = vld [vmem:[%s0 + $0x58] sm:$0xff]
  %v50 = vld [vmem:[%s0 + $0x60] sm:$0xff]
  %v51 = vld [vmem:[%s0 + $0x68] sm:$0xff]
  %v52 = vld [vmem:[%s0 + $0x70] sm:$0xff]
  %v53 = vld [vmem:[%s0 + $0x78] sm:$0xff]
  %v54 = vld [vmem:[%s0 + $0x80] sm:$0xff]
  %v55 = vld [vmem:[%s0 + $0x88] sm:$0xff]
  %v56 = vld [vmem:[%s0 + $0x90] sm:$0xff]
  %v57 = vld [vmem:[%s0 + $0x98] sm:$0xff]
  %v58 = vld [vmem:[%s0 + $0xa0] sm:$0xff]
  %v59 = vld [vmem:[%s0 + $0xa8] sm:$0xff]
  %v60 = vld [vmem:[%s0 + $0xb0] sm:$0xff]
  %v61 = vld [vmem:[%s0 + $0xb8] sm:$0xff]
  %v62 = vld [vmem:[%s0 + $0xc0] sm:$0xff]
  %v63 = vld [vmem:[%s0 + $0xc8] sm:$0xff]
  %v64 = vld [vmem:[%s0 + $0xd0] sm:$0xff]
  %v65 = vld [vmem:[%s0 + $0xd8] sm:$0xff]
  %v66 = vld [vmem:[%s0 + $0xe0] sm:$0xff]
  %v67 = vld [vmem:[%s0 + $0xe8] sm:$0xff]
  %v68 = vld [vmem:[%s0 + $0xf0] sm:$0xff]
  %v69 = vld [vmem:[%s0 + $0xf8] sm:$0xff]
  %v70 = vld [vmem:[#allocation2] sm:$0xff]
  %v71 = vld [vmem:[#allocation2 + $0x8] sm:$0xff]
  %v72 = vld [vmem:[#allocation2 + $0x10] sm:$0xff]
  %v73 = vld [vmem:[#allocation2 + $0x18] sm:$0xff]
  %v74 = vld [vmem:[#allocation2 + $0x20] sm:$0xff]
  %v75 = vld [vmem:[#allocation2 + $0x28] sm:$0xff]
  %v76 = vld [vmem:[#allocation2 + $0x30] sm:$0xff]
  %v77 = vld [vmem:[#allocation2 + $0x38] sm:$0xff]
  %v78 = vld [vmem:[#allocation2 + $0x40] sm:$0xff]
  %v79 = vld [vmem:[#allocation2 + $0x48] sm:$0xff]
  %v80 = vld [vmem:[#allocation2 + $0x50] sm:$0xff]
  %v81 = vld [vmem:[#allocation2 + $0x58] sm:$0xff]
  %v82 = vld [vmem:[#allocation2 + $0x60] sm:$0xff]
  %v83 = vld [vmem:[#allocation2 + $0x68] sm:$0xff]
  %v84 = vld [vmem:[#allocation2 + $0x70] sm:$0xff]
  %v85 = vld [vmem:[#allocation2 + $0x78] sm:$0xff]
  %v86 = vld [vmem:[%s1] sm:$0xf]
  %v87 = vld [vmem:[%s1 + $0x4] sm:$0xf]
  %v88 = vld [vmem:[%s1 + $0x8] sm:$0xf]
  %v89 = vld [vmem:[%s1 + $0xc] sm:$0xf]
  %v90 = vld [vmem:[%s1 + $0x10] sm:$0xf]
  %v91 = vld [vmem:[%s1 + $0x14] sm:$0xf]
  %v92 = vld [vmem:[%s1 + $0x18] sm:$0xf]
  %v93 = vld [vmem:[%s1 + $0x1c] sm:$0xf]
  %v94 = vld [vmem:[%s1 + $0x20] sm:$0xf]
  %v95 = vld [vmem:[%s1 + $0x24] sm:$0xf]
  %v96 = vld [vmem:[%s1 + $0x28] sm:$0xf]
  %v97 = vld [vmem:[%s1 + $0x2c] sm:$0xf]
  %v98 = vld [vmem:[%s1 + $0x30] sm:$0xf]
  %v99 = vld [vmem:[%s1 + $0x34] sm:$0xf]
  %v100 = vld [vmem:[%s1 + $0x38] sm:$0xf]
  %v101 = vld [vmem:[%s1 + $0x3c] sm:$0xf]
  %v102 = vld [vmem:[%s1 + $0x40] sm:$0xf]
  %v103 = vld [vmem:[%s1 + $0x44] sm:$0xf]
  %v104 = vld [vmem:[%s1 + $0x48] sm:$0xf]
  %v105 = vld [vmem:[%s1 + $0x4c] sm:$0xf]
  %v106 = vld [vmem:[%s1 + $0x50] sm:$0xf]
  %v107 = vld [vmem:[%s1 + $0x54] sm:$0xf]
  %v108 = vld [vmem:[%s1 + $0x58] sm:$0xf]
  %v109 = vld [vmem:[%s1 + $0x5c] sm:$0xf]
  %v110 = vld [vmem:[%s1 + $0x60] sm:$0xf]
  %v111 = vld [vmem:[%s1 + $0x64] sm:$0xf]
  %v112 = vld [vmem:[%s1 + $0x68] sm:$0xf]
  %v113 = vld [vmem:[%s1 + $0x6c] sm:$0xf]
  %v114 = vld [vmem:[%s1 + $0x70] sm:$0xf]
  %v115 = vld [vmem:[%s1 + $0x74] sm:$0xf]
  %v116 = vld [vmem:[%s1 + $0x78] sm:$0xf]
  %v117 = vld [vmem:[%s1 + $0x7c] sm:$0xf]
  %v118 = vld [vmem:[%s1 + $0x80] sm:$0xf]
  %v119 = vld [vmem:[%s1 + $0x84] sm:$0xf]
  %v120 = vld [vmem:[%s1 + $0x88] sm:$0xf]
  %v121 = vld [vmem:[%s1 + $0x8c] sm:$0xf]
  %v122 = vld [vmem:[%s1 + $0x90] sm:$0xf]
  %v123 = vld [vmem:[%s1 + $0x94] sm:$0xf]
  %v124 = vld [vmem:[%s1 + $0x98] sm:$0xf]
  %v125 = vld [vmem:[%s1 + $0x9c] sm:$0xf]
  %v126 = vld [vmem:[%s1 + $0xa0] sm:$0xf]
  %v127 = vld [vmem:[%s1 + $0xa4] sm:$0xf]
  %v128 = vld [vmem:[%s1 + $0xa8] sm:$0xf]
  %v129 = vld [vmem:[%s1 + $0xac] sm:$0xf]
  %v130 = vld [vmem:[%s1 + $0xb0] sm:$0xf]
  %v131 = vld [vmem:[%s1 + $0xb4] sm:$0xf]
  %v132 = vld [vmem:[%s1 + $0xb8] sm:$0xf]
  %v133 = vld [vmem:[%s1 + $0xbc] sm:$0xf]
  %v134 = vld [vmem:[%s1 + $0xc0] sm:$0xf]
  %v135 = vld [vmem:[%s1 + $0xc4] sm:$0xf]
  %v136 = vld [vmem:[%s1 + $0xc8] sm:$0xf]
  %v137 = vld [vmem:[%s1 + $0xcc] sm:$0xf]
  %v138 = vld [vmem:[%s1 + $0xd0] sm:$0xf]
  %v139 = vld [vmem:[%s1 + $0xd4] sm:$0xf]
  %v140 = vld [vmem:[%s1 + $0xd8] sm:$0xf]
  %v141 = vld [vmem:[%s1 + $0xdc] sm:$0xf]
  %v142 = vld [vmem:[%s1 + $0xe0] sm:$0xf]
  %v143 = vld [vmem:[%s1 + $0xe4] sm:$0xf]
  %v144 = vld [vmem:[%s1 + $0xe8] sm:$0xf]
  %v145 = vld [vmem:[%s1 + $0xec] sm:$0xf]
  %v146 = vld [vmem:[%s1 + $0xf0] sm:$0xf]
  %v147 = vld [vmem:[%s1 + $0xf4] sm:$0xf]
  %v148 = vld [vmem:[%s1 + $0xf8] sm:$0xf]
  %v149 = vld [vmem:[%s1 + $0xfc] sm:$0xf]
  %v182 = vunpack.c.l.b16 %v38
  %v183 = vunpack.c.h.b16 %v38
  %v184 = vunpack.c.l.b16 %v39
  %v185 = vunpack.c.h.b16 %v39
  %v186 = vunpack.c.l.b16 %v40
  %v187 = vunpack.c.h.b16 %v40
  %v188 = vunpack.c.l.b16 %v41
  %v189 = vunpack.c.h.b16 %v41
  %v190 = vunpack.c.l.b16 %v42
  %v191 = vunpack.c.h.b16 %v42
  %v192 = vunpack.c.l.b16 %v43
  %v193 = vunpack.c.h.b16 %v43
  %v194 = vunpack.c.l.b16 %v44
  %v195 = vunpack.c.h.b16 %v44
  %v196 = vunpack.c.l.b16 %v45
  %v197 = vunpack.c.h.b16 %v45
  %v198 = vunpack.c.l.b16 %v46
  %v199 = vunpack.c.h.b16 %v46
  %v200 = vunpack.c.l.b16 %v47
  %v201 = vunpack.c.h.b16 %v47
  %v202 = vunpack.c.l.b16 %v48
  %v203 = vunpack.c.h.b16 %v48
  %v204 = vunpack.c.l.b16 %v49
  %v205 = vunpack.c.h.b16 %v49
  %v206 = vunpack.c.l.b16 %v50
  %v207 = vunpack.c.h.b16 %v50
  %v208 = vunpack.c.l.b16 %v51
  %v209 = vunpack.c.h.b16 %v51
  %v210 = vunpack.c.l.b16 %v52
  %v211 = vunpack.c.h.b16 %v52
  %v212 = vunpack.c.l.b16 %v53
  %v213 = vunpack.c.h.b16 %v53
  %v214 = vunpack.c.l.b16 %v54
  %v215 = vunpack.c.h.b16 %v54
  %v216 = vunpack.c.l.b16 %v55
  %v217 = vunpack.c.h.b16 %v55
  %v218 = vunpack.c.l.b16 %v56
  %v219 = vunpack.c.h.b16 %v56
  %v220 = vunpack.c.l.b16 %v57
  %v221 = vunpack.c.h.b16 %v57
  %v222 = vunpack.c.l.b16 %v58
  %v223 = vunpack.c.h.b16 %v58
  %v224 = vunpack.c.l.b16 %v59
  %v225 = vunpack.c.h.b16 %v59
  %v226 = vunpack.c.l.b16 %v60
  %v227 = vunpack.c.h.b16 %v60
  %v228 = vunpack.c.l.b16 %v61
  %v229 = vunpack.c.h.b16 %v61
  %v230 = vunpack.c.l.b16 %v62
  %v231 = vunpack.c.h.b16 %v62
  %v232 = vunpack.c.l.b16 %v63
  %v233 = vunpack.c.h.b16 %v63
  %v234 = vunpack.c.l.b16 %v64
  %v235 = vunpack.c.h.b16 %v64
  %v236 = vunpack.c.l.b16 %v65
  %v237 = vunpack.c.h.b16 %v65
  %v238 = vunpack.c.l.b16 %v66
  %v239 = vunpack.c.h.b16 %v66
  %v240 = vunpack.c.l.b16 %v67
  %v241 = vunpack.c.h.b16 %v67
  %v242 = vunpack.c.l.b16 %v68
  %v243 = vunpack.c.h.b16 %v68
  %v244 = vunpack.c.l.b16 %v69
  %v245 = vunpack.c.h.b16 %v69
  %v246 = vpack.c.b16 %v186, %v182
  %v247 = vpack.c.b16 %v187, %v183
  %v248 = vpack.c.b16 %v188, %v184
  %v249 = vpack.c.b16 %v189, %v185
  %v250 = vpack.c.b16 %v194, %v190
  %v251 = vpack.c.b16 %v195, %v191
  %v252 = vpack.c.b16 %v196, %v192
  %v253 = vpack.c.b16 %v197, %v193
  %v254 = vpack.c.b16 %v202, %v198
  %v255 = vpack.c.b16 %v203, %v199
  %v256 = vpack.c.b16 %v204, %v200
  %v257 = vpack.c.b16 %v205, %v201
  %v258 = vpack.c.b16 %v210, %v206
  %v259 = vpack.c.b16 %v211, %v207
  %v260 = vpack.c.b16 %v212, %v208
  %v261 = vpack.c.b16 %v213, %v209
  %v262 = vpack.c.b16 %v218, %v214
  %v263 = vpack.c.b16 %v219, %v215
  %v264 = vpack.c.b16 %v220, %v216
  %v265 = vpack.c.b16 %v221, %v217
  %v266 = vpack.c.b16 %v226, %v222
  %v267 = vpack.c.b16 %v227, %v223
  %v268 = vpack.c.b16 %v228, %v224
  %v269 = vpack.c.b16 %v229, %v225
  %v270 = vpack.c.b16 %v234, %v230
  %v271 = vpack.c.b16 %v235, %v231
  %v272 = vpack.c.b16 %v236, %v232
  %v273 = vpack.c.b16 %v237, %v233
  %v274 = vpack.c.b16 %v242, %v238
  %v275 = vpack.c.b16 %v243, %v239
  %v276 = vpack.c.b16 %v244, %v240
  %v277 = vpack.c.b16 %v245, %v241
  %v374 = vunpack.c.l.b16 %v86
  %v375 = vunpack.c.l.b16 %v87
  %v376 = vunpack.c.l.b16 %v88
  %v377 = vunpack.c.l.b16 %v89
  %v378 = vunpack.c.l.b16 %v90
  %v379 = vunpack.c.l.b16 %v91
  %v380 = vunpack.c.l.b16 %v92
  %v381 = vunpack.c.l.b16 %v93
  %v382 = vunpack.c.l.b16 %v94
  %v383 = vunpack.c.l.b16 %v95
  %v384 = vunpack.c.l.b16 %v96
  %v385 = vunpack.c.l.b16 %v97
  %v386 = vunpack.c.l.b16 %v98
  %v387 = vunpack.c.l.b16 %v99
  %v388 = vunpack.c.l.b16 %v100
  %v389 = vunpack.c.l.b16 %v101
  %v390 = vunpack.c.l.b16 %v102
  %v391 = vunpack.c.l.b16 %v103
  %v392 = vunpack.c.l.b16 %v104
  %v393 = vunpack.c.l.b16 %v105
  %v394 = vunpack.c.l.b16 %v106
  %v395 = vunpack.c.l.b16 %v107
  %v396 = vunpack.c.l.b16 %v108
  %v397 = vunpack.c.l.b16 %v109
  %v398 = vunpack.c.l.b16 %v110
  %v399 = vunpack.c.l.b16 %v111
  %v400 = vunpack.c.l.b16 %v112
  %v401 = vunpack.c.l.b16 %v113
  %v402 = vunpack.c.l.b16 %v114
  %v403 = vunpack.c.l.b16 %v115
  %v404 = vunpack.c.l.b16 %v116
  %v405 = vunpack.c.l.b16 %v117
  %v406 = vunpack.c.l.b16 %v118
  %v407 = vunpack.c.l.b16 %v119
  %v408 = vunpack.c.l.b16 %v120
  %v409 = vunpack.c.l.b16 %v121
  %v410 = vunpack.c.l.b16 %v122
  %v411 = vunpack.c.l.b16 %v123
  %v412 = vunpack.c.l.b16 %v124
  %v413 = vunpack.c.l.b16 %v125
  %v414 = vunpack.c.l.b16 %v126
  %v415 = vunpack.c.l.b16 %v127
  %v416 = vunpack.c.l.b16 %v128
  %v417 = vunpack.c.l.b16 %v129
  %v418 = vunpack.c.l.b16 %v130
  %v419 = vunpack.c.l.b16 %v131
  %v420 = vunpack.c.l.b16 %v132
  %v421 = vunpack.c.l.b16 %v133
  %v422 = vunpack.c.l.b16 %v134
  %v423 = vunpack.c.l.b16 %v135
  %v424 = vunpack.c.l.b16 %v136
  %v425 = vunpack.c.l.b16 %v137
  %v426 = vunpack.c.l.b16 %v138
  %v427 = vunpack.c.l.b16 %v139
  %v428 = vunpack.c.l.b16 %v140
  %v429 = vunpack.c.l.b16 %v141
  %v430 = vunpack.c.l.b16 %v142
  %v431 = vunpack.c.l.b16 %v143
  %v432 = vunpack.c.l.b16 %v144
  %v433 = vunpack.c.l.b16 %v145
  %v434 = vunpack.c.l.b16 %v146
  %v435 = vunpack.c.l.b16 %v147
  %v436 = vunpack.c.l.b16 %v148
  %v437 = vunpack.c.l.b16 %v149
  %v438 = vpack.c.b16 %v375, %v374
  %v439 = vpack.c.b16 %v377, %v376
  %v440 = vpack.c.b16 %v379, %v378
  %v441 = vpack.c.b16 %v381, %v380
  %v442 = vpack.c.b16 %v383, %v382
  %v443 = vpack.c.b16 %v385, %v384
  %v444 = vpack.c.b16 %v387, %v386
  %v445 = vpack.c.b16 %v389, %v388
  %v446 = vpack.c.b16 %v391, %v390
  %v447 = vpack.c.b16 %v393, %v392
  %v448 = vpack.c.b16 %v395, %v394
  %v449 = vpack.c.b16 %v397, %v396
  %v450 = vpack.c.b16 %v399, %v398
  %v451 = vpack.c.b16 %v401, %v400
  %v452 = vpack.c.b16 %v403, %v402
  %v453 = vpack.c.b16 %v405, %v404
  %v454 = vpack.c.b16 %v407, %v406
  %v455 = vpack.c.b16 %v409, %v408
  %v456 = vpack.c.b16 %v411, %v410
  %v457 = vpack.c.b16 %v413, %v412
  %v458 = vpack.c.b16 %v415, %v414
  %v459 = vpack.c.b16 %v417, %v416
  %v460 = vpack.c.b16 %v419, %v418
  %v461 = vpack.c.b16 %v421, %v420
  %v462 = vpack.c.b16 %v423, %v422
  %v463 = vpack.c.b16 %v425, %v424
  %v464 = vpack.c.b16 %v427, %v426
  %v465 = vpack.c.b16 %v429, %v428
  %v466 = vpack.c.b16 %v431, %v430
  %v467 = vpack.c.b16 %v433, %v432
  %v468 = vpack.c.b16 %v435, %v434
  %v469 = vpack.c.b16 %v437, %v436
  %502 = vmatprep.subr.bf16.mxu0 0
  %503 = vmatpush1.bf16.msra.mxu0 %v438
  %504 = vmatprep.subr.bf16.mxu0 0
  %505 = vmatpush1.bf16.msra.mxu0 %v439
  %506 = vmatprep.subr.bf16.mxu0 0
  %507 = vmatpush1.bf16.msra.mxu0 %v440
  %508 = vmatprep.subr.bf16.mxu0 0
  %509 = vmatpush1.bf16.msra.mxu0 %v441
  %510 = vmatprep.subr.bf16.mxu0 0
  %511 = vmatpush1.bf16.msra.mxu0 %v442
  %512 = vmatprep.subr.bf16.mxu0 0
  %513 = vmatpush1.bf16.msra.mxu0 %v443
  %514 = vmatprep.subr.bf16.mxu0 0
  %515 = vmatpush1.bf16.msra.mxu0 %v444
  %516 = vmatprep.subr.bf16.mxu0 0
  %517 = vmatpush1.bf16.msra.mxu0 %v445
  %518 = vmatprep.subr.bf16.mxu0 0
  %519 = vmatpush1.bf16.msra.mxu0 %v446
  %520 = vmatprep.subr.bf16.mxu0 0
  %521 = vmatpush1.bf16.msra.mxu0 %v447
  %522 = vmatprep.subr.bf16.mxu0 0
  %523 = vmatpush1.bf16.msra.mxu0 %v448
  %524 = vmatprep.subr.bf16.mxu0 0
  %525 = vmatpush1.bf16.msra.mxu0 %v449
  %526 = vmatprep.subr.bf16.mxu0 0
  %527 = vmatpush1.bf16.msra.mxu0 %v450
  %528 = vmatprep.subr.bf16.mxu0 0
  %529 = vmatpush1.bf16.msra.mxu0 %v451
  %530 = vmatprep.subr.bf16.mxu0 0
  %531 = vmatpush1.bf16.msra.mxu0 %v452
  %532 = vmatprep.subr.bf16.mxu0 0
  %533 = vmatpush1.bf16.msra.mxu0 %v453
  %534 = vmatprep.mubr.bf16.mxu0 %v247
  %535 = vmatmul.mubr.bf16.gmra.mrb[0].mxu0 %v246
  %v536 = vpop.f32.mrb[0].mxu0
  %v537 = vadd.f32 0.0, %v536
  %v538 = vpop.f32.mrb[0].mxu0
  %v539 = vpop.f32.mrb[0].mxu0
  %v540 = vadd.f32 0.0, %v539
  %v541 = vpop.f32.mrb[0].mxu0
  %542 = vmatprep.mubr.bf16.mxu0 %v251
  %543 = vmatmul.mubr.bf16.gmra.mrb[0].mxu0 %v250
  %v544 = vpop.f32.mrb[0].mxu0
  %v545 = vadd.f32 0.0, %v544
  %v546 = vpop.f32.mrb[0].mxu0
  %v547 = vpop.f32.mrb[0].mxu0
  %v548 = vadd.f32 0.0, %v547
  %v549 = vpop.f32.mrb[0].mxu0
  %550 = vmatprep.mubr.bf16.mxu0 %v255
  %551 = vmatmul.mubr.bf16.gmra.mrb[0].mxu0 %v254
  %v552 = vpop.f32.mrb[0].mxu0
  %v553 = vadd.f32 0.0, %v552
  %v554 = vpop.f32.mrb[0].mxu0
  %v555 = vpop.f32.mrb[0].mxu0
  %v556 = vadd.f32 0.0, %v555
  %v557 = vpop.f32.mrb[0].mxu0
  %558 = vmatprep.mubr.bf16.mxu0 %v259
  %559 = vmatmul.mubr.bf16.gmra.mrb[0].mxu0 %v258
  %v560 = vpop.f32.mrb[0].mxu0
  %v561 = vadd.f32 0.0, %v560
  %v562 = vpop.f32.mrb[0].mxu0
  %v563 = vpop.f32.mrb[0].mxu0
  %v564 = vadd.f32 0.0, %v563
  %v565 = vpop.f32.mrb[0].mxu0
  %566 = vmatprep.mubr.bf16.mxu0 %v263
  %567 = vmatmul.mubr.bf16.gmra.mrb[0].mxu0 %v262
  %v568 = vpop.f32.mrb[0].mxu0
  %v569 = vadd.f32 0.0, %v568
  %v570 = vpop.f32.mrb[0].mxu0
  %v571 = vpop.f32.mrb[0].mxu0
  %v572 = vadd.f32 0.0, %v571
  %v573 = vpop.f32.mrb[0].mxu0
  %574 = vmatprep.mubr.bf16.mxu0 %v267
  %575 = vmatmul.mubr.bf16.gmra.mrb[0].mxu0 %v266
  %v576 = vpop.f32.mrb[0].mxu0
  %v577 = vadd.f32 0.0, %v576
  %v578 = vpop.f32.mrb[0].mxu0
  %v579 = vpop.f32.mrb[0].mxu0
  %v580 = vadd.f32 0.0, %v579
  %v581 = vpop.f32.mrb[0].mxu0
  %582 = vmatprep.mubr.bf16.mxu0 %v271
  %583 = vmatmul.mubr.bf16.gmra.mrb[0].mxu0 %v270
  %v584 = vpop.f32.mrb[0].mxu0
  %v585 = vadd.f32 0.0, %v584
  %v586 = vpop.f32.mrb[0].mxu0
  %v587 = vpop.f32.mrb[0].mxu0
  %v588 = vadd.f32 0.0, %v587
  %v589 = vpop.f32.mrb[0].mxu0
  %590 = vmatprep.mubr.bf16.mxu0 %v275
  %591 = vmatmul.mubr.bf16.gmra.mrb[0].mxu0 %v274
  %v592 = vpop.f32.mrb[0].mxu0
  %v593 = vadd.f32 0.0, %v592
  %v594 = vpop.f32.mrb[0].mxu0
  %v595 = vpop.f32.mrb[0].mxu0
  %v596 = vadd.f32 0.0, %v595
  %v597 = vpop.f32.mrb[0].mxu0
  %598 = vdwg.mxu0
  %599 = vmatprep.subr.bf16.mxu0 0
  %600 = vmatpush1.bf16.msra.mxu0 %v454
  %601 = vmatprep.subr.bf16.mxu0 0
  %602 = vmatpush1.bf16.msra.mxu0 %v455
  %603 = vmatprep.subr.bf16.mxu0 0
  %604 = vmatpush1.bf16.msra.mxu0 %v456
  %605 = vmatprep.subr.bf16.mxu0 0
  %606 = vmatpush1.bf16.msra.mxu0 %v457
  %607 = vmatprep.subr.bf16.mxu0 0
  %608 = vmatpush1.bf16.msra.mxu0 %v458
  %609 = vmatprep.subr.bf16.mxu0 0
  %610 = vmatpush1.bf16.msra.mxu0 %v459
  %611 = vmatprep.subr.bf16.mxu0 0
  %612 = vmatpush1.bf16.msra.mxu0 %v460
  %613 = vmatprep.subr.bf16.mxu0 0
  %614 = vmatpush1.bf16.msra.mxu0 %v461
  %615 = vmatprep.subr.bf16.mxu0 0
  %616 = vmatpush1.bf16.msra.mxu0 %v462
  %617 = vmatprep.subr.bf16.mxu0 0
  %618 = vmatpush1.bf16.msra.mxu0 %v463
  %619 = vmatprep.subr.bf16.mxu0 0
  %620 = vmatpush1.bf16.msra.mxu0 %v464
  %621 = vmatprep.subr.bf16.mxu0 0
  %622 = vmatpush1.bf16.msra.mxu0 %v465
  %623 = vmatprep.subr.bf16.mxu0 0
  %624 = vmatpush1.bf16.msra.mxu0 %v466
  %625 = vmatprep.subr.bf16.mxu0 0
  %626 = vmatpush1.bf16.msra.mxu0 %v467
  %627 = vmatprep.subr.bf16.mxu0 0
  %628 = vmatpush1.bf16.msra.mxu0 %v468
  %629 = vmatprep.subr.bf16.mxu0 0
  %630 = vmatpush1.bf16.msra.mxu0 %v469
  %631 = vmatprep.mubr.bf16.mxu0 %v249
  %632 = vmatmul.mubr.bf16.gmra.mrb[0].mxu0 %v248
  %v633 = vpop.f32.mrb[0].mxu0
  %v634 = vadd.f32 %v537, %v633
  %v635 = vpop.f32.mrb[0].mxu0
  %v636 = vpop.f32.mrb[0].mxu0
  %v637 = vadd.f32 %v540, %v636
  %v638 = vpop.f32.mrb[0].mxu0
  %639 = vmatprep.mubr.bf16.mxu0 %v253
  %640 = vmatmul.mubr.bf16.gmra.mrb[0].mxu0 %v252
  %v641 = vpop.f32.mrb[0].mxu0
  %v642 = vadd.f32 %v545, %v641
  %v643 = vpop.f32.mrb[0].mxu0
  %v644 = vpop.f32.mrb[0].mxu0
  %v645 = vadd.f32 %v548, %v644
  %v646 = vpop.f32.mrb[0].mxu0
  %647 = vmatprep.mubr.bf16.mxu0 %v257
  %648 = vmatmul.mubr.bf16.gmra.mrb[0].mxu0 %v256
  %v649 = vpop.f32.mrb[0].mxu0
  %v650 = vadd.f32 %v553, %v649
  %v651 = vpop.f32.mrb[0].mxu0
  %v652 = vpop.f32.mrb[0].mxu0
  %v653 = vadd.f32 %v556, %v652
  %v654 = vpop.f32.mrb[0].mxu0
  %655 = vmatprep.mubr.bf16.mxu0 %v261
  %656 = vmatmul.mubr.bf16.gmra.mrb[0].mxu0 %v260
  %v657 = vpop.f32.mrb[0].mxu0
  %v658 = vadd.f32 %v561, %v657
  %v659 = vpop.f32.mrb[0].mxu0
  %v660 = vpop.f32.mrb[0].mxu0
  %v661 = vadd.f32 %v564, %v660
  %v662 = vpop.f32.mrb[0].mxu0
  %663 = vmatprep.mubr.bf16.mxu0 %v265
  %664 = vmatmul.mubr.bf16.gmra.mrb[0].mxu0 %v264
  %v665 = vpop.f32.mrb[0].mxu0
  %v666 = vadd.f32 %v569, %v665
  %v667 = vpop.f32.mrb[0].mxu0
  %v668 = vpop.f32.mrb[0].mxu0
  %v669 = vadd.f32 %v572, %v668
  %v670 = vpop.f32.mrb[0].mxu0
  %671 = vmatprep.mubr.bf16.mxu0 %v269
  %672 = vmatmul.mubr.bf16.gmra.mrb[0].mxu0 %v268
  %v673 = vpop.f32.mrb[0].mxu0
  %v674 = vadd.f32 %v577, %v673
  %v675 = vpop.f32.mrb[0].mxu0
  %v676 = vpop.f32.mrb[0].mxu0
  %v677 = vadd.f32 %v580, %v676
  %v678 = vpop.f32.mrb[0].mxu0
  %679 = vmatprep.mubr.bf16.mxu0 %v273
  %680 = vmatmul.mubr.bf16.gmra.mrb[0].mxu0 %v272
  %v681 = vpop.f32.mrb[0].mxu0
  %v682 = vadd.f32 %v585, %v681
  %v683 = vpop.f32.mrb[0].mxu0
  %v684 = vpop.f32.mrb[0].mxu0
  %v685 = vadd.f32 %v588, %v684
  %v686 = vpop.f32.mrb[0].mxu0
  %687 = vmatprep.mubr.bf16.mxu0 %v277
  %688 = vmatmul.mubr.bf16.gmra.mrb[0].mxu0 %v276
  %v689 = vpop.f32.mrb[0].mxu0
  %v690 = vadd.f32 %v593, %v689
  %v691 = vpop.f32.mrb[0].mxu0
  %v692 = vpop.f32.mrb[0].mxu0
  %v693 = vadd.f32 %v596, %v692
  %v694 = vpop.f32.mrb[0].mxu0
  %695 = vdwg.mxu0
  %v696 = vadd.f32 %v70, %v634
  %v697 = vadd.f32 %v71, %v637
  %v698 = vadd.f32 %v72, %v642
  %v699 = vadd.f32 %v73, %v645
  %v700 = vadd.f32 %v74, %v650
  %v701 = vadd.f32 %v75, %v653
  %v702 = vadd.f32 %v76, %v658
  %v703 = vadd.f32 %v77, %v661
  %v704 = vadd.f32 %v78, %v666
  %v705 = vadd.f32 %v79, %v669
  %v706 = vadd.f32 %v80, %v674
  %v707 = vadd.f32 %v81, %v677
  %v708 = vadd.f32 %v82, %v682
  %v709 = vadd.f32 %v83, %v685
  %v710 = vadd.f32 %v84, %v690
  %v711 = vadd.f32 %v85, %v693
  %712 = vst [vmem:[#allocation2] sm:$0xff] %v696
  %713 = vst [vmem:[#allocation2 + $0x8] sm:$0xff] %v697
  %714 = vst [vmem:[#allocation2 + $0x10] sm:$0xff] %v698
  %715 = vst [vmem:[#allocation2 + $0x18] sm:$0xff] %v699
  %716 = vst [vmem:[#allocation2 + $0x20] sm:$0xff] %v700
  %717 = vst [vmem:[#allocation2 + $0x28] sm:$0xff] %v701
  %718 = vst [vmem:[#allocation2 + $0x30] sm:$0xff] %v702
  %719 = vst [vmem:[#allocation2 + $0x38] sm:$0xff] %v703
  %720 = vst [vmem:[#allocation2 + $0x40] sm:$0xff] %v704
  %721 = vst [vmem:[#allocation2 + $0x48] sm:$0xff] %v705
  %722 = vst [vmem:[#allocation2 + $0x50] sm:$0xff] %v706
  %723 = vst [vmem:[#allocation2 + $0x58] sm:$0xff] %v707
  %724 = vst [vmem:[#allocation2 + $0x60] sm:$0xff] %v708
  %725 = vst [vmem:[#allocation2 + $0x68] sm:$0xff] %v709
  %726 = vst [vmem:[#allocation2 + $0x70] sm:$0xff] %v710
  %727 = vst [vmem:[#allocation2 + $0x78] sm:$0xff] %v711
  // Predicated region
  $region22: #{spatial_transformer_forward.20} parent=0 // pred_check
    %p728 = pneg %p18
  $region23: #{spatial_transformer_forward.20} parent=0 // pred_check_branch
    %730 = sbr.rel (%p728) target = $region25
  $region24: #{spatial_transformer_forward.20} parent=0 // pred_region
    %v731 = vld [vmem:[#allocation2] sm:$0xff]
    %v732 = vld [vmem:[#allocation2 + $0x8] sm:$0xff]
    %v733 = vld [vmem:[#allocation2 + $0x10] sm:$0xff]
    %v734 = vld [vmem:[#allocation2 + $0x18] sm:$0xff]
    %v735 = vld [vmem:[#allocation2 + $0x20] sm:$0xff]
    %v736 = vld [vmem:[#allocation2 + $0x28] sm:$0xff]
    %v737 = vld [vmem:[#allocation2 + $0x30] sm:$0xff]
    %v738 = vld [vmem:[#allocation2 + $0x38] sm:$0xff]
    %v739 = vld [vmem:[#allocation2 + $0x40] sm:$0xff]
    %v740 = vld [vmem:[#allocation2 + $0x48] sm:$0xff]
    %v741 = vld [vmem:[#allocation2 + $0x50] sm:$0xff]
    %v742 = vld [vmem:[#allocation2 + $0x58] sm:$0xff]
    %v743 = vld [vmem:[#allocation2 + $0x60] sm:$0xff]
    %v744 = vld [vmem:[#allocation2 + $0x68] sm:$0xff]
    %v745 = vld [vmem:[#allocation2 + $0x70] sm:$0xff]
    %v746 = vld [vmem:[#allocation2 + $0x78] sm:$0xff]
    %v747 = vld [vmem:[%s2] sm:$0x1]
    %v749 = vlaneseq
    %v750 = vshrl.u32 %v749, 7
    %v751 = vsub.s32 0, %v750
    %v752 = vrot.slane %v747, %v751
    %v754 = vadd.f32 %v731, %v752
    %v755 = vadd.f32 %v732, %v752
    %v756 = vadd.f32 %v733, %v752
    %v757 = vadd.f32 %v734, %v752
    %v758 = vadd.f32 %v735, %v752
    %v759 = vadd.f32 %v736, %v752
    %v760 = vadd.f32 %v737, %v752
    %v761 = vadd.f32 %v738, %v752
    %v762 = vadd.f32 %v739, %v752
    %v763 = vadd.f32 %v740, %v752
    %v764 = vadd.f32 %v741, %v752
    %v765 = vadd.f32 %v742, %v752
    %v766 = vadd.f32 %v743, %v752
    %v767 = vadd.f32 %v744, %v752
    %v768 = vadd.f32 %v745, %v752
    %v769 = vadd.f32 %v746, %v752
    %v770 = vld [vmem:[%s3] sm:$0xff]
    %v771 = vld [vmem:[%s3 + $0x8] sm:$0xff]
    %v772 = vld [vmem:[%s3 + $0x10] sm:$0xff]
    %v773 = vld [vmem:[%s3 + $0x18] sm:$0xff]
    %v774 = vld [vmem:[%s3 + $0x20] sm:$0xff]
    %v775 = vld [vmem:[%s3 + $0x28] sm:$0xff]
    %v776 = vld [vmem:[%s3 + $0x30] sm:$0xff]
    %v777 = vld [vmem:[%s3 + $0x38] sm:$0xff]
    %v778 = vld [vmem:[%s3 + $0x40] sm:$0xff]
    %v779 = vld [vmem:[%s3 + $0x48] sm:$0xff]
    %v780 = vld [vmem:[%s3 + $0x50] sm:$0xff]
    %v781 = vld [vmem:[%s3 + $0x58] sm:$0xff]
    %v782 = vld [vmem:[%s3 + $0x60] sm:$0xff]
    %v783 = vld [vmem:[%s3 + $0x68] sm:$0xff]
    %v784 = vld [vmem:[%s3 + $0x70] sm:$0xff]
    %v785 = vld [vmem:[%s3 + $0x78] sm:$0xff]
    %v786 = vadd.f32 %v754, %v770
    %v787 = vadd.f32 %v755, %v771
    %v788 = vadd.f32 %v756, %v772
    %v789 = vadd.f32 %v757, %v773
    %v790 = vadd.f32 %v758, %v774
    %v791 = vadd.f32 %v759, %v775
    %v792 = vadd.f32 %v760, %v776
    %v793 = vadd.f32 %v761, %v777
    %v794 = vadd.f32 %v762, %v778
    %v795 = vadd.f32 %v763, %v779
    %v796 = vadd.f32 %v764, %v780
    %v797 = vadd.f32 %v765, %v781
    %v798 = vadd.f32 %v766, %v782
    %v799 = vadd.f32 %v767, %v783
    %v800 = vadd.f32 %v768, %v784
    %v801 = vadd.f32 %v769, %v785
    %802 = vst [vmem:[%s4] sm:$0xff] %v786
    %803 = vst [vmem:[%s4 + $0x8] sm:$0xff] %v787
    %804 = vst [vmem:[%s4 + $0x10] sm:$0xff] %v788
    %805 = vst [vmem:[%s4 + $0x18] sm:$0xff] %v789
    %806 = vst [vmem:[%s4 + $0x20] sm:$0xff] %v790
    %807 = vst [vmem:[%s4 + $0x28] sm:$0xff] %v791
    %808 = vst [vmem:[%s4 + $0x30] sm:$0xff] %v792
    %809 = vst [vmem:[%s4 + $0x38] sm:$0xff] %v793
    %810 = vst [vmem:[%s4 + $0x40] sm:$0xff] %v794
    %811 = vst [vmem:[%s4 + $0x48] sm:$0xff] %v795
    %812 = vst [vmem:[%s4 + $0x50] sm:$0xff] %v796
    %813 = vst [vmem:[%s4 + $0x58] sm:$0xff] %v797
    %814 = vst [vmem:[%s4 + $0x60] sm:$0xff] %v798
    %815 = vst [vmem:[%s4 + $0x68] sm:$0xff] %v799
    %816 = vst [vmem:[%s4 + $0x70] sm:$0xff] %v800
    %817 = vst [vmem:[%s4 + $0x78] sm:$0xff] %v801
  $region25: #{spatial_transformer_forward.20} parent=0 // pred_fallthru
    _
  // Predicated region
  $region26: #{spatial_transformer_forward.20} parent=0 // pred_check
    _
  $region27: #{spatial_transformer_forward.20} parent=0 // pred_check_branch
    %819 = sbr.rel (0) target = $region29
  $region28: #{spatial_transformer_forward.20} parent=0 // pred_region
    _
  $region29: #{spatial_transformer_forward.20} parent=0 // pred_fallthru
    _
  // Predicated region
  $region30: #{spatial_transformer_forward.20} parent=0 // pred_check
    _
  $region31: #{spatial_transformer_forward.20} parent=0 // pred_check_branch
    %821 = sbr.rel (0) target = $region33
  $region32: #{spatial_transformer_forward.20} parent=0 // pred_region
    _
  $region33: #{spatial_transformer_forward.20} parent=0 // pred_fallthru
    _

// kernel: spatial_transformer_forward.21
$region0: #{spatial_transformer_forward.21}
  #allocation0 [shape = 'u32[]', space=smem, size = 0x4, offset = 0x4, fixed_abs, tag = 'smem constant byte address 0x4 - core index']
  #allocation1 [shape = 'u32[144,128]{1,0:T(1,128)}', space=vmem, size = 0x12000, scoped, tag = 'internal scratch']
  #allocation2 [shape = 'f32[128,32]{1,0:T(8,128)}', space=vmem, size = 0x10000, scoped, tag = 'scratch operand']
  %s0 = inlined_call_operand.vmem [shape: f32[128,128], index: 0, kind: input, shape index: {}]
  %s1 = inlined_call_operand.vmem [shape: bf16[128,32], index: 1, kind: input, shape index: {}]
  %s2 = inlined_call_operand.vmem [shape: f32[1,32], index: 2, kind: input, shape index: {}]
  %s3 = inlined_call_operand.vmem [shape: f32[128,32], index: 3, kind: output, shape index: {}]
  %s4 = sld [smem:[#allocation0]]
  $region30: #{spatial_transformer_forward.21} parent=0
    _
  %s6 = ssub.s32 1, %s4
  %s7 = scalar_select 0, %s6, %s4
  // Predicated region
  $region2: #{spatial_transformer_forward.21} parent=0 // pred_check
    _
  $region3: #{spatial_transformer_forward.21} parent=0 // pred_check_branch
    %9 = sbr.rel (0) target = $region5
  $region4: #{spatial_transformer_forward.21} parent=0 // pred_region
    _
  $region5: #{spatial_transformer_forward.21} parent=0 // pred_fallthru
    _
  // Predicated region
  $region6: #{spatial_transformer_forward.21} parent=0 // pred_check
    _
  $region7: #{spatial_transformer_forward.21} parent=0 // pred_check_branch
    %11 = sbr.rel (0) target = $region9
  $region8: #{spatial_transformer_forward.21} parent=0 // pred_region
    _
  $region9: #{spatial_transformer_forward.21} parent=0 // pred_fallthru
    _
  // Predicated region
  $region10: #{spatial_transformer_forward.21} parent=0 // pred_check
    _
  $region11: #{spatial_transformer_forward.21} parent=0 // pred_check_branch
    %13 = sbr.rel (0) target = $region13
  $region12: #{spatial_transformer_forward.21} parent=0 // pred_region
    _
  $region13: #{spatial_transformer_forward.21} parent=0 // pred_fallthru
    _
  %p15 = scmp.eq.s32.totalorder 0, 0
  // Predicated region
  $region14: #{spatial_transformer_forward.21} parent=0 // pred_check
    %p16 = pneg %p15
  $region15: #{spatial_transformer_forward.21} parent=0 // pred_check_branch
    %18 = sbr.rel (%p16) target = $region17
  $region16: #{spatial_transformer_forward.21} parent=0 // pred_region
    %vm19 = vcmask 261120
    %20 = vst.msk [vmem:[#allocation2] sm:$0xff] %vm19, 0.0
    %21 = vst.msk [vmem:[#allocation2 + $0x8] sm:$0xff] %vm19, 0.0
    %22 = vst.msk [vmem:[#allocation2 + $0x10] sm:$0xff] %vm19, 0.0
    %23 = vst.msk [vmem:[#allocation2 + $0x18] sm:$0xff] %vm19, 0.0
    %24 = vst.msk [vmem:[#allocation2 + $0x20] sm:$0xff] %vm19, 0.0
    %25 = vst.msk [vmem:[#allocation2 + $0x28] sm:$0xff] %vm19, 0.0
    %26 = vst.msk [vmem:[#allocation2 + $0x30] sm:$0xff] %vm19, 0.0
    %27 = vst.msk [vmem:[#allocation2 + $0x38] sm:$0xff] %vm19, 0.0
    %28 = vst.msk [vmem:[#allocation2 + $0x40] sm:$0xff] %vm19, 0.0
    %29 = vst.msk [vmem:[#allocation2 + $0x48] sm:$0xff] %vm19, 0.0
    %30 = vst.msk [vmem:[#allocation2 + $0x50] sm:$0xff] %vm19, 0.0
    %31 = vst.msk [vmem:[#allocation2 + $0x58] sm:$0xff] %vm19, 0.0
    %32 = vst.msk [vmem:[#allocation2 + $0x60] sm:$0xff] %vm19, 0.0
    %33 = vst.msk [vmem:[#allocation2 + $0x68] sm:$0xff] %vm19, 0.0
    %34 = vst.msk [vmem:[#allocation2 + $0x70] sm:$0xff] %vm19, 0.0
    %35 = vst.msk [vmem:[#allocation2 + $0x78] sm:$0xff] %vm19, 0.0
  $region17: #{spatial_transformer_forward.21} parent=0 // pred_fallthru
    _
  %v36 = vld [vmem:[%s0] sm:$0xff]
  %v37 = vld [vmem:[%s0 + $0x8] sm:$0xff]
  %v38 = vld [vmem:[%s0 + $0x10] sm:$0xff]
  %v39 = vld [vmem:[%s0 + $0x18] sm:$0xff]
  %v40 = vld [vmem:[%s0 + $0x20] sm:$0xff]
  %v41 = vld [vmem:[%s0 + $0x28] sm:$0xff]
  %v42 = vld [vmem:[%s0 + $0x30] sm:$0xff]
  %v43 = vld [vmem:[%s0 + $0x38] sm:$0xff]
  %v44 = vld [vmem:[%s0 + $0x40] sm:$0xff]
  %v45 = vld [vmem:[%s0 + $0x48] sm:$0xff]
  %v46 = vld [vmem:[%s0 + $0x50] sm:$0xff]
  %v47 = vld [vmem:[%s0 + $0x58] sm:$0xff]
  %v48 = vld [vmem:[%s0 + $0x60] sm:$0xff]
  %v49 = vld [vmem:[%s0 + $0x68] sm:$0xff]
  %v50 = vld [vmem:[%s0 + $0x70] sm:$0xff]
  %v51 = vld [vmem:[%s0 + $0x78] sm:$0xff]
  %v52 = vld [vmem:[#allocation2] sm:$0xff]
  %v53 = vld [vmem:[#allocation2 + $0x8] sm:$0xff]
  %v54 = vld [vmem:[#allocation2 + $0x10] sm:$0xff]
  %v55 = vld [vmem:[#allocation2 + $0x18] sm:$0xff]
  %v56 = vld [vmem:[#allocation2 + $0x20] sm:$0xff]
  %v57 = vld [vmem:[#allocation2 + $0x28] sm:$0xff]
  %v58 = vld [vmem:[#allocation2 + $0x30] sm:$0xff]
  %v59 = vld [vmem:[#allocation2 + $0x38] sm:$0xff]
  %v60 = vld [vmem:[#allocation2 + $0x40] sm:$0xff]
  %v61 = vld [vmem:[#allocation2 + $0x48] sm:$0xff]
  %v62 = vld [vmem:[#allocation2 + $0x50] sm:$0xff]
  %v63 = vld [vmem:[#allocation2 + $0x58] sm:$0xff]
  %v64 = vld [vmem:[#allocation2 + $0x60] sm:$0xff]
  %v65 = vld [vmem:[#allocation2 + $0x68] sm:$0xff]
  %v66 = vld [vmem:[#allocation2 + $0x70] sm:$0xff]
  %v67 = vld [vmem:[#allocation2 + $0x78] sm:$0xff]
  %v68 = vpack.c.bf16 %v37, %v36
  %v69 = vpack.c.bf16 %v39, %v38
  %v70 = vpack.c.bf16 %v41, %v40
  %v71 = vpack.c.bf16 %v43, %v42
  %v72 = vpack.c.bf16 %v45, %v44
  %v73 = vpack.c.bf16 %v47, %v46
  %v74 = vpack.c.bf16 %v49, %v48
  %v75 = vpack.c.bf16 %v51, %v50
  %v76 = vld [vmem:[%s1] sm:$0xf]
  %v77 = vld [vmem:[%s1 + $0x4] sm:$0xf]
  %v78 = vld [vmem:[%s1 + $0x8] sm:$0xf]
  %v79 = vld [vmem:[%s1 + $0xc] sm:$0xf]
  %v80 = vld [vmem:[%s1 + $0x10] sm:$0xf]
  %v81 = vld [vmem:[%s1 + $0x14] sm:$0xf]
  %v82 = vld [vmem:[%s1 + $0x18] sm:$0xf]
  %v83 = vld [vmem:[%s1 + $0x1c] sm:$0xf]
  %v84 = vld [vmem:[%s1 + $0x20] sm:$0xf]
  %v85 = vld [vmem:[%s1 + $0x24] sm:$0xf]
  %v86 = vld [vmem:[%s1 + $0x28] sm:$0xf]
  %v87 = vld [vmem:[%s1 + $0x2c] sm:$0xf]
  %v88 = vld [vmem:[%s1 + $0x30] sm:$0xf]
  %v89 = vld [vmem:[%s1 + $0x34] sm:$0xf]
  %v90 = vld [vmem:[%s1 + $0x38] sm:$0xf]
  %v91 = vld [vmem:[%s1 + $0x3c] sm:$0xf]
  %v108 = vunpack.c.l.b16 %v76
  %v109 = vunpack.c.l.b16 %v77
  %v110 = vunpack.c.l.b16 %v78
  %v111 = vunpack.c.l.b16 %v79
  %v112 = vunpack.c.l.b16 %v80
  %v113 = vunpack.c.l.b16 %v81
  %v114 = vunpack.c.l.b16 %v82
  %v115 = vunpack.c.l.b16 %v83
  %v116 = vunpack.c.l.b16 %v84
  %v117 = vunpack.c.l.b16 %v85
  %v118 = vunpack.c.l.b16 %v86
  %v119 = vunpack.c.l.b16 %v87
  %v120 = vunpack.c.l.b16 %v88
  %v121 = vunpack.c.l.b16 %v89
  %v122 = vunpack.c.l.b16 %v90
  %v123 = vunpack.c.l.b16 %v91
  %v124 = vpack.c.b16 %v109, %v108
  %v125 = vpack.c.b16 %v111, %v110
  %v126 = vpack.c.b16 %v113, %v112
  %v127 = vpack.c.b16 %v115, %v114
  %v128 = vpack.c.b16 %v117, %v116
  %v129 = vpack.c.b16 %v119, %v118
  %v130 = vpack.c.b16 %v121, %v120
  %v131 = vpack.c.b16 %v123, %v122
  %140 = vmatprep.subr.bf16.mxu0 0
  %141 = vmatpush1.bf16.msra.mxu0 %v124
  %142 = vmatprep.subr.bf16.mxu0 0
  %143 = vmatpush1.bf16.msra.mxu0 %v125
  %144 = vmatprep.subr.bf16.mxu0 0
  %145 = vmatpush1.bf16.msra.mxu0 %v126
  %146 = vmatprep.subr.bf16.mxu0 0
  %147 = vmatpush1.bf16.msra.mxu0 %v127
  %148 = vmatprep.subr.bf16.mxu0 0
  %149 = vmatpush1.bf16.msra.mxu0 %v128
  %150 = vmatprep.subr.bf16.mxu0 0
  %151 = vmatpush1.bf16.msra.mxu0 %v129
  %152 = vmatprep.subr.bf16.mxu0 0
  %153 = vmatpush1.bf16.msra.mxu0 %v130
  %154 = vmatprep.subr.bf16.mxu0 0
  %155 = vmatpush1.bf16.msra.mxu0 %v131
  %156 = vmatprep.subr.bf16.mxu0 0
  %157 = vmatpush1.bf16.msra.mxu0 0
  %158 = vmatprep.subr.bf16.mxu0 0
  %159 = vmatpush1.bf16.msra.mxu0 0
  %160 = vmatprep.subr.bf16.mxu0 0
  %161 = vmatpush1.bf16.msra.mxu0 0
  %162 = vmatprep.subr.bf16.mxu0 0
  %163 = vmatpush1.bf16.msra.mxu0 0
  %164 = vmatprep.subr.bf16.mxu0 0
  %165 = vmatpush1.bf16.msra.mxu0 0
  %166 = vmatprep.subr.bf16.mxu0 0
  %167 = vmatpush1.bf16.msra.mxu0 0
  %168 = vmatprep.subr.bf16.mxu0 0
  %169 = vmatpush1.bf16.msra.mxu0 0
  %170 = vmatprep.subr.bf16.mxu0 0
  %171 = vmatpush1.bf16.msra.mxu0 0
  %172 = vmatprep.mubr.bf16.mxu0 0
  %173 = vmatmul.mubr.bf16.gmra.mrb[0].mxu0 %v68
  %v174 = vpop.f32.mrb[0].mxu0
  %v175 = vadd.f32 0.0, %v174
  %v176 = vpop.f32.mrb[0].mxu0
  %v177 = vpop.f32.mrb[0].mxu0
  %v178 = vadd.f32 0.0, %v177
  %v179 = vpop.f32.mrb[0].mxu0
  %180 = vmatprep.mubr.bf16.mxu0 0
  %181 = vmatmul.mubr.bf16.gmra.mrb[0].mxu0 %v69
  %v182 = vpop.f32.mrb[0].mxu0
  %v183 = vadd.f32 0.0, %v182
  %v184 = vpop.f32.mrb[0].mxu0
  %v185 = vpop.f32.mrb[0].mxu0
  %v186 = vadd.f32 0.0, %v185
  %v187 = vpop.f32.mrb[0].mxu0
  %188 = vmatprep.mubr.bf16.mxu0 0
  %189 = vmatmul.mubr.bf16.gmra.mrb[0].mxu0 %v70
  %v190 = vpop.f32.mrb[0].mxu0
  %v191 = vadd.f32 0.0, %v190
  %v192 = vpop.f32.mrb[0].mxu0
  %v193 = vpop.f32.mrb[0].mxu0
  %v194 = vadd.f32 0.0, %v193
  %v195 = vpop.f32.mrb[0].mxu0
  %196 = vmatprep.mubr.bf16.mxu0 0
  %197 = vmatmul.mubr.bf16.gmra.mrb[0].mxu0 %v71
  %v198 = vpop.f32.mrb[0].mxu0
  %v199 = vadd.f32 0.0, %v198
  %v200 = vpop.f32.mrb[0].mxu0
  %v201 = vpop.f32.mrb[0].mxu0
  %v202 = vadd.f32 0.0, %v201
  %v203 = vpop.f32.mrb[0].mxu0
  %204 = vmatprep.mubr.bf16.mxu0 0
  %205 = vmatmul.mubr.bf16.gmra.mrb[0].mxu0 %v72
  %v206 = vpop.f32.mrb[0].mxu0
  %v207 = vadd.f32 0.0, %v206
  %v208 = vpop.f32.mrb[0].mxu0
  %v209 = vpop.f32.mrb[0].mxu0
  %v210 = vadd.f32 0.0, %v209
  %v211 = vpop.f32.mrb[0].mxu0
  %212 = vmatprep.mubr.bf16.mxu0 0
  %213 = vmatmul.mubr.bf16.gmra.mrb[0].mxu0 %v73
  %v214 = vpop.f32.mrb[0].mxu0
  %v215 = vadd.f32 0.0, %v214
  %v216 = vpop.f32.mrb[0].mxu0
  %v217 = vpop.f32.mrb[0].mxu0
  %v218 = vadd.f32 0.0, %v217
  %v219 = vpop.f32.mrb[0].mxu0
  %220 = vmatprep.mubr.bf16.mxu0 0
  %221 = vmatmul.mubr.bf16.gmra.mrb[0].mxu0 %v74
  %v222 = vpop.f32.mrb[0].mxu0
  %v223 = vadd.f32 0.0, %v222
  %v224 = vpop.f32.mrb[0].mxu0
  %v225 = vpop.f32.mrb[0].mxu0
  %v226 = vadd.f32 0.0, %v225
  %v227 = vpop.f32.mrb[0].mxu0
  %228 = vmatprep.mubr.bf16.mxu0 0
  %229 = vmatmul.mubr.bf16.gmra.mrb[0].mxu0 %v75
  %v230 = vpop.f32.mrb[0].mxu0
  %v231 = vadd.f32 0.0, %v230
  %v232 = vpop.f32.mrb[0].mxu0
  %v233 = vpop.f32.mrb[0].mxu0
  %v234 = vadd.f32 0.0, %v233
  %v235 = vpop.f32.mrb[0].mxu0
  %236 = vdwg.mxu0
  %v237 = vadd.f32 %v52, %v175
  %v238 = vadd.f32 %v53, %v178
  %v239 = vadd.f32 %v54, %v183
  %v240 = vadd.f32 %v55, %v186
  %v241 = vadd.f32 %v56, %v191
  %v242 = vadd.f32 %v57, %v194
  %v243 = vadd.f32 %v58, %v199
  %v244 = vadd.f32 %v59, %v202
  %v245 = vadd.f32 %v60, %v207
  %v246 = vadd.f32 %v61, %v210
  %v247 = vadd.f32 %v62, %v215
  %v248 = vadd.f32 %v63, %v218
  %v249 = vadd.f32 %v64, %v223
  %v250 = vadd.f32 %v65, %v226
  %v251 = vadd.f32 %v66, %v231
  %v252 = vadd.f32 %v67, %v234
  %vm253 = vcmask 261120
  %254 = vst.msk [vmem:[#allocation2] sm:$0xff] %vm253, %v237
  %255 = vst.msk [vmem:[#allocation2 + $0x8] sm:$0xff] %vm253, %v238
  %256 = vst.msk [vmem:[#allocation2 + $0x10] sm:$0xff] %vm253, %v239
  %257 = vst.msk [vmem:[#allocation2 + $0x18] sm:$0xff] %vm253, %v240
  %258 = vst.msk [vmem:[#allocation2 + $0x20] sm:$0xff] %vm253, %v241
  %259 = vst.msk [vmem:[#allocation2 + $0x28] sm:$0xff] %vm253, %v242
  %260 = vst.msk [vmem:[#allocation2 + $0x30] sm:$0xff] %vm253, %v243
  %261 = vst.msk [vmem:[#allocation2 + $0x38] sm:$0xff] %vm253, %v244
  %262 = vst.msk [vmem:[#allocation2 + $0x40] sm:$0xff] %vm253, %v245
  %263 = vst.msk [vmem:[#allocation2 + $0x48] sm:$0xff] %vm253, %v246
  %264 = vst.msk [vmem:[#allocation2 + $0x50] sm:$0xff] %vm253, %v247
  %265 = vst.msk [vmem:[#allocation2 + $0x58] sm:$0xff] %vm253, %v248
  %266 = vst.msk [vmem:[#allocation2 + $0x60] sm:$0xff] %vm253, %v249
  %267 = vst.msk [vmem:[#allocation2 + $0x68] sm:$0xff] %vm253, %v250
  %268 = vst.msk [vmem:[#allocation2 + $0x70] sm:$0xff] %vm253, %v251
  %269 = vst.msk [vmem:[#allocation2 + $0x78] sm:$0xff] %vm253, %v252
  // Predicated region
  $region18: #{spatial_transformer_forward.21} parent=0 // pred_check
    %p270 = pneg %p15
  $region19: #{spatial_transformer_forward.21} parent=0 // pred_check_branch
    %272 = sbr.rel (%p270) target = $region21
  $region20: #{spatial_transformer_forward.21} parent=0 // pred_region
    %v273 = vld [vmem:[#allocation2] sm:$0xff]
    %v274 = vld [vmem:[#allocation2 + $0x8] sm:$0xff]
    %v275 = vld [vmem:[#allocation2 + $0x10] sm:$0xff]
    %v276 = vld [vmem:[#allocation2 + $0x18] sm:$0xff]
    %v277 = vld [vmem:[#allocation2 + $0x20] sm:$0xff]
    %v278 = vld [vmem:[#allocation2 + $0x28] sm:$0xff]
    %v279 = vld [vmem:[#allocation2 + $0x30] sm:$0xff]
    %v280 = vld [vmem:[#allocation2 + $0x38] sm:$0xff]
    %v281 = vld [vmem:[#allocation2 + $0x40] sm:$0xff]
    %v282 = vld [vmem:[#allocation2 + $0x48] sm:$0xff]
    %v283 = vld [vmem:[#allocation2 + $0x50] sm:$0xff]
    %v284 = vld [vmem:[#allocation2 + $0x58] sm:$0xff]
    %v285 = vld [vmem:[#allocation2 + $0x60] sm:$0xff]
    %v286 = vld [vmem:[#allocation2 + $0x68] sm:$0xff]
    %v287 = vld [vmem:[#allocation2 + $0x70] sm:$0xff]
    %v288 = vld [vmem:[#allocation2 + $0x78] sm:$0xff]
    %v289 = vld [vmem:[%s2] sm:$0x1]
    %v291 = vlaneseq
    %v292 = vshrl.u32 %v291, 7
    %v293 = vsub.s32 0, %v292
    %v294 = vrot.slane %v289, %v293
    %v296 = vadd.f32 %v273, %v294
    %v297 = vadd.f32 %v274, %v294
    %v298 = vadd.f32 %v275, %v294
    %v299 = vadd.f32 %v276, %v294
    %v300 = vadd.f32 %v277, %v294
    %v301 = vadd.f32 %v278, %v294
    %v302 = vadd.f32 %v279, %v294
    %v303 = vadd.f32 %v280, %v294
    %v304 = vadd.f32 %v281, %v294
    %v305 = vadd.f32 %v282, %v294
    %v306 = vadd.f32 %v283, %v294
    %v307 = vadd.f32 %v284, %v294
    %v308 = vadd.f32 %v285, %v294
    %v309 = vadd.f32 %v286, %v294
    %v310 = vadd.f32 %v287, %v294
    %v311 = vadd.f32 %v288, %v294
    %312 = vst.msk [vmem:[%s3] sm:$0xff] %vm253, %v296
    %313 = vst.msk [vmem:[%s3 + $0x8] sm:$0xff] %vm253, %v297
    %314 = vst.msk [vmem:[%s3 + $0x10] sm:$0xff] %vm253, %v298
    %315 = vst.msk [vmem:[%s3 + $0x18] sm:$0xff] %vm253, %v299
    %316 = vst.msk [vmem:[%s3 + $0x20] sm:$0xff] %vm253, %v300
    %317 = vst.msk [vmem:[%s3 + $0x28] sm:$0xff] %vm253, %v301
    %318 = vst.msk [vmem:[%s3 + $0x30] sm:$0xff] %vm253, %v302
    %319 = vst.msk [vmem:[%s3 + $0x38] sm:$0xff] %vm253, %v303
    %320 = vst.msk [vmem:[%s3 + $0x40] sm:$0xff] %vm253, %v304
    %321 = vst.msk [vmem:[%s3 + $0x48] sm:$0xff] %vm253, %v305
    %322 = vst.msk [vmem:[%s3 + $0x50] sm:$0xff] %vm253, %v306
    %323 = vst.msk [vmem:[%s3 + $0x58] sm:$0xff] %vm253, %v307
    %324 = vst.msk [vmem:[%s3 + $0x60] sm:$0xff] %vm253, %v308
    %325 = vst.msk [vmem:[%s3 + $0x68] sm:$0xff] %vm253, %v309
    %326 = vst.msk [vmem:[%s3 + $0x70] sm:$0xff] %vm253, %v310
    %327 = vst.msk [vmem:[%s3 + $0x78] sm:$0xff] %vm253, %v311
  $region21: #{spatial_transformer_forward.21} parent=0 // pred_fallthru
    _
  // Predicated region
  $region22: #{spatial_transformer_forward.21} parent=0 // pred_check
    _
  $region23: #{spatial_transformer_forward.21} parent=0 // pred_check_branch
    %329 = sbr.rel (0) target = $region25
  $region24: #{spatial_transformer_forward.21} parent=0 // pred_region
    _
  $region25: #{spatial_transformer_forward.21} parent=0 // pred_fallthru
    _
  // Predicated region
  $region26: #{spatial_transformer_forward.21} parent=0 // pred_check
    _
  $region27: #{spatial_transformer_forward.21} parent=0 // pred_check_branch
    %331 = sbr.rel (0) target = $region29
  $region28: #{spatial_transformer_forward.21} parent=0 // pred_region
    _
  $region29: #{spatial_transformer_forward.21} parent=0 // pred_fallthru
    _

// kernel: spatial_transformer_forward.19
$region0: #{spatial_transformer_forward.19}
  #allocation0 [shape = 'u32[]', space=smem, size = 0x4, offset = 0x4, fixed_abs, tag = 'smem constant byte address 0x4 - core index']
  #allocation1 [shape = 'u32[144,128]{1,0:T(1,128)}', space=vmem, size = 0x12000, scoped, tag = 'internal scratch']
  #allocation2 [shape = 'f32[128,512]{1,0:T(8,128)}', space=vmem, size = 0x40000, scoped, tag = 'scratch operand']
  #allocation3 [shape = 'f32[128,512]{1,0:T(8,128)}', space=vmem, size = 0x40000, scoped, tag = 'scratch operand']
  %s0 = inlined_call_operand.vmem [shape: f32[128,128], index: 0, kind: input, shape index: {}]
  %s1 = inlined_call_operand.vmem [shape: bf16[128,1024], index: 1, kind: input, shape index: {}, may-alias: {1,2}]
  %s2 = inlined_call_operand.vmem [shape: bf16[128,1024], index: 2, kind: input, shape index: {}, may-alias: {1,2}]
  %s3 = inlined_call_operand.vmem [shape: f32[1,1024], index: 3, kind: input, shape index: {}, may-alias: {3,4}]
  %s4 = inlined_call_operand.vmem [shape: f32[1,1024], index: 4, kind: input, shape index: {}, may-alias: {3,4}]
  %s5 = inlined_call_operand.vmem [shape: f32[1,128], index: 5, kind: input, shape index: {}]
  %s6 = inlined_call_operand.vmem [shape: f32[1,128], index: 6, kind: input, shape index: {}]
  %s7 = inlined_call_operand.vmem [shape: bf16[128,512], index: 7, kind: output, shape index: {}]
  %s8 = sld [smem:[#allocation0]]
  $region92: #{spatial_transformer_forward.19} parent=0
    _
  %s10 = ssub.s32 1, %s8
  %s11 = scalar_select 0, %s10, %s8
  $region1: #{spatial_transformer_forward.19} parent=0
    #allocation4 [shape = 'u8[131072]{0}', space=vmem, size = 0x20000, scoped, tag = 'input window, operand 1, single buffered']
    #allocation5 [shape = 'u8[131072]{0}', space=vmem, size = 0x20000, scoped, tag = 'input window, operand 2, single buffered']
    // Predicated region
    $region2: #{spatial_transformer_forward.19} parent=1 // pred_check
      _
    $region3: #{spatial_transformer_forward.19} parent=1 // pred_check_branch
      %13 = sbr.rel (0) target = $region5
    $region4: #{spatial_transformer_forward.19} parent=1 // pred_region
      _
    $region5: #{spatial_transformer_forward.19} parent=1 // pred_fallthru
      _
    // Predicated region
    $region6: #{spatial_transformer_forward.19} parent=1 // pred_check
      _
    $region7: #{spatial_transformer_forward.19} parent=1 // pred_check_branch
      %15 = sbr.rel (0) target = $region9
    $region8: #{spatial_transformer_forward.19} parent=1 // pred_region
      // Predicated region
      $region10: #{spatial_transformer_forward.19} parent=8 // pred_check
        _
      $region11: #{spatial_transformer_forward.19} parent=8 // pred_check_branch
        %17 = sbr.rel (0) target = $region13
      $region12: #{spatial_transformer_forward.19} parent=8 // pred_region
        // Predicated region
        $region14: #{spatial_transformer_forward.19} parent=12 // pred_check
          _
        $region15: #{spatial_transformer_forward.19} parent=12 // pred_check_branch
          %19 = sbr.rel (0) target = $region17
        $region16: #{spatial_transformer_forward.19} parent=12 // pred_region
          loop: start=0, step=1, limit=1
          $region18: #{spatial_transformer_forward.19} parent=16 // loop_pre_header
            _
          $region19: #{spatial_transformer_forward.19} parent=16 // loop_header
            %s21 = sphi 0, %s25
            %p22 = scmp.ge.s32.totalorder %s21, 1
            %s26 = sphi %s1, %s1
            %s27 = sphi [#allocation4], [#allocation4]
          $region20: #{spatial_transformer_forward.19} parent=16 // loop_header_branch
            %24 = sbr.rel (%p22) target = $region24
          $region21: #{spatial_transformer_forward.19} parent=16 // loop_body
            %v28 = vld [vmem:[%s26] sm:$0xff]
            %29 = vst [vmem:[%s27] sm:$0xff] %v28
            %v30 = vld [vmem:[%s26 + $0x8] sm:$0xff]
            %31 = vst [vmem:[%s27 + $0x8] sm:$0xff] %v30
            %v32 = vld [vmem:[%s26 + $0x20] sm:$0xff]
            %33 = vst [vmem:[%s27 + $0x10] sm:$0xff] %v32
            %v34 = vld [vmem:[%s26 + $0x28] sm:$0xff]
            %35 = vst [vmem:[%s27 + $0x18] sm:$0xff] %v34
            %v36 = vld [vmem:[%s26 + $0x40] sm:$0xff]
            %37 = vst [vmem:[%s27 + $0x20] sm:$0xff] %v36
            %v38 = vld [vmem:[%s26 + $0x48] sm:$0xff]
            %39 = vst [vmem:[%s27 + $0x28] sm:$0xff] %v38
            %v40 = vld [vmem:[%s26 + $0x60] sm:$0xff]
            %41 = vst [vmem:[%s27 + $0x30] sm:$0xff] %v40
            %v42 = vld [vmem:[%s26 + $0x68] sm:$0xff]
            %43 = vst [vmem:[%s27 + $0x38] sm:$0xff] %v42
            %v44 = vld [vmem:[%s26 + $0x80] sm:$0xff]
            %45 = vst [vmem:[%s27 + $0x40] sm:$0xff] %v44
            %v46 = vld [vmem:[%s26 + $0x88] sm:$0xff]
            %47 = vst [vmem:[%s27 + $0x48] sm:$0xff] %v46
            %v48 = vld [vmem:[%s26 + $0xa0] sm:$0xff]
            %49 = vst [vmem:[%s27 + $0x50] sm:$0xff] %v48
            %v50 = vld [vmem:[%s26 + $0xa8] sm:$0xff]
            %51 = vst [vmem:[%s27 + $0x58] sm:$0xff] %v50
            %v52 = vld [vmem:[%s26 + $0xc0] sm:$0xff]
            %53 = vst [vmem:[%s27 + $0x60] sm:$0xff] %v52
            %v54 = vld [vmem:[%s26 + $0xc8] sm:$0xff]
            %55 = vst [vmem:[%s27 + $0x68] sm:$0xff] %v54
            %v56 = vld [vmem:[%s26 + $0xe0] sm:$0xff]
            %57 = vst [vmem:[%s27 + $0x70] sm:$0xff] %v56
            %v58 = vld [vmem:[%s26 + $0xe8] sm:$0xff]
            %59 = vst [vmem:[%s27 + $0x78] sm:$0xff] %v58
            %v60 = vld [vmem:[%s26 + $0x100] sm:$0xff]
            %61 = vst [vmem:[%s27 + $0x80] sm:$0xff] %v60
            %v62 = vld [vmem:[%s26 + $0x108] sm:$0xff]
            %63 = vst [vmem:[%s27 + $0x88] sm:$0xff] %v62
            %v64 = vld [vmem:[%s26 + $0x120] sm:$0xff]
            %65 = vst [vmem:[%s27 + $0x90] sm:$0xff] %v64
            %v66 = vld [vmem:[%s26 + $0x128] sm:$0xff]
            %67 = vst [vmem:[%s27 + $0x98] sm:$0xff] %v66
            %v68 = vld [vmem:[%s26 + $0x140] sm:$0xff]
            %69 = vst [vmem:[%s27 + $0xa0] sm:$0xff] %v68
            %v70 = vld [vmem:[%s26 + $0x148] sm:$0xff]
            %71 = vst [vmem:[%s27 + $0xa8] sm:$0xff] %v70
            %v72 = vld [vmem:[%s26 + $0x160] sm:$0xff]
            %73 = vst [vmem:[%s27 + $0xb0] sm:$0xff] %v72
            %v74 = vld [vmem:[%s26 + $0x168] sm:$0xff]
            %75 = vst [vmem:[%s27 + $0xb8] sm:$0xff] %v74
            %v76 = vld [vmem:[%s26 + $0x180] sm:$0xff]
            %77 = vst [vmem:[%s27 + $0xc0] sm:$0xff] %v76
            %v78 = vld [vmem:[%s26 + $0x188] sm:$0xff]
            %79 = vst [vmem:[%s27 + $0xc8] sm:$0xff] %v78
            %v80 = vld [vmem:[%s26 + $0x1a0] sm:$0xff]
            %81 = vst [vmem:[%s27 + $0xd0] sm:$0xff] %v80
            %v82 = vld [vmem:[%s26 + $0x1a8] sm:$0xff]
            %83 = vst [vmem:[%s27 + $0xd8] sm:$0xff] %v82
            %v84 = vld [vmem:[%s26 + $0x1c0] sm:$0xff]
            %85 = vst [vmem:[%s27 + $0xe0] sm:$0xff] %v84
            %v86 = vld [vmem:[%s26 + $0x1c8] sm:$0xff]
            %87 = vst [vmem:[%s27 + $0xe8] sm:$0xff] %v86
            %v88 = vld [vmem:[%s26 + $0x1e0] sm:$0xff]
            %89 = vst [vmem:[%s27 + $0xf0] sm:$0xff] %v88
            %v90 = vld [vmem:[%s26 + $0x1e8] sm:$0xff]
            %91 = vst [vmem:[%s27 + $0xf8] sm:$0xff] %v90
          $region22: #{spatial_transformer_forward.19} parent=16 // loop_footer
            %s25 = sadd.s32 1, %s21
          $region23: #{spatial_transformer_forward.19} parent=16 // loop_footer_branch
            %20 = sbr.rel target = $region19
          $region24: #{spatial_transformer_forward.19} parent=16 // loop_exit
            _
        $region17: #{spatial_transformer_forward.19} parent=12 // pred_fallthru
          _
        // Predicated region
        $region25: #{spatial_transformer_forward.19} parent=12 // pred_check
          _
        $region26: #{spatial_transformer_forward.19} parent=12 // pred_check_branch
          %93 = sbr.rel target = $region28
        $region27: #{spatial_transformer_forward.19} parent=12 // pred_region
          _
        $region28: #{spatial_transformer_forward.19} parent=12 // pred_fallthru
          _
      $region13: #{spatial_transformer_forward.19} parent=8 // pred_fallthru
        _
      %94 = vnop
    $region9: #{spatial_transformer_forward.19} parent=1 // pred_fallthru
      _
    // Predicated region
    $region29: #{spatial_transformer_forward.19} parent=1 // pred_check
      _
    $region30: #{spatial_transformer_forward.19} parent=1 // pred_check_branch
      %96 = sbr.rel (0) target = $region32
    $region31: #{spatial_transformer_forward.19} parent=1 // pred_region
      %s97 = sadd.s32 0, 1
      %s98 = smul.u32 4, %s97
      %s99 = smul.addr %s98, 4
      %s100 = scalar_lea.vmem %s2, %s99
      // Predicated region
      $region33: #{spatial_transformer_forward.19} parent=31 // pred_check
        _
      $region34: #{spatial_transformer_forward.19} parent=31 // pred_check_branch
        %102 = sbr.rel (0) target = $region36
      $region35: #{spatial_transformer_forward.19} parent=31 // pred_region
        // Predicated region
        $region37: #{spatial_transformer_forward.19} parent=35 // pred_check
          _
        $region38: #{spatial_transformer_forward.19} parent=35 // pred_check_branch
          %104 = sbr.rel (0) target = $region40
        $region39: #{spatial_transformer_forward.19} parent=35 // pred_region
          loop: start=0, step=1, limit=1
          $region41: #{spatial_transformer_forward.19} parent=39 // loop_pre_header
            _
          $region42: #{spatial_transformer_forward.19} parent=39 // loop_header
            %s106 = sphi 0, %s110
            %p107 = scmp.ge.s32.totalorder %s106, 1
            %s111 = sphi %s100, %s100
            %s112 = sphi [#allocation5], [#allocation5]
          $region43: #{spatial_transformer_forward.19} parent=39 // loop_header_branch
            %109 = sbr.rel (%p107) target = $region47
          $region44: #{spatial_transformer_forward.19} parent=39 // loop_body
            %v113 = vld [vmem:[%s111] sm:$0xff]
            %114 = vst [vmem:[%s112] sm:$0xff] %v113
            %v115 = vld [vmem:[%s111 + $0x8] sm:$0xff]
            %116 = vst [vmem:[%s112 + $0x8] sm:$0xff] %v115
            %v117 = vld [vmem:[%s111 + $0x20] sm:$0xff]
            %118 = vst [vmem:[%s112 + $0x10] sm:$0xff] %v117
            %v119 = vld [vmem:[%s111 + $0x28] sm:$0xff]
            %120 = vst [vmem:[%s112 + $0x18] sm:$0xff] %v119
            %v121 = vld [vmem:[%s111 + $0x40] sm:$0xff]
            %122 = vst [vmem:[%s112 + $0x20] sm:$0xff] %v121
            %v123 = vld [vmem:[%s111 + $0x48] sm:$0xff]
            %124 = vst [vmem:[%s112 + $0x28] sm:$0xff] %v123
            %v125 = vld [vmem:[%s111 + $0x60] sm:$0xff]
            %126 = vst [vmem:[%s112 + $0x30] sm:$0xff] %v125
            %v127 = vld [vmem:[%s111 + $0x68] sm:$0xff]
            %128 = vst [vmem:[%s112 + $0x38] sm:$0xff] %v127
            %v129 = vld [vmem:[%s111 + $0x80] sm:$0xff]
            %130 = vst [vmem:[%s112 + $0x40] sm:$0xff] %v129
            %v131 = vld [vmem:[%s111 + $0x88] sm:$0xff]
            %132 = vst [vmem:[%s112 + $0x48] sm:$0xff] %v131
            %v133 = vld [vmem:[%s111 + $0xa0] sm:$0xff]
            %134 = vst [vmem:[%s112 + $0x50] sm:$0xff] %v133
            %v135 = vld [vmem:[%s111 + $0xa8] sm:$0xff]
            %136 = vst [vmem:[%s112 + $0x58] sm:$0xff] %v135
            %v137 = vld [vmem:[%s111 + $0xc0] sm:$0xff]
            %138 = vst [vmem:[%s112 + $0x60] sm:$0xff] %v137
            %v139 = vld [vmem:[%s111 + $0xc8] sm:$0xff]
            %140 = vst [vmem:[%s112 + $0x68] sm:$0xff] %v139
            %v141 = vld [vmem:[%s111 + $0xe0] sm:$0xff]
            %142 = vst [vmem:[%s112 + $0x70] sm:$0xff] %v141
            %v143 = vld [vmem:[%s111 + $0xe8] sm:$0xff]
            %144 = vst [vmem:[%s112 + $0x78] sm:$0xff] %v143
            %v145 = vld [vmem:[%s111 + $0x100] sm:$0xff]
            %146 = vst [vmem:[%s112 + $0x80] sm:$0xff] %v145
            %v147 = vld [vmem:[%s111 + $0x108] sm:$0xff]
            %148 = vst [vmem:[%s112 + $0x88] sm:$0xff] %v147
            %v149 = vld [vmem:[%s111 + $0x120] sm:$0xff]
            %150 = vst [vmem:[%s112 + $0x90] sm:$0xff] %v149
            %v151 = vld [vmem:[%s111 + $0x128] sm:$0xff]
            %152 = vst [vmem:[%s112 + $0x98] sm:$0xff] %v151
            %v153 = vld [vmem:[%s111 + $0x140] sm:$0xff]
            %154 = vst [vmem:[%s112 + $0xa0] sm:$0xff] %v153
            %v155 = vld [vmem:[%s111 + $0x148] sm:$0xff]
            %156 = vst [vmem:[%s112 + $0xa8] sm:$0xff] %v155
            %v157 = vld [vmem:[%s111 + $0x160] sm:$0xff]
            %158 = vst [vmem:[%s112 + $0xb0] sm:$0xff] %v157
            %v159 = vld [vmem:[%s111 + $0x168] sm:$0xff]
            %160 = vst [vmem:[%s112 + $0xb8] sm:$0xff] %v159
            %v161 = vld [vmem:[%s111 + $0x180] sm:$0xff]
            %162 = vst [vmem:[%s112 + $0xc0] sm:$0xff] %v161
            %v163 = vld [vmem:[%s111 + $0x188] sm:$0xff]
            %164 = vst [vmem:[%s112 + $0xc8] sm:$0xff] %v163
            %v165 = vld [vmem:[%s111 + $0x1a0] sm:$0xff]
            %166 = vst [vmem:[%s112 + $0xd0] sm:$0xff] %v165
            %v167 = vld [vmem:[%s111 + $0x1a8] sm:$0xff]
            %168 = vst [vmem:[%s112 + $0xd8] sm:$0xff] %v167
            %v169 = vld [vmem:[%s111 + $0x1c0] sm:$0xff]
            %170 = vst [vmem:[%s112 + $0xe0] sm:$0xff] %v169
            %v171 = vld [vmem:[%s111 + $0x1c8] sm:$0xff]
            %172 = vst [vmem:[%s112 + $0xe8] sm:$0xff] %v171
            %v173 = vld [vmem:[%s111 + $0x1e0] sm:$0xff]
            %174 = vst [vmem:[%s112 + $0xf0] sm:$0xff] %v173
            %v175 = vld [vmem:[%s111 + $0x1e8] sm:$0xff]
            %176 = vst [vmem:[%s112 + $0xf8] sm:$0xff] %v175
          $region45: #{spatial_transformer_forward.19} parent=39 // loop_footer
            %s110 = sadd.s32 1, %s106
          $region46: #{spatial_transformer_forward.19} parent=39 // loop_footer_branch
            %105 = sbr.rel target = $region42
          $region47: #{spatial_transformer_forward.19} parent=39 // loop_exit
            _
        $region40: #{spatial_transformer_forward.19} parent=35 // pred_fallthru
          _
        // Predicated region
        $region48: #{spatial_transformer_forward.19} parent=35 // pred_check
          _
        $region49: #{spatial_transformer_forward.19} parent=35 // pred_check_branch
          %178 = sbr.rel target = $region51
        $region50: #{spatial_transformer_forward.19} parent=35 // pred_region
          _
        $region51: #{spatial_transformer_forward.19} parent=35 // pred_fallthru
          _
      $region36: #{spatial_transformer_forward.19} parent=31 // pred_fallthru
        _
      %179 = vnop
    $region32: #{spatial_transformer_forward.19} parent=1 // pred_fallthru
      _
    // Predicated region
    $region52: #{spatial_transformer_forward.19} parent=1 // pred_check
      _
    $region53: #{spatial_transformer_forward.19} parent=1 // pred_check_branch
      %181 = sbr.rel (0) target = $region55
    $region54: #{spatial_transformer_forward.19} parent=1 // pred_region
      _
    $region55: #{spatial_transformer_forward.19} parent=1 // pred_fallthru
      _
    // Predicated region
    $region56: #{spatial_transformer_forward.19} parent=1 // pred_check
      _
    $region57: #{spatial_transformer_forward.19} parent=1 // pred_check_branch
      %183 = sbr.rel (0) target = $region59
    $region58: #{spatial_transformer_forward.19} parent=1 // pred_region
      %s184 = sadd.s32 0, 1
      %s185 = smul.u32 4, %s184
      %p186 = scmp.lt.s32.totalorder %s185, 7
      %s187 = scalar_select %p186, %s185, 7
      %s188 = scalar_lea.vmem %s4, %s187
      %s189 = sadd.s32 0, 1
      %s190 = smul.u32 4, %s189
    $region59: #{spatial_transformer_forward.19} parent=1 // pred_fallthru
      _
    // Predicated region
    $region60: #{spatial_transformer_forward.19} parent=1 // pred_check
      _
    $region61: #{spatial_transformer_forward.19} parent=1 // pred_check_branch
      %192 = sbr.rel (0) target = $region63
    $region62: #{spatial_transformer_forward.19} parent=1 // pred_region
      _
    $region63: #{spatial_transformer_forward.19} parent=1 // pred_fallthru
      _
    // Predicated region
    $region64: #{spatial_transformer_forward.19} parent=1 // pred_check
      _
    $region65: #{spatial_transformer_forward.19} parent=1 // pred_check_branch
      %194 = sbr.rel (0) target = $region67
    $region66: #{spatial_transformer_forward.19} parent=1 // pred_region
      _
    $region67: #{spatial_transformer_forward.19} parent=1 // pred_fallthru
      _
    // Predicated region
    $region68: #{spatial_transformer_forward.19} parent=1 // pred_check
      _
    $region69: #{spatial_transformer_forward.19} parent=1 // pred_check_branch
      %196 = sbr.rel (0) target = $region71
    $region70: #{spatial_transformer_forward.19} parent=1 // pred_region
      _
    $region71: #{spatial_transformer_forward.19} parent=1 // pred_fallthru
      _
    // Predicated region
    $region72: #{spatial_transformer_forward.19} parent=1 // pred_check
      _
    $region73: #{spatial_transformer_forward.19} parent=1 // pred_check_branch
      %198 = sbr.rel (0) target = $region75
    $region74: #{spatial_transformer_forward.19} parent=1 // pred_region
      _
    $region75: #{spatial_transformer_forward.19} parent=1 // pred_fallthru
      _
    %s199 = sadd.s32 0, 1
    %s200 = smul.u32 4, %s199
    %p201 = scmp.lt.s32.totalorder %s200, 7
    %s202 = scalar_select %p201, %s200, 7
    %s203 = scalar_lea.vmem %s4, %s202
    %s204 = sadd.s32 0, 1
    %s205 = smul.u32 4, %s204
    %s206 = sadd.s32 0, 1
    %s207 = smul.u32 4, %s206
    %p208 = scmp.lt.s32.totalorder %s207, 7
    %s209 = scalar_select %p208, %s207, 7
    %s210 = scalar_lea.vmem %s4, %s209
    %s211 = sadd.s32 0, 1
    %s212 = smul.u32 4, %s211
    %p214 = scmp.eq.s32.totalorder 0, 0
    // Predicated region
    $region76: #{spatial_transformer_forward.19} parent=1 // pred_check
      %p215 = pneg %p214
    $region77: #{spatial_transformer_forward.19} parent=1 // pred_check_branch
      %217 = sbr.rel (%p215) target = $region79
    $region78: #{spatial_transformer_forward.19} parent=1 // pred_region
      %218 = vst [vmem:[#allocation2] sm:$0xff] 0.0
      %219 = vst [vmem:[#allocation2 + $0x8] sm:$0xff] 0.0
      %220 = vst [vmem:[#allocation2 + $0x10] sm:$0xff] 0.0
      %221 = vst [vmem:[#allocation2 + $0x18] sm:$0xff] 0.0
      %222 = vst [vmem:[#allocation2 + $0x20] sm:$0xff] 0.0
      %223 = vst [vmem:[#allocation2 + $0x28] sm:$0xff] 0.0
      %224 = vst [vmem:[#allocation2 + $0x30] sm:$0xff] 0.0
      %225 = vst [vmem:[#allocation2 + $0x38] sm:$0xff] 0.0
      %226 = vst [vmem:[#allocation2 + $0x40] sm:$0xff] 0.0
      %227 = vst [vmem:[#allocation2 + $0x48] sm:$0xff] 0.0
      %228 = vst [vmem:[#allocation2 + $0x50] sm:$0xff] 0.0
      %229 = vst [vmem:[#allocation2 + $0x58] sm:$0xff] 0.0
      %230 = vst [vmem:[#allocation2 + $0x60] sm:$0xff] 0.0
      %231 = vst [vmem:[#allocation2 + $0x68] sm:$0xff] 0.0
      %232 = vst [vmem:[#allocation2 + $0x70] sm:$0xff] 0.0
      %233 = vst [vmem:[#allocation2 + $0x78] sm:$0xff] 0.0
      %234 = vst [vmem:[#allocation2 + $0x80] sm:$0xff] 0.0
      %235 = vst [vmem:[#allocation2 + $0x88] sm:$0xff] 0.0
      %236 = vst [vmem:[#allocation2 + $0x90] sm:$0xff] 0.0
      %237 = vst [vmem:[#allocation2 + $0x98] sm:$0xff] 0.0
      %238 = vst [vmem:[#allocation2 + $0xa0] sm:$0xff] 0.0
      %239 = vst [vmem:[#allocation2 + $0xa8] sm:$0xff] 0.0
      %240 = vst [vmem:[#allocation2 + $0xb0] sm:$0xff] 0.0
      %241 = vst [vmem:[#allocation2 + $0xb8] sm:$0xff] 0.0
      %242 = vst [vmem:[#allocation2 + $0xc0] sm:$0xff] 0.0
      %243 = vst [vmem:[#allocation2 + $0xc8] sm:$0xff] 0.0
      %244 = vst [vmem:[#allocation2 + $0xd0] sm:$0xff] 0.0
      %245 = vst [vmem:[#allocation2 + $0xd8] sm:$0xff] 0.0
      %246 = vst [vmem:[#allocation2 + $0xe0] sm:$0xff] 0.0
      %247 = vst [vmem:[#allocation2 + $0xe8] sm:$0xff] 0.0
      %248 = vst [vmem:[#allocation2 + $0xf0] sm:$0xff] 0.0
      %249 = vst [vmem:[#allocation2 + $0xf8] sm:$0xff] 0.0
      %250 = vst [vmem:[#allocation2 + $0x100] sm:$0xff] 0.0
      %251 = vst [vmem:[#allocation2 + $0x108] sm:$0xff] 0.0
      %252 = vst [vmem:[#allocation2 + $0x110] sm:$0xff] 0.0
      %253 = vst [vmem:[#allocation2 + $0x118] sm:$0xff] 0.0
      %254 = vst [vmem:[#allocation2 + $0x120] sm:$0xff] 0.0
      %255 = vst [vmem:[#allocation2 + $0x128] sm:$0xff] 0.0
      %256 = vst [vmem:[#allocation2 + $0x130] sm:$0xff] 0.0
      %257 = vst [vmem:[#allocation2 + $0x138] sm:$0xff] 0.0
      %258 = vst [vmem:[#allocation2 + $0x140] sm:$0xff] 0.0
      %259 = vst [vmem:[#allocation2 + $0x148] sm:$0xff] 0.0
      %260 = vst [vmem:[#allocation2 + $0x150] sm:$0xff] 0.0
      %261 = vst [vmem:[#allocation2 + $0x158] sm:$0xff] 0.0
      %262 = vst [vmem:[#allocation2 + $0x160] sm:$0xff] 0.0
      %263 = vst [vmem:[#allocation2 + $0x168] sm:$0xff] 0.0
      %264 = vst [vmem:[#allocation2 + $0x170] sm:$0xff] 0.0
      %265 = vst [vmem:[#allocation2 + $0x178] sm:$0xff] 0.0
      %266 = vst [vmem:[#allocation2 + $0x180] sm:$0xff] 0.0
      %267 = vst [vmem:[#allocation2 + $0x188] sm:$0xff] 0.0
      %268 = vst [vmem:[#allocation2 + $0x190] sm:$0xff] 0.0
      %269 = vst [vmem:[#allocation2 + $0x198] sm:$0xff] 0.0
      %270 = vst [vmem:[#allocation2 + $0x1a0] sm:$0xff] 0.0
      %271 = vst [vmem:[#allocation2 + $0x1a8] sm:$0xff] 0.0
      %272 = vst [vmem:[#allocation2 + $0x1b0] sm:$0xff] 0.0
      %273 = vst [vmem:[#allocation2 + $0x1b8] sm:$0xff] 0.0
      %274 = vst [vmem:[#allocation2 + $0x1c0] sm:$0xff] 0.0
      %275 = vst [vmem:[#allocation2 + $0x1c8] sm:$0xff] 0.0
      %276 = vst [vmem:[#allocation2 + $0x1d0] sm:$0xff] 0.0
      %277 = vst [vmem:[#allocation2 + $0x1d8] sm:$0xff] 0.0
      %278 = vst [vmem:[#allocation2 + $0x1e0] sm:$0xff] 0.0
      %279 = vst [vmem:[#allocation2 + $0x1e8] sm:$0xff] 0.0
      %280 = vst [vmem:[#allocation2 + $0x1f0] sm:$0xff] 0.0
      %281 = vst [vmem:[#allocation2 + $0x1f8] sm:$0xff] 0.0
      %282 = vst [vmem:[#allocation3] sm:$0xff] 0.0
      %283 = vst [vmem:[#allocation3 + $0x8] sm:$0xff] 0.0
      %284 = vst [vmem:[#allocation3 + $0x10] sm:$0xff] 0.0
      %285 = vst [vmem:[#allocation3 + $0x18] sm:$0xff] 0.0
      %286 = vst [vmem:[#allocation3 + $0x20] sm:$0xff] 0.0
      %287 = vst [vmem:[#allocation3 + $0x28] sm:$0xff] 0.0
      %288 = vst [vmem:[#allocation3 + $0x30] sm:$0xff] 0.0
      %289 = vst [vmem:[#allocation3 + $0x38] sm:$0xff] 0.0
      %290 = vst [vmem:[#allocation3 + $0x40] sm:$0xff] 0.0
      %291 = vst [vmem:[#allocation3 + $0x48] sm:$0xff] 0.0
      %292 = vst [vmem:[#allocation3 + $0x50] sm:$0xff] 0.0
      %293 = vst [vmem:[#allocation3 + $0x58] sm:$0xff] 0.0
      %294 = vst [vmem:[#allocation3 + $0x60] sm:$0xff] 0.0
      %295 = vst [vmem:[#allocation3 + $0x68] sm:$0xff] 0.0
      %296 = vst [vmem:[#allocation3 + $0x70] sm:$0xff] 0.0
      %297 = vst [vmem:[#allocation3 + $0x78] sm:$0xff] 0.0
      %298 = vst [vmem:[#allocation3 + $0x80] sm:$0xff] 0.0
      %299 = vst [vmem:[#allocation3 + $0x88] sm:$0xff] 0.0
      %300 = vst [vmem:[#allocation3 + $0x90] sm:$0xff] 0.0
      %301 = vst [vmem:[#allocation3 + $0x98] sm:$0xff] 0.0
      %302 = vst [vmem:[#allocation3 + $0xa0] sm:$0xff] 0.0
      %303 = vst [vmem:[#allocation3 + $0xa8] sm:$0xff] 0.0
      %304 = vst [vmem:[#allocation3 + $0xb0] sm:$0xff] 0.0
      %305 = vst [vmem:[#allocation3 + $0xb8] sm:$0xff] 0.0
      %306 = vst [vmem:[#allocation3 + $0xc0] sm:$0xff] 0.0
      %307 = vst [vmem:[#allocation3 + $0xc8] sm:$0xff] 0.0
      %308 = vst [vmem:[#allocation3 + $0xd0] sm:$0xff] 0.0
      %309 = vst [vmem:[#allocation3 + $0xd8] sm:$0xff] 0.0
      %310 = vst [vmem:[#allocation3 + $0xe0] sm:$0xff] 0.0
      %311 = vst [vmem:[#allocation3 + $0xe8] sm:$0xff] 0.0
      %312 = vst [vmem:[#allocation3 + $0xf0] sm:$0xff] 0.0
      %313 = vst [vmem:[#allocation3 + $0xf8] sm:$0xff] 0.0
      %314 = vst [vmem:[#allocation3 + $0x100] sm:$0xff] 0.0
      %315 = vst [vmem:[#allocation3 + $0x108] sm:$0xff] 0.0
      %316 = vst [vmem:[#allocation3 + $0x110] sm:$0xff] 0.0
      %317 = vst [vmem:[#allocation3 + $0x118] sm:$0xff] 0.0
      %318 = vst [vmem:[#allocation3 + $0x120] sm:$0xff] 0.0
      %319 = vst [vmem:[#allocation3 + $0x128] sm:$0xff] 0.0
      %320 = vst [vmem:[#allocation3 + $0x130] sm:$0xff] 0.0
      %321 = vst [vmem:[#allocation3 + $0x138] sm:$0xff] 0.0
      %322 = vst [vmem:[#allocation3 + $0x140] sm:$0xff] 0.0
      %323 = vst [vmem:[#allocation3 + $0x148] sm:$0xff] 0.0
      %324 = vst [vmem:[#allocation3 + $0x150] sm:$0xff] 0.0
      %325 = vst [vmem:[#allocation3 + $0x158] sm:$0xff] 0.0
      %326 = vst [vmem:[#allocation3 + $0x160] sm:$0xff] 0.0
      %327 = vst [vmem:[#allocation3 + $0x168] sm:$0xff] 0.0
      %328 = vst [vmem:[#allocation3 + $0x170] sm:$0xff] 0.0
      %329 = vst [vmem:[#allocation3 + $0x178] sm:$0xff] 0.0
      %330 = vst [vmem:[#allocation3 + $0x180] sm:$0xff] 0.0
      %331 = vst [vmem:[#allocation3 + $0x188] sm:$0xff] 0.0
      %332 = vst [vmem:[#allocation3 + $0x190] sm:$0xff] 0.0
      %333 = vst [vmem:[#allocation3 + $0x198] sm:$0xff] 0.0
      %334 = vst [vmem:[#allocation3 + $0x1a0] sm:$0xff] 0.0
      %335 = vst [vmem:[#allocation3 + $0x1a8] sm:$0xff] 0.0
      %336 = vst [vmem:[#allocation3 + $0x1b0] sm:$0xff] 0.0
      %337 = vst [vmem:[#allocation3 + $0x1b8] sm:$0xff] 0.0
      %338 = vst [vmem:[#allocation3 + $0x1c0] sm:$0xff] 0.0
      %339 = vst [vmem:[#allocation3 + $0x1c8] sm:$0xff] 0.0
      %340 = vst [vmem:[#allocation3 + $0x1d0] sm:$0xff] 0.0
      %341 = vst [vmem:[#allocation3 + $0x1d8] sm:$0xff] 0.0
      %342 = vst [vmem:[#allocation3 + $0x1e0] sm:$0xff] 0.0
      %343 = vst [vmem:[#allocation3 + $0x1e8] sm:$0xff] 0.0
      %344 = vst [vmem:[#allocation3 + $0x1f0] sm:$0xff] 0.0
      %345 = vst [vmem:[#allocation3 + $0x1f8] sm:$0xff] 0.0
    $region79: #{spatial_transformer_forward.19} parent=1 // pred_fallthru
      _
    %v346 = vld [vmem:[%s0] sm:$0xff]
    %v347 = vld [vmem:[%s0 + $0x8] sm:$0xff]
    %v348 = vld [vmem:[%s0 + $0x10] sm:$0xff]
    %v349 = vld [vmem:[%s0 + $0x18] sm:$0xff]
    %v350 = vld [vmem:[%s0 + $0x20] sm:$0xff]
    %v351 = vld [vmem:[%s0 + $0x28] sm:$0xff]
    %v352 = vld [vmem:[%s0 + $0x30] sm:$0xff]
    %v353 = vld [vmem:[%s0 + $0x38] sm:$0xff]
    %v354 = vld [vmem:[%s0 + $0x40] sm:$0xff]
    %v355 = vld [vmem:[%s0 + $0x48] sm:$0xff]
    %v356 = vld [vmem:[%s0 + $0x50] sm:$0xff]
    %v357 = vld [vmem:[%s0 + $0x58] sm:$0xff]
    %v358 = vld [vmem:[%s0 + $0x60] sm:$0xff]
    %v359 = vld [vmem:[%s0 + $0x68] sm:$0xff]
    %v360 = vld [vmem:[%s0 + $0x70] sm:$0xff]
    %v361 = vld [vmem:[%s0 + $0x78] sm:$0xff]
    %362 = vadd.xlane.f32.xlu0 %v346
    %v363 = vpop.xlane.xlu0 %362
    %364 = vadd.xlane.f32.xlu0 %v347
    %v365 = vpop.xlane.xlu0 %364
    %366 = vadd.xlane.f32.xlu0 %v348
    %v367 = vpop.xlane.xlu0 %366
    %368 = vadd.xlane.f32.xlu0 %v349
    %v369 = vpop.xlane.xlu0 %368
    %370 = vadd.xlane.f32.xlu0 %v350
    %v371 = vpop.xlane.xlu0 %370
    %372 = vadd.xlane.f32.xlu0 %v351
    %v373 = vpop.xlane.xlu0 %372
    %374 = vadd.xlane.f32.xlu0 %v352
    %v375 = vpop.xlane.xlu0 %374
    %376 = vadd.xlane.f32.xlu0 %v353
    %v377 = vpop.xlane.xlu0 %376
    %378 = vadd.xlane.f32.xlu0 %v354
    %v379 = vpop.xlane.xlu0 %378
    %380 = vadd.xlane.f32.xlu0 %v355
    %v381 = vpop.xlane.xlu0 %380
    %382 = vadd.xlane.f32.xlu0 %v356
    %v383 = vpop.xlane.xlu0 %382
    %384 = vadd.xlane.f32.xlu0 %v357
    %v385 = vpop.xlane.xlu0 %384
    %386 = vadd.xlane.f32.xlu0 %v358
    %v387 = vpop.xlane.xlu0 %386
    %388 = vadd.xlane.f32.xlu0 %v359
    %v389 = vpop.xlane.xlu0 %388
    %390 = vadd.xlane.f32.xlu0 %v360
    %v391 = vpop.xlane.xlu0 %390
    %392 = vadd.xlane.f32.xlu0 %v361
    %v393 = vpop.xlane.xlu0 %392
    %v394 = vrcp.pop 128.0
    %v395 = vmul.f32 %v363, %v394
    %v396 = vmul.f32 %v365, %v394
    %v397 = vmul.f32 %v367, %v394
    %v398 = vmul.f32 %v369, %v394
    %v399 = vmul.f32 %v371, %v394
    %v400 = vmul.f32 %v373, %v394
    %v401 = vmul.f32 %v375, %v394
    %v402 = vmul.f32 %v377, %v394
    %v403 = vmul.f32 %v379, %v394
    %v404 = vmul.f32 %v381, %v394
    %v405 = vmul.f32 %v383, %v394
    %v406 = vmul.f32 %v385, %v394
    %v407 = vmul.f32 %v387, %v394
    %v408 = vmul.f32 %v389, %v394
    %v409 = vmul.f32 %v391, %v394
    %v410 = vmul.f32 %v393, %v394
    %v411 = vsub.f32 %v346, %v395
    %v412 = vsub.f32 %v347, %v396
    %v413 = vsub.f32 %v348, %v397
    %v414 = vsub.f32 %v349, %v398
    %v415 = vsub.f32 %v350, %v399
    %v416 = vsub.f32 %v351, %v400
    %v417 = vsub.f32 %v352, %v401
    %v418 = vsub.f32 %v353, %v402
    %v419 = vsub.f32 %v354, %v403
    %v420 = vsub.f32 %v355, %v404
    %v421 = vsub.f32 %v356, %v405
    %v422 = vsub.f32 %v357, %v406
    %v423 = vsub.f32 %v358, %v407
    %v424 = vsub.f32 %v359, %v408
    %v425 = vsub.f32 %v360, %v409
    %v426 = vsub.f32 %v361, %v410
    %v427 = vmul.f32 %v411, %v411
    %v428 = vmul.f32 %v412, %v412
    %v429 = vmul.f32 %v413, %v413
    %v430 = vmul.f32 %v414, %v414
    %v431 = vmul.f32 %v415, %v415
    %v432 = vmul.f32 %v416, %v416
    %v433 = vmul.f32 %v417, %v417
    %v434 = vmul.f32 %v418, %v418
    %v435 = vmul.f32 %v419, %v419
    %v436 = vmul.f32 %v420, %v420
    %v437 = vmul.f32 %v421, %v421
    %v438 = vmul.f32 %v422, %v422
    %v439 = vmul.f32 %v423, %v423
    %v440 = vmul.f32 %v424, %v424
    %v441 = vmul.f32 %v425, %v425
    %v442 = vmul.f32 %v426, %v426
    %443 = vadd.xlane.f32.xlu0 %v427
    %v444 = vpop.xlane.xlu0 %443
    %445 = vadd.xlane.f32.xlu0 %v428
    %v446 = vpop.xlane.xlu0 %445
    %447 = vadd.xlane.f32.xlu0 %v429
    %v448 = vpop.xlane.xlu0 %447
    %449 = vadd.xlane.f32.xlu0 %v430
    %v450 = vpop.xlane.xlu0 %449
    %451 = vadd.xlane.f32.xlu0 %v431
    %v452 = vpop.xlane.xlu0 %451
    %453 = vadd.xlane.f32.xlu0 %v432
    %v454 = vpop.xlane.xlu0 %453
    %455 = vadd.xlane.f32.xlu0 %v433
    %v456 = vpop.xlane.xlu0 %455
    %457 = vadd.xlane.f32.xlu0 %v434
    %v458 = vpop.xlane.xlu0 %457
    %459 = vadd.xlane.f32.xlu0 %v435
    %v460 = vpop.xlane.xlu0 %459
    %461 = vadd.xlane.f32.xlu0 %v436
    %v462 = vpop.xlane.xlu0 %461
    %463 = vadd.xlane.f32.xlu0 %v437
    %v464 = vpop.xlane.xlu0 %463
    %465 = vadd.xlane.f32.xlu0 %v438
    %v466 = vpop.xlane.xlu0 %465
    %467 = vadd.xlane.f32.xlu0 %v439
    %v468 = vpop.xlane.xlu0 %467
    %469 = vadd.xlane.f32.xlu0 %v440
    %v470 = vpop.xlane.xlu0 %469
    %471 = vadd.xlane.f32.xlu0 %v441
    %v472 = vpop.xlane.xlu0 %471
    %473 = vadd.xlane.f32.xlu0 %v442
    %v474 = vpop.xlane.xlu0 %473
    %v475 = vmul.f32 %v444, %v394
    %v476 = vmul.f32 %v446, %v394
    %v477 = vmul.f32 %v448, %v394
    %v478 = vmul.f32 %v450, %v394
    %v479 = vmul.f32 %v452, %v394
    %v480 = vmul.f32 %v454, %v394
    %v481 = vmul.f32 %v456, %v394
    %v482 = vmul.f32 %v458, %v394
    %v483 = vmul.f32 %v460, %v394
    %v484 = vmul.f32 %v462, %v394
    %v485 = vmul.f32 %v464, %v394
    %v486 = vmul.f32 %v466, %v394
    %v487 = vmul.f32 %v468, %v394
    %v488 = vmul.f32 %v470, %v394
    %v489 = vmul.f32 %v472, %v394
    %v490 = vmul.f32 %v474, %v394
    %v491 = vadd.f32 %v475, 1e-05
    %v492 = vadd.f32 %v476, 1e-05
    %v493 = vadd.f32 %v477, 1e-05
    %v494 = vadd.f32 %v478, 1e-05
    %v495 = vadd.f32 %v479, 1e-05
    %v496 = vadd.f32 %v480, 1e-05
    %v497 = vadd.f32 %v481, 1e-05
    %v498 = vadd.f32 %v482, 1e-05
    %v499 = vadd.f32 %v483, 1e-05
    %v500 = vadd.f32 %v484, 1e-05
    %v501 = vadd.f32 %v485, 1e-05
    %v502 = vadd.f32 %v486, 1e-05
    %v503 = vadd.f32 %v487, 1e-05
    %v504 = vadd.f32 %v488, 1e-05
    %v505 = vadd.f32 %v489, 1e-05
    %v506 = vadd.f32 %v490, 1e-05
    %v507 = vrsqrt.pop %v491
    %v508 = vrsqrt.pop %v492
    %v509 = vrsqrt.pop %v493
    %v510 = vrsqrt.pop %v494
    %v511 = vrsqrt.pop %v495
    %v512 = vrsqrt.pop %v496
    %v513 = vrsqrt.pop %v497
    %v514 = vrsqrt.pop %v498
    %v515 = vrsqrt.pop %v499
    %v516 = vrsqrt.pop %v500
    %v517 = vrsqrt.pop %v501
    %v518 = vrsqrt.pop %v502
    %v519 = vrsqrt.pop %v503
    %v520 = vrsqrt.pop %v504
    %v521 = vrsqrt.pop %v505
    %v522 = vrsqrt.pop %v506
    %v523 = vmul.f32 %v411, %v507
    %v524 = vmul.f32 %v412, %v508
    %v525 = vmul.f32 %v413, %v509
    %v526 = vmul.f32 %v414, %v510
    %v527 = vmul.f32 %v415, %v511
    %v528 = vmul.f32 %v416, %v512
    %v529 = vmul.f32 %v417, %v513
    %v530 = vmul.f32 %v418, %v514
    %v531 = vmul.f32 %v419, %v515
    %v532 = vmul.f32 %v420, %v516
    %v533 = vmul.f32 %v421, %v517
    %v534 = vmul.f32 %v422, %v518
    %v535 = vmul.f32 %v423, %v519
    %v536 = vmul.f32 %v424, %v520
    %v537 = vmul.f32 %v425, %v521
    %v538 = vmul.f32 %v426, %v522
    %v539 = vld [vmem:[%s5] sm:$0x1]
    %v541 = vlaneseq
    %v542 = vshrl.u32 %v541, 7
    %v543 = vsub.s32 0, %v542
    %v544 = vrot.slane %v539, %v543
    %v546 = vmul.f32 %v523, %v544
    %v547 = vmul.f32 %v524, %v544
    %v548 = vmul.f32 %v525, %v544
    %v549 = vmul.f32 %v526, %v544
    %v550 = vmul.f32 %v527, %v544
    %v551 = vmul.f32 %v528, %v544
    %v552 = vmul.f32 %v529, %v544
    %v553 = vmul.f32 %v530, %v544
    %v554 = vmul.f32 %v531, %v544
    %v555 = vmul.f32 %v532, %v544
    %v556 = vmul.f32 %v533, %v544
    %v557 = vmul.f32 %v534, %v544
    %v558 = vmul.f32 %v535, %v544
    %v559 = vmul.f32 %v536, %v544
    %v560 = vmul.f32 %v537, %v544
    %v561 = vmul.f32 %v538, %v544
    %v562 = vld [vmem:[%s6] sm:$0x1]
    %v564 = vlaneseq
    %v565 = vshrl.u32 %v564, 7
    %v566 = vsub.s32 0, %v565
    %v567 = vrot.slane %v562, %v566
    %v569 = vadd.f32 %v546, %v567
    %v570 = vadd.f32 %v547, %v567
    %v571 = vadd.f32 %v548, %v567
    %v572 = vadd.f32 %v549, %v567
    %v573 = vadd.f32 %v550, %v567
    %v574 = vadd.f32 %v551, %v567
    %v575 = vadd.f32 %v552, %v567
    %v576 = vadd.f32 %v553, %v567
    %v577 = vadd.f32 %v554, %v567
    %v578 = vadd.f32 %v555, %v567
    %v579 = vadd.f32 %v556, %v567
    %v580 = vadd.f32 %v557, %v567
    %v581 = vadd.f32 %v558, %v567
    %v582 = vadd.f32 %v559, %v567
    %v583 = vadd.f32 %v560, %v567
    %v584 = vadd.f32 %v561, %v567
    %v585 = vpack.c.bf16 %v570, %v569
    %v586 = vpack.c.bf16 %v572, %v571
    %v587 = vpack.c.bf16 %v574, %v573
    %v588 = vpack.c.bf16 %v576, %v575
    %v589 = vpack.c.bf16 %v578, %v577
    %v590 = vpack.c.bf16 %v580, %v579
    %v591 = vpack.c.bf16 %v582, %v581
    %v592 = vpack.c.bf16 %v584, %v583
    %v593 = vld [vmem:[#allocation2] sm:$0xff]
    %v594 = vld [vmem:[#allocation2 + $0x8] sm:$0xff]
    %v595 = vld [vmem:[#allocation2 + $0x10] sm:$0xff]
    %v596 = vld [vmem:[#allocation2 + $0x18] sm:$0xff]
    %v597 = vld [vmem:[#allocation2 + $0x20] sm:$0xff]
    %v598 = vld [vmem:[#allocation2 + $0x28] sm:$0xff]
    %v599 = vld [vmem:[#allocation2 + $0x30] sm:$0xff]
    %v600 = vld [vmem:[#allocation2 + $0x38] sm:$0xff]
    %v601 = vld [vmem:[#allocation2 + $0x40] sm:$0xff]
    %v602 = vld [vmem:[#allocation2 + $0x48] sm:$0xff]
    %v603 = vld [vmem:[#allocation2 + $0x50] sm:$0xff]
    %v604 = vld [vmem:[#allocation2 + $0x58] sm:$0xff]
    %v605 = vld [vmem:[#allocation2 + $0x60] sm:$0xff]
    %v606 = vld [vmem:[#allocation2 + $0x68] sm:$0xff]
    %v607 = vld [vmem:[#allocation2 + $0x70] sm:$0xff]
    %v608 = vld [vmem:[#allocation2 + $0x78] sm:$0xff]
    %v609 = vld [vmem:[#allocation2 + $0x80] sm:$0xff]
    %v610 = vld [vmem:[#allocation2 + $0x88] sm:$0xff]
    %v611 = vld [vmem:[#allocation2 + $0x90] sm:$0xff]
    %v612 = vld [vmem:[#allocation2 + $0x98] sm:$0xff]
    %v613 = vld [vmem:[#allocation2 + $0xa0] sm:$0xff]
    %v614 = vld [vmem:[#allocation2 + $0xa8] sm:$0xff]
    %v615 = vld [vmem:[#allocation2 + $0xb0] sm:$0xff]
    %v616 = vld [vmem:[#allocation2 + $0xb8] sm:$0xff]
    %v617 = vld [vmem:[#allocation2 + $0xc0] sm:$0xff]
    %v618 = vld [vmem:[#allocation2 + $0xc8] sm:$0xff]
    %v619 = vld [vmem:[#allocation2 + $0xd0] sm:$0xff]
    %v620 = vld [vmem:[#allocation2 + $0xd8] sm:$0xff]
    %v621 = vld [vmem:[#allocation2 + $0xe0] sm:$0xff]
    %v622 = vld [vmem:[#allocation2 + $0xe8] sm:$0xff]
    %v623 = vld [vmem:[#allocation2 + $0xf0] sm:$0xff]
    %v624 = vld [vmem:[#allocation2 + $0xf8] sm:$0xff]
    %v625 = vld [vmem:[#allocation2 + $0x100] sm:$0xff]
    %v626 = vld [vmem:[#allocation2 + $0x108] sm:$0xff]
    %v627 = vld [vmem:[#allocation2 + $0x110] sm:$0xff]
    %v628 = vld [vmem:[#allocation2 + $0x118] sm:$0xff]
    %v629 = vld [vmem:[#allocation2 + $0x120] sm:$0xff]
    %v630 = vld [vmem:[#allocation2 + $0x128] sm:$0xff]
    %v631 = vld [vmem:[#allocation2 + $0x130] sm:$0xff]
    %v632 = vld [vmem:[#allocation2 + $0x138] sm:$0xff]
    %v633 = vld [vmem:[#allocation2 + $0x140] sm:$0xff]
    %v634 = vld [vmem:[#allocation2 + $0x148] sm:$0xff]
    %v635 = vld [vmem:[#allocation2 + $0x150] sm:$0xff]
    %v636 = vld [vmem:[#allocation2 + $0x158] sm:$0xff]
    %v637 = vld [vmem:[#allocation2 + $0x160] sm:$0xff]
    %v638 = vld [vmem:[#allocation2 + $0x168] sm:$0xff]
    %v639 = vld [vmem:[#allocation2 + $0x170] sm:$0xff]
    %v640 = vld [vmem:[#allocation2 + $0x178] sm:$0xff]
    %v641 = vld [vmem:[#allocation2 + $0x180] sm:$0xff]
    %v642 = vld [vmem:[#allocation2 + $0x188] sm:$0xff]
    %v643 = vld [vmem:[#allocation2 + $0x190] sm:$0xff]
    %v644 = vld [vmem:[#allocation2 + $0x198] sm:$0xff]
    %v645 = vld [vmem:[#allocation2 + $0x1a0] sm:$0xff]
    %v646 = vld [vmem:[#allocation2 + $0x1a8] sm:$0xff]
    %v647 = vld [vmem:[#allocation2 + $0x1b0] sm:$0xff]
    %v648 = vld [vmem:[#allocation2 + $0x1b8] sm:$0xff]
    %v649 = vld [vmem:[#allocation2 + $0x1c0] sm:$0xff]
    %v650 = vld [vmem:[#allocation2 + $0x1c8] sm:$0xff]
    %v651 = vld [vmem:[#allocation2 + $0x1d0] sm:$0xff]
    %v652 = vld [vmem:[#allocation2 + $0x1d8] sm:$0xff]
    %v653 = vld [vmem:[#allocation2 + $0x1e0] sm:$0xff]
    %v654 = vld [vmem:[#allocation2 + $0x1e8] sm:$0xff]
    %v655 = vld [vmem:[#allocation2 + $0x1f0] sm:$0xff]
    %v656 = vld [vmem:[#allocation2 + $0x1f8] sm:$0xff]
    %v657 = vld [vmem:[#allocation4] sm:$0xff]
    %v658 = vld [vmem:[#allocation4 + $0x8] sm:$0xff]
    %v659 = vld [vmem:[#allocation4 + $0x10] sm:$0xff]
    %v660 = vld [vmem:[#allocation4 + $0x18] sm:$0xff]
    %v661 = vld [vmem:[#allocation4 + $0x20] sm:$0xff]
    %v662 = vld [vmem:[#allocation4 + $0x28] sm:$0xff]
    %v663 = vld [vmem:[#allocation4 + $0x30] sm:$0xff]
    %v664 = vld [vmem:[#allocation4 + $0x38] sm:$0xff]
    %v665 = vld [vmem:[#allocation4 + $0x40] sm:$0xff]
    %v666 = vld [vmem:[#allocation4 + $0x48] sm:$0xff]
    %v667 = vld [vmem:[#allocation4 + $0x50] sm:$0xff]
    %v668 = vld [vmem:[#allocation4 + $0x58] sm:$0xff]
    %v669 = vld [vmem:[#allocation4 + $0x60] sm:$0xff]
    %v670 = vld [vmem:[#allocation4 + $0x68] sm:$0xff]
    %v671 = vld [vmem:[#allocation4 + $0x70] sm:$0xff]
    %v672 = vld [vmem:[#allocation4 + $0x78] sm:$0xff]
    %v673 = vld [vmem:[#allocation4 + $0x80] sm:$0xff]
    %v674 = vld [vmem:[#allocation4 + $0x88] sm:$0xff]
    %v675 = vld [vmem:[#allocation4 + $0x90] sm:$0xff]
    %v676 = vld [vmem:[#allocation4 + $0x98] sm:$0xff]
    %v677 = vld [vmem:[#allocation4 + $0xa0] sm:$0xff]
    %v678 = vld [vmem:[#allocation4 + $0xa8] sm:$0xff]
    %v679 = vld [vmem:[#allocation4 + $0xb0] sm:$0xff]
    %v680 = vld [vmem:[#allocation4 + $0xb8] sm:$0xff]
    %v681 = vld [vmem:[#allocation4 + $0xc0] sm:$0xff]
    %v682 = vld [vmem:[#allocation4 + $0xc8] sm:$0xff]
    %v683 = vld [vmem:[#allocation4 + $0xd0] sm:$0xff]
    %v684 = vld [vmem:[#allocation4 + $0xd8] sm:$0xff]
    %v685 = vld [vmem:[#allocation4 + $0xe0] sm:$0xff]
    %v686 = vld [vmem:[#allocation4 + $0xe8] sm:$0xff]
    %v687 = vld [vmem:[#allocation4 + $0xf0] sm:$0xff]
    %v688 = vld [vmem:[#allocation4 + $0xf8] sm:$0xff]
    %v721 = vunpack.c.l.b16 %v657
    %v722 = vunpack.c.h.b16 %v657
    %v723 = vunpack.c.l.b16 %v658
    %v724 = vunpack.c.h.b16 %v658
    %v725 = vunpack.c.l.b16 %v659
    %v726 = vunpack.c.h.b16 %v659
    %v727 = vunpack.c.l.b16 %v660
    %v728 = vunpack.c.h.b16 %v660
    %v729 = vunpack.c.l.b16 %v661
    %v730 = vunpack.c.h.b16 %v661
    %v731 = vunpack.c.l.b16 %v662
    %v732 = vunpack.c.h.b16 %v662
    %v733 = vunpack.c.l.b16 %v663
    %v734 = vunpack.c.h.b16 %v663
    %v735 = vunpack.c.l.b16 %v664
    %v736 = vunpack.c.h.b16 %v664
    %v737 = vunpack.c.l.b16 %v665
    %v738 = vunpack.c.h.b16 %v665
    %v739 = vunpack.c.l.b16 %v666
    %v740 = vunpack.c.h.b16 %v666
    %v741 = vunpack.c.l.b16 %v667
    %v742 = vunpack.c.h.b16 %v667
    %v743 = vunpack.c.l.b16 %v668
    %v744 = vunpack.c.h.b16 %v668
    %v745 = vunpack.c.l.b16 %v669
    %v746 = vunpack.c.h.b16 %v669
    %v747 = vunpack.c.l.b16 %v670
    %v748 = vunpack.c.h.b16 %v670
    %v749 = vunpack.c.l.b16 %v671
    %v750 = vunpack.c.h.b16 %v671
    %v751 = vunpack.c.l.b16 %v672
    %v752 = vunpack.c.h.b16 %v672
    %v753 = vunpack.c.l.b16 %v673
    %v754 = vunpack.c.h.b16 %v673
    %v755 = vunpack.c.l.b16 %v674
    %v756 = vunpack.c.h.b16 %v674
    %v757 = vunpack.c.l.b16 %v675
    %v758 = vunpack.c.h.b16 %v675
    %v759 = vunpack.c.l.b16 %v676
    %v760 = vunpack.c.h.b16 %v676
    %v761 = vunpack.c.l.b16 %v677
    %v762 = vunpack.c.h.b16 %v677
    %v763 = vunpack.c.l.b16 %v678
    %v764 = vunpack.c.h.b16 %v678
    %v765 = vunpack.c.l.b16 %v679
    %v766 = vunpack.c.h.b16 %v679
    %v767 = vunpack.c.l.b16 %v680
    %v768 = vunpack.c.h.b16 %v680
    %v769 = vunpack.c.l.b16 %v681
    %v770 = vunpack.c.h.b16 %v681
    %v771 = vunpack.c.l.b16 %v682
    %v772 = vunpack.c.h.b16 %v682
    %v773 = vunpack.c.l.b16 %v683
    %v774 = vunpack.c.h.b16 %v683
    %v775 = vunpack.c.l.b16 %v684
    %v776 = vunpack.c.h.b16 %v684
    %v777 = vunpack.c.l.b16 %v685
    %v778 = vunpack.c.h.b16 %v685
    %v779 = vunpack.c.l.b16 %v686
    %v780 = vunpack.c.h.b16 %v686
    %v781 = vunpack.c.l.b16 %v687
    %v782 = vunpack.c.h.b16 %v687
    %v783 = vunpack.c.l.b16 %v688
    %v784 = vunpack.c.h.b16 %v688
    %v785 = vpack.c.b16 %v725, %v721
    %v786 = vpack.c.b16 %v726, %v722
    %v787 = vpack.c.b16 %v727, %v723
    %v788 = vpack.c.b16 %v728, %v724
    %v789 = vpack.c.b16 %v733, %v729
    %v790 = vpack.c.b16 %v734, %v730
    %v791 = vpack.c.b16 %v735, %v731
    %v792 = vpack.c.b16 %v736, %v732
    %v793 = vpack.c.b16 %v741, %v737
    %v794 = vpack.c.b16 %v742, %v738
    %v795 = vpack.c.b16 %v743, %v739
    %v796 = vpack.c.b16 %v744, %v740
    %v797 = vpack.c.b16 %v749, %v745
    %v798 = vpack.c.b16 %v750, %v746
    %v799 = vpack.c.b16 %v751, %v747
    %v800 = vpack.c.b16 %v752, %v748
    %v801 = vpack.c.b16 %v757, %v753
    %v802 = vpack.c.b16 %v758, %v754
    %v803 = vpack.c.b16 %v759, %v755
    %v804 = vpack.c.b16 %v760, %v756
    %v805 = vpack.c.b16 %v765, %v761
    %v806 = vpack.c.b16 %v766, %v762
    %v807 = vpack.c.b16 %v767, %v763
    %v808 = vpack.c.b16 %v768, %v764
    %v809 = vpack.c.b16 %v773, %v769
    %v810 = vpack.c.b16 %v774, %v770
    %v811 = vpack.c.b16 %v775, %v771
    %v812 = vpack.c.b16 %v776, %v772
    %v813 = vpack.c.b16 %v781, %v777
    %v814 = vpack.c.b16 %v782, %v778
    %v815 = vpack.c.b16 %v783, %v779
    %v816 = vpack.c.b16 %v784, %v780
    %849 = vmatprep.subr.bf16.mxu0 %v786
    %850 = vmatpush1.bf16.msra.mxu0 %v785
    %851 = vmatprep.subr.bf16.mxu0 %v790
    %852 = vmatpush1.bf16.msra.mxu0 %v789
    %853 = vmatprep.subr.bf16.mxu0 %v794
    %854 = vmatpush1.bf16.msra.mxu0 %v793
    %855 = vmatprep.subr.bf16.mxu0 %v798
    %856 = vmatpush1.bf16.msra.mxu0 %v797
    %857 = vmatprep.subr.bf16.mxu0 %v802
    %858 = vmatpush1.bf16.msra.mxu0 %v801
    %859 = vmatprep.subr.bf16.mxu0 %v806
    %860 = vmatpush1.bf16.msra.mxu0 %v805
    %861 = vmatprep.subr.bf16.mxu0 %v810
    %862 = vmatpush1.bf16.msra.mxu0 %v809
    %863 = vmatprep.subr.bf16.mxu0 %v814
    %864 = vmatpush1.bf16.msra.mxu0 %v813
    %865 = vmatprep.subr.bf16.mxu0 0
    %866 = vmatpush1.bf16.msra.mxu0 0
    %867 = vmatprep.subr.bf16.mxu0 0
    %868 = vmatpush1.bf16.msra.mxu0 0
    %869 = vmatprep.subr.bf16.mxu0 0
    %870 = vmatpush1.bf16.msra.mxu0 0
    %871 = vmatprep.subr.bf16.mxu0 0
    %872 = vmatpush1.bf16.msra.mxu0 0
    %873 = vmatprep.subr.bf16.mxu0 0
    %874 = vmatpush1.bf16.msra.mxu0 0
    %875 = vmatprep.subr.bf16.mxu0 0
    %876 = vmatpush1.bf16.msra.mxu0 0
    %877 = vmatprep.subr.bf16.mxu0 0
    %878 = vmatpush1.bf16.msra.mxu0 0
    %879 = vmatprep.subr.bf16.mxu0 0
    %880 = vmatpush1.bf16.msra.mxu0 0
    %881 = vmatprep.mubr.bf16.mxu0 0
    %882 = vmatmul.mubr.bf16.gmra.mrb[0].mxu0 %v585
    %v883 = vpop.f32.mrb[0].mxu0
    %v884 = vadd.f32 0.0, %v883
    %v885 = vpop.f32.mrb[0].mxu0
    %v886 = vadd.f32 0.0, %v885
    %v887 = vpop.f32.mrb[0].mxu0
    %v888 = vadd.f32 0.0, %v887
    %v889 = vpop.f32.mrb[0].mxu0
    %v890 = vadd.f32 0.0, %v889
    %891 = vmatprep.mubr.bf16.mxu0 0
    %892 = vmatmul.mubr.bf16.gmra.mrb[0].mxu0 %v586
    %v893 = vpop.f32.mrb[0].mxu0
    %v894 = vadd.f32 0.0, %v893
    %v895 = vpop.f32.mrb[0].mxu0
    %v896 = vadd.f32 0.0, %v895
    %v897 = vpop.f32.mrb[0].mxu0
    %v898 = vadd.f32 0.0, %v897
    %v899 = vpop.f32.mrb[0].mxu0
    %v900 = vadd.f32 0.0, %v899
    %901 = vmatprep.mubr.bf16.mxu0 0
    %902 = vmatmul.mubr.bf16.gmra.mrb[0].mxu0 %v587
    %v903 = vpop.f32.mrb[0].mxu0
    %v904 = vadd.f32 0.0, %v903
    %v905 = vpop.f32.mrb[0].mxu0
    %v906 = vadd.f32 0.0, %v905
    %v907 = vpop.f32.mrb[0].mxu0
    %v908 = vadd.f32 0.0, %v907
    %v909 = vpop.f32.mrb[0].mxu0
    %v910 = vadd.f32 0.0, %v909
    %911 = vmatprep.mubr.bf16.mxu0 0
    %912 = vmatmul.mubr.bf16.gmra.mrb[0].mxu0 %v588
    %v913 = vpop.f32.mrb[0].mxu0
    %v914 = vadd.f32 0.0, %v913
    %v915 = vpop.f32.mrb[0].mxu0
    %v916 = vadd.f32 0.0, %v915
    %v917 = vpop.f32.mrb[0].mxu0
    %v918 = vadd.f32 0.0, %v917
    %v919 = vpop.f32.mrb[0].mxu0
    %v920 = vadd.f32 0.0, %v919
    %921 = vmatprep.mubr.bf16.mxu0 0
    %922 = vmatmul.mubr.bf16.gmra.mrb[0].mxu0 %v589
    %v923 = vpop.f32.mrb[0].mxu0
    %v924 = vadd.f32 0.0, %v923
    %v925 = vpop.f32.mrb[0].mxu0
    %v926 = vadd.f32 0.0, %v925
    %v927 = vpop.f32.mrb[0].mxu0
    %v928 = vadd.f32 0.0, %v927
    %v929 = vpop.f32.mrb[0].mxu0
    %v930 = vadd.f32 0.0, %v929
    %931 = vmatprep.mubr.bf16.mxu0 0
    %932 = vmatmul.mubr.bf16.gmra.mrb[0].mxu0 %v590
    %v933 = vpop.f32.mrb[0].mxu0
    %v934 = vadd.f32 0.0, %v933
    %v935 = vpop.f32.mrb[0].mxu0
    %v936 = vadd.f32 0.0, %v935
    %v937 = vpop.f32.mrb[0].mxu0
    %v938 = vadd.f32 0.0, %v937
    %v939 = vpop.f32.mrb[0].mxu0
    %v940 = vadd.f32 0.0, %v939
    %941 = vmatprep.mubr.bf16.mxu0 0
    %942 = vmatmul.mubr.bf16.gmra.mrb[0].mxu0 %v591
    %v943 = vpop.f32.mrb[0].mxu0
    %v944 = vadd.f32 0.0, %v943
    %v945 = vpop.f32.mrb[0].mxu0
    %v946 = vadd.f32 0.0, %v945
    %v947 = vpop.f32.mrb[0].mxu0
    %v948 = vadd.f32 0.0, %v947
    %v949 = vpop.f32.mrb[0].mxu0
    %v950 = vadd.f32 0.0, %v949
    %951 = vmatprep.mubr.bf16.mxu0 0
    %952 = vmatmul.mubr.bf16.gmra.mrb[0].mxu0 %v592
    %v953 = vpop.f32.mrb[0].mxu0
    %v954 = vadd.f32 0.0, %v953
    %v955 = vpop.f32.mrb[0].mxu0
    %v956 = vadd.f32 0.0, %v955
    %v957 = vpop.f32.mrb[0].mxu0
    %v958 = vadd.f32 0.0, %v957
    %v959 = vpop.f32.mrb[0].mxu0
    %v960 = vadd.f32 0.0, %v959
    %961 = vdwg.mxu0
    %962 = vmatprep.subr.bf16.mxu0 %v788
    %963 = vmatpush1.bf16.msra.mxu0 %v787
    %964 = vmatprep.subr.bf16.mxu0 %v792
    %965 = vmatpush1.bf16.msra.mxu0 %v791
    %966 = vmatprep.subr.bf16.mxu0 %v796
    %967 = vmatpush1.bf16.msra.mxu0 %v795
    %968 = vmatprep.subr.bf16.mxu0 %v800
    %969 = vmatpush1.bf16.msra.mxu0 %v799
    %970 = vmatprep.subr.bf16.mxu0 %v804
    %971 = vmatpush1.bf16.msra.mxu0 %v803
    %972 = vmatprep.subr.bf16.mxu0 %v808
    %973 = vmatpush1.bf16.msra.mxu0 %v807
    %974 = vmatprep.subr.bf16.mxu0 %v812
    %975 = vmatpush1.bf16.msra.mxu0 %v811
    %976 = vmatprep.subr.bf16.mxu0 %v816
    %977 = vmatpush1.bf16.msra.mxu0 %v815
    %978 = vmatprep.subr.bf16.mxu0 0
    %979 = vmatpush1.bf16.msra.mxu0 0
    %980 = vmatprep.subr.bf16.mxu0 0
    %981 = vmatpush1.bf16.msra.mxu0 0
    %982 = vmatprep.subr.bf16.mxu0 0
    %983 = vmatpush1.bf16.msra.mxu0 0
    %984 = vmatprep.subr.bf16.mxu0 0
    %985 = vmatpush1.bf16.msra.mxu0 0
    %986 = vmatprep.subr.bf16.mxu0 0
    %987 = vmatpush1.bf16.msra.mxu0 0
    %988 = vmatprep.subr.bf16.mxu0 0
    %989 = vmatpush1.bf16.msra.mxu0 0
    %990 = vmatprep.subr.bf16.mxu0 0
    %991 = vmatpush1.bf16.msra.mxu0 0
    %992 = vmatprep.subr.bf16.mxu0 0
    %993 = vmatpush1.bf16.msra.mxu0 0
    %994 = vmatprep.mubr.bf16.mxu0 0
    %995 = vmatmul.mubr.bf16.gmra.mrb[0].mxu0 %v585
    %v996 = vpop.f32.mrb[0].mxu0
    %v997 = vadd.f32 0.0, %v996
    %v998 = vpop.f32.mrb[0].mxu0
    %v999 = vadd.f32 0.0, %v998
    %v1000 = vpop.f32.mrb[0].mxu0
    %v1001 = vadd.f32 0.0, %v1000
    %v1002 = vpop.f32.mrb[0].mxu0
    %v1003 = vadd.f32 0.0, %v1002
    %1004 = vmatprep.mubr.bf16.mxu0 0
    %1005 = vmatmul.mubr.bf16.gmra.mrb[0].mxu0 %v586
    %v1006 = vpop.f32.mrb[0].mxu0
    %v1007 = vadd.f32 0.0, %v1006
    %v1008 = vpop.f32.mrb[0].mxu0
    %v1009 = vadd.f32 0.0, %v1008
    %v1010 = vpop.f32.mrb[0].mxu0
    %v1011 = vadd.f32 0.0, %v1010
    %v1012 = vpop.f32.mrb[0].mxu0
    %v1013 = vadd.f32 0.0, %v1012
    %1014 = vmatprep.mubr.bf16.mxu0 0
    %1015 = vmatmul.mubr.bf16.gmra.mrb[0].mxu0 %v587
    %v1016 = vpop.f32.mrb[0].mxu0
    %v1017 = vadd.f32 0.0, %v1016
    %v1018 = vpop.f32.mrb[0].mxu0
    %v1019 = vadd.f32 0.0, %v1018
    %v1020 = vpop.f32.mrb[0].mxu0
    %v1021 = vadd.f32 0.0, %v1020
    %v1022 = vpop.f32.mrb[0].mxu0
    %v1023 = vadd.f32 0.0, %v1022
    %1024 = vmatprep.mubr.bf16.mxu0 0
    %1025 = vmatmul.mubr.bf16.gmra.mrb[0].mxu0 %v588
    %v1026 = vpop.f32.mrb[0].mxu0
    %v1027 = vadd.f32 0.0, %v1026
    %v1028 = vpop.f32.mrb[0].mxu0
    %v1029 = vadd.f32 0.0, %v1028
    %v1030 = vpop.f32.mrb[0].mxu0
    %v1031 = vadd.f32 0.0, %v1030
    %v1032 = vpop.f32.mrb[0].mxu0
    %v1033 = vadd.f32 0.0, %v1032
    %1034 = vmatprep.mubr.bf16.mxu0 0
    %1035 = vmatmul.mubr.bf16.gmra.mrb[0].mxu0 %v589
    %v1036 = vpop.f32.mrb[0].mxu0
    %v1037 = vadd.f32 0.0, %v1036
    %v1038 = vpop.f32.mrb[0].mxu0
    %v1039 = vadd.f32 0.0, %v1038
    %v1040 = vpop.f32.mrb[0].mxu0
    %v1041 = vadd.f32 0.0, %v1040
    %v1042 = vpop.f32.mrb[0].mxu0
    %v1043 = vadd.f32 0.0, %v1042
    %1044 = vmatprep.mubr.bf16.mxu0 0
    %1045 = vmatmul.mubr.bf16.gmra.mrb[0].mxu0 %v590
    %v1046 = vpop.f32.mrb[0].mxu0
    %v1047 = vadd.f32 0.0, %v1046
    %v1048 = vpop.f32.mrb[0].mxu0
    %v1049 = vadd.f32 0.0, %v1048
    %v1050 = vpop.f32.mrb[0].mxu0
    %v1051 = vadd.f32 0.0, %v1050
    %v1052 = vpop.f32.mrb[0].mxu0
    %v1053 = vadd.f32 0.0, %v1052
    %1054 = vmatprep.mubr.bf16.mxu0 0
    %1055 = vmatmul.mubr.bf16.gmra.mrb[0].mxu0 %v591
    %v1056 = vpop.f32.mrb[0].mxu0
    %v1057 = vadd.f32 0.0, %v1056
    %v1058 = vpop.f32.mrb[0].mxu0
    %v1059 = vadd.f32 0.0, %v1058
    %v1060 = vpop.f32.mrb[0].mxu0
    %v1061 = vadd.f32 0.0, %v1060
    %v1062 = vpop.f32.mrb[0].mxu0
    %v1063 = vadd.f32 0.0, %v1062
    %1064 = vmatprep.mubr.bf16.mxu0 0
    %1065 = vmatmul.mubr.bf16.gmra.mrb[0].mxu0 %v592
    %v1066 = vpop.f32.mrb[0].mxu0
    %v1067 = vadd.f32 0.0, %v1066
    %v1068 = vpop.f32.mrb[0].mxu0
    %v1069 = vadd.f32 0.0, %v1068
    %v1070 = vpop.f32.mrb[0].mxu0
    %v1071 = vadd.f32 0.0, %v1070
    %v1072 = vpop.f32.mrb[0].mxu0
    %v1073 = vadd.f32 0.0, %v1072
    %1074 = vdwg.mxu0
    %v1075 = vadd.f32 %v593, %v884
    %v1076 = vadd.f32 %v594, %v886
    %v1077 = vadd.f32 %v595, %v997
    %v1078 = vadd.f32 %v596, %v999
    %v1079 = vadd.f32 %v597, %v888
    %v1080 = vadd.f32 %v598, %v890
    %v1081 = vadd.f32 %v599, %v1001
    %v1082 = vadd.f32 %v600, %v1003
    %v1083 = vadd.f32 %v601, %v894
    %v1084 = vadd.f32 %v602, %v896
    %v1085 = vadd.f32 %v603, %v1007
    %v1086 = vadd.f32 %v604, %v1009
    %v1087 = vadd.f32 %v605, %v898
    %v1088 = vadd.f32 %v606, %v900
    %v1089 = vadd.f32 %v607, %v1011
    %v1090 = vadd.f32 %v608, %v1013
    %v1091 = vadd.f32 %v609, %v904
    %v1092 = vadd.f32 %v610, %v906
    %v1093 = vadd.f32 %v611, %v1017
    %v1094 = vadd.f32 %v612, %v1019
    %v1095 = vadd.f32 %v613, %v908
    %v1096 = vadd.f32 %v614, %v910
    %v1097 = vadd.f32 %v615, %v1021
    %v1098 = vadd.f32 %v616, %v1023
    %v1099 = vadd.f32 %v617, %v914
    %v1100 = vadd.f32 %v618, %v916
    %v1101 = vadd.f32 %v619, %v1027
    %v1102 = vadd.f32 %v620, %v1029
    %v1103 = vadd.f32 %v621, %v918
    %v1104 = vadd.f32 %v622, %v920
    %v1105 = vadd.f32 %v623, %v1031
    %v1106 = vadd.f32 %v624, %v1033
    %v1107 = vadd.f32 %v625, %v924
    %v1108 = vadd.f32 %v626, %v926
    %v1109 = vadd.f32 %v627, %v1037
    %v1110 = vadd.f32 %v628, %v1039
    %v1111 = vadd.f32 %v629, %v928
    %v1112 = vadd.f32 %v630, %v930
    %v1113 = vadd.f32 %v631, %v1041
    %v1114 = vadd.f32 %v632, %v1043
    %v1115 = vadd.f32 %v633, %v934
    %v1116 = vadd.f32 %v634, %v936
    %v1117 = vadd.f32 %v635, %v1047
    %v1118 = vadd.f32 %v636, %v1049
    %v1119 = vadd.f32 %v637, %v938
    %v1120 = vadd.f32 %v638, %v940
    %v1121 = vadd.f32 %v639, %v1051
    %v1122 = vadd.f32 %v640, %v1053
    %v1123 = vadd.f32 %v641, %v944
    %v1124 = vadd.f32 %v642, %v946
    %v1125 = vadd.f32 %v643, %v1057
    %v1126 = vadd.f32 %v644, %v1059
    %v1127 = vadd.f32 %v645, %v948
    %v1128 = vadd.f32 %v646, %v950
    %v1129 = vadd.f32 %v647, %v1061
    %v1130 = vadd.f32 %v648, %v1063
    %v1131 = vadd.f32 %v649, %v954
    %v1132 = vadd.f32 %v650, %v956
    %v1133 = vadd.f32 %v651, %v1067
    %v1134 = vadd.f32 %v652, %v1069
    %v1135 = vadd.f32 %v653, %v958
    %v1136 = vadd.f32 %v654, %v960
    %v1137 = vadd.f32 %v655, %v1071
    %v1138 = vadd.f32 %v656, %v1073
    %1139 = vst [vmem:[#allocation2] sm:$0xff] %v1075
    %1140 = vst [vmem:[#allocation2 + $0x8] sm:$0xff] %v1076
    %1141 = vst [vmem:[#allocation2 + $0x10] sm:$0xff] %v1077
    %1142 = vst [vmem:[#allocation2 + $0x18] sm:$0xff] %v1078
    %1143 = vst [vmem:[#allocation2 + $0x20] sm:$0xff] %v1079
    %1144 = vst [vmem:[#allocation2 + $0x28] sm:$0xff] %v1080
    %1145 = vst [vmem:[#allocation2 + $0x30] sm:$0xff] %v1081
    %1146 = vst [vmem:[#allocation2 + $0x38] sm:$0xff] %v1082
    %1147 = vst [vmem:[#allocation2 + $0x40] sm:$0xff] %v1083
    %1148 = vst [vmem:[#allocation2 + $0x48] sm:$0xff] %v1084
    %1149 = vst [vmem:[#allocation2 + $0x50] sm:$0xff] %v1085
    %1150 = vst [vmem:[#allocation2 + $0x58] sm:$0xff] %v1086
    %1151 = vst [vmem:[#allocation2 + $0x60] sm:$0xff] %v1087
    %1152 = vst [vmem:[#allocation2 + $0x68] sm:$0xff] %v1088
    %1153 = vst [vmem:[#allocation2 + $0x70] sm:$0xff] %v1089
    %1154 = vst [vmem:[#allocation2 + $0x78] sm:$0xff] %v1090
    %1155 = vst [vmem:[#allocation2 + $0x80] sm:$0xff] %v1091
    %1156 = vst [vmem:[#allocation2 + $0x88] sm:$0xff] %v1092
    %1157 = vst [vmem:[#allocation2 + $0x90] sm:$0xff] %v1093
    %1158 = vst [vmem:[#allocation2 + $0x98] sm:$0xff] %v1094
    %1159 = vst [vmem:[#allocation2 + $0xa0] sm:$0xff] %v1095
    %1160 = vst [vmem:[#allocation2 + $0xa8] sm:$0xff] %v1096
    %1161 = vst [vmem:[#allocation2 + $0xb0] sm:$0xff] %v1097
    %1162 = vst [vmem:[#allocation2 + $0xb8] sm:$0xff] %v1098
    %1163 = vst [vmem:[#allocation2 + $0xc0] sm:$0xff] %v1099
    %1164 = vst [vmem:[#allocation2 + $0xc8] sm:$0xff] %v1100
    %1165 = vst [vmem:[#allocation2 + $0xd0] sm:$0xff] %v1101
    %1166 = vst [vmem:[#allocation2 + $0xd8] sm:$0xff] %v1102
    %1167 = vst [vmem:[#allocation2 + $0xe0] sm:$0xff] %v1103
    %1168 = vst [vmem:[#allocation2 + $0xe8] sm:$0xff] %v1104
    %1169 = vst [vmem:[#allocation2 + $0xf0] sm:$0xff] %v1105
    %1170 = vst [vmem:[#allocation2 + $0xf8] sm:$0xff] %v1106
    %1171 = vst [vmem:[#allocation2 + $0x100] sm:$0xff] %v1107
    %1172 = vst [vmem:[#allocation2 + $0x108] sm:$0xff] %v1108
    %1173 = vst [vmem:[#allocation2 + $0x110] sm:$0xff] %v1109
    %1174 = vst [vmem:[#allocation2 + $0x118] sm:$0xff] %v1110
    %1175 = vst [vmem:[#allocation2 + $0x120] sm:$0xff] %v1111
    %1176 = vst [vmem:[#allocation2 + $0x128] sm:$0xff] %v1112
    %1177 = vst [vmem:[#allocation2 + $0x130] sm:$0xff] %v1113
    %1178 = vst [vmem:[#allocation2 + $0x138] sm:$0xff] %v1114
    %1179 = vst [vmem:[#allocation2 + $0x140] sm:$0xff] %v1115
    %1180 = vst [vmem:[#allocation2 + $0x148] sm:$0xff] %v1116
    %1181 = vst [vmem:[#allocation2 + $0x150] sm:$0xff] %v1117
    %1182 = vst [vmem:[#allocation2 + $0x158] sm:$0xff] %v1118
    %1183 = vst [vmem:[#allocation2 + $0x160] sm:$0xff] %v1119
    %1184 = vst [vmem:[#allocation2 + $0x168] sm:$0xff] %v1120
    %1185 = vst [vmem:[#allocation2 + $0x170] sm:$0xff] %v1121
    %1186 = vst [vmem:[#allocation2 + $0x178] sm:$0xff] %v1122
    %1187 = vst [vmem:[#allocation2 + $0x180] sm:$0xff] %v1123
    %1188 = vst [vmem:[#allocation2 + $0x188] sm:$0xff] %v1124
    %1189 = vst [vmem:[#allocation2 + $0x190] sm:$0xff] %v1125
    %1190 = vst [vmem:[#allocation2 + $0x198] sm:$0xff] %v1126
    %1191 = vst [vmem:[#allocation2 + $0x1a0] sm:$0xff] %v1127
    %1192 = vst [vmem:[#allocation2 + $0x1a8] sm:$0xff] %v1128
    %1193 = vst [vmem:[#allocation2 + $0x1b0] sm:$0xff] %v1129
    %1194 = vst [vmem:[#allocation2 + $0x1b8] sm:$0xff] %v1130
    %1195 = vst [vmem:[#allocation2 + $0x1c0] sm:$0xff] %v1131
    %1196 = vst [vmem:[#allocation2 + $0x1c8] sm:$0xff] %v1132
    %1197 = vst [vmem:[#allocation2 + $0x1d0] sm:$0xff] %v1133
    %1198 = vst [vmem:[#allocation2 + $0x1d8] sm:$0xff] %v1134
    %1199 = vst [vmem:[#allocation2 + $0x1e0] sm:$0xff] %v1135
    %1200 = vst [vmem:[#allocation2 + $0x1e8] sm:$0xff] %v1136
    %1201 = vst [vmem:[#allocation2 + $0x1f0] sm:$0xff] %v1137
    %1202 = vst [vmem:[#allocation2 + $0x1f8] sm:$0xff] %v1138
    %v1203 = vld [vmem:[#allocation3] sm:$0xff]
    %v1204 = vld [vmem:[#allocation3 + $0x8] sm:$0xff]
    %v1205 = vld [vmem:[#allocation3 + $0x10] sm:$0xff]
    %v1206 = vld [vmem:[#allocation3 + $0x18] sm:$0xff]
    %v1207 = vld [vmem:[#allocation3 + $0x20] sm:$0xff]
    %v1208 = vld [vmem:[#allocation3 + $0x28] sm:$0xff]
    %v1209 = vld [vmem:[#allocation3 + $0x30] sm:$0xff]
    %v1210 = vld [vmem:[#allocation3 + $0x38] sm:$0xff]
    %v1211 = vld [vmem:[#allocation3 + $0x40] sm:$0xff]
    %v1212 = vld [vmem:[#allocation3 + $0x48] sm:$0xff]
    %v1213 = vld [vmem:[#allocation3 + $0x50] sm:$0xff]
    %v1214 = vld [vmem:[#allocation3 + $0x58] sm:$0xff]
    %v1215 = vld [vmem:[#allocation3 + $0x60] sm:$0xff]
    %v1216 = vld [vmem:[#allocation3 + $0x68] sm:$0xff]
    %v1217 = vld [vmem:[#allocation3 + $0x70] sm:$0xff]
    %v1218 = vld [vmem:[#allocation3 + $0x78] sm:$0xff]
    %v1219 = vld [vmem:[#allocation3 + $0x80] sm:$0xff]
    %v1220 = vld [vmem:[#allocation3 + $0x88] sm:$0xff]
    %v1221 = vld [vmem:[#allocation3 + $0x90] sm:$0xff]
    %v1222 = vld [vmem:[#allocation3 + $0x98] sm:$0xff]
    %v1223 = vld [vmem:[#allocation3 + $0xa0] sm:$0xff]
    %v1224 = vld [vmem:[#allocation3 + $0xa8] sm:$0xff]
    %v1225 = vld [vmem:[#allocation3 + $0xb0] sm:$0xff]
    %v1226 = vld [vmem:[#allocation3 + $0xb8] sm:$0xff]
    %v1227 = vld [vmem:[#allocation3 + $0xc0] sm:$0xff]
    %v1228 = vld [vmem:[#allocation3 + $0xc8] sm:$0xff]
    %v1229 = vld [vmem:[#allocation3 + $0xd0] sm:$0xff]
    %v1230 = vld [vmem:[#allocation3 + $0xd8] sm:$0xff]
    %v1231 = vld [vmem:[#allocation3 + $0xe0] sm:$0xff]
    %v1232 = vld [vmem:[#allocation3 + $0xe8] sm:$0xff]
    %v1233 = vld [vmem:[#allocation3 + $0xf0] sm:$0xff]
    %v1234 = vld [vmem:[#allocation3 + $0xf8] sm:$0xff]
    %v1235 = vld [vmem:[#allocation3 + $0x100] sm:$0xff]
    %v1236 = vld [vmem:[#allocation3 + $0x108] sm:$0xff]
    %v1237 = vld [vmem:[#allocation3 + $0x110] sm:$0xff]
    %v1238 = vld [vmem:[#allocation3 + $0x118] sm:$0xff]
    %v1239 = vld [vmem:[#allocation3 + $0x120] sm:$0xff]
    %v1240 = vld [vmem:[#allocation3 + $0x128] sm:$0xff]
    %v1241 = vld [vmem:[#allocation3 + $0x130] sm:$0xff]
    %v1242 = vld [vmem:[#allocation3 + $0x138] sm:$0xff]
    %v1243 = vld [vmem:[#allocation3 + $0x140] sm:$0xff]
    %v1244 = vld [vmem:[#allocation3 + $0x148] sm:$0xff]
    %v1245 = vld [vmem:[#allocation3 + $0x150] sm:$0xff]
    %v1246 = vld [vmem:[#allocation3 + $0x158] sm:$0xff]
    %v1247 = vld [vmem:[#allocation3 + $0x160] sm:$0xff]
    %v1248 = vld [vmem:[#allocation3 + $0x168] sm:$0xff]
    %v1249 = vld [vmem:[#allocation3 + $0x170] sm:$0xff]
    %v1250 = vld [vmem:[#allocation3 + $0x178] sm:$0xff]
    %v1251 = vld [vmem:[#allocation3 + $0x180] sm:$0xff]
    %v1252 = vld [vmem:[#allocation3 + $0x188] sm:$0xff]
    %v1253 = vld [vmem:[#allocation3 + $0x190] sm:$0xff]
    %v1254 = vld [vmem:[#allocation3 + $0x198] sm:$0xff]
    %v1255 = vld [vmem:[#allocation3 + $0x1a0] sm:$0xff]
    %v1256 = vld [vmem:[#allocation3 + $0x1a8] sm:$0xff]
    %v1257 = vld [vmem:[#allocation3 + $0x1b0] sm:$0xff]
    %v1258 = vld [vmem:[#allocation3 + $0x1b8] sm:$0xff]
    %v1259 = vld [vmem:[#allocation3 + $0x1c0] sm:$0xff]
    %v1260 = vld [vmem:[#allocation3 + $0x1c8] sm:$0xff]
    %v1261 = vld [vmem:[#allocation3 + $0x1d0] sm:$0xff]
    %v1262 = vld [vmem:[#allocation3 + $0x1d8] sm:$0xff]
    %v1263 = vld [vmem:[#allocation3 + $0x1e0] sm:$0xff]
    %v1264 = vld [vmem:[#allocation3 + $0x1e8] sm:$0xff]
    %v1265 = vld [vmem:[#allocation3 + $0x1f0] sm:$0xff]
    %v1266 = vld [vmem:[#allocation3 + $0x1f8] sm:$0xff]
    %v1267 = vld [vmem:[#allocation5] sm:$0xff]
    %v1268 = vld [vmem:[#allocation5 + $0x8] sm:$0xff]
    %v1269 = vld [vmem:[#allocation5 + $0x10] sm:$0xff]
    %v1270 = vld [vmem:[#allocation5 + $0x18] sm:$0xff]
    %v1271 = vld [vmem:[#allocation5 + $0x20] sm:$0xff]
    %v1272 = vld [vmem:[#allocation5 + $0x28] sm:$0xff]
    %v1273 = vld [vmem:[#allocation5 + $0x30] sm:$0xff]
    %v1274 = vld [vmem:[#allocation5 + $0x38] sm:$0xff]
    %v1275 = vld [vmem:[#allocation5 + $0x40] sm:$0xff]
    %v1276 = vld [vmem:[#allocation5 + $0x48] sm:$0xff]
    %v1277 = vld [vmem:[#allocation5 + $0x50] sm:$0xff]
    %v1278 = vld [vmem:[#allocation5 + $0x58] sm:$0xff]
    %v1279 = vld [vmem:[#allocation5 + $0x60] sm:$0xff]
    %v1280 = vld [vmem:[#allocation5 + $0x68] sm:$0xff]
    %v1281 = vld [vmem:[#allocation5 + $0x70] sm:$0xff]
    %v1282 = vld [vmem:[#allocation5 + $0x78] sm:$0xff]
    %v1283 = vld [vmem:[#allocation5 + $0x80] sm:$0xff]
    %v1284 = vld [vmem:[#allocation5 + $0x88] sm:$0xff]
    %v1285 = vld [vmem:[#allocation5 + $0x90] sm:$0xff]
    %v1286 = vld [vmem:[#allocation5 + $0x98] sm:$0xff]
    %v1287 = vld [vmem:[#allocation5 + $0xa0] sm:$0xff]
    %v1288 = vld [vmem:[#allocation5 + $0xa8] sm:$0xff]
    %v1289 = vld [vmem:[#allocation5 + $0xb0] sm:$0xff]
    %v1290 = vld [vmem:[#allocation5 + $0xb8] sm:$0xff]
    %v1291 = vld [vmem:[#allocation5 + $0xc0] sm:$0xff]
    %v1292 = vld [vmem:[#allocation5 + $0xc8] sm:$0xff]
    %v1293 = vld [vmem:[#allocation5 + $0xd0] sm:$0xff]
    %v1294 = vld [vmem:[#allocation5 + $0xd8] sm:$0xff]
    %v1295 = vld [vmem:[#allocation5 + $0xe0] sm:$0xff]
    %v1296 = vld [vmem:[#allocation5 + $0xe8] sm:$0xff]
    %v1297 = vld [vmem:[#allocation5 + $0xf0] sm:$0xff]
    %v1298 = vld [vmem:[#allocation5 + $0xf8] sm:$0xff]
    %v1331 = vunpack.c.l.b16 %v1267
    %v1332 = vunpack.c.h.b16 %v1267
    %v1333 = vunpack.c.l.b16 %v1268
    %v1334 = vunpack.c.h.b16 %v1268
    %v1335 = vunpack.c.l.b16 %v1269
    %v1336 = vunpack.c.h.b16 %v1269
    %v1337 = vunpack.c.l.b16 %v1270
    %v1338 = vunpack.c.h.b16 %v1270
    %v1339 = vunpack.c.l.b16 %v1271
    %v1340 = vunpack.c.h.b16 %v1271
    %v1341 = vunpack.c.l.b16 %v1272
    %v1342 = vunpack.c.h.b16 %v1272
    %v1343 = vunpack.c.l.b16 %v1273
    %v1344 = vunpack.c.h.b16 %v1273
    %v1345 = vunpack.c.l.b16 %v1274
    %v1346 = vunpack.c.h.b16 %v1274
    %v1347 = vunpack.c.l.b16 %v1275
    %v1348 = vunpack.c.h.b16 %v1275
    %v1349 = vunpack.c.l.b16 %v1276
    %v1350 = vunpack.c.h.b16 %v1276
    %v1351 = vunpack.c.l.b16 %v1277
    %v1352 = vunpack.c.h.b16 %v1277
    %v1353 = vunpack.c.l.b16 %v1278
    %v1354 = vunpack.c.h.b16 %v1278
    %v1355 = vunpack.c.l.b16 %v1279
    %v1356 = vunpack.c.h.b16 %v1279
    %v1357 = vunpack.c.l.b16 %v1280
    %v1358 = vunpack.c.h.b16 %v1280
    %v1359 = vunpack.c.l.b16 %v1281
    %v1360 = vunpack.c.h.b16 %v1281
    %v1361 = vunpack.c.l.b16 %v1282
    %v1362 = vunpack.c.h.b16 %v1282
    %v1363 = vunpack.c.l.b16 %v1283
    %v1364 = vunpack.c.h.b16 %v1283
    %v1365 = vunpack.c.l.b16 %v1284
    %v1366 = vunpack.c.h.b16 %v1284
    %v1367 = vunpack.c.l.b16 %v1285
    %v1368 = vunpack.c.h.b16 %v1285
    %v1369 = vunpack.c.l.b16 %v1286
    %v1370 = vunpack.c.h.b16 %v1286
    %v1371 = vunpack.c.l.b16 %v1287
    %v1372 = vunpack.c.h.b16 %v1287
    %v1373 = vunpack.c.l.b16 %v1288
    %v1374 = vunpack.c.h.b16 %v1288
    %v1375 = vunpack.c.l.b16 %v1289
    %v1376 = vunpack.c.h.b16 %v1289
    %v1377 = vunpack.c.l.b16 %v1290
    %v1378 = vunpack.c.h.b16 %v1290
    %v1379 = vunpack.c.l.b16 %v1291
    %v1380 = vunpack.c.h.b16 %v1291
    %v1381 = vunpack.c.l.b16 %v1292
    %v1382 = vunpack.c.h.b16 %v1292
    %v1383 = vunpack.c.l.b16 %v1293
    %v1384 = vunpack.c.h.b16 %v1293
    %v1385 = vunpack.c.l.b16 %v1294
    %v1386 = vunpack.c.h.b16 %v1294
    %v1387 = vunpack.c.l.b16 %v1295
    %v1388 = vunpack.c.h.b16 %v1295
    %v1389 = vunpack.c.l.b16 %v1296
    %v1390 = vunpack.c.h.b16 %v1296
    %v1391 = vunpack.c.l.b16 %v1297
    %v1392 = vunpack.c.h.b16 %v1297
    %v1393 = vunpack.c.l.b16 %v1298
    %v1394 = vunpack.c.h.b16 %v1298
    %v1395 = vpack.c.b16 %v1335, %v1331
    %v1396 = vpack.c.b16 %v1336, %v1332
    %v1397 = vpack.c.b16 %v1337, %v1333
    %v1398 = vpack.c.b16 %v1338, %v1334
    %v1399 = vpack.c.b16 %v1343, %v1339
    %v1400 = vpack.c.b16 %v1344, %v1340
    %v1401 = vpack.c.b16 %v1345, %v1341
    %v1402 = vpack.c.b16 %v1346, %v1342
    %v1403 = vpack.c.b16 %v1351, %v1347
    %v1404 = vpack.c.b16 %v1352, %v1348
    %v1405 = vpack.c.b16 %v1353, %v1349
    %v1406 = vpack.c.b16 %v1354, %v1350
    %v1407 = vpack.c.b16 %v1359, %v1355
    %v1408 = vpack.c.b16 %v1360, %v1356
    %v1409 = vpack.c.b16 %v1361, %v1357
    %v1410 = vpack.c.b16 %v1362, %v1358
    %v1411 = vpack.c.b16 %v1367, %v1363
    %v1412 = vpack.c.b16 %v1368, %v1364
    %v1413 = vpack.c.b16 %v1369, %v1365
    %v1414 = vpack.c.b16 %v1370, %v1366
    %v1415 = vpack.c.b16 %v1375, %v1371
    %v1416 = vpack.c.b16 %v1376, %v1372
    %v1417 = vpack.c.b16 %v1377, %v1373
    %v1418 = vpack.c.b16 %v1378, %v1374
    %v1419 = vpack.c.b16 %v1383, %v1379
    %v1420 = vpack.c.b16 %v1384, %v1380
    %v1421 = vpack.c.b16 %v1385, %v1381
    %v1422 = vpack.c.b16 %v1386, %v1382
    %v1423 = vpack.c.b16 %v1391, %v1387
    %v1424 = vpack.c.b16 %v1392, %v1388
    %v1425 = vpack.c.b16 %v1393, %v1389
    %v1426 = vpack.c.b16 %v1394, %v1390
    %1459 = vmatprep.subr.bf16.mxu0 %v1396
    %1460 = vmatpush1.bf16.msra.mxu0 %v1395
    %1461 = vmatprep.subr.bf16.mxu0 %v1400
    %1462 = vmatpush1.bf16.msra.mxu0 %v1399
    %1463 = vmatprep.subr.bf16.mxu0 %v1404
    %1464 = vmatpush1.bf16.msra.mxu0 %v1403
    %1465 = vmatprep.subr.bf16.mxu0 %v1408
    %1466 = vmatpush1.bf16.msra.mxu0 %v1407
    %1467 = vmatprep.subr.bf16.mxu0 %v1412
    %1468 = vmatpush1.bf16.msra.mxu0 %v1411
    %1469 = vmatprep.subr.bf16.mxu0 %v1416
    %1470 = vmatpush1.bf16.msra.mxu0 %v1415
    %1471 = vmatprep.subr.bf16.mxu0 %v1420
    %1472 = vmatpush1.bf16.msra.mxu0 %v1419
    %1473 = vmatprep.subr.bf16.mxu0 %v1424
    %1474 = vmatpush1.bf16.msra.mxu0 %v1423
    %1475 = vmatprep.subr.bf16.mxu0 0
    %1476 = vmatpush1.bf16.msra.mxu0 0
    %1477 = vmatprep.subr.bf16.mxu0 0
    %1478 = vmatpush1.bf16.msra.mxu0 0
    %1479 = vmatprep.subr.bf16.mxu0 0
    %1480 = vmatpush1.bf16.msra.mxu0 0
    %1481 = vmatprep.subr.bf16.mxu0 0
    %1482 = vmatpush1.bf16.msra.mxu0 0
    %1483 = vmatprep.subr.bf16.mxu0 0
    %1484 = vmatpush1.bf16.msra.mxu0 0
    %1485 = vmatprep.subr.bf16.mxu0 0
    %1486 = vmatpush1.bf16.msra.mxu0 0
    %1487 = vmatprep.subr.bf16.mxu0 0
    %1488 = vmatpush1.bf16.msra.mxu0 0
    %1489 = vmatprep.subr.bf16.mxu0 0
    %1490 = vmatpush1.bf16.msra.mxu0 0
    %1491 = vmatprep.mubr.bf16.mxu0 0
    %1492 = vmatmul.mubr.bf16.gmra.mrb[0].mxu0 %v585
    %v1493 = vpop.f32.mrb[0].mxu0
    %v1494 = vadd.f32 0.0, %v1493
    %v1495 = vpop.f32.mrb[0].mxu0
    %v1496 = vadd.f32 0.0, %v1495
    %v1497 = vpop.f32.mrb[0].mxu0
    %v1498 = vadd.f32 0.0, %v1497
    %v1499 = vpop.f32.mrb[0].mxu0
    %v1500 = vadd.f32 0.0, %v1499
    %1501 = vmatprep.mubr.bf16.mxu0 0
    %1502 = vmatmul.mubr.bf16.gmra.mrb[0].mxu0 %v586
    %v1503 = vpop.f32.mrb[0].mxu0
    %v1504 = vadd.f32 0.0, %v1503
    %v1505 = vpop.f32.mrb[0].mxu0
    %v1506 = vadd.f32 0.0, %v1505
    %v1507 = vpop.f32.mrb[0].mxu0
    %v1508 = vadd.f32 0.0, %v1507
    %v1509 = vpop.f32.mrb[0].mxu0
    %v1510 = vadd.f32 0.0, %v1509
    %1511 = vmatprep.mubr.bf16.mxu0 0
    %1512 = vmatmul.mubr.bf16.gmra.mrb[0].mxu0 %v587
    %v1513 = vpop.f32.mrb[0].mxu0
    %v1514 = vadd.f32 0.0, %v1513
    %v1515 = vpop.f32.mrb[0].mxu0
    %v1516 = vadd.f32 0.0, %v1515
    %v1517 = vpop.f32.mrb[0].mxu0
    %v1518 = vadd.f32 0.0, %v1517
    %v1519 = vpop.f32.mrb[0].mxu0
    %v1520 = vadd.f32 0.0, %v1519
    %1521 = vmatprep.mubr.bf16.mxu0 0
    %1522 = vmatmul.mubr.bf16.gmra.mrb[0].mxu0 %v588
    %v1523 = vpop.f32.mrb[0].mxu0
    %v1524 = vadd.f32 0.0, %v1523
    %v1525 = vpop.f32.mrb[0].mxu0
    %v1526 = vadd.f32 0.0, %v1525
    %v1527 = vpop.f32.mrb[0].mxu0
    %v1528 = vadd.f32 0.0, %v1527
    %v1529 = vpop.f32.mrb[0].mxu0
    %v1530 = vadd.f32 0.0, %v1529
    %1531 = vmatprep.mubr.bf16.mxu0 0
    %1532 = vmatmul.mubr.bf16.gmra.mrb[0].mxu0 %v589
    %v1533 = vpop.f32.mrb[0].mxu0
    %v1534 = vadd.f32 0.0, %v1533
    %v1535 = vpop.f32.mrb[0].mxu0
    %v1536 = vadd.f32 0.0, %v1535
    %v1537 = vpop.f32.mrb[0].mxu0
    %v1538 = vadd.f32 0.0, %v1537
    %v1539 = vpop.f32.mrb[0].mxu0
    %v1540 = vadd.f32 0.0, %v1539
    %1541 = vmatprep.mubr.bf16.mxu0 0
    %1542 = vmatmul.mubr.bf16.gmra.mrb[0].mxu0 %v590
    %v1543 = vpop.f32.mrb[0].mxu0
    %v1544 = vadd.f32 0.0, %v1543
    %v1545 = vpop.f32.mrb[0].mxu0
    %v1546 = vadd.f32 0.0, %v1545
    %v1547 = vpop.f32.mrb[0].mxu0
    %v1548 = vadd.f32 0.0, %v1547
    %v1549 = vpop.f32.mrb[0].mxu0
    %v1550 = vadd.f32 0.0, %v1549
    %1551 = vmatprep.mubr.bf16.mxu0 0
    %1552 = vmatmul.mubr.bf16.gmra.mrb[0].mxu0 %v591
    %v1553 = vpop.f32.mrb[0].mxu0
    %v1554 = vadd.f32 0.0, %v1553
    %v1555 = vpop.f32.mrb[0].mxu0
    %v1556 = vadd.f32 0.0, %v1555
    %v1557 = vpop.f32.mrb[0].mxu0
    %v1558 = vadd.f32 0.0, %v1557
    %v1559 = vpop.f32.mrb[0].mxu0
    %v1560 = vadd.f32 0.0, %v1559
    %1561 = vmatprep.mubr.bf16.mxu0 0
    %1562 = vmatmul.mubr.bf16.gmra.mrb[0].mxu0 %v592
    %v1563 = vpop.f32.mrb[0].mxu0
    %v1564 = vadd.f32 0.0, %v1563
    %v1565 = vpop.f32.mrb[0].mxu0
    %v1566 = vadd.f32 0.0, %v1565
    %v1567 = vpop.f32.mrb[0].mxu0
    %v1568 = vadd.f32 0.0, %v1567
    %v1569 = vpop.f32.mrb[0].mxu0
    %v1570 = vadd.f32 0.0, %v1569
    %1571 = vdwg.mxu0
    %1572 = vmatprep.subr.bf16.mxu0 %v1398
    %1573 = vmatpush1.bf16.msra.mxu0 %v1397
    %1574 = vmatprep.subr.bf16.mxu0 %v1402
    %1575 = vmatpush1.bf16.msra.mxu0 %v1401
    %1576 = vmatprep.subr.bf16.mxu0 %v1406
    %1577 = vmatpush1.bf16.msra.mxu0 %v1405
    %1578 = vmatprep.subr.bf16.mxu0 %v1410
    %1579 = vmatpush1.bf16.msra.mxu0 %v1409
    %1580 = vmatprep.subr.bf16.mxu0 %v1414
    %1581 = vmatpush1.bf16.msra.mxu0 %v1413
    %1582 = vmatprep.subr.bf16.mxu0 %v1418
    %1583 = vmatpush1.bf16.msra.mxu0 %v1417
    %1584 = vmatprep.subr.bf16.mxu0 %v1422
    %1585 = vmatpush1.bf16.msra.mxu0 %v1421
    %1586 = vmatprep.subr.bf16.mxu0 %v1426
    %1587 = vmatpush1.bf16.msra.mxu0 %v1425
    %1588 = vmatprep.subr.bf16.mxu0 0
    %1589 = vmatpush1.bf16.msra.mxu0 0
    %1590 = vmatprep.subr.bf16.mxu0 0
    %1591 = vmatpush1.bf16.msra.mxu0 0
    %1592 = vmatprep.subr.bf16.mxu0 0
    %1593 = vmatpush1.bf16.msra.mxu0 0
    %1594 = vmatprep.subr.bf16.mxu0 0
    %1595 = vmatpush1.bf16.msra.mxu0 0
    %1596 = vmatprep.subr.bf16.mxu0 0
    %1597 = vmatpush1.bf16.msra.mxu0 0
    %1598 = vmatprep.subr.bf16.mxu0 0
    %1599 = vmatpush1.bf16.msra.mxu0 0
    %1600 = vmatprep.subr.bf16.mxu0 0
    %1601 = vmatpush1.bf16.msra.mxu0 0
    %1602 = vmatprep.subr.bf16.mxu0 0
    %1603 = vmatpush1.bf16.msra.mxu0 0
    %1604 = vmatprep.mubr.bf16.mxu0 0
    %1605 = vmatmul.mubr.bf16.gmra.mrb[0].mxu0 %v585
    %v1606 = vpop.f32.mrb[0].mxu0
    %v1607 = vadd.f32 0.0, %v1606
    %v1608 = vpop.f32.mrb[0].mxu0
    %v1609 = vadd.f32 0.0, %v1608
    %v1610 = vpop.f32.mrb[0].mxu0
    %v1611 = vadd.f32 0.0, %v1610
    %v1612 = vpop.f32.mrb[0].mxu0
    %v1613 = vadd.f32 0.0, %v1612
    %1614 = vmatprep.mubr.bf16.mxu0 0
    %1615 = vmatmul.mubr.bf16.gmra.mrb[0].mxu0 %v586
    %v1616 = vpop.f32.mrb[0].mxu0
    %v1617 = vadd.f32 0.0, %v1616
    %v1618 = vpop.f32.mrb[0].mxu0
    %v1619 = vadd.f32 0.0, %v1618
    %v1620 = vpop.f32.mrb[0].mxu0
    %v1621 = vadd.f32 0.0, %v1620
    %v1622 = vpop.f32.mrb[0].mxu0
    %v1623 = vadd.f32 0.0, %v1622
    %1624 = vmatprep.mubr.bf16.mxu0 0
    %1625 = vmatmul.mubr.bf16.gmra.mrb[0].mxu0 %v587
    %v1626 = vpop.f32.mrb[0].mxu0
    %v1627 = vadd.f32 0.0, %v1626
    %v1628 = vpop.f32.mrb[0].mxu0
    %v1629 = vadd.f32 0.0, %v1628
    %v1630 = vpop.f32.mrb[0].mxu0
    %v1631 = vadd.f32 0.0, %v1630
    %v1632 = vpop.f32.mrb[0].mxu0
    %v1633 = vadd.f32 0.0, %v1632
    %1634 = vmatprep.mubr.bf16.mxu0 0
    %1635 = vmatmul.mubr.bf16.gmra.mrb[0].mxu0 %v588
    %v1636 = vpop.f32.mrb[0].mxu0
    %v1637 = vadd.f32 0.0, %v1636
    %v1638 = vpop.f32.mrb[0].mxu0
    %v1639 = vadd.f32 0.0, %v1638
    %v1640 = vpop.f32.mrb[0].mxu0
    %v1641 = vadd.f32 0.0, %v1640
    %v1642 = vpop.f32.mrb[0].mxu0
    %v1643 = vadd.f32 0.0, %v1642
    %1644 = vmatprep.mubr.bf16.mxu0 0
    %1645 = vmatmul.mubr.bf16.gmra.mrb[0].mxu0 %v589
    %v1646 = vpop.f32.mrb[0].mxu0
    %v1647 = vadd.f32 0.0, %v1646
    %v1648 = vpop.f32.mrb[0].mxu0
    %v1649 = vadd.f32 0.0, %v1648
    %v1650 = vpop.f32.mrb[0].mxu0
    %v1651 = vadd.f32 0.0, %v1650
    %v1652 = vpop.f32.mrb[0].mxu0
    %v1653 = vadd.f32 0.0, %v1652
    %1654 = vmatprep.mubr.bf16.mxu0 0
    %1655 = vmatmul.mubr.bf16.gmra.mrb[0].mxu0 %v590
    %v1656 = vpop.f32.mrb[0].mxu0
    %v1657 = vadd.f32 0.0, %v1656
    %v1658 = vpop.f32.mrb[0].mxu0
    %v1659 = vadd.f32 0.0, %v1658
    %v1660 = vpop.f32.mrb[0].mxu0
    %v1661 = vadd.f32 0.0, %v1660
    %v1662 = vpop.f32.mrb[0].mxu0
    %v1663 = vadd.f32 0.0, %v1662
    %1664 = vmatprep.mubr.bf16.mxu0 0
    %1665 = vmatmul.mubr.bf16.gmra.mrb[0].mxu0 %v591
    %v1666 = vpop.f32.mrb[0].mxu0
    %v1667 = vadd.f32 0.0, %v1666
    %v1668 = vpop.f32.mrb[0].mxu0
    %v1669 = vadd.f32 0.0, %v1668
    %v1670 = vpop.f32.mrb[0].mxu0
    %v1671 = vadd.f32 0.0, %v1670
    %v1672 = vpop.f32.mrb[0].mxu0
    %v1673 = vadd.f32 0.0, %v1672
    %1674 = vmatprep.mubr.bf16.mxu0 0
    %1675 = vmatmul.mubr.bf16.gmra.mrb[0].mxu0 %v592
    %v1676 = vpop.f32.mrb[0].mxu0
    %v1677 = vadd.f32 0.0, %v1676
    %v1678 = vpop.f32.mrb[0].mxu0
    %v1679 = vadd.f32 0.0, %v1678
    %v1680 = vpop.f32.mrb[0].mxu0
    %v1681 = vadd.f32 0.0, %v1680
    %v1682 = vpop.f32.mrb[0].mxu0
    %v1683 = vadd.f32 0.0, %v1682
    %1684 = vdwg.mxu0
    %v1685 = vadd.f32 %v1203, %v1494
    %v1686 = vadd.f32 %v1204, %v1496
    %v1687 = vadd.f32 %v1205, %v1607
    %v1688 = vadd.f32 %v1206, %v1609
    %v1689 = vadd.f32 %v1207, %v1498
    %v1690 = vadd.f32 %v1208, %v1500
    %v1691 = vadd.f32 %v1209, %v1611
    %v1692 = vadd.f32 %v1210, %v1613
    %v1693 = vadd.f32 %v1211, %v1504
    %v1694 = vadd.f32 %v1212, %v1506
    %v1695 = vadd.f32 %v1213, %v1617
    %v1696 = vadd.f32 %v1214, %v1619
    %v1697 = vadd.f32 %v1215, %v1508
    %v1698 = vadd.f32 %v1216, %v1510
    %v1699 = vadd.f32 %v1217, %v1621
    %v1700 = vadd.f32 %v1218, %v1623
    %v1701 = vadd.f32 %v1219, %v1514
    %v1702 = vadd.f32 %v1220, %v1516
    %v1703 = vadd.f32 %v1221, %v1627
    %v1704 = vadd.f32 %v1222, %v1629
    %v1705 = vadd.f32 %v1223, %v1518
    %v1706 = vadd.f32 %v1224, %v1520
    %v1707 = vadd.f32 %v1225, %v1631
    %v1708 = vadd.f32 %v1226, %v1633
    %v1709 = vadd.f32 %v1227, %v1524
    %v1710 = vadd.f32 %v1228, %v1526
    %v1711 = vadd.f32 %v1229, %v1637
    %v1712 = vadd.f32 %v1230, %v1639
    %v1713 = vadd.f32 %v1231, %v1528
    %v1714 = vadd.f32 %v1232, %v1530
    %v1715 = vadd.f32 %v1233, %v1641
    %v1716 = vadd.f32 %v1234, %v1643
    %v1717 = vadd.f32 %v1235, %v1534
    %v1718 = vadd.f32 %v1236, %v1536
    %v1719 = vadd.f32 %v1237, %v1647
    %v1720 = vadd.f32 %v1238, %v1649
    %v1721 = vadd.f32 %v1239, %v1538
    %v1722 = vadd.f32 %v1240, %v1540
    %v1723 = vadd.f32 %v1241, %v1651
    %v1724 = vadd.f32 %v1242, %v1653
    %v1725 = vadd.f32 %v1243, %v1544
    %v1726 = vadd.f32 %v1244, %v1546
    %v1727 = vadd.f32 %v1245, %v1657
    %v1728 = vadd.f32 %v1246, %v1659
    %v1729 = vadd.f32 %v1247, %v1548
    %v1730 = vadd.f32 %v1248, %v1550
    %v1731 = vadd.f32 %v1249, %v1661
    %v1732 = vadd.f32 %v1250, %v1663
    %v1733 = vadd.f32 %v1251, %v1554
    %v1734 = vadd.f32 %v1252, %v1556
    %v1735 = vadd.f32 %v1253, %v1667
    %v1736 = vadd.f32 %v1254, %v1669
    %v1737 = vadd.f32 %v1255, %v1558
    %v1738 = vadd.f32 %v1256, %v1560
    %v1739 = vadd.f32 %v1257, %v1671
    %v1740 = vadd.f32 %v1258, %v1673
    %v1741 = vadd.f32 %v1259, %v1564
    %v1742 = vadd.f32 %v1260, %v1566
    %v1743 = vadd.f32 %v1261, %v1677
    %v1744 = vadd.f32 %v1262, %v1679
    %v1745 = vadd.f32 %v1263, %v1568
    %v1746 = vadd.f32 %v1264, %v1570
    %v1747 = vadd.f32 %v1265, %v1681
    %v1748 = vadd.f32 %v1266, %v1683
    %1749 = vst [vmem:[#allocation3] sm:$0xff] %v1685
    %1750 = vst [vmem:[#allocation3 + $0x8] sm:$0xff] %v1686
    %1751 = vst [vmem:[#allocation3 + $0x10] sm:$0xff] %v1687
    %1752 = vst [vmem:[#allocation3 + $0x18] sm:$0xff] %v1688
    %1753 = vst [vmem:[#allocation3 + $0x20] sm:$0xff] %v1689
    %1754 = vst [vmem:[#allocation3 + $0x28] sm:$0xff] %v1690
    %1755 = vst [vmem:[#allocation3 + $0x30] sm:$0xff] %v1691
    %1756 = vst [vmem:[#allocation3 + $0x38] sm:$0xff] %v1692
    %1757 = vst [vmem:[#allocation3 + $0x40] sm:$0xff] %v1693
    %1758 = vst [vmem:[#allocation3 + $0x48] sm:$0xff] %v1694
    %1759 = vst [vmem:[#allocation3 + $0x50] sm:$0xff] %v1695
    %1760 = vst [vmem:[#allocation3 + $0x58] sm:$0xff] %v1696
    %1761 = vst [vmem:[#allocation3 + $0x60] sm:$0xff] %v1697
    %1762 = vst [vmem:[#allocation3 + $0x68] sm:$0xff] %v1698
    %1763 = vst [vmem:[#allocation3 + $0x70] sm:$0xff] %v1699
    %1764 = vst [vmem:[#allocation3 + $0x78] sm:$0xff] %v1700
    %1765 = vst [vmem:[#allocation3 + $0x80] sm:$0xff] %v1701
    %1766 = vst [vmem:[#allocation3 + $0x88] sm:$0xff] %v1702
    %1767 = vst [vmem:[#allocation3 + $0x90] sm:$0xff] %v1703
    %1768 = vst [vmem:[#allocation3 + $0x98] sm:$0xff] %v1704
    %1769 = vst [vmem:[#allocation3 + $0xa0] sm:$0xff] %v1705
    %1770 = vst [vmem:[#allocation3 + $0xa8] sm:$0xff] %v1706
    %1771 = vst [vmem:[#allocation3 + $0xb0] sm:$0xff] %v1707
    %1772 = vst [vmem:[#allocation3 + $0xb8] sm:$0xff] %v1708
    %1773 = vst [vmem:[#allocation3 + $0xc0] sm:$0xff] %v1709
    %1774 = vst [vmem:[#allocation3 + $0xc8] sm:$0xff] %v1710
    %1775 = vst [vmem:[#allocation3 + $0xd0] sm:$0xff] %v1711
    %1776 = vst [vmem:[#allocation3 + $0xd8] sm:$0xff] %v1712
    %1777 = vst [vmem:[#allocation3 + $0xe0] sm:$0xff] %v1713
    %1778 = vst [vmem:[#allocation3 + $0xe8] sm:$0xff] %v1714
    %1779 = vst [vmem:[#allocation3 + $0xf0] sm:$0xff] %v1715
    %1780 = vst [vmem:[#allocation3 + $0xf8] sm:$0xff] %v1716
    %1781 = vst [vmem:[#allocation3 + $0x100] sm:$0xff] %v1717
    %1782 = vst [vmem:[#allocation3 + $0x108] sm:$0xff] %v1718
    %1783 = vst [vmem:[#allocation3 + $0x110] sm:$0xff] %v1719
    %1784 = vst [vmem:[#allocation3 + $0x118] sm:$0xff] %v1720
    %1785 = vst [vmem:[#allocation3 + $0x120] sm:$0xff] %v1721
    %1786 = vst [vmem:[#allocation3 + $0x128] sm:$0xff] %v1722
    %1787 = vst [vmem:[#allocation3 + $0x130] sm:$0xff] %v1723
    %1788 = vst [vmem:[#allocation3 + $0x138] sm:$0xff] %v1724
    %1789 = vst [vmem:[#allocation3 + $0x140] sm:$0xff] %v1725
    %1790 = vst [vmem:[#allocation3 + $0x148] sm:$0xff] %v1726
    %1791 = vst [vmem:[#allocation3 + $0x150] sm:$0xff] %v1727
    %1792 = vst [vmem:[#allocation3 + $0x158] sm:$0xff] %v1728
    %1793 = vst [vmem:[#allocation3 + $0x160] sm:$0xff] %v1729
    %1794 = vst [vmem:[#allocation3 + $0x168] sm:$0xff] %v1730
    %1795 = vst [vmem:[#allocation3 + $0x170] sm:$0xff] %v1731
    %1796 = vst [vmem:[#allocation3 + $0x178] sm:$0xff] %v1732
    %1797 = vst [vmem:[#allocation3 + $0x180] sm:$0xff] %v1733
    %1798 = vst [vmem:[#allocation3 + $0x188] sm:$0xff] %v1734
    %1799 = vst [vmem:[#allocation3 + $0x190] sm:$0xff] %v1735
    %1800 = vst [vmem:[#allocation3 + $0x198] sm:$0xff] %v1736
    %1801 = vst [vmem:[#allocation3 + $0x1a0] sm:$0xff] %v1737
    %1802 = vst [vmem:[#allocation3 + $0x1a8] sm:$0xff] %v1738
    %1803 = vst [vmem:[#allocation3 + $0x1b0] sm:$0xff] %v1739
    %1804 = vst [vmem:[#allocation3 + $0x1b8] sm:$0xff] %v1740
    %1805 = vst [vmem:[#allocation3 + $0x1c0] sm:$0xff] %v1741
    %1806 = vst [vmem:[#allocation3 + $0x1c8] sm:$0xff] %v1742
    %1807 = vst [vmem:[#allocation3 + $0x1d0] sm:$0xff] %v1743
    %1808 = vst [vmem:[#allocation3 + $0x1d8] sm:$0xff] %v1744
    %1809 = vst [vmem:[#allocation3 + $0x1e0] sm:$0xff] %v1745
    %1810 = vst [vmem:[#allocation3 + $0x1e8] sm:$0xff] %v1746
    %1811 = vst [vmem:[#allocation3 + $0x1f0] sm:$0xff] %v1747
    %1812 = vst [vmem:[#allocation3 + $0x1f8] sm:$0xff] %v1748
    // Predicated region
    $region80: #{spatial_transformer_forward.19} parent=1 // pred_check
      %p1813 = pneg %p214
    $region81: #{spatial_transformer_forward.19} parent=1 // pred_check_branch
      %1815 = sbr.rel (%p1813) target = $region83
    $region82: #{spatial_transformer_forward.19} parent=1 // pred_region
      %v1816 = vld [vmem:[#allocation2] sm:$0xff]
      %v1817 = vld [vmem:[#allocation2 + $0x8] sm:$0xff]
      %v1818 = vld [vmem:[#allocation2 + $0x10] sm:$0xff]
      %v1819 = vld [vmem:[#allocation2 + $0x18] sm:$0xff]
      %v1820 = vld [vmem:[#allocation2 + $0x20] sm:$0xff]
      %v1821 = vld [vmem:[#allocation2 + $0x28] sm:$0xff]
      %v1822 = vld [vmem:[#allocation2 + $0x30] sm:$0xff]
      %v1823 = vld [vmem:[#allocation2 + $0x38] sm:$0xff]
      %v1824 = vld [vmem:[#allocation2 + $0x40] sm:$0xff]
      %v1825 = vld [vmem:[#allocation2 + $0x48] sm:$0xff]
      %v1826 = vld [vmem:[#allocation2 + $0x50] sm:$0xff]
      %v1827 = vld [vmem:[#allocation2 + $0x58] sm:$0xff]
      %v1828 = vld [vmem:[#allocation2 + $0x60] sm:$0xff]
      %v1829 = vld [vmem:[#allocation2 + $0x68] sm:$0xff]
      %v1830 = vld [vmem:[#allocation2 + $0x70] sm:$0xff]
      %v1831 = vld [vmem:[#allocation2 + $0x78] sm:$0xff]
      %v1832 = vld [vmem:[#allocation2 + $0x80] sm:$0xff]
      %v1833 = vld [vmem:[#allocation2 + $0x88] sm:$0xff]
      %v1834 = vld [vmem:[#allocation2 + $0x90] sm:$0xff]
      %v1835 = vld [vmem:[#allocation2 + $0x98] sm:$0xff]
      %v1836 = vld [vmem:[#allocation2 + $0xa0] sm:$0xff]
      %v1837 = vld [vmem:[#allocation2 + $0xa8] sm:$0xff]
      %v1838 = vld [vmem:[#allocation2 + $0xb0] sm:$0xff]
      %v1839 = vld [vmem:[#allocation2 + $0xb8] sm:$0xff]
      %v1840 = vld [vmem:[#allocation2 + $0xc0] sm:$0xff]
      %v1841 = vld [vmem:[#allocation2 + $0xc8] sm:$0xff]
      %v1842 = vld [vmem:[#allocation2 + $0xd0] sm:$0xff]
      %v1843 = vld [vmem:[#allocation2 + $0xd8] sm:$0xff]
      %v1844 = vld [vmem:[#allocation2 + $0xe0] sm:$0xff]
      %v1845 = vld [vmem:[#allocation2 + $0xe8] sm:$0xff]
      %v1846 = vld [vmem:[#allocation2 + $0xf0] sm:$0xff]
      %v1847 = vld [vmem:[#allocation2 + $0xf8] sm:$0xff]
      %v1848 = vld [vmem:[#allocation2 + $0x100] sm:$0xff]
      %v1849 = vld [vmem:[#allocation2 + $0x108] sm:$0xff]
      %v1850 = vld [vmem:[#allocation2 + $0x110] sm:$0xff]
      %v1851 = vld [vmem:[#allocation2 + $0x118] sm:$0xff]
      %v1852 = vld [vmem:[#allocation2 + $0x120] sm:$0xff]
      %v1853 = vld [vmem:[#allocation2 + $0x128] sm:$0xff]
      %v1854 = vld [vmem:[#allocation2 + $0x130] sm:$0xff]
      %v1855 = vld [vmem:[#allocation2 + $0x138] sm:$0xff]
      %v1856 = vld [vmem:[#allocation2 + $0x140] sm:$0xff]
      %v1857 = vld [vmem:[#allocation2 + $0x148] sm:$0xff]
      %v1858 = vld [vmem:[#allocation2 + $0x150] sm:$0xff]
      %v1859 = vld [vmem:[#allocation2 + $0x158] sm:$0xff]
      %v1860 = vld [vmem:[#allocation2 + $0x160] sm:$0xff]
      %v1861 = vld [vmem:[#allocation2 + $0x168] sm:$0xff]
      %v1862 = vld [vmem:[#allocation2 + $0x170] sm:$0xff]
      %v1863 = vld [vmem:[#allocation2 + $0x178] sm:$0xff]
      %v1864 = vld [vmem:[#allocation2 + $0x180] sm:$0xff]
      %v1865 = vld [vmem:[#allocation2 + $0x188] sm:$0xff]
      %v1866 = vld [vmem:[#allocation2 + $0x190] sm:$0xff]
      %v1867 = vld [vmem:[#allocation2 + $0x198] sm:$0xff]
      %v1868 = vld [vmem:[#allocation2 + $0x1a0] sm:$0xff]
      %v1869 = vld [vmem:[#allocation2 + $0x1a8] sm:$0xff]
      %v1870 = vld [vmem:[#allocation2 + $0x1b0] sm:$0xff]
      %v1871 = vld [vmem:[#allocation2 + $0x1b8] sm:$0xff]
      %v1872 = vld [vmem:[#allocation2 + $0x1c0] sm:$0xff]
      %v1873 = vld [vmem:[#allocation2 + $0x1c8] sm:$0xff]
      %v1874 = vld [vmem:[#allocation2 + $0x1d0] sm:$0xff]
      %v1875 = vld [vmem:[#allocation2 + $0x1d8] sm:$0xff]
      %v1876 = vld [vmem:[#allocation2 + $0x1e0] sm:$0xff]
      %v1877 = vld [vmem:[#allocation2 + $0x1e8] sm:$0xff]
      %v1878 = vld [vmem:[#allocation2 + $0x1f0] sm:$0xff]
      %v1879 = vld [vmem:[#allocation2 + $0x1f8] sm:$0xff]
      %v1880 = vld [vmem:[%s3] sm:$0xf]
      %v1882 = vlaneseq
      %v1883 = vshrl.u32 %v1882, 7
      %v1884 = vsub.s32 0, %v1883
      %v1885 = vrot.slane %v1880, %v1884
      %v1886 = vlaneseq
      %v1887 = vshrl.u32 %v1886, 7
      %v1888 = vsub.s32 1, %v1887
      %v1889 = vrot.slane %v1880, %v1888
      %v1890 = vlaneseq
      %v1891 = vshrl.u32 %v1890, 7
      %v1892 = vsub.s32 2, %v1891
      %v1893 = vrot.slane %v1880, %v1892
      %v1894 = vlaneseq
      %v1895 = vshrl.u32 %v1894, 7
      %v1896 = vsub.s32 3, %v1895
      %v1897 = vrot.slane %v1880, %v1896
      %v1902 = vadd.f32 %v1816, %v1885
      %v1903 = vadd.f32 %v1817, %v1889
      %v1904 = vadd.f32 %v1818, %v1893
      %v1905 = vadd.f32 %v1819, %v1897
      %v1906 = vadd.f32 %v1820, %v1885
      %v1907 = vadd.f32 %v1821, %v1889
      %v1908 = vadd.f32 %v1822, %v1893
      %v1909 = vadd.f32 %v1823, %v1897
      %v1910 = vadd.f32 %v1824, %v1885
      %v1911 = vadd.f32 %v1825, %v1889
      %v1912 = vadd.f32 %v1826, %v1893
      %v1913 = vadd.f32 %v1827, %v1897
      %v1914 = vadd.f32 %v1828, %v1885
      %v1915 = vadd.f32 %v1829, %v1889
      %v1916 = vadd.f32 %v1830, %v1893
      %v1917 = vadd.f32 %v1831, %v1897
      %v1918 = vadd.f32 %v1832, %v1885
      %v1919 = vadd.f32 %v1833, %v1889
      %v1920 = vadd.f32 %v1834, %v1893
      %v1921 = vadd.f32 %v1835, %v1897
      %v1922 = vadd.f32 %v1836, %v1885
      %v1923 = vadd.f32 %v1837, %v1889
      %v1924 = vadd.f32 %v1838, %v1893
      %v1925 = vadd.f32 %v1839, %v1897
      %v1926 = vadd.f32 %v1840, %v1885
      %v1927 = vadd.f32 %v1841, %v1889
      %v1928 = vadd.f32 %v1842, %v1893
      %v1929 = vadd.f32 %v1843, %v1897
      %v1930 = vadd.f32 %v1844, %v1885
      %v1931 = vadd.f32 %v1845, %v1889
      %v1932 = vadd.f32 %v1846, %v1893
      %v1933 = vadd.f32 %v1847, %v1897
      %v1934 = vadd.f32 %v1848, %v1885
      %v1935 = vadd.f32 %v1849, %v1889
      %v1936 = vadd.f32 %v1850, %v1893
      %v1937 = vadd.f32 %v1851, %v1897
      %v1938 = vadd.f32 %v1852, %v1885
      %v1939 = vadd.f32 %v1853, %v1889
      %v1940 = vadd.f32 %v1854, %v1893
      %v1941 = vadd.f32 %v1855, %v1897
      %v1942 = vadd.f32 %v1856, %v1885
      %v1943 = vadd.f32 %v1857, %v1889
      %v1944 = vadd.f32 %v1858, %v1893
      %v1945 = vadd.f32 %v1859, %v1897
      %v1946 = vadd.f32 %v1860, %v1885
      %v1947 = vadd.f32 %v1861, %v1889
      %v1948 = vadd.f32 %v1862, %v1893
      %v1949 = vadd.f32 %v1863, %v1897
      %v1950 = vadd.f32 %v1864, %v1885
      %v1951 = vadd.f32 %v1865, %v1889
      %v1952 = vadd.f32 %v1866, %v1893
      %v1953 = vadd.f32 %v1867, %v1897
      %v1954 = vadd.f32 %v1868, %v1885
      %v1955 = vadd.f32 %v1869, %v1889
      %v1956 = vadd.f32 %v1870, %v1893
      %v1957 = vadd.f32 %v1871, %v1897
      %v1958 = vadd.f32 %v1872, %v1885
      %v1959 = vadd.f32 %v1873, %v1889
      %v1960 = vadd.f32 %v1874, %v1893
      %v1961 = vadd.f32 %v1875, %v1897
      %v1962 = vadd.f32 %v1876, %v1885
      %v1963 = vadd.f32 %v1877, %v1889
      %v1964 = vadd.f32 %v1878, %v1893
      %v1965 = vadd.f32 %v1879, %v1897
      %v1966 = vld [vmem:[#allocation3] sm:$0xff]
      %v1967 = vld [vmem:[#allocation3 + $0x8] sm:$0xff]
      %v1968 = vld [vmem:[#allocation3 + $0x10] sm:$0xff]
      %v1969 = vld [vmem:[#allocation3 + $0x18] sm:$0xff]
      %v1970 = vld [vmem:[#allocation3 + $0x20] sm:$0xff]
      %v1971 = vld [vmem:[#allocation3 + $0x28] sm:$0xff]
      %v1972 = vld [vmem:[#allocation3 + $0x30] sm:$0xff]
      %v1973 = vld [vmem:[#allocation3 + $0x38] sm:$0xff]
      %v1974 = vld [vmem:[#allocation3 + $0x40] sm:$0xff]
      %v1975 = vld [vmem:[#allocation3 + $0x48] sm:$0xff]
      %v1976 = vld [vmem:[#allocation3 + $0x50] sm:$0xff]
      %v1977 = vld [vmem:[#allocation3 + $0x58] sm:$0xff]
      %v1978 = vld [vmem:[#allocation3 + $0x60] sm:$0xff]
      %v1979 = vld [vmem:[#allocation3 + $0x68] sm:$0xff]
      %v1980 = vld [vmem:[#allocation3 + $0x70] sm:$0xff]
      %v1981 = vld [vmem:[#allocation3 + $0x78] sm:$0xff]
      %v1982 = vld [vmem:[#allocation3 + $0x80] sm:$0xff]
      %v1983 = vld [vmem:[#allocation3 + $0x88] sm:$0xff]
      %v1984 = vld [vmem:[#allocation3 + $0x90] sm:$0xff]
      %v1985 = vld [vmem:[#allocation3 + $0x98] sm:$0xff]
      %v1986 = vld [vmem:[#allocation3 + $0xa0] sm:$0xff]
      %v1987 = vld [vmem:[#allocation3 + $0xa8] sm:$0xff]
      %v1988 = vld [vmem:[#allocation3 + $0xb0] sm:$0xff]
      %v1989 = vld [vmem:[#allocation3 + $0xb8] sm:$0xff]
      %v1990 = vld [vmem:[#allocation3 + $0xc0] sm:$0xff]
      %v1991 = vld [vmem:[#allocation3 + $0xc8] sm:$0xff]
      %v1992 = vld [vmem:[#allocation3 + $0xd0] sm:$0xff]
      %v1993 = vld [vmem:[#allocation3 + $0xd8] sm:$0xff]
      %v1994 = vld [vmem:[#allocation3 + $0xe0] sm:$0xff]
      %v1995 = vld [vmem:[#allocation3 + $0xe8] sm:$0xff]
      %v1996 = vld [vmem:[#allocation3 + $0xf0] sm:$0xff]
      %v1997 = vld [vmem:[#allocation3 + $0xf8] sm:$0xff]
      %v1998 = vld [vmem:[#allocation3 + $0x100] sm:$0xff]
      %v1999 = vld [vmem:[#allocation3 + $0x108] sm:$0xff]
      %v2000 = vld [vmem:[#allocation3 + $0x110] sm:$0xff]
      %v2001 = vld [vmem:[#allocation3 + $0x118] sm:$0xff]
      %v2002 = vld [vmem:[#allocation3 + $0x120] sm:$0xff]
      %v2003 = vld [vmem:[#allocation3 + $0x128] sm:$0xff]
      %v2004 = vld [vmem:[#allocation3 + $0x130] sm:$0xff]
      %v2005 = vld [vmem:[#allocation3 + $0x138] sm:$0xff]
      %v2006 = vld [vmem:[#allocation3 + $0x140] sm:$0xff]
      %v2007 = vld [vmem:[#allocation3 + $0x148] sm:$0xff]
      %v2008 = vld [vmem:[#allocation3 + $0x150] sm:$0xff]
      %v2009 = vld [vmem:[#allocation3 + $0x158] sm:$0xff]
      %v2010 = vld [vmem:[#allocation3 + $0x160] sm:$0xff]
      %v2011 = vld [vmem:[#allocation3 + $0x168] sm:$0xff]
      %v2012 = vld [vmem:[#allocation3 + $0x170] sm:$0xff]
      %v2013 = vld [vmem:[#allocation3 + $0x178] sm:$0xff]
      %v2014 = vld [vmem:[#allocation3 + $0x180] sm:$0xff]
      %v2015 = vld [vmem:[#allocation3 + $0x188] sm:$0xff]
      %v2016 = vld [vmem:[#allocation3 + $0x190] sm:$0xff]
      %v2017 = vld [vmem:[#allocation3 + $0x198] sm:$0xff]
      %v2018 = vld [vmem:[#allocation3 + $0x1a0] sm:$0xff]
      %v2019 = vld [vmem:[#allocation3 + $0x1a8] sm:$0xff]
      %v2020 = vld [vmem:[#allocation3 + $0x1b0] sm:$0xff]
      %v2021 = vld [vmem:[#allocation3 + $0x1b8] sm:$0xff]
      %v2022 = vld [vmem:[#allocation3 + $0x1c0] sm:$0xff]
      %v2023 = vld [vmem:[#allocation3 + $0x1c8] sm:$0xff]
      %v2024 = vld [vmem:[#allocation3 + $0x1d0] sm:$0xff]
      %v2025 = vld [vmem:[#allocation3 + $0x1d8] sm:$0xff]
      %v2026 = vld [vmem:[#allocation3 + $0x1e0] sm:$0xff]
      %v2027 = vld [vmem:[#allocation3 + $0x1e8] sm:$0xff]
      %v2028 = vld [vmem:[#allocation3 + $0x1f0] sm:$0xff]
      %v2029 = vld [vmem:[#allocation3 + $0x1f8] sm:$0xff]
      %v2030 = vld [vmem:[%s210] sm:$0xf]
      %v2032 = vlaneseq
      %v2033 = vshrl.u32 %v2032, 7
      %v2034 = vsub.s32 0, %v2033
      %v2035 = vrot.slane %v2030, %v2034
      %v2036 = vlaneseq
      %v2037 = vshrl.u32 %v2036, 7
      %v2038 = vsub.s32 1, %v2037
      %v2039 = vrot.slane %v2030, %v2038
      %v2040 = vlaneseq
      %v2041 = vshrl.u32 %v2040, 7
      %v2042 = vsub.s32 2, %v2041
      %v2043 = vrot.slane %v2030, %v2042
      %v2044 = vlaneseq
      %v2045 = vshrl.u32 %v2044, 7
      %v2046 = vsub.s32 3, %v2045
      %v2047 = vrot.slane %v2030, %v2046
      %v2052 = vadd.f32 %v1966, %v2035
      %v2053 = vadd.f32 %v1967, %v2039
      %v2054 = vadd.f32 %v1968, %v2043
      %v2055 = vadd.f32 %v1969, %v2047
      %v2056 = vadd.f32 %v1970, %v2035
      %v2057 = vadd.f32 %v1971, %v2039
      %v2058 = vadd.f32 %v1972, %v2043
      %v2059 = vadd.f32 %v1973, %v2047
      %v2060 = vadd.f32 %v1974, %v2035
      %v2061 = vadd.f32 %v1975, %v2039
      %v2062 = vadd.f32 %v1976, %v2043
      %v2063 = vadd.f32 %v1977, %v2047
      %v2064 = vadd.f32 %v1978, %v2035
      %v2065 = vadd.f32 %v1979, %v2039
      %v2066 = vadd.f32 %v1980, %v2043
      %v2067 = vadd.f32 %v1981, %v2047
      %v2068 = vadd.f32 %v1982, %v2035
      %v2069 = vadd.f32 %v1983, %v2039
      %v2070 = vadd.f32 %v1984, %v2043
      %v2071 = vadd.f32 %v1985, %v2047
      %v2072 = vadd.f32 %v1986, %v2035
      %v2073 = vadd.f32 %v1987, %v2039
      %v2074 = vadd.f32 %v1988, %v2043
      %v2075 = vadd.f32 %v1989, %v2047
      %v2076 = vadd.f32 %v1990, %v2035
      %v2077 = vadd.f32 %v1991, %v2039
      %v2078 = vadd.f32 %v1992, %v2043
      %v2079 = vadd.f32 %v1993, %v2047
      %v2080 = vadd.f32 %v1994, %v2035
      %v2081 = vadd.f32 %v1995, %v2039
      %v2082 = vadd.f32 %v1996, %v2043
      %v2083 = vadd.f32 %v1997, %v2047
      %v2084 = vadd.f32 %v1998, %v2035
      %v2085 = vadd.f32 %v1999, %v2039
      %v2086 = vadd.f32 %v2000, %v2043
      %v2087 = vadd.f32 %v2001, %v2047
      %v2088 = vadd.f32 %v2002, %v2035
      %v2089 = vadd.f32 %v2003, %v2039
      %v2090 = vadd.f32 %v2004, %v2043
      %v2091 = vadd.f32 %v2005, %v2047
      %v2092 = vadd.f32 %v2006, %v2035
      %v2093 = vadd.f32 %v2007, %v2039
      %v2094 = vadd.f32 %v2008, %v2043
      %v2095 = vadd.f32 %v2009, %v2047
      %v2096 = vadd.f32 %v2010, %v2035
      %v2097 = vadd.f32 %v2011, %v2039
      %v2098 = vadd.f32 %v2012, %v2043
      %v2099 = vadd.f32 %v2013, %v2047
      %v2100 = vadd.f32 %v2014, %v2035
      %v2101 = vadd.f32 %v2015, %v2039
      %v2102 = vadd.f32 %v2016, %v2043
      %v2103 = vadd.f32 %v2017, %v2047
      %v2104 = vadd.f32 %v2018, %v2035
      %v2105 = vadd.f32 %v2019, %v2039
      %v2106 = vadd.f32 %v2020, %v2043
      %v2107 = vadd.f32 %v2021, %v2047
      %v2108 = vadd.f32 %v2022, %v2035
      %v2109 = vadd.f32 %v2023, %v2039
      %v2110 = vadd.f32 %v2024, %v2043
      %v2111 = vadd.f32 %v2025, %v2047
      %v2112 = vadd.f32 %v2026, %v2035
      %v2113 = vadd.f32 %v2027, %v2039
      %v2114 = vadd.f32 %v2028, %v2043
      %v2115 = vadd.f32 %v2029, %v2047
      %v2116 = vmul.f32 %v2052, 0.5
      %v2117 = vmul.f32 %v2053, 0.5
      %v2118 = vmul.f32 %v2054, 0.5
      %v2119 = vmul.f32 %v2055, 0.5
      %v2120 = vmul.f32 %v2056, 0.5
      %v2121 = vmul.f32 %v2057, 0.5
      %v2122 = vmul.f32 %v2058, 0.5
      %v2123 = vmul.f32 %v2059, 0.5
      %v2124 = vmul.f32 %v2060, 0.5
      %v2125 = vmul.f32 %v2061, 0.5
      %v2126 = vmul.f32 %v2062, 0.5
      %v2127 = vmul.f32 %v2063, 0.5
      %v2128 = vmul.f32 %v2064, 0.5
      %v2129 = vmul.f32 %v2065, 0.5
      %v2130 = vmul.f32 %v2066, 0.5
      %v2131 = vmul.f32 %v2067, 0.5
      %v2132 = vmul.f32 %v2068, 0.5
      %v2133 = vmul.f32 %v2069, 0.5
      %v2134 = vmul.f32 %v2070, 0.5
      %v2135 = vmul.f32 %v2071, 0.5
      %v2136 = vmul.f32 %v2072, 0.5
      %v2137 = vmul.f32 %v2073, 0.5
      %v2138 = vmul.f32 %v2074, 0.5
      %v2139 = vmul.f32 %v2075, 0.5
      %v2140 = vmul.f32 %v2076, 0.5
      %v2141 = vmul.f32 %v2077, 0.5
      %v2142 = vmul.f32 %v2078, 0.5
      %v2143 = vmul.f32 %v2079, 0.5
      %v2144 = vmul.f32 %v2080, 0.5
      %v2145 = vmul.f32 %v2081, 0.5
      %v2146 = vmul.f32 %v2082, 0.5
      %v2147 = vmul.f32 %v2083, 0.5
      %v2148 = vmul.f32 %v2084, 0.5
      %v2149 = vmul.f32 %v2085, 0.5
      %v2150 = vmul.f32 %v2086, 0.5
      %v2151 = vmul.f32 %v2087, 0.5
      %v2152 = vmul.f32 %v2088, 0.5
      %v2153 = vmul.f32 %v2089, 0.5
      %v2154 = vmul.f32 %v2090, 0.5
      %v2155 = vmul.f32 %v2091, 0.5
      %v2156 = vmul.f32 %v2092, 0.5
      %v2157 = vmul.f32 %v2093, 0.5
      %v2158 = vmul.f32 %v2094, 0.5
      %v2159 = vmul.f32 %v2095, 0.5
      %v2160 = vmul.f32 %v2096, 0.5
      %v2161 = vmul.f32 %v2097, 0.5
      %v2162 = vmul.f32 %v2098, 0.5
      %v2163 = vmul.f32 %v2099, 0.5
      %v2164 = vmul.f32 %v2100, 0.5
      %v2165 = vmul.f32 %v2101, 0.5
      %v2166 = vmul.f32 %v2102, 0.5
      %v2167 = vmul.f32 %v2103, 0.5
      %v2168 = vmul.f32 %v2104, 0.5
      %v2169 = vmul.f32 %v2105, 0.5
      %v2170 = vmul.f32 %v2106, 0.5
      %v2171 = vmul.f32 %v2107, 0.5
      %v2172 = vmul.f32 %v2108, 0.5
      %v2173 = vmul.f32 %v2109, 0.5
      %v2174 = vmul.f32 %v2110, 0.5
      %v2175 = vmul.f32 %v2111, 0.5
      %v2176 = vmul.f32 %v2112, 0.5
      %v2177 = vmul.f32 %v2113, 0.5
      %v2178 = vmul.f32 %v2114, 0.5
      %v2179 = vmul.f32 %v2115, 0.5
      %v2180 = vmul.f32 %v2052, 0.70710677
      %v2181 = vmul.f32 %v2053, 0.70710677
      %v2182 = vmul.f32 %v2054, 0.70710677
      %v2183 = vmul.f32 %v2055, 0.70710677
      %v2184 = vmul.f32 %v2056, 0.70710677
      %v2185 = vmul.f32 %v2057, 0.70710677
      %v2186 = vmul.f32 %v2058, 0.70710677
      %v2187 = vmul.f32 %v2059, 0.70710677
      %v2188 = vmul.f32 %v2060, 0.70710677
      %v2189 = vmul.f32 %v2061, 0.70710677
      %v2190 = vmul.f32 %v2062, 0.70710677
      %v2191 = vmul.f32 %v2063, 0.70710677
      %v2192 = vmul.f32 %v2064, 0.70710677
      %v2193 = vmul.f32 %v2065, 0.70710677
      %v2194 = vmul.f32 %v2066, 0.70710677
      %v2195 = vmul.f32 %v2067, 0.70710677
      %v2196 = vmul.f32 %v2068, 0.70710677
      %v2197 = vmul.f32 %v2069, 0.70710677
      %v2198 = vmul.f32 %v2070, 0.70710677
      %v2199 = vmul.f32 %v2071, 0.70710677
      %v2200 = vmul.f32 %v2072, 0.70710677
      %v2201 = vmul.f32 %v2073, 0.70710677
      %v2202 = vmul.f32 %v2074, 0.70710677
      %v2203 = vmul.f32 %v2075, 0.70710677
      %v2204 = vmul.f32 %v2076, 0.70710677
      %v2205 = vmul.f32 %v2077, 0.70710677
      %v2206 = vmul.f32 %v2078, 0.70710677
      %v2207 = vmul.f32 %v2079, 0.70710677
      %v2208 = vmul.f32 %v2080, 0.70710677
      %v2209 = vmul.f32 %v2081, 0.70710677
      %v2210 = vmul.f32 %v2082, 0.70710677
      %v2211 = vmul.f32 %v2083, 0.70710677
      %v2212 = vmul.f32 %v2084, 0.70710677
      %v2213 = vmul.f32 %v2085, 0.70710677
      %v2214 = vmul.f32 %v2086, 0.70710677
      %v2215 = vmul.f32 %v2087, 0.70710677
      %v2216 = vmul.f32 %v2088, 0.70710677
      %v2217 = vmul.f32 %v2089, 0.70710677
      %v2218 = vmul.f32 %v2090, 0.70710677
      %v2219 = vmul.f32 %v2091, 0.70710677
      %v2220 = vmul.f32 %v2092, 0.70710677
      %v2221 = vmul.f32 %v2093, 0.70710677
      %v2222 = vmul.f32 %v2094, 0.70710677
      %v2223 = vmul.f32 %v2095, 0.70710677
      %v2224 = vmul.f32 %v2096, 0.70710677
      %v2225 = vmul.f32 %v2097, 0.70710677
      %v2226 = vmul.f32 %v2098, 0.70710677
      %v2227 = vmul.f32 %v2099, 0.70710677
      %v2228 = vmul.f32 %v2100, 0.70710677
      %v2229 = vmul.f32 %v2101, 0.70710677
      %v2230 = vmul.f32 %v2102, 0.70710677
      %v2231 = vmul.f32 %v2103, 0.70710677
      %v2232 = vmul.f32 %v2104, 0.70710677
      %v2233 = vmul.f32 %v2105, 0.70710677
      %v2234 = vmul.f32 %v2106, 0.70710677
      %v2235 = vmul.f32 %v2107, 0.70710677
      %v2236 = vmul.f32 %v2108, 0.70710677
      %v2237 = vmul.f32 %v2109, 0.70710677
      %v2238 = vmul.f32 %v2110, 0.70710677
      %v2239 = vmul.f32 %v2111, 0.70710677
      %v2240 = vmul.f32 %v2112, 0.70710677
      %v2241 = vmul.f32 %v2113, 0.70710677
      %v2242 = vmul.f32 %v2114, 0.70710677
      %v2243 = vmul.f32 %v2115, 0.70710677
      %v2244 = verf.f32.pop %v2180
      %v2245 = verf.f32.pop %v2181
      %v2246 = verf.f32.pop %v2182
      %v2247 = verf.f32.pop %v2183
      %v2248 = verf.f32.pop %v2184
      %v2249 = verf.f32.pop %v2185
      %v2250 = verf.f32.pop %v2186
      %v2251 = verf.f32.pop %v2187
      %v2252 = verf.f32.pop %v2188
      %v2253 = verf.f32.pop %v2189
      %v2254 = verf.f32.pop %v2190
      %v2255 = verf.f32.pop %v2191
      %v2256 = verf.f32.pop %v2192
      %v2257 = verf.f32.pop %v2193
      %v2258 = verf.f32.pop %v2194
      %v2259 = verf.f32.pop %v2195
      %v2260 = verf.f32.pop %v2196
      %v2261 = verf.f32.pop %v2197
      %v2262 = verf.f32.pop %v2198
      %v2263 = verf.f32.pop %v2199
      %v2264 = verf.f32.pop %v2200
      %v2265 = verf.f32.pop %v2201
      %v2266 = verf.f32.pop %v2202
      %v2267 = verf.f32.pop %v2203
      %v2268 = verf.f32.pop %v2204
      %v2269 = verf.f32.pop %v2205
      %v2270 = verf.f32.pop %v2206
      %v2271 = verf.f32.pop %v2207
      %v2272 = verf.f32.pop %v2208
      %v2273 = verf.f32.pop %v2209
      %v2274 = verf.f32.pop %v2210
      %v2275 = verf.f32.pop %v2211
      %v2276 = verf.f32.pop %v2212
      %v2277 = verf.f32.pop %v2213
      %v2278 = verf.f32.pop %v2214
      %v2279 = verf.f32.pop %v2215
      %v2280 = verf.f32.pop %v2216
      %v2281 = verf.f32.pop %v2217
      %v2282 = verf.f32.pop %v2218
      %v2283 = verf.f32.pop %v2219
      %v2284 = verf.f32.pop %v2220
      %v2285 = verf.f32.pop %v2221
      %v2286 = verf.f32.pop %v2222
      %v2287 = verf.f32.pop %v2223
      %v2288 = verf.f32.pop %v2224
      %v2289 = verf.f32.pop %v2225
      %v2290 = verf.f32.pop %v2226
      %v2291 = verf.f32.pop %v2227
      %v2292 = verf.f32.pop %v2228
      %v2293 = verf.f32.pop %v2229
      %v2294 = verf.f32.pop %v2230
      %v2295 = verf.f32.pop %v2231
      %v2296 = verf.f32.pop %v2232
      %v2297 = verf.f32.pop %v2233
      %v2298 = verf.f32.pop %v2234
      %v2299 = verf.f32.pop %v2235
      %v2300 = verf.f32.pop %v2236
      %v2301 = verf.f32.pop %v2237
      %v2302 = verf.f32.pop %v2238
      %v2303 = verf.f32.pop %v2239
      %v2304 = verf.f32.pop %v2240
      %v2305 = verf.f32.pop %v2241
      %v2306 = verf.f32.pop %v2242
      %v2307 = verf.f32.pop %v2243
      %v2308 = vadd.f32 %v2244, 1.0
      %v2309 = vadd.f32 %v2245, 1.0
      %v2310 = vadd.f32 %v2246, 1.0
      %v2311 = vadd.f32 %v2247, 1.0
      %v2312 = vadd.f32 %v2248, 1.0
      %v2313 = vadd.f32 %v2249, 1.0
      %v2314 = vadd.f32 %v2250, 1.0
      %v2315 = vadd.f32 %v2251, 1.0
      %v2316 = vadd.f32 %v2252, 1.0
      %v2317 = vadd.f32 %v2253, 1.0
      %v2318 = vadd.f32 %v2254, 1.0
      %v2319 = vadd.f32 %v2255, 1.0
      %v2320 = vadd.f32 %v2256, 1.0
      %v2321 = vadd.f32 %v2257, 1.0
      %v2322 = vadd.f32 %v2258, 1.0
      %v2323 = vadd.f32 %v2259, 1.0
      %v2324 = vadd.f32 %v2260, 1.0
      %v2325 = vadd.f32 %v2261, 1.0
      %v2326 = vadd.f32 %v2262, 1.0
      %v2327 = vadd.f32 %v2263, 1.0
      %v2328 = vadd.f32 %v2264, 1.0
      %v2329 = vadd.f32 %v2265, 1.0
      %v2330 = vadd.f32 %v2266, 1.0
      %v2331 = vadd.f32 %v2267, 1.0
      %v2332 = vadd.f32 %v2268, 1.0
      %v2333 = vadd.f32 %v2269, 1.0
      %v2334 = vadd.f32 %v2270, 1.0
      %v2335 = vadd.f32 %v2271, 1.0
      %v2336 = vadd.f32 %v2272, 1.0
      %v2337 = vadd.f32 %v2273, 1.0
      %v2338 = vadd.f32 %v2274, 1.0
      %v2339 = vadd.f32 %v2275, 1.0
      %v2340 = vadd.f32 %v2276, 1.0
      %v2341 = vadd.f32 %v2277, 1.0
      %v2342 = vadd.f32 %v2278, 1.0
      %v2343 = vadd.f32 %v2279, 1.0
      %v2344 = vadd.f32 %v2280, 1.0
      %v2345 = vadd.f32 %v2281, 1.0
      %v2346 = vadd.f32 %v2282, 1.0
      %v2347 = vadd.f32 %v2283, 1.0
      %v2348 = vadd.f32 %v2284, 1.0
      %v2349 = vadd.f32 %v2285, 1.0
      %v2350 = vadd.f32 %v2286, 1.0
      %v2351 = vadd.f32 %v2287, 1.0
      %v2352 = vadd.f32 %v2288, 1.0
      %v2353 = vadd.f32 %v2289, 1.0
      %v2354 = vadd.f32 %v2290, 1.0
      %v2355 = vadd.f32 %v2291, 1.0
      %v2356 = vadd.f32 %v2292, 1.0
      %v2357 = vadd.f32 %v2293, 1.0
      %v2358 = vadd.f32 %v2294, 1.0
      %v2359 = vadd.f32 %v2295, 1.0
      %v2360 = vadd.f32 %v2296, 1.0
      %v2361 = vadd.f32 %v2297, 1.0
      %v2362 = vadd.f32 %v2298, 1.0
      %v2363 = vadd.f32 %v2299, 1.0
      %v2364 = vadd.f32 %v2300, 1.0
      %v2365 = vadd.f32 %v2301, 1.0
      %v2366 = vadd.f32 %v2302, 1.0
      %v2367 = vadd.f32 %v2303, 1.0
      %v2368 = vadd.f32 %v2304, 1.0
      %v2369 = vadd.f32 %v2305, 1.0
      %v2370 = vadd.f32 %v2306, 1.0
      %v2371 = vadd.f32 %v2307, 1.0
      %v2372 = vmul.f32 %v2116, %v2308
      %v2373 = vmul.f32 %v2117, %v2309
      %v2374 = vmul.f32 %v2118, %v2310
      %v2375 = vmul.f32 %v2119, %v2311
      %v2376 = vmul.f32 %v2120, %v2312
      %v2377 = vmul.f32 %v2121, %v2313
      %v2378 = vmul.f32 %v2122, %v2314
      %v2379 = vmul.f32 %v2123, %v2315
      %v2380 = vmul.f32 %v2124, %v2316
      %v2381 = vmul.f32 %v2125, %v2317
      %v2382 = vmul.f32 %v2126, %v2318
      %v2383 = vmul.f32 %v2127, %v2319
      %v2384 = vmul.f32 %v2128, %v2320
      %v2385 = vmul.f32 %v2129, %v2321
      %v2386 = vmul.f32 %v2130, %v2322
      %v2387 = vmul.f32 %v2131, %v2323
      %v2388 = vmul.f32 %v2132, %v2324
      %v2389 = vmul.f32 %v2133, %v2325
      %v2390 = vmul.f32 %v2134, %v2326
      %v2391 = vmul.f32 %v2135, %v2327
      %v2392 = vmul.f32 %v2136, %v2328
      %v2393 = vmul.f32 %v2137, %v2329
      %v2394 = vmul.f32 %v2138, %v2330
      %v2395 = vmul.f32 %v2139, %v2331
      %v2396 = vmul.f32 %v2140, %v2332
      %v2397 = vmul.f32 %v2141, %v2333
      %v2398 = vmul.f32 %v2142, %v2334
      %v2399 = vmul.f32 %v2143, %v2335
      %v2400 = vmul.f32 %v2144, %v2336
      %v2401 = vmul.f32 %v2145, %v2337
      %v2402 = vmul.f32 %v2146, %v2338
      %v2403 = vmul.f32 %v2147, %v2339
      %v2404 = vmul.f32 %v2148, %v2340
      %v2405 = vmul.f32 %v2149, %v2341
      %v2406 = vmul.f32 %v2150, %v2342
      %v2407 = vmul.f32 %v2151, %v2343
      %v2408 = vmul.f32 %v2152, %v2344
      %v2409 = vmul.f32 %v2153, %v2345
      %v2410 = vmul.f32 %v2154, %v2346
      %v2411 = vmul.f32 %v2155, %v2347
      %v2412 = vmul.f32 %v2156, %v2348
      %v2413 = vmul.f32 %v2157, %v2349
      %v2414 = vmul.f32 %v2158, %v2350
      %v2415 = vmul.f32 %v2159, %v2351
      %v2416 = vmul.f32 %v2160, %v2352
      %v2417 = vmul.f32 %v2161, %v2353
      %v2418 = vmul.f32 %v2162, %v2354
      %v2419 = vmul.f32 %v2163, %v2355
      %v2420 = vmul.f32 %v2164, %v2356
      %v2421 = vmul.f32 %v2165, %v2357
      %v2422 = vmul.f32 %v2166, %v2358
      %v2423 = vmul.f32 %v2167, %v2359
      %v2424 = vmul.f32 %v2168, %v2360
      %v2425 = vmul.f32 %v2169, %v2361
      %v2426 = vmul.f32 %v2170, %v2362
      %v2427 = vmul.f32 %v2171, %v2363
      %v2428 = vmul.f32 %v2172, %v2364
      %v2429 = vmul.f32 %v2173, %v2365
      %v2430 = vmul.f32 %v2174, %v2366
      %v2431 = vmul.f32 %v2175, %v2367
      %v2432 = vmul.f32 %v2176, %v2368
      %v2433 = vmul.f32 %v2177, %v2369
      %v2434 = vmul.f32 %v2178, %v2370
      %v2435 = vmul.f32 %v2179, %v2371
      %v2436 = vmul.f32 %v1902, %v2372
      %v2437 = vmul.f32 %v1903, %v2373
      %v2438 = vmul.f32 %v1904, %v2374
      %v2439 = vmul.f32 %v1905, %v2375
      %v2440 = vmul.f32 %v1906, %v2376
      %v2441 = vmul.f32 %v1907, %v2377
      %v2442 = vmul.f32 %v1908, %v2378
      %v2443 = vmul.f32 %v1909, %v2379
      %v2444 = vmul.f32 %v1910, %v2380
      %v2445 = vmul.f32 %v1911, %v2381
      %v2446 = vmul.f32 %v1912, %v2382
      %v2447 = vmul.f32 %v1913, %v2383
      %v2448 = vmul.f32 %v1914, %v2384
      %v2449 = vmul.f32 %v1915, %v2385
      %v2450 = vmul.f32 %v1916, %v2386
      %v2451 = vmul.f32 %v1917, %v2387
      %v2452 = vmul.f32 %v1918, %v2388
      %v2453 = vmul.f32 %v1919, %v2389
      %v2454 = vmul.f32 %v1920, %v2390
      %v2455 = vmul.f32 %v1921, %v2391
      %v2456 = vmul.f32 %v1922, %v2392
      %v2457 = vmul.f32 %v1923, %v2393
      %v2458 = vmul.f32 %v1924, %v2394
      %v2459 = vmul.f32 %v1925, %v2395
      %v2460 = vmul.f32 %v1926, %v2396
      %v2461 = vmul.f32 %v1927, %v2397
      %v2462 = vmul.f32 %v1928, %v2398
      %v2463 = vmul.f32 %v1929, %v2399
      %v2464 = vmul.f32 %v1930, %v2400
      %v2465 = vmul.f32 %v1931, %v2401
      %v2466 = vmul.f32 %v1932, %v2402
      %v2467 = vmul.f32 %v1933, %v2403
      %v2468 = vmul.f32 %v1934, %v2404
      %v2469 = vmul.f32 %v1935, %v2405
      %v2470 = vmul.f32 %v1936, %v2406
      %v2471 = vmul.f32 %v1937, %v2407
      %v2472 = vmul.f32 %v1938, %v2408
      %v2473 = vmul.f32 %v1939, %v2409
      %v2474 = vmul.f32 %v1940, %v2410
      %v2475 = vmul.f32 %v1941, %v2411
      %v2476 = vmul.f32 %v1942, %v2412
      %v2477 = vmul.f32 %v1943, %v2413
      %v2478 = vmul.f32 %v1944, %v2414
      %v2479 = vmul.f32 %v1945, %v2415
      %v2480 = vmul.f32 %v1946, %v2416
      %v2481 = vmul.f32 %v1947, %v2417
      %v2482 = vmul.f32 %v1948, %v2418
      %v2483 = vmul.f32 %v1949, %v2419
      %v2484 = vmul.f32 %v1950, %v2420
      %v2485 = vmul.f32 %v1951, %v2421
      %v2486 = vmul.f32 %v1952, %v2422
      %v2487 = vmul.f32 %v1953, %v2423
      %v2488 = vmul.f32 %v1954, %v2424
      %v2489 = vmul.f32 %v1955, %v2425
      %v2490 = vmul.f32 %v1956, %v2426
      %v2491 = vmul.f32 %v1957, %v2427
      %v2492 = vmul.f32 %v1958, %v2428
      %v2493 = vmul.f32 %v1959, %v2429
      %v2494 = vmul.f32 %v1960, %v2430
      %v2495 = vmul.f32 %v1961, %v2431
      %v2496 = vmul.f32 %v1962, %v2432
      %v2497 = vmul.f32 %v1963, %v2433
      %v2498 = vmul.f32 %v1964, %v2434
      %v2499 = vmul.f32 %v1965, %v2435
      %v2500 = vpack.c.bf16 %v2440, %v2436
      %v2501 = vpack.c.bf16 %v2441, %v2437
      %v2502 = vpack.c.bf16 %v2442, %v2438
      %v2503 = vpack.c.bf16 %v2443, %v2439
      %v2504 = vpack.c.bf16 %v2448, %v2444
      %v2505 = vpack.c.bf16 %v2449, %v2445
      %v2506 = vpack.c.bf16 %v2450, %v2446
      %v2507 = vpack.c.bf16 %v2451, %v2447
      %v2508 = vpack.c.bf16 %v2456, %v2452
      %v2509 = vpack.c.bf16 %v2457, %v2453
      %v2510 = vpack.c.bf16 %v2458, %v2454
      %v2511 = vpack.c.bf16 %v2459, %v2455
      %v2512 = vpack.c.bf16 %v2464, %v2460
      %v2513 = vpack.c.bf16 %v2465, %v2461
      %v2514 = vpack.c.bf16 %v2466, %v2462
      %v2515 = vpack.c.bf16 %v2467, %v2463
      %v2516 = vpack.c.bf16 %v2472, %v2468
      %v2517 = vpack.c.bf16 %v2473, %v2469
      %v2518 = vpack.c.bf16 %v2474, %v2470
      %v2519 = vpack.c.bf16 %v2475, %v2471
      %v2520 = vpack.c.bf16 %v2480, %v2476
      %v2521 = vpack.c.bf16 %v2481, %v2477
      %v2522 = vpack.c.bf16 %v2482, %v2478
      %v2523 = vpack.c.bf16 %v2483, %v2479
      %v2524 = vpack.c.bf16 %v2488, %v2484
      %v2525 = vpack.c.bf16 %v2489, %v2485
      %v2526 = vpack.c.bf16 %v2490, %v2486
      %v2527 = vpack.c.bf16 %v2491, %v2487
      %v2528 = vpack.c.bf16 %v2496, %v2492
      %v2529 = vpack.c.bf16 %v2497, %v2493
      %v2530 = vpack.c.bf16 %v2498, %v2494
      %v2531 = vpack.c.bf16 %v2499, %v2495
      %v2564 = vunpack.c.l.b16 %v2500
      %v2565 = vunpack.c.l.b16 %v2501
      %v2566 = vunpack.c.l.b16 %v2502
      %v2567 = vunpack.c.l.b16 %v2503
      %v2568 = vunpack.c.h.b16 %v2500
      %v2569 = vunpack.c.h.b16 %v2501
      %v2570 = vunpack.c.h.b16 %v2502
      %v2571 = vunpack.c.h.b16 %v2503
      %v2572 = vunpack.c.l.b16 %v2504
      %v2573 = vunpack.c.l.b16 %v2505
      %v2574 = vunpack.c.l.b16 %v2506
      %v2575 = vunpack.c.l.b16 %v2507
      %v2576 = vunpack.c.h.b16 %v2504
      %v2577 = vunpack.c.h.b16 %v2505
      %v2578 = vunpack.c.h.b16 %v2506
      %v2579 = vunpack.c.h.b16 %v2507
      %v2580 = vunpack.c.l.b16 %v2508
      %v2581 = vunpack.c.l.b16 %v2509
      %v2582 = vunpack.c.l.b16 %v2510
      %v2583 = vunpack.c.l.b16 %v2511
      %v2584 = vunpack.c.h.b16 %v2508
      %v2585 = vunpack.c.h.b16 %v2509
      %v2586 = vunpack.c.h.b16 %v2510
      %v2587 = vunpack.c.h.b16 %v2511
      %v2588 = vunpack.c.l.b16 %v2512
      %v2589 = vunpack.c.l.b16 %v2513
      %v2590 = vunpack.c.l.b16 %v2514
      %v2591 = vunpack.c.l.b16 %v2515
      %v2592 = vunpack.c.h.b16 %v2512
      %v2593 = vunpack.c.h.b16 %v2513
      %v2594 = vunpack.c.h.b16 %v2514
      %v2595 = vunpack.c.h.b16 %v2515
      %v2596 = vunpack.c.l.b16 %v2516
      %v2597 = vunpack.c.l.b16 %v2517
      %v2598 = vunpack.c.l.b16 %v2518
      %v2599 = vunpack.c.l.b16 %v2519
      %v2600 = vunpack.c.h.b16 %v2516
      %v2601 = vunpack.c.h.b16 %v2517
      %v2602 = vunpack.c.h.b16 %v2518
      %v2603 = vunpack.c.h.b16 %v2519
      %v2604 = vunpack.c.l.b16 %v2520
      %v2605 = vunpack.c.l.b16 %v2521
      %v2606 = vunpack.c.l.b16 %v2522
      %v2607 = vunpack.c.l.b16 %v2523
      %v2608 = vunpack.c.h.b16 %v2520
      %v2609 = vunpack.c.h.b16 %v2521
      %v2610 = vunpack.c.h.b16 %v2522
      %v2611 = vunpack.c.h.b16 %v2523
      %v2612 = vunpack.c.l.b16 %v2524
      %v2613 = vunpack.c.l.b16 %v2525
      %v2614 = vunpack.c.l.b16 %v2526
      %v2615 = vunpack.c.l.b16 %v2527
      %v2616 = vunpack.c.h.b16 %v2524
      %v2617 = vunpack.c.h.b16 %v2525
      %v2618 = vunpack.c.h.b16 %v2526
      %v2619 = vunpack.c.h.b16 %v2527
      %v2620 = vunpack.c.l.b16 %v2528
      %v2621 = vunpack.c.l.b16 %v2529
      %v2622 = vunpack.c.l.b16 %v2530
      %v2623 = vunpack.c.l.b16 %v2531
      %v2624 = vunpack.c.h.b16 %v2528
      %v2625 = vunpack.c.h.b16 %v2529
      %v2626 = vunpack.c.h.b16 %v2530
      %v2627 = vunpack.c.h.b16 %v2531
      %v2628 = vpack.c.b16 %v2565, %v2564
      %v2629 = vpack.c.b16 %v2567, %v2566
      %v2630 = vpack.c.b16 %v2569, %v2568
      %v2631 = vpack.c.b16 %v2571, %v2570
      %v2632 = vpack.c.b16 %v2573, %v2572
      %v2633 = vpack.c.b16 %v2575, %v2574
      %v2634 = vpack.c.b16 %v2577, %v2576
      %v2635 = vpack.c.b16 %v2579, %v2578
      %v2636 = vpack.c.b16 %v2581, %v2580
      %v2637 = vpack.c.b16 %v2583, %v2582
      %v2638 = vpack.c.b16 %v2585, %v2584
      %v2639 = vpack.c.b16 %v2587, %v2586
      %v2640 = vpack.c.b16 %v2589, %v2588
      %v2641 = vpack.c.b16 %v2591, %v2590
      %v2642 = vpack.c.b16 %v2593, %v2592
      %v2643 = vpack.c.b16 %v2595, %v2594
      %v2644 = vpack.c.b16 %v2597, %v2596
      %v2645 = vpack.c.b16 %v2599, %v2598
      %v2646 = vpack.c.b16 %v2601, %v2600
      %v2647 = vpack.c.b16 %v2603, %v2602
      %v2648 = vpack.c.b16 %v2605, %v2604
      %v2649 = vpack.c.b16 %v2607, %v2606
      %v2650 = vpack.c.b16 %v2609, %v2608
      %v2651 = vpack.c.b16 %v2611, %v2610
      %v2652 = vpack.c.b16 %v2613, %v2612
      %v2653 = vpack.c.b16 %v2615, %v2614
      %v2654 = vpack.c.b16 %v2617, %v2616
      %v2655 = vpack.c.b16 %v2619, %v2618
      %v2656 = vpack.c.b16 %v2621, %v2620
      %v2657 = vpack.c.b16 %v2623, %v2622
      %v2658 = vpack.c.b16 %v2625, %v2624
      %v2659 = vpack.c.b16 %v2627, %v2626
      %2692 = vst [vmem:[%s7] sm:$0xff] %v2628
      %2693 = vst [vmem:[%s7 + $0x8] sm:$0xff] %v2629
      %2694 = vst [vmem:[%s7 + $0x10] sm:$0xff] %v2630
      %2695 = vst [vmem:[%s7 + $0x18] sm:$0xff] %v2631
      %2696 = vst [vmem:[%s7 + $0x20] sm:$0xff] %v2632
      %2697 = vst [vmem:[%s7 + $0x28] sm:$0xff] %v2633
      %2698 = vst [vmem:[%s7 + $0x30] sm:$0xff] %v2634
      %2699 = vst [vmem:[%s7 + $0x38] sm:$0xff] %v2635
      %2700 = vst [vmem:[%s7 + $0x40] sm:$0xff] %v2636
      %2701 = vst [vmem:[%s7 + $0x48] sm:$0xff] %v2637
      %2702 = vst [vmem:[%s7 + $0x50] sm:$0xff] %v2638
      %2703 = vst [vmem:[%s7 + $0x58] sm:$0xff] %v2639
      %2704 = vst [vmem:[%s7 + $0x60] sm:$0xff] %v2640
      %2705 = vst [vmem:[%s7 + $0x68] sm:$0xff] %v2641
      %2706 = vst [vmem:[%s7 + $0x70] sm:$0xff] %v2642
      %2707 = vst [vmem:[%s7 + $0x78] sm:$0xff] %v2643
      %2708 = vst [vmem:[%s7 + $0x80] sm:$0xff] %v2644
      %2709 = vst [vmem:[%s7 + $0x88] sm:$0xff] %v2645
      %2710 = vst [vmem:[%s7 + $0x90] sm:$0xff] %v2646
      %2711 = vst [vmem:[%s7 + $0x98] sm:$0xff] %v2647
      %2712 = vst [vmem:[%s7 + $0xa0] sm:$0xff] %v2648
      %2713 = vst [vmem:[%s7 + $0xa8] sm:$0xff] %v2649
      %2714 = vst [vmem:[%s7 + $0xb0] sm:$0xff] %v2650
      %2715 = vst [vmem:[%s7 + $0xb8] sm:$0xff] %v2651
      %2716 = vst [vmem:[%s7 + $0xc0] sm:$0xff] %v2652
      %2717 = vst [vmem:[%s7 + $0xc8] sm:$0xff] %v2653
      %2718 = vst [vmem:[%s7 + $0xd0] sm:$0xff] %v2654
      %2719 = vst [vmem:[%s7 + $0xd8] sm:$0xff] %v2655
      %2720 = vst [vmem:[%s7 + $0xe0] sm:$0xff] %v2656
      %2721 = vst [vmem:[%s7 + $0xe8] sm:$0xff] %v2657
      %2722 = vst [vmem:[%s7 + $0xf0] sm:$0xff] %v2658
      %2723 = vst [vmem:[%s7 + $0xf8] sm:$0xff] %v2659
    $region83: #{spatial_transformer_forward.19} parent=1 // pred_fallthru
      _
    // Predicated region
    $region84: #{spatial_transformer_forward.19} parent=1 // pred_check
      _
    $region85: #{spatial_transformer_forward.19} parent=1 // pred_check_branch
      %2725 = sbr.rel (0) target = $region87
    $region86: #{spatial_transformer_forward.19} parent=1 // pred_region
      _
    $region87: #{spatial_transformer_forward.19} parent=1 // pred_fallthru
      _
    // Predicated region
    $region88: #{spatial_transformer_forward.19} parent=1 // pred_check
      _
    $region89: #{spatial_transformer_forward.19} parent=1 // pred_check_branch
      %2727 = sbr.rel (0) target = $region91
    $region90: #{spatial_transformer_forward.19} parent=1 // pred_region
      _
    $region91: #{spatial_transformer_forward.19} parent=1 // pred_fallthru
      _

</llo_original>
